<compile_context>
chip_gen: v6e
topology: v6e:2x2x1
jax: 0.10.0
libtpu: 0.0.40
codegen_flags: <defaults>
</compile_context>

<pallas_src>
import functools

import jax
import jax.numpy as jnp
from jax.experimental import pallas as pl
from jax.experimental.pallas import tpu as pltpu  # noqa: F401  (kept for TPU-specific tuning hooks)


# -------------------- small synthetic ModelConfig --------------------
class ModelConfig:
    num_encoded_bits = 8
    image_shape = (16, 16, 3)        # resolution = image_shape[0]
    watermark_hidden_dim = 4
    num_initial_channels = 8
    num_down_levels = 2


# -------------------- Pallas kernels --------------------
def _apply_act(acc, act):
    if act == 'relu':
        return jnp.maximum(acc, 0.0)
    if act == 'silu':
        return acc * pl.reciprocal(1.0 + jnp.exp(-acc), approx=True)
    if act == 'tanh':
        return jnp.tanh(acc)
    return acc


def _make_gemm_kernel(act):
    def kernel(x_ref, w_ref, b_ref, o_ref):
        acc = jnp.dot(x_ref[...], w_ref[...], preferred_element_type=jnp.float32)
        acc = _apply_act(acc + b_ref[...], act)      # (1, N) bias broadcasts over rows
        o_ref[...] = acc.astype(o_ref.dtype)
    return kernel


def matmul_bias_act(x, w2d, b2d, act, out_dtype=jnp.bfloat16):
    """o = act(x @ w2d + b).  x: (M, K) bf16, w2d: (K, N) bf16, b2d: (1, N) f32."""
    M, K = x.shape
    N = w2d.shape[1]
    return pl.pallas_call(
        _make_gemm_kernel(act),
        out_shape=jax.ShapeDtypeStruct((M, N), out_dtype),
        grid=(1,),                                   # single block: launch-overhead-bound regime
        in_specs=[pl.BlockSpec((M, K), lambda i: (0, 0)),
                  pl.BlockSpec((K, N), lambda i: (0, 0)),
                  pl.BlockSpec((1, N), lambda i: (0, 0))],
        out_specs=pl.BlockSpec((M, N), lambda i: (0, 0)),
    )(x, w2d, b2d)


def _post_fused_kernel(p_ref, w0_ref, b0_ref, w1_ref, b1_ref, w2_ref, b2_ref, o_ref):
    # post[0]: 3x3 conv (as GEMM on im2col patches), no activation
    h = jnp.dot(p_ref[...], w0_ref[...], preferred_element_type=jnp.float32) + b0_ref[...]
    # post[1]: 1x1 conv + SiLU (chained entirely in VMEM)
    h = jnp.dot(h.astype(jnp.bfloat16), w1_ref[...], preferred_element_type=jnp.float32) + b1_ref[...]
    h = h * pl.reciprocal(1.0 + jnp.exp(-h), approx=True)
    # post[2]: 1x1 conv + tanh
    h = jnp.dot(h.astype(jnp.bfloat16), w2_ref[...], preferred_element_type=jnp.float32) + b2_ref[...]
    o_ref[...] = jnp.tanh(h).astype(o_ref.dtype)


def post_fused(patches, p0, p1, p2):
    """Fused post head: GEMM(no act) -> GEMM(silu) -> GEMM(tanh), one pallas_call."""
    M, K0 = patches.shape
    N0 = p0['w2d'].shape[1]
    N1 = p1['w2d'].shape[1]
    N2 = p2['w2d'].shape[1]
    return pl.pallas_call(
        _post_fused_kernel,
        out_shape=jax.ShapeDtypeStruct((M, N2), jnp.float32),
        grid=(1,),
        in_specs=[pl.BlockSpec((M, K0), lambda i: (0, 0)),
                  pl.BlockSpec((K0, N0), lambda i: (0, 0)),
                  pl.BlockSpec((1, N0), lambda i: (0, 0)),
                  pl.BlockSpec((N0, N1), lambda i: (0, 0)),
                  pl.BlockSpec((1, N1), lambda i: (0, 0)),
                  pl.BlockSpec((N1, N2), lambda i: (0, 0)),
                  pl.BlockSpec((1, N2), lambda i: (0, 0))],
        out_specs=pl.BlockSpec((M, N2), lambda i: (0, 0)),
    )(patches, p0['w2d'], p0['b2d'], p1['w2d'], p1['b2d'], p2['w2d'], p2['b2d'])


# -------------------- conv2d = im2col (glue) + fused Pallas GEMM --------------------
def _im2col(x, ksize, stride, pad):
    """x: (B, H, W, C) NHWC (bf16) -> patches (B*Ho*Wo, ksize*ksize*C), channels minor."""
    if pad:
        x = jnp.pad(x, ((0, 0), (pad, pad), (pad, pad), (0, 0)))
    B, Hp, Wp, C = x.shape
    Ho = (Hp - ksize) // stride + 1
    Wo = (Wp - ksize) // stride + 1
    cols = []
    for kh in range(ksize):
        for kw in range(ksize):
            cols.append(x[:, kh:kh + stride * (Ho - 1) + 1:stride,
                           kw:kw + stride * (Wo - 1) + 1:stride, :])
    patches = jnp.concatenate(cols, axis=-1).reshape(B * Ho * Wo, ksize * ksize * C)
    return patches, (B, Ho, Wo)


def conv2d_nhwc(x, lp, ksize, stride, pad, act):
    """x: (B, H, W, Cin) bf16; lp: {'w2d': (KH*KW*Cin, Cout) bf16, 'b2d': (1, Cout) f32}."""
    patches, (B, Ho, Wo) = _im2col(x, ksize, stride, pad)
    out = matmul_bias_act(patches, lp['w2d'], lp['b2d'], act)
    return out.reshape(B, Ho, Wo, lp['w2d'].shape[1])


# -------------------- DecBlock (Upsample + ZeroPad2d((0,1,0,1)) + convs) --------------------
def dec_block_nhwc(x, skip, lp):
    # TODO(synk): fuse nearest-x2 upsample + ZeroPad2d + 2x2 conv1 into per-output-parity
    # GEMMs inside a single Pallas kernel to remove the repeat/pad glue and one launch.
    x = jnp.repeat(jnp.repeat(x, 2, axis=1), 2, axis=2)          # nearest x2
    x = jnp.pad(x, ((0, 0), (0, 1), (0, 1), (0, 0)))             # (left0, right1, top0, bottom1)
    x = conv2d_nhwc(x, lp['conv1'], 2, 1, 0, 'relu')
    x = jnp.concatenate([x, skip], axis=-1)                      # torch.cat([x, skip], dim=1)
    x = conv2d_nhwc(x, lp['conv2'], 3, 1, 1, 'relu')
    return x


# -------------------- parameter init (deterministic, synthetic; PyTorch layout) --------------------
def _conv_init(key, cin, cout, k):
    kw, kb = jax.random.split(key)
    fan_in = cin * k * k
    w = jax.random.normal(kw, (cout, cin, k, k), jnp.float32) / jnp.sqrt(float(fan_in))
    b = jax.random.normal(kb, (cout,), jnp.float32) * 0.01
    return {'w': w, 'b': b}


def init_params(key, cfg):
    keys = jax.random.split(key, 16)
    hd = cfg.watermark_hidden_dim
    params = {}
    # Watermark2Image Linear(num_encoded_bits -> hd*hd*3), PyTorch weight (out, in)
    kw, kb = jax.random.split(keys[0])
    params['w2i'] = {
        'w': jax.random.normal(kw, (hd * hd * 3, cfg.num_encoded_bits), jnp.float32)
             / jnp.sqrt(float(cfg.num_encoded_bits)),
        'b': jax.random.normal(kb, (hd * hd * 3,), jnp.float32) * 0.01,
    }
    c0 = cfg.num_initial_channels
    params['pre'] = _conv_init(keys[1], 6, c0, 3)
    params['enc'] = []
    ic = c0
    for i in range(cfg.num_down_levels):
        params['enc'].append(_conv_init(keys[2 + i], ic, ic * 2, 3))
        ic *= 2
    params['dec'] = []
    for i in range(cfg.num_down_levels):
        skip_w = ic // 2 if i < cfg.num_down_levels - 1 else ic // 2 + 6
        oc = ic // 2
        k1, k2 = jax.random.split(keys[6 + i])
        params['dec'].append({
            'conv1': _conv_init(k1, ic, oc, 2),
            'conv2': _conv_init(k2, oc + skip_w, oc, 3),
        })
        ic //= 2
    params['post'] = [
        _conv_init(keys[10], ic, ic, 3),
        _conv_init(keys[11], ic, ic // 2, 1),
        _conv_init(keys[12], ic // 2, 3, 1),
    ]
    return params


# -------------------- one-time weight packing into GEMM layout --------------------
def _pack_conv(p):
    cout, cin, kh, kw = p['w'].shape
    w2d = jnp.transpose(p['w'], (2, 3, 1, 0)).reshape(kh * kw * cin, cout)
    return {'w2d': w2d.astype(jnp.bfloat16),
            'b2d': p['b'].astype(jnp.float32).reshape(1, cout)}


def pack_params(params):
    packed = {}
    packed['w2i'] = {'w2d': params['w2i']['w'].T.astype(jnp.bfloat16),
                     'b2d': params['w2i']['b'].astype(jnp.float32).reshape(1, -1)}
    packed['pre'] = _pack_conv(params['pre'])
    packed['enc'] = [_pack_conv(p) for p in params['enc']]
    packed['dec'] = [{'conv1': _pack_conv(p['conv1']), 'conv2': _pack_conv(p['conv2'])}
                     for p in params['dec']]
    packed['post'] = [_pack_conv(p) for p in params['post']]
    return packed


# -------------------- Encoder forward --------------------
def encoder_forward(packed, image_nchw, watermark, cfg):
    B = image_nchw.shape[0]
    res = cfg.image_shape[0]
    hd = cfg.watermark_hidden_dim

    if watermark is None:
        watermark = jnp.zeros((B, cfg.num_encoded_bits), jnp.float32)

    # ---- Watermark2Image (num_repeats = 1) ----
    # ReLU is fused into the GEMM kernel; it commutes exactly through the
    # nearest-neighbor upsample and zero padding that follow (relu(0) == 0).
    wm = matmul_bias_act(watermark.astype(jnp.bfloat16),
                         packed['w2i']['w2d'], packed['w2i']['b2d'], act='relu')
    wm = wm.reshape(B, 3, hd, hd).transpose(0, 2, 3, 1)          # view + to NHWC
    scale = res // hd // 1 // 2
    wm = jnp.repeat(jnp.repeat(wm, scale, axis=1), scale, axis=2)
    # ImageRepeatLayer(num_repeats=1) is the identity
    p = res // 4
    wm = jnp.pad(wm, ((0, 0), (p, p), (p, p), (0, 0)))           # transforms.Pad(pad_length)

    image = image_nchw.transpose(0, 2, 3, 1).astype(jnp.bfloat16)  # NCHW -> NHWC
    inputs = jnp.concatenate([image, wm], axis=-1)                 # 6 channels

    # ---- pre + encoder ----
    x = conv2d_nhwc(inputs, packed['pre'], 3, 1, 1, 'relu')
    enc = []
    for lp in packed['enc']:
        enc.append(x)
        x = conv2d_nhwc(x, lp, 3, 2, 1, 'relu')
    enc = enc[::-1]

    # ---- decoder ----
    for i, (lp, skip) in enumerate(zip(packed['dec'], enc)):
        if i == cfg.num_down_levels - 1:
            skip = jnp.concatenate([skip, inputs], axis=-1)
        x = dec_block_nhwc(x, skip, lp)

    # ---- post: 3x3 (no act) -> 1x1 silu -> 1x1 tanh, all fused in one kernel ----
    patches, (Bb, Ho, Wo) = _im2col(x, 3, 1, 1)
    out = post_fused(patches, packed['post'][0], packed['post'][1], packed['post'][2])
    out = out.reshape(Bb, Ho, Wo, 3)
    return out.transpose(0, 3, 1, 2).astype(jnp.float32)            # NHWC -> NCHW


if __name__ == "__main__":
    cfg = ModelConfig()
    key = jax.random.PRNGKey(0)
    kp, ki, kw = jax.random.split(key, 3)

    params = init_params(kp, cfg)
    packed = pack_params(params)       # one-time GEMM-layout / bf16 packing (outside jit)

    image = jax.random.uniform(ki, (2, 3, cfg.image_shape[0], cfg.image_shape[0]),
                               dtype=jnp.float32)
    watermark = jax.random.bernoulli(kw, 0.5, (2, cfg.num_encoded_bits)).astype(jnp.float32)

    fwd = jax.jit(functools.partial(encoder_forward, cfg=cfg))
    out = fwd(packed, image, watermark)
    jax.block_until_ready(out)

    assert out.shape == (2, 3, cfg.image_shape[0], cfg.image_shape[0]), out.shape
    assert out.dtype == jnp.float32
    print("KERNEL_OK")
</pallas_src>

<mosaic_0001>
module attributes {stable_mosaic.version = 11 : i64} {
  func.func @kernel(%arg0: i32, %arg1: memref<2x8xbf16, #tpu.memory_space<vmem>>, %arg2: memref<8x48xbf16, #tpu.memory_space<vmem>>, %arg3: memref<1x48xf32, #tpu.memory_space<vmem>>, %arg4: memref<2x48xbf16, #tpu.memory_space<vmem>>) attributes {dimension_semantics = [#tpu.dimension_semantics<arbitrary>], iteration_bounds = array<i64: 1>, scalar_prefetch = 0 : i64, scratch_operands = 0 : i64, tpu.core_type = #tpu.core_type<tc>, window_params = [{pipeline_mode = #tpu.pipeline_mode<synchronous>, transform_indices = @transform_0, window_bounds = array<i64: 2, 8>}, {pipeline_mode = #tpu.pipeline_mode<synchronous>, transform_indices = @transform_1, window_bounds = array<i64: 8, 48>}, {pipeline_mode = #tpu.pipeline_mode<synchronous>, transform_indices = @transform_2, window_bounds = array<i64: 1, 48>}, {pipeline_mode = #tpu.pipeline_mode<synchronous>, transform_indices = @transform_3, window_bounds = array<i64: 2, 48>}]} {
    %c0 = arith.constant 0 : index
    %c0_0 = arith.constant 0 : index
    %0 = vector.load %arg1[%c0, %c0_0] : memref<2x8xbf16, #tpu.memory_space<vmem>>, vector<2x8xbf16>
    %c0_1 = arith.constant 0 : index
    %c0_2 = arith.constant 0 : index
    %1 = vector.load %arg2[%c0_1, %c0_2] : memref<8x48xbf16, #tpu.memory_space<vmem>>, vector<8x48xbf16>
    %cst = arith.constant dense<0.000000e+00> : vector<2x48xf32>
    %2 = tpu.matmul %0, %1, %cst {dimension_numbers = #tpu.dot_dimension_numbers<[1], [0], [0], [1], [0, 0, 1, 1], [], []>} : vector<2x8xbf16>, vector<8x48xbf16>, vector<2x48xf32> -> vector<2x48xf32>
    %c0_3 = arith.constant 0 : index
    %c0_4 = arith.constant 0 : index
    %3 = vector.load %arg3[%c0_3, %c0_4] : memref<1x48xf32, #tpu.memory_space<vmem>>, vector<1x48xf32>
    %4 = vector.broadcast %3 : vector<1x48xf32> to vector<2x48xf32>
    %5 = arith.addf %2, %4 : vector<2x48xf32>
    %cst_5 = arith.constant 0.000000e+00 : f32
    %6 = vector.broadcast %cst_5 : f32 to vector<2x48xf32>
    %7 = arith.maximumf %5, %6 : vector<2x48xf32>
    %8 = arith.truncf %7 : vector<2x48xf32> to vector<2x48xbf16>
    %c0_6 = arith.constant 0 : index
    %c0_7 = arith.constant 0 : index
    %9 = vector.load %arg4[%c0_6, %c0_7] : memref<2x48xbf16, #tpu.memory_space<vmem>>, vector<2x48xbf16>
    tpu.vector_store %arg4[%c0_6, %c0_7], %8 {strides = array<i32>} : memref<2x48xbf16, #tpu.memory_space<vmem>>, vector<2x48xbf16>,
    return
  }
  func.func @transform_0(%arg0: i32) -> (i32, i32) {
    %c0_i32 = arith.constant 0 : i32
    %c0_i32_0 = arith.constant 0 : i32
    %c0_i32_1 = arith.constant 0 : i32
    return %c0_i32, %c0_i32_0 : i32, i32
  }
  func.func @transform_1(%arg0: i32) -> (i32, i32) {
    %c0_i32 = arith.constant 0 : i32
    %c0_i32_0 = arith.constant 0 : i32
    %c0_i32_1 = arith.constant 0 : i32
    return %c0_i32, %c0_i32_0 : i32, i32
  }
  func.func @transform_2(%arg0: i32) -> (i32, i32) {
    %c0_i32 = arith.constant 0 : i32
    %c0_i32_0 = arith.constant 0 : i32
    %c0_i32_1 = arith.constant 0 : i32
    return %c0_i32, %c0_i32_0 : i32, i32
  }
  func.func @transform_3(%arg0: i32) -> (i32, i32) {
    %c0_i32 = arith.constant 0 : i32
    %c0_i32_0 = arith.constant 0 : i32
    %c0_i32_1 = arith.constant 0 : i32
    return %c0_i32, %c0_i32_0 : i32, i32
  }
}

module attributes {stable_mosaic.version = 11 : i64} {
  func.func @kernel(%arg0: i32, %arg1: memref<512x54xbf16, #tpu.memory_space<vmem>>, %arg2: memref<54x8xbf16, #tpu.memory_space<vmem>>, %arg3: memref<1x8xf32, #tpu.memory_space<vmem>>, %arg4: memref<512x8xbf16, #tpu.memory_space<vmem>>) attributes {dimension_semantics = [#tpu.dimension_semantics<arbitrary>], iteration_bounds = array<i64: 1>, scalar_prefetch = 0 : i64, scratch_operands = 0 : i64, tpu.core_type = #tpu.core_type<tc>, window_params = [{pipeline_mode = #tpu.pipeline_mode<synchronous>, transform_indices = @transform_0, window_bounds = array<i64: 512, 54>}, {pipeline_mode = #tpu.pipeline_mode<synchronous>, transform_indices = @transform_1, window_bounds = array<i64: 54, 8>}, {pipeline_mode = #tpu.pipeline_mode<synchronous>, transform_indices = @transform_2, window_bounds = array<i64: 1, 8>}, {pipeline_mode = #tpu.pipeline_mode<synchronous>, transform_indices = @transform_3, window_bounds = array<i64: 512, 8>}]} {
    %c0 = arith.constant 0 : index
    %c0_0 = arith.constant 0 : index
    %0 = vector.load %arg1[%c0, %c0_0] : memref<512x54xbf16, #tpu.memory_space<vmem>>, vector<512x54xbf16>
    %c0_1 = arith.constant 0 : index
    %c0_2 = arith.constant 0 : index
    %1 = vector.load %arg2[%c0_1, %c0_2] : memref<54x8xbf16, #tpu.memory_space<vmem>>, vector<54x8xbf16>
    %cst = arith.constant dense<0.000000e+00> : vector<512x8xf32>
    %2 = tpu.matmul %0, %1, %cst {dimension_numbers = #tpu.dot_dimension_numbers<[1], [0], [0], [1], [0, 0, 1, 1], [], []>} : vector<512x54xbf16>, vector<54x8xbf16>, vector<512x8xf32> -> vector<512x8xf32>
    %c0_3 = arith.constant 0 : index
    %c0_4 = arith.constant 0 : index
    %3 = vector.load %arg3[%c0_3, %c0_4] : memref<1x8xf32, #tpu.memory_space<vmem>>, vector<1x8xf32>
    %4 = vector.broadcast %3 : vector<1x8xf32> to vector<512x8xf32>
    %5 = arith.addf %2, %4 : vector<512x8xf32>
    %cst_5 = arith.constant 0.000000e+00 : f32
    %6 = vector.broadcast %cst_5 : f32 to vector<512x8xf32>
    %7 = arith.maximumf %5, %6 : vector<512x8xf32>
    %8 = arith.truncf %7 : vector<512x8xf32> to vector<512x8xbf16>
    %c0_6 = arith.constant 0 : index
    %c0_7 = arith.constant 0 : index
    %9 = vector.load %arg4[%c0_6, %c0_7] : memref<512x8xbf16, #tpu.memory_space<vmem>>, vector<512x8xbf16>
    tpu.vector_store %arg4[%c0_6, %c0_7], %8 {strides = array<i32>} : memref<512x8xbf16, #tpu.memory_space<vmem>>, vector<512x8xbf16>,
    return
  }
  func.func @transform_0(%arg0: i32) -> (i32, i32) {
    %c0_i32 = arith.constant 0 : i32
    %c0_i32_0 = arith.constant 0 : i32
    %c0_i32_1 = arith.constant 0 : i32
    return %c0_i32, %c0_i32_0 : i32, i32
  }
  func.func @transform_1(%arg0: i32) -> (i32, i32) {
    %c0_i32 = arith.constant 0 : i32
    %c0_i32_0 = arith.constant 0 : i32
    %c0_i32_1 = arith.constant 0 : i32
    return %c0_i32, %c0_i32_0 : i32, i32
  }
  func.func @transform_2(%arg0: i32) -> (i32, i32) {
    %c0_i32 = arith.constant 0 : i32
    %c0_i32_0 = arith.constant 0 : i32
    %c0_i32_1 = arith.constant 0 : i32
    return %c0_i32, %c0_i32_0 : i32, i32
  }
  func.func @transform_3(%arg0: i32) -> (i32, i32) {
    %c0_i32 = arith.constant 0 : i32
    %c0_i32_0 = arith.constant 0 : i32
    %c0_i32_1 = arith.constant 0 : i32
    return %c0_i32, %c0_i32_0 : i32, i32
  }
}

module attributes {stable_mosaic.version = 11 : i64} {
  func.func @kernel(%arg0: i32, %arg1: memref<128x72xbf16, #tpu.memory_space<vmem>>, %arg2: memref<72x16xbf16, #tpu.memory_space<vmem>>, %arg3: memref<1x16xf32, #tpu.memory_space<vmem>>, %arg4: memref<128x16xbf16, #tpu.memory_space<vmem>>) attributes {dimension_semantics = [#tpu.dimension_semantics<arbitrary>], iteration_bounds = array<i64: 1>, scalar_prefetch = 0 : i64, scratch_operands = 0 : i64, tpu.core_type = #tpu.core_type<tc>, window_params = [{pipeline_mode = #tpu.pipeline_mode<synchronous>, transform_indices = @transform_0, window_bounds = array<i64: 128, 72>}, {pipeline_mode = #tpu.pipeline_mode<synchronous>, transform_indices = @transform_1, window_bounds = array<i64: 72, 16>}, {pipeline_mode = #tpu.pipeline_mode<synchronous>, transform_indices = @transform_2, window_bounds = array<i64: 1, 16>}, {pipeline_mode = #tpu.pipeline_mode<synchronous>, transform_indices = @transform_3, window_bounds = array<i64: 128, 16>}]} {
    %c0 = arith.constant 0 : index
    %c0_0 = arith.constant 0 : index
    %0 = vector.load %arg1[%c0, %c0_0] : memref<128x72xbf16, #tpu.memory_space<vmem>>, vector<128x72xbf16>
    %c0_1 = arith.constant 0 : index
    %c0_2 = arith.constant 0 : index
    %1 = vector.load %arg2[%c0_1, %c0_2] : memref<72x16xbf16, #tpu.memory_space<vmem>>, vector<72x16xbf16>
    %cst = arith.constant dense<0.000000e+00> : vector<128x16xf32>
    %2 = tpu.matmul %0, %1, %cst {dimension_numbers = #tpu.dot_dimension_numbers<[1], [0], [0], [1], [0, 0, 1, 1], [], []>} : vector<128x72xbf16>, vector<72x16xbf16>, vector<128x16xf32> -> vector<128x16xf32>
    %c0_3 = arith.constant 0 : index
    %c0_4 = arith.constant 0 : index
    %3 = vector.load %arg3[%c0_3, %c0_4] : memref<1x16xf32, #tpu.memory_space<vmem>>, vector<1x16xf32>
    %4 = vector.broadcast %3 : vector<1x16xf32> to vector<128x16xf32>
    %5 = arith.addf %2, %4 : vector<128x16xf32>
    %cst_5 = arith.constant 0.000000e+00 : f32
    %6 = vector.broadcast %cst_5 : f32 to vector<128x16xf32>
    %7 = arith.maximumf %5, %6 : vector<128x16xf32>
    %8 = arith.truncf %7 : vector<128x16xf32> to vector<128x16xbf16>
    %c0_6 = arith.constant 0 : index
    %c0_7 = arith.constant 0 : index
    %9 = vector.load %arg4[%c0_6, %c0_7] : memref<128x16xbf16, #tpu.memory_space<vmem>>, vector<128x16xbf16>
    tpu.vector_store %arg4[%c0_6, %c0_7], %8 {strides = array<i32>} : memref<128x16xbf16, #tpu.memory_space<vmem>>, vector<128x16xbf16>,
    return
  }
  func.func @transform_0(%arg0: i32) -> (i32, i32) {
    %c0_i32 = arith.constant 0 : i32
    %c0_i32_0 = arith.constant 0 : i32
    %c0_i32_1 = arith.constant 0 : i32
    return %c0_i32, %c0_i32_0 : i32, i32
  }
  func.func @transform_1(%arg0: i32) -> (i32, i32) {
    %c0_i32 = arith.constant 0 : i32
    %c0_i32_0 = arith.constant 0 : i32
    %c0_i32_1 = arith.constant 0 : i32
    return %c0_i32, %c0_i32_0 : i32, i32
  }
  func.func @transform_2(%arg0: i32) -> (i32, i32) {
    %c0_i32 = arith.constant 0 : i32
    %c0_i32_0 = arith.constant 0 : i32
    %c0_i32_1 = arith.constant 0 : i32
    return %c0_i32, %c0_i32_0 : i32, i32
  }
  func.func @transform_3(%arg0: i32) -> (i32, i32) {
    %c0_i32 = arith.constant 0 : i32
    %c0_i32_0 = arith.constant 0 : i32
    %c0_i32_1 = arith.constant 0 : i32
    return %c0_i32, %c0_i32_0 : i32, i32
  }
}

module attributes {stable_mosaic.version = 11 : i64} {
  func.func @kernel(%arg0: i32, %arg1: memref<32x144xbf16, #tpu.memory_space<vmem>>, %arg2: memref<144x32xbf16, #tpu.memory_space<vmem>>, %arg3: memref<1x32xf32, #tpu.memory_space<vmem>>, %arg4: memref<32x32xbf16, #tpu.memory_space<vmem>>) attributes {dimension_semantics = [#tpu.dimension_semantics<arbitrary>], iteration_bounds = array<i64: 1>, scalar_prefetch = 0 : i64, scratch_operands = 0 : i64, tpu.core_type = #tpu.core_type<tc>, window_params = [{pipeline_mode = #tpu.pipeline_mode<synchronous>, transform_indices = @transform_0, window_bounds = array<i64: 32, 144>}, {pipeline_mode = #tpu.pipeline_mode<synchronous>, transform_indices = @transform_1, window_bounds = array<i64: 144, 32>}, {pipeline_mode = #tpu.pipeline_mode<synchronous>, transform_indices = @transform_2, window_bounds = array<i64: 1, 32>}, {pipeline_mode = #tpu.pipeline_mode<synchronous>, transform_indices = @transform_3, window_bounds = array<i64: 32, 32>}]} {
    %c0 = arith.constant 0 : index
    %c0_0 = arith.constant 0 : index
    %0 = vector.load %arg1[%c0, %c0_0] : memref<32x144xbf16, #tpu.memory_space<vmem>>, vector<32x144xbf16>
    %c0_1 = arith.constant 0 : index
    %c0_2 = arith.constant 0 : index
    %1 = vector.load %arg2[%c0_1, %c0_2] : memref<144x32xbf16, #tpu.memory_space<vmem>>, vector<144x32xbf16>
    %cst = arith.constant dense<0.000000e+00> : vector<32x32xf32>
    %2 = tpu.matmul %0, %1, %cst {dimension_numbers = #tpu.dot_dimension_numbers<[1], [0], [0], [1], [0, 0, 1, 1], [], []>} : vector<32x144xbf16>, vector<144x32xbf16>, vector<32x32xf32> -> vector<32x32xf32>
    %c0_3 = arith.constant 0 : index
    %c0_4 = arith.constant 0 : index
    %3 = vector.load %arg3[%c0_3, %c0_4] : memref<1x32xf32, #tpu.memory_space<vmem>>, vector<1x32xf32>
    %4 = vector.broadcast %3 : vector<1x32xf32> to vector<32x32xf32>
    %5 = arith.addf %2, %4 : vector<32x32xf32>
    %cst_5 = arith.constant 0.000000e+00 : f32
    %6 = vector.broadcast %cst_5 : f32 to vector<32x32xf32>
    %7 = arith.maximumf %5, %6 : vector<32x32xf32>
    %8 = arith.truncf %7 : vector<32x32xf32> to vector<32x32xbf16>
    %c0_6 = arith.constant 0 : index
    %c0_7 = arith.constant 0 : index
    %9 = vector.load %arg4[%c0_6, %c0_7] : memref<32x32xbf16, #tpu.memory_space<vmem>>, vector<32x32xbf16>
    tpu.vector_store %arg4[%c0_6, %c0_7], %8 {strides = array<i32>} : memref<32x32xbf16, #tpu.memory_space<vmem>>, vector<32x32xbf16>,
    return
  }
  func.func @transform_0(%arg0: i32) -> (i32, i32) {
    %c0_i32 = arith.constant 0 : i32
    %c0_i32_0 = arith.constant 0 : i32
    %c0_i32_1 = arith.constant 0 : i32
    return %c0_i32, %c0_i32_0 : i32, i32
  }
  func.func @transform_1(%arg0: i32) -> (i32, i32) {
    %c0_i32 = arith.constant 0 : i32
    %c0_i32_0 = arith.constant 0 : i32
    %c0_i32_1 = arith.constant 0 : i32
    return %c0_i32, %c0_i32_0 : i32, i32
  }
  func.func @transform_2(%arg0: i32) -> (i32, i32) {
    %c0_i32 = arith.constant 0 : i32
    %c0_i32_0 = arith.constant 0 : i32
    %c0_i32_1 = arith.constant 0 : i32
    return %c0_i32, %c0_i32_0 : i32, i32
  }
  func.func @transform_3(%arg0: i32) -> (i32, i32) {
    %c0_i32 = arith.constant 0 : i32
    %c0_i32_0 = arith.constant 0 : i32
    %c0_i32_1 = arith.constant 0 : i32
    return %c0_i32, %c0_i32_0 : i32, i32
  }
}

module attributes {stable_mosaic.version = 11 : i64} {
  func.func @kernel(%arg0: i32, %arg1: memref<128x128xbf16, #tpu.memory_space<vmem>>, %arg2: memref<128x16xbf16, #tpu.memory_space<vmem>>, %arg3: memref<1x16xf32, #tpu.memory_space<vmem>>, %arg4: memref<128x16xbf16, #tpu.memory_space<vmem>>) attributes {dimension_semantics = [#tpu.dimension_semantics<arbitrary>], iteration_bounds = array<i64: 1>, scalar_prefetch = 0 : i64, scratch_operands = 0 : i64, tpu.core_type = #tpu.core_type<tc>, window_params = [{pipeline_mode = #tpu.pipeline_mode<synchronous>, transform_indices = @transform_0, window_bounds = array<i64: 128, 128>}, {pipeline_mode = #tpu.pipeline_mode<synchronous>, transform_indices = @transform_1, window_bounds = array<i64: 128, 16>}, {pipeline_mode = #tpu.pipeline_mode<synchronous>, transform_indices = @transform_2, window_bounds = array<i64: 1, 16>}, {pipeline_mode = #tpu.pipeline_mode<synchronous>, transform_indices = @transform_3, window_bounds = array<i64: 128, 16>}]} {
    %c0 = arith.constant 0 : index
    %c0_0 = arith.constant 0 : index
    %0 = vector.load %arg1[%c0, %c0_0] : memref<128x128xbf16, #tpu.memory_space<vmem>>, vector<128x128xbf16>
    %c0_1 = arith.constant 0 : index
    %c0_2 = arith.constant 0 : index
    %1 = vector.load %arg2[%c0_1, %c0_2] : memref<128x16xbf16, #tpu.memory_space<vmem>>, vector<128x16xbf16>
    %cst = arith.constant dense<0.000000e+00> : vector<128x16xf32>
    %2 = tpu.matmul %0, %1, %cst {dimension_numbers = #tpu.dot_dimension_numbers<[1], [0], [0], [1], [0, 0, 1, 1], [], []>} : vector<128x128xbf16>, vector<128x16xbf16>, vector<128x16xf32> -> vector<128x16xf32>
    %c0_3 = arith.constant 0 : index
    %c0_4 = arith.constant 0 : index
    %3 = vector.load %arg3[%c0_3, %c0_4] : memref<1x16xf32, #tpu.memory_space<vmem>>, vector<1x16xf32>
    %4 = vector.broadcast %3 : vector<1x16xf32> to vector<128x16xf32>
    %5 = arith.addf %2, %4 : vector<128x16xf32>
    %cst_5 = arith.constant 0.000000e+00 : f32
    %6 = vector.broadcast %cst_5 : f32 to vector<128x16xf32>
    %7 = arith.maximumf %5, %6 : vector<128x16xf32>
    %8 = arith.truncf %7 : vector<128x16xf32> to vector<128x16xbf16>
    %c0_6 = arith.constant 0 : index
    %c0_7 = arith.constant 0 : index
    %9 = vector.load %arg4[%c0_6, %c0_7] : memref<128x16xbf16, #tpu.memory_space<vmem>>, vector<128x16xbf16>
    tpu.vector_store %arg4[%c0_6, %c0_7], %8 {strides = array<i32>} : memref<128x16xbf16, #tpu.memory_space<vmem>>, vector<128x16xbf16>,
    return
  }
  func.func @transform_0(%arg0: i32) -> (i32, i32) {
    %c0_i32 = arith.constant 0 : i32
    %c0_i32_0 = arith.constant 0 : i32
    %c0_i32_1 = arith.constant 0 : i32
    return %c0_i32, %c0_i32_0 : i32, i32
  }
  func.func @transform_1(%arg0: i32) -> (i32, i32) {
    %c0_i32 = arith.constant 0 : i32
    %c0_i32_0 = arith.constant 0 : i32
    %c0_i32_1 = arith.constant 0 : i32
    return %c0_i32, %c0_i32_0 : i32, i32
  }
  func.func @transform_2(%arg0: i32) -> (i32, i32) {
    %c0_i32 = arith.constant 0 : i32
    %c0_i32_0 = arith.constant 0 : i32
    %c0_i32_1 = arith.constant 0 : i32
    return %c0_i32, %c0_i32_0 : i32, i32
  }
  func.func @transform_3(%arg0: i32) -> (i32, i32) {
    %c0_i32 = arith.constant 0 : i32
    %c0_i32_0 = arith.constant 0 : i32
    %c0_i32_1 = arith.constant 0 : i32
    return %c0_i32, %c0_i32_0 : i32, i32
  }
}

module attributes {stable_mosaic.version = 11 : i64} {
  func.func @kernel(%arg0: i32, %arg1: memref<128x288xbf16, #tpu.memory_space<vmem>>, %arg2: memref<288x16xbf16, #tpu.memory_space<vmem>>, %arg3: memref<1x16xf32, #tpu.memory_space<vmem>>, %arg4: memref<128x16xbf16, #tpu.memory_space<vmem>>) attributes {dimension_semantics = [#tpu.dimension_semantics<arbitrary>], iteration_bounds = array<i64: 1>, scalar_prefetch = 0 : i64, scratch_operands = 0 : i64, tpu.core_type = #tpu.core_type<tc>, window_params = [{pipeline_mode = #tpu.pipeline_mode<synchronous>, transform_indices = @transform_0, window_bounds = array<i64: 128, 288>}, {pipeline_mode = #tpu.pipeline_mode<synchronous>, transform_indices = @transform_1, window_bounds = array<i64: 288, 16>}, {pipeline_mode = #tpu.pipeline_mode<synchronous>, transform_indices = @transform_2, window_bounds = array<i64: 1, 16>}, {pipeline_mode = #tpu.pipeline_mode<synchronous>, transform_indices = @transform_3, window_bounds = array<i64: 128, 16>}]} {
    %c0 = arith.constant 0 : index
    %c0_0 = arith.constant 0 : index
    %0 = vector.load %arg1[%c0, %c0_0] : memref<128x288xbf16, #tpu.memory_space<vmem>>, vector<128x288xbf16>
    %c0_1 = arith.constant 0 : index
    %c0_2 = arith.constant 0 : index
    %1 = vector.load %arg2[%c0_1, %c0_2] : memref<288x16xbf16, #tpu.memory_space<vmem>>, vector<288x16xbf16>
    %cst = arith.constant dense<0.000000e+00> : vector<128x16xf32>
    %2 = tpu.matmul %0, %1, %cst {dimension_numbers = #tpu.dot_dimension_numbers<[1], [0], [0], [1], [0, 0, 1, 1], [], []>} : vector<128x288xbf16>, vector<288x16xbf16>, vector<128x16xf32> -> vector<128x16xf32>
    %c0_3 = arith.constant 0 : index
    %c0_4 = arith.constant 0 : index
    %3 = vector.load %arg3[%c0_3, %c0_4] : memref<1x16xf32, #tpu.memory_space<vmem>>, vector<1x16xf32>
    %4 = vector.broadcast %3 : vector<1x16xf32> to vector<128x16xf32>
    %5 = arith.addf %2, %4 : vector<128x16xf32>
    %cst_5 = arith.constant 0.000000e+00 : f32
    %6 = vector.broadcast %cst_5 : f32 to vector<128x16xf32>
    %7 = arith.maximumf %5, %6 : vector<128x16xf32>
    %8 = arith.truncf %7 : vector<128x16xf32> to vector<128x16xbf16>
    %c0_6 = arith.constant 0 : index
    %c0_7 = arith.constant 0 : index
    %9 = vector.load %arg4[%c0_6, %c0_7] : memref<128x16xbf16, #tpu.memory_space<vmem>>, vector<128x16xbf16>
    tpu.vector_store %arg4[%c0_6, %c0_7], %8 {strides = array<i32>} : memref<128x16xbf16, #tpu.memory_space<vmem>>, vector<128x16xbf16>,
    return
  }
  func.func @transform_0(%arg0: i32) -> (i32, i32) {
    %c0_i32 = arith.constant 0 : i32
    %c0_i32_0 = arith.constant 0 : i32
    %c0_i32_1 = arith.constant 0 : i32
    return %c0_i32, %c0_i32_0 : i32, i32
  }
  func.func @transform_1(%arg0: i32) -> (i32, i32) {
    %c0_i32 = arith.constant 0 : i32
    %c0_i32_0 = arith.constant 0 : i32
    %c0_i32_1 = arith.constant 0 : i32
    return %c0_i32, %c0_i32_0 : i32, i32
  }
  func.func @transform_2(%arg0: i32) -> (i32, i32) {
    %c0_i32 = arith.constant 0 : i32
    %c0_i32_0 = arith.constant 0 : i32
    %c0_i32_1 = arith.constant 0 : i32
    return %c0_i32, %c0_i32_0 : i32, i32
  }
  func.func @transform_3(%arg0: i32) -> (i32, i32) {
    %c0_i32 = arith.constant 0 : i32
    %c0_i32_0 = arith.constant 0 : i32
    %c0_i32_1 = arith.constant 0 : i32
    return %c0_i32, %c0_i32_0 : i32, i32
  }
}

module attributes {stable_mosaic.version = 11 : i64} {
  func.func @kernel(%arg0: i32, %arg1: memref<512x64xbf16, #tpu.memory_space<vmem>>, %arg2: memref<64x8xbf16, #tpu.memory_space<vmem>>, %arg3: memref<1x8xf32, #tpu.memory_space<vmem>>, %arg4: memref<512x8xbf16, #tpu.memory_space<vmem>>) attributes {dimension_semantics = [#tpu.dimension_semantics<arbitrary>], iteration_bounds = array<i64: 1>, scalar_prefetch = 0 : i64, scratch_operands = 0 : i64, tpu.core_type = #tpu.core_type<tc>, window_params = [{pipeline_mode = #tpu.pipeline_mode<synchronous>, transform_indices = @transform_0, window_bounds = array<i64: 512, 64>}, {pipeline_mode = #tpu.pipeline_mode<synchronous>, transform_indices = @transform_1, window_bounds = array<i64: 64, 8>}, {pipeline_mode = #tpu.pipeline_mode<synchronous>, transform_indices = @transform_2, window_bounds = array<i64: 1, 8>}, {pipeline_mode = #tpu.pipeline_mode<synchronous>, transform_indices = @transform_3, window_bounds = array<i64: 512, 8>}]} {
    %c0 = arith.constant 0 : index
    %c0_0 = arith.constant 0 : index
    %0 = vector.load %arg1[%c0, %c0_0] : memref<512x64xbf16, #tpu.memory_space<vmem>>, vector<512x64xbf16>
    %c0_1 = arith.constant 0 : index
    %c0_2 = arith.constant 0 : index
    %1 = vector.load %arg2[%c0_1, %c0_2] : memref<64x8xbf16, #tpu.memory_space<vmem>>, vector<64x8xbf16>
    %cst = arith.constant dense<0.000000e+00> : vector<512x8xf32>
    %2 = tpu.matmul %0, %1, %cst {dimension_numbers = #tpu.dot_dimension_numbers<[1], [0], [0], [1], [0, 0, 1, 1], [], []>} : vector<512x64xbf16>, vector<64x8xbf16>, vector<512x8xf32> -> vector<512x8xf32>
    %c0_3 = arith.constant 0 : index
    %c0_4 = arith.constant 0 : index
    %3 = vector.load %arg3[%c0_3, %c0_4] : memref<1x8xf32, #tpu.memory_space<vmem>>, vector<1x8xf32>
    %4 = vector.broadcast %3 : vector<1x8xf32> to vector<512x8xf32>
    %5 = arith.addf %2, %4 : vector<512x8xf32>
    %cst_5 = arith.constant 0.000000e+00 : f32
    %6 = vector.broadcast %cst_5 : f32 to vector<512x8xf32>
    %7 = arith.maximumf %5, %6 : vector<512x8xf32>
    %8 = arith.truncf %7 : vector<512x8xf32> to vector<512x8xbf16>
    %c0_6 = arith.constant 0 : index
    %c0_7 = arith.constant 0 : index
    %9 = vector.load %arg4[%c0_6, %c0_7] : memref<512x8xbf16, #tpu.memory_space<vmem>>, vector<512x8xbf16>
    tpu.vector_store %arg4[%c0_6, %c0_7], %8 {strides = array<i32>} : memref<512x8xbf16, #tpu.memory_space<vmem>>, vector<512x8xbf16>,
    return
  }
  func.func @transform_0(%arg0: i32) -> (i32, i32) {
    %c0_i32 = arith.constant 0 : i32
    %c0_i32_0 = arith.constant 0 : i32
    %c0_i32_1 = arith.constant 0 : i32
    return %c0_i32, %c0_i32_0 : i32, i32
  }
  func.func @transform_1(%arg0: i32) -> (i32, i32) {
    %c0_i32 = arith.constant 0 : i32
    %c0_i32_0 = arith.constant 0 : i32
    %c0_i32_1 = arith.constant 0 : i32
    return %c0_i32, %c0_i32_0 : i32, i32
  }
  func.func @transform_2(%arg0: i32) -> (i32, i32) {
    %c0_i32 = arith.constant 0 : i32
    %c0_i32_0 = arith.constant 0 : i32
    %c0_i32_1 = arith.constant 0 : i32
    return %c0_i32, %c0_i32_0 : i32, i32
  }
  func.func @transform_3(%arg0: i32) -> (i32, i32) {
    %c0_i32 = arith.constant 0 : i32
    %c0_i32_0 = arith.constant 0 : i32
    %c0_i32_1 = arith.constant 0 : i32
    return %c0_i32, %c0_i32_0 : i32, i32
  }
}

module attributes {stable_mosaic.version = 11 : i64} {
  func.func @kernel(%arg0: i32, %arg1: memref<512x198xbf16, #tpu.memory_space<vmem>>, %arg2: memref<198x8xbf16, #tpu.memory_space<vmem>>, %arg3: memref<1x8xf32, #tpu.memory_space<vmem>>, %arg4: memref<512x8xbf16, #tpu.memory_space<vmem>>) attributes {dimension_semantics = [#tpu.dimension_semantics<arbitrary>], iteration_bounds = array<i64: 1>, scalar_prefetch = 0 : i64, scratch_operands = 0 : i64, tpu.core_type = #tpu.core_type<tc>, window_params = [{pipeline_mode = #tpu.pipeline_mode<synchronous>, transform_indices = @transform_0, window_bounds = array<i64: 512, 198>}, {pipeline_mode = #tpu.pipeline_mode<synchronous>, transform_indices = @transform_1, window_bounds = array<i64: 198, 8>}, {pipeline_mode = #tpu.pipeline_mode<synchronous>, transform_indices = @transform_2, window_bounds = array<i64: 1, 8>}, {pipeline_mode = #tpu.pipeline_mode<synchronous>, transform_indices = @transform_3, window_bounds = array<i64: 512, 8>}]} {
    %c0 = arith.constant 0 : index
    %c0_0 = arith.constant 0 : index
    %0 = vector.load %arg1[%c0, %c0_0] : memref<512x198xbf16, #tpu.memory_space<vmem>>, vector<512x198xbf16>
    %c0_1 = arith.constant 0 : index
    %c0_2 = arith.constant 0 : index
    %1 = vector.load %arg2[%c0_1, %c0_2] : memref<198x8xbf16, #tpu.memory_space<vmem>>, vector<198x8xbf16>
    %cst = arith.constant dense<0.000000e+00> : vector<512x8xf32>
    %2 = tpu.matmul %0, %1, %cst {dimension_numbers = #tpu.dot_dimension_numbers<[1], [0], [0], [1], [0, 0, 1, 1], [], []>} : vector<512x198xbf16>, vector<198x8xbf16>, vector<512x8xf32> -> vector<512x8xf32>
    %c0_3 = arith.constant 0 : index
    %c0_4 = arith.constant 0 : index
    %3 = vector.load %arg3[%c0_3, %c0_4] : memref<1x8xf32, #tpu.memory_space<vmem>>, vector<1x8xf32>
    %4 = vector.broadcast %3 : vector<1x8xf32> to vector<512x8xf32>
    %5 = arith.addf %2, %4 : vector<512x8xf32>
    %cst_5 = arith.constant 0.000000e+00 : f32
    %6 = vector.broadcast %cst_5 : f32 to vector<512x8xf32>
    %7 = arith.maximumf %5, %6 : vector<512x8xf32>
    %8 = arith.truncf %7 : vector<512x8xf32> to vector<512x8xbf16>
    %c0_6 = arith.constant 0 : index
    %c0_7 = arith.constant 0 : index
    %9 = vector.load %arg4[%c0_6, %c0_7] : memref<512x8xbf16, #tpu.memory_space<vmem>>, vector<512x8xbf16>
    tpu.vector_store %arg4[%c0_6, %c0_7], %8 {strides = array<i32>} : memref<512x8xbf16, #tpu.memory_space<vmem>>, vector<512x8xbf16>,
    return
  }
  func.func @transform_0(%arg0: i32) -> (i32, i32) {
    %c0_i32 = arith.constant 0 : i32
    %c0_i32_0 = arith.constant 0 : i32
    %c0_i32_1 = arith.constant 0 : i32
    return %c0_i32, %c0_i32_0 : i32, i32
  }
  func.func @transform_1(%arg0: i32) -> (i32, i32) {
    %c0_i32 = arith.constant 0 : i32
    %c0_i32_0 = arith.constant 0 : i32
    %c0_i32_1 = arith.constant 0 : i32
    return %c0_i32, %c0_i32_0 : i32, i32
  }
  func.func @transform_2(%arg0: i32) -> (i32, i32) {
    %c0_i32 = arith.constant 0 : i32
    %c0_i32_0 = arith.constant 0 : i32
    %c0_i32_1 = arith.constant 0 : i32
    return %c0_i32, %c0_i32_0 : i32, i32
  }
  func.func @transform_3(%arg0: i32) -> (i32, i32) {
    %c0_i32 = arith.constant 0 : i32
    %c0_i32_0 = arith.constant 0 : i32
    %c0_i32_1 = arith.constant 0 : i32
    return %c0_i32, %c0_i32_0 : i32, i32
  }
}

module attributes {stable_mosaic.version = 11 : i64} {
  func.func @_post_fused_kernel(%arg0: i32, %arg1: memref<512x72xbf16, #tpu.memory_space<vmem>>, %arg2: memref<72x8xbf16, #tpu.memory_space<vmem>>, %arg3: memref<1x8xf32, #tpu.memory_space<vmem>>, %arg4: memref<8x4xbf16, #tpu.memory_space<vmem>>, %arg5: memref<1x4xf32, #tpu.memory_space<vmem>>, %arg6: memref<4x3xbf16, #tpu.memory_space<vmem>>, %arg7: memref<1x3xf32, #tpu.memory_space<vmem>>, %arg8: memref<512x3xf32, #tpu.memory_space<vmem>>) attributes {dimension_semantics = [#tpu.dimension_semantics<arbitrary>], iteration_bounds = array<i64: 1>, scalar_prefetch = 0 : i64, scratch_operands = 0 : i64, tpu.core_type = #tpu.core_type<tc>, window_params = [{pipeline_mode = #tpu.pipeline_mode<synchronous>, transform_indices = @transform_0, window_bounds = array<i64: 512, 72>}, {pipeline_mode = #tpu.pipeline_mode<synchronous>, transform_indices = @transform_1, window_bounds = array<i64: 72, 8>}, {pipeline_mode = #tpu.pipeline_mode<synchronous>, transform_indices = @transform_2, window_bounds = array<i64: 1, 8>}, {pipeline_mode = #tpu.pipeline_mode<synchronous>, transform_indices = @transform_3, window_bounds = array<i64: 8, 4>}, {pipeline_mode = #tpu.pipeline_mode<synchronous>, transform_indices = @transform_4, window_bounds = array<i64: 1, 4>}, {pipeline_mode = #tpu.pipeline_mode<synchronous>, transform_indices = @transform_5, window_bounds = array<i64: 4, 3>}, {pipeline_mode = #tpu.pipeline_mode<synchronous>, transform_indices = @transform_6, window_bounds = array<i64: 1, 3>}, {pipeline_mode = #tpu.pipeline_mode<synchronous>, transform_indices = @transform_7, window_bounds = array<i64: 512, 3>}]} {
    %c0 = arith.constant 0 : index
    %c0_0 = arith.constant 0 : index
    %0 = vector.load %arg1[%c0, %c0_0] : memref<512x72xbf16, #tpu.memory_space<vmem>>, vector<512x72xbf16>
    %c0_1 = arith.constant 0 : index
    %c0_2 = arith.constant 0 : index
    %1 = vector.load %arg2[%c0_1, %c0_2] : memref<72x8xbf16, #tpu.memory_space<vmem>>, vector<72x8xbf16>
    %cst = arith.constant dense<0.000000e+00> : vector<512x8xf32>
    %2 = tpu.matmul %0, %1, %cst {dimension_numbers = #tpu.dot_dimension_numbers<[1], [0], [0], [1], [0, 0, 1, 1], [], []>} : vector<512x72xbf16>, vector<72x8xbf16>, vector<512x8xf32> -> vector<512x8xf32>
    %c0_3 = arith.constant 0 : index
    %c0_4 = arith.constant 0 : index
    %3 = vector.load %arg3[%c0_3, %c0_4] : memref<1x8xf32, #tpu.memory_space<vmem>>, vector<1x8xf32>
    %4 = vector.broadcast %3 : vector<1x8xf32> to vector<512x8xf32>
    %5 = arith.addf %2, %4 : vector<512x8xf32>
    %6 = arith.truncf %5 : vector<512x8xf32> to vector<512x8xbf16>
    %c0_5 = arith.constant 0 : index
    %c0_6 = arith.constant 0 : index
    %7 = vector.load %arg4[%c0_5, %c0_6] : memref<8x4xbf16, #tpu.memory_space<vmem>>, vector<8x4xbf16>
    %cst_7 = arith.constant dense<0.000000e+00> : vector<512x4xf32>
    %8 = tpu.matmul %6, %7, %cst_7 {dimension_numbers = #tpu.dot_dimension_numbers<[1], [0], [0], [1], [0, 0, 1, 1], [], []>} : vector<512x8xbf16>, vector<8x4xbf16>, vector<512x4xf32> -> vector<512x4xf32>
    %c0_8 = arith.constant 0 : index
    %c0_9 = arith.constant 0 : index
    %9 = vector.load %arg5[%c0_8, %c0_9] : memref<1x4xf32, #tpu.memory_space<vmem>>, vector<1x4xf32>
    %10 = vector.broadcast %9 : vector<1x4xf32> to vector<512x4xf32>
    %11 = arith.addf %8, %10 : vector<512x4xf32>
    %cst_10 = arith.constant 0.000000e+00 : f32
    %12 = vector.broadcast %cst_10 : f32 to vector<512x4xf32>
    %13 = arith.subf %12, %11 : vector<512x4xf32>
    %14 = math.exp %13 : vector<512x4xf32>
    %cst_11 = arith.constant 1.000000e+00 : f32
    %15 = vector.broadcast %cst_11 : f32 to vector<512x4xf32>
    %16 = arith.addf %15, %14 : vector<512x4xf32>
    %17 = tpu.reciprocal %16 {approx = true} : vector<512x4xf32> -> vector<512x4xf32>
    %18 = arith.mulf %11, %17 : vector<512x4xf32>
    %19 = arith.truncf %18 : vector<512x4xf32> to vector<512x4xbf16>
    %c0_12 = arith.constant 0 : index
    %c0_13 = arith.constant 0 : index
    %20 = vector.load %arg6[%c0_12, %c0_13] : memref<4x3xbf16, #tpu.memory_space<vmem>>, vector<4x3xbf16>
    %cst_14 = arith.constant dense<0.000000e+00> : vector<512x3xf32>
    %21 = tpu.matmul %19, %20, %cst_14 {dimension_numbers = #tpu.dot_dimension_numbers<[1], [0], [0], [1], [0, 0, 1, 1], [], []>} : vector<512x4xbf16>, vector<4x3xbf16>, vector<512x3xf32> -> vector<512x3xf32>
    %c0_15 = arith.constant 0 : index
    %c0_16 = arith.constant 0 : index
    %22 = vector.load %arg7[%c0_15, %c0_16] : memref<1x3xf32, #tpu.memory_space<vmem>>, vector<1x3xf32>
    %23 = vector.broadcast %22 : vector<1x3xf32> to vector<512x3xf32>
    %24 = arith.addf %21, %23 : vector<512x3xf32>
    %25 = math.tanh %24 : vector<512x3xf32>
    %c0_17 = arith.constant 0 : index
    %c0_18 = arith.constant 0 : index
    %26 = vector.load %arg8[%c0_17, %c0_18] : memref<512x3xf32, #tpu.memory_space<vmem>>, vector<512x3xf32>
    tpu.vector_store %arg8[%c0_17, %c0_18], %25 {strides = array<i32>} : memref<512x3xf32, #tpu.memory_space<vmem>>, vector<512x3xf32>,
    return
  }
  func.func @transform_0(%arg0: i32) -> (i32, i32) {
    %c0_i32 = arith.constant 0 : i32
    %c0_i32_0 = arith.constant 0 : i32
    %c0_i32_1 = arith.constant 0 : i32
    return %c0_i32, %c0_i32_0 : i32, i32
  }
  func.func @transform_1(%arg0: i32) -> (i32, i32) {
    %c0_i32 = arith.constant 0 : i32
    %c0_i32_0 = arith.constant 0 : i32
    %c0_i32_1 = arith.constant 0 : i32
    return %c0_i32, %c0_i32_0 : i32, i32
  }
  func.func @transform_2(%arg0: i32) -> (i32, i32) {
    %c0_i32 = arith.constant 0 : i32
    %c0_i32_0 = arith.constant 0 : i32
    %c0_i32_1 = arith.constant 0 : i32
    return %c0_i32, %c0_i32_0 : i32, i32
  }
  func.func @transform_3(%arg0: i32) -> (i32, i32) {
    %c0_i32 = arith.constant 0 : i32
    %c0_i32_0 = arith.constant 0 : i32
    %c0_i32_1 = arith.constant 0 : i32
    return %c0_i32, %c0_i32_0 : i32, i32
  }
  func.func @transform_4(%arg0: i32) -> (i32, i32) {
    %c0_i32 = arith.constant 0 : i32
    %c0_i32_0 = arith.constant 0 : i32
    %c0_i32_1 = arith.constant 0 : i32
    return %c0_i32, %c0_i32_0 : i32, i32
  }
  func.func @transform_5(%arg0: i32) -> (i32, i32) {
    %c0_i32 = arith.constant 0 : i32
    %c0_i32_0 = arith.constant 0 : i32
    %c0_i32_1 = arith.constant 0 : i32
    return %c0_i32, %c0_i32_0 : i32, i32
  }
  func.func @transform_6(%arg0: i32) -> (i32, i32) {
    %c0_i32 = arith.constant 0 : i32
    %c0_i32_0 = arith.constant 0 : i32
    %c0_i32_1 = arith.constant 0 : i32
    return %c0_i32, %c0_i32_0 : i32, i32
  }
  func.func @transform_7(%arg0: i32) -> (i32, i32) {
    %c0_i32 = arith.constant 0 : i32
    %c0_i32_0 = arith.constant 0 : i32
    %c0_i32_1 = arith.constant 0 : i32
    return %c0_i32, %c0_i32_0 : i32, i32
  }
}

</mosaic_0001>

<llo_original>
// kernel: encoder_forward.9
$region0: #{encoder_forward.9}
  #allocation0 [shape = 'u32[]', space=smem, size = 0x4, offset = 0x4, fixed_abs, tag = 'smem constant byte address 0x4 - core index']
  #allocation1 [shape = 'u32[144,128]{1,0:T(1,128)}', space=vmem, size = 0x12000, scoped, tag = 'internal scratch']
  %s0 = inlined_call_operand.vmem [shape: bf16[2,8], index: 0, kind: input, shape index: {}]
  %s1 = inlined_call_operand.vmem [shape: bf16[8,48], index: 1, kind: input, shape index: {}]
  %s2 = inlined_call_operand.vmem [shape: f32[1,48], index: 2, kind: input, shape index: {}]
  %s3 = inlined_call_operand.vmem [shape: bf16[2,48], index: 3, kind: output, shape index: {}]
  %s4 = sld [smem:[#allocation0]]
  $region22: #{encoder_forward.9} parent=0
    _
  %s6 = ssub.s32 1, %s4
  %s7 = scalar_select 0, %s6, %s4
  // Predicated region
  $region2: #{encoder_forward.9} parent=0 // pred_check
    _
  $region3: #{encoder_forward.9} parent=0 // pred_check_branch
    %9 = sbr.rel (0) target = $region5
  $region4: #{encoder_forward.9} parent=0 // pred_region
    _
  $region5: #{encoder_forward.9} parent=0 // pred_fallthru
    _
  // Predicated region
  $region6: #{encoder_forward.9} parent=0 // pred_check
    _
  $region7: #{encoder_forward.9} parent=0 // pred_check_branch
    %11 = sbr.rel (0) target = $region9
  $region8: #{encoder_forward.9} parent=0 // pred_region
    _
  $region9: #{encoder_forward.9} parent=0 // pred_fallthru
    _
  // Predicated region
  $region10: #{encoder_forward.9} parent=0 // pred_check
    _
  $region11: #{encoder_forward.9} parent=0 // pred_check_branch
    %13 = sbr.rel (0) target = $region13
  $region12: #{encoder_forward.9} parent=0 // pred_region
    _
  $region13: #{encoder_forward.9} parent=0 // pred_fallthru
    _
  %v15 = vld [vmem:[%s0] sm:$0x1]
  %v16 = vld [vmem:[%s1] sm:$0xf]
  %v17 = vld [vmem:[%s2] sm:$0x1]
  %v19 = vlaneseq
  %v20 = vshrl.u32 %v19, 7
  %v21 = vsub.s32 0, %v20
  %v22 = vrot.slane %v17, %v21
  %vm24 = vcmask 64512
  %v26 = vsel %vm24, %v15, 0
  %vm28 = vcmask 1043456
  %v30 = vsel %vm28, %v16, 0
  %32 = vmatprep.subr.bf16.mxu0 0
  %33 = vmatpush1.bf16.msra.mxu0 0
  %34 = vmatprep.subr.bf16.mxu0 0
  %35 = vmatpush1.bf16.msra.mxu0 0
  %36 = vmatprep.subr.bf16.mxu0 0
  %37 = vmatpush1.bf16.msra.mxu0 0
  %38 = vmatprep.subr.bf16.mxu0 0
  %39 = vmatpush1.bf16.msra.mxu0 0
  %40 = vmatprep.subr.bf16.mxu0 0
  %41 = vmatpush1.bf16.msra.mxu0 0
  %42 = vmatprep.subr.bf16.mxu0 0
  %43 = vmatpush1.bf16.msra.mxu0 0
  %44 = vmatprep.subr.bf16.mxu0 0
  %45 = vmatpush1.bf16.msra.mxu0 0
  %46 = vmatprep.subr.bf16.mxu0 0
  %47 = vmatpush1.bf16.msra.mxu0 %v30
  %48 = vmatprep.subr.bf16.mxu0 0
  %49 = vmatpush2.bf16.msra.mxu0 0
  %50 = vmatprep.subr.bf16.mxu0 0
  %51 = vmatpush2.bf16.msra.mxu0 0
  %52 = vmatprep.subr.bf16.mxu0 0
  %53 = vmatpush2.bf16.msra.mxu0 0
  %54 = vmatprep.subr.bf16.mxu0 0
  %55 = vmatpush2.bf16.msra.mxu0 0
  %56 = vmatprep.subr.bf16.mxu0 0
  %57 = vmatpush2.bf16.msra.mxu0 0
  %58 = vmatprep.subr.bf16.mxu0 0
  %59 = vmatpush2.bf16.msra.mxu0 0
  %60 = vmatprep.subr.bf16.mxu0 0
  %61 = vmatpush2.bf16.msra.mxu0 0
  %62 = vmatprep.subr.bf16.mxu0 0
  %63 = vmatpush2.bf16.msra.mxu0 0
  %64 = vmatprep.mubr.bf16.mxu0 0
  %65 = vmatmul.mubr.bf16.gmra.mxu0 %v26
  %v66 = vpop.f32.mrf.mxu0
  %v67 = vadd.f32 %v22, %v66
  %v68 = vpop.f32.mrf.mxu0
  %v69 = vpop.f32.mrf.mxu0
  %v70 = vpop.f32.mrf.mxu0
  %71 = vdwg.mxu0
  %v72 = vmax.f32 %v67, 0.0
  %v73 = vpack.c.bf16 %v72, %v72
  %vm74 = vcmask 385024
  %75 = vst.msk [vmem:[%s3] sm:$0x1] %vm74, %v73
  // Predicated region
  $region14: #{encoder_forward.9} parent=0 // pred_check
    _
  $region15: #{encoder_forward.9} parent=0 // pred_check_branch
    %77 = sbr.rel (0) target = $region17
  $region16: #{encoder_forward.9} parent=0 // pred_region
    _
  $region17: #{encoder_forward.9} parent=0 // pred_fallthru
    _
  // Predicated region
  $region18: #{encoder_forward.9} parent=0 // pred_check
    _
  $region19: #{encoder_forward.9} parent=0 // pred_check_branch
    %79 = sbr.rel (0) target = $region21
  $region20: #{encoder_forward.9} parent=0 // pred_region
    _
  $region21: #{encoder_forward.9} parent=0 // pred_fallthru
    _

// kernel: encoder_forward.10
$region0: #{encoder_forward.10}
  #allocation0 [shape = 'u32[]', space=smem, size = 0x4, offset = 0x4, fixed_abs, tag = 'smem constant byte address 0x4 - core index']
  #allocation1 [shape = 'u32[144,128]{1,0:T(1,128)}', space=vmem, size = 0x12000, scoped, tag = 'internal scratch']
  %s0 = inlined_call_operand.vmem [shape: bf16[512,54], index: 0, kind: input, shape index: {}]
  %s1 = inlined_call_operand.vmem [shape: bf16[54,8], index: 1, kind: input, shape index: {}]
  %s2 = inlined_call_operand.vmem [shape: f32[1,8], index: 2, kind: input, shape index: {}]
  %s3 = inlined_call_operand.vmem [shape: bf16[512,8], index: 3, kind: output, shape index: {}]
  %s4 = sld [smem:[#allocation0]]
  $region22: #{encoder_forward.10} parent=0
    _
  %s6 = ssub.s32 1, %s4
  %s7 = scalar_select 0, %s6, %s4
  // Predicated region
  $region2: #{encoder_forward.10} parent=0 // pred_check
    _
  $region3: #{encoder_forward.10} parent=0 // pred_check_branch
    %9 = sbr.rel (0) target = $region5
  $region4: #{encoder_forward.10} parent=0 // pred_region
    _
  $region5: #{encoder_forward.10} parent=0 // pred_fallthru
    _
  // Predicated region
  $region6: #{encoder_forward.10} parent=0 // pred_check
    _
  $region7: #{encoder_forward.10} parent=0 // pred_check_branch
    %11 = sbr.rel (0) target = $region9
  $region8: #{encoder_forward.10} parent=0 // pred_region
    _
  $region9: #{encoder_forward.10} parent=0 // pred_fallthru
    _
  // Predicated region
  $region10: #{encoder_forward.10} parent=0 // pred_check
    _
  $region11: #{encoder_forward.10} parent=0 // pred_check_branch
    %13 = sbr.rel (0) target = $region13
  $region12: #{encoder_forward.10} parent=0 // pred_region
    _
  $region13: #{encoder_forward.10} parent=0 // pred_fallthru
    _
  %v15 = vld [vmem:[%s0] sm:$0xf]
  %v16 = vld [vmem:[%s0 + $0x4] sm:$0xf]
  %v17 = vld [vmem:[%s0 + $0x8] sm:$0xf]
  %v18 = vld [vmem:[%s0 + $0xc] sm:$0xf]
  %v19 = vld [vmem:[%s0 + $0x10] sm:$0xf]
  %v20 = vld [vmem:[%s0 + $0x14] sm:$0xf]
  %v21 = vld [vmem:[%s0 + $0x18] sm:$0xf]
  %v22 = vld [vmem:[%s0 + $0x1c] sm:$0xf]
  %v23 = vld [vmem:[%s0 + $0x20] sm:$0xf]
  %v24 = vld [vmem:[%s0 + $0x24] sm:$0xf]
  %v25 = vld [vmem:[%s0 + $0x28] sm:$0xf]
  %v26 = vld [vmem:[%s0 + $0x2c] sm:$0xf]
  %v27 = vld [vmem:[%s0 + $0x30] sm:$0xf]
  %v28 = vld [vmem:[%s0 + $0x34] sm:$0xf]
  %v29 = vld [vmem:[%s0 + $0x38] sm:$0xf]
  %v30 = vld [vmem:[%s0 + $0x3c] sm:$0xf]
  %v31 = vld [vmem:[%s0 + $0x40] sm:$0xf]
  %v32 = vld [vmem:[%s0 + $0x44] sm:$0xf]
  %v33 = vld [vmem:[%s0 + $0x48] sm:$0xf]
  %v34 = vld [vmem:[%s0 + $0x4c] sm:$0xf]
  %v35 = vld [vmem:[%s0 + $0x50] sm:$0xf]
  %v36 = vld [vmem:[%s0 + $0x54] sm:$0xf]
  %v37 = vld [vmem:[%s0 + $0x58] sm:$0xf]
  %v38 = vld [vmem:[%s0 + $0x5c] sm:$0xf]
  %v39 = vld [vmem:[%s0 + $0x60] sm:$0xf]
  %v40 = vld [vmem:[%s0 + $0x64] sm:$0xf]
  %v41 = vld [vmem:[%s0 + $0x68] sm:$0xf]
  %v42 = vld [vmem:[%s0 + $0x6c] sm:$0xf]
  %v43 = vld [vmem:[%s0 + $0x70] sm:$0xf]
  %v44 = vld [vmem:[%s0 + $0x74] sm:$0xf]
  %v45 = vld [vmem:[%s0 + $0x78] sm:$0xf]
  %v46 = vld [vmem:[%s0 + $0x7c] sm:$0xf]
  %v47 = vld [vmem:[%s0 + $0x80] sm:$0xf]
  %v48 = vld [vmem:[%s0 + $0x84] sm:$0xf]
  %v49 = vld [vmem:[%s0 + $0x88] sm:$0xf]
  %v50 = vld [vmem:[%s0 + $0x8c] sm:$0xf]
  %v51 = vld [vmem:[%s0 + $0x90] sm:$0xf]
  %v52 = vld [vmem:[%s0 + $0x94] sm:$0xf]
  %v53 = vld [vmem:[%s0 + $0x98] sm:$0xf]
  %v54 = vld [vmem:[%s0 + $0x9c] sm:$0xf]
  %v55 = vld [vmem:[%s0 + $0xa0] sm:$0xf]
  %v56 = vld [vmem:[%s0 + $0xa4] sm:$0xf]
  %v57 = vld [vmem:[%s0 + $0xa8] sm:$0xf]
  %v58 = vld [vmem:[%s0 + $0xac] sm:$0xf]
  %v59 = vld [vmem:[%s0 + $0xb0] sm:$0xf]
  %v60 = vld [vmem:[%s0 + $0xb4] sm:$0xf]
  %v61 = vld [vmem:[%s0 + $0xb8] sm:$0xf]
  %v62 = vld [vmem:[%s0 + $0xbc] sm:$0xf]
  %v63 = vld [vmem:[%s0 + $0xc0] sm:$0xf]
  %v64 = vld [vmem:[%s0 + $0xc4] sm:$0xf]
  %v65 = vld [vmem:[%s0 + $0xc8] sm:$0xf]
  %v66 = vld [vmem:[%s0 + $0xcc] sm:$0xf]
  %v67 = vld [vmem:[%s0 + $0xd0] sm:$0xf]
  %v68 = vld [vmem:[%s0 + $0xd4] sm:$0xf]
  %v69 = vld [vmem:[%s0 + $0xd8] sm:$0xf]
  %v70 = vld [vmem:[%s0 + $0xdc] sm:$0xf]
  %v71 = vld [vmem:[%s0 + $0xe0] sm:$0xf]
  %v72 = vld [vmem:[%s0 + $0xe4] sm:$0xf]
  %v73 = vld [vmem:[%s0 + $0xe8] sm:$0xf]
  %v74 = vld [vmem:[%s0 + $0xec] sm:$0xf]
  %v75 = vld [vmem:[%s0 + $0xf0] sm:$0xf]
  %v76 = vld [vmem:[%s0 + $0xf4] sm:$0xf]
  %v77 = vld [vmem:[%s0 + $0xf8] sm:$0xf]
  %v78 = vld [vmem:[%s0 + $0xfc] sm:$0xf]
  %v79 = vld [vmem:[%s1] sm:$0xf]
  %v80 = vld [vmem:[%s1 + $0x4] sm:$0xf]
  %v81 = vld [vmem:[%s1 + $0x8] sm:$0xf]
  %v82 = vld [vmem:[%s1 + $0xc] sm:$0xf]
  %v83 = vld [vmem:[%s1 + $0x10] sm:$0xf]
  %v84 = vld [vmem:[%s1 + $0x14] sm:$0xf]
  %v85 = vld [vmem:[%s1 + $0x18] sm:$0x7]
  %v86 = vld [vmem:[%s2] sm:$0x1]
  %v88 = vlaneseq
  %v89 = vshrl.u32 %v88, 7
  %v90 = vsub.s32 0, %v89
  %v91 = vrot.slane %v86, %v90
  %v157 = vunpack.c.l.b16 %v15
  %v158 = vunpack.c.l.b16 %v16
  %v159 = vunpack.c.l.b16 %v17
  %v160 = vunpack.c.l.b16 %v18
  %v161 = vunpack.c.l.b16 %v19
  %v162 = vunpack.c.l.b16 %v20
  %v163 = vunpack.c.l.b16 %v21
  %v164 = vunpack.c.l.b16 %v22
  %v165 = vunpack.c.l.b16 %v23
  %v166 = vunpack.c.l.b16 %v24
  %v167 = vunpack.c.l.b16 %v25
  %v168 = vunpack.c.l.b16 %v26
  %v169 = vunpack.c.l.b16 %v27
  %v170 = vunpack.c.l.b16 %v28
  %v171 = vunpack.c.l.b16 %v29
  %v172 = vunpack.c.l.b16 %v30
  %v173 = vunpack.c.l.b16 %v31
  %v174 = vunpack.c.l.b16 %v32
  %v175 = vunpack.c.l.b16 %v33
  %v176 = vunpack.c.l.b16 %v34
  %v177 = vunpack.c.l.b16 %v35
  %v178 = vunpack.c.l.b16 %v36
  %v179 = vunpack.c.l.b16 %v37
  %v180 = vunpack.c.l.b16 %v38
  %v181 = vunpack.c.l.b16 %v39
  %v182 = vunpack.c.l.b16 %v40
  %v183 = vunpack.c.l.b16 %v41
  %v184 = vunpack.c.l.b16 %v42
  %v185 = vunpack.c.l.b16 %v43
  %v186 = vunpack.c.l.b16 %v44
  %v187 = vunpack.c.l.b16 %v45
  %v188 = vunpack.c.l.b16 %v46
  %v189 = vunpack.c.l.b16 %v47
  %v190 = vunpack.c.l.b16 %v48
  %v191 = vunpack.c.l.b16 %v49
  %v192 = vunpack.c.l.b16 %v50
  %v193 = vunpack.c.l.b16 %v51
  %v194 = vunpack.c.l.b16 %v52
  %v195 = vunpack.c.l.b16 %v53
  %v196 = vunpack.c.l.b16 %v54
  %v197 = vunpack.c.l.b16 %v55
  %v198 = vunpack.c.l.b16 %v56
  %v199 = vunpack.c.l.b16 %v57
  %v200 = vunpack.c.l.b16 %v58
  %v201 = vunpack.c.l.b16 %v59
  %v202 = vunpack.c.l.b16 %v60
  %v203 = vunpack.c.l.b16 %v61
  %v204 = vunpack.c.l.b16 %v62
  %v205 = vunpack.c.l.b16 %v63
  %v206 = vunpack.c.l.b16 %v64
  %v207 = vunpack.c.l.b16 %v65
  %v208 = vunpack.c.l.b16 %v66
  %v209 = vunpack.c.l.b16 %v67
  %v210 = vunpack.c.l.b16 %v68
  %v211 = vunpack.c.l.b16 %v69
  %v212 = vunpack.c.l.b16 %v70
  %v213 = vunpack.c.l.b16 %v71
  %v214 = vunpack.c.l.b16 %v72
  %v215 = vunpack.c.l.b16 %v73
  %v216 = vunpack.c.l.b16 %v74
  %v217 = vunpack.c.l.b16 %v75
  %v218 = vunpack.c.l.b16 %v76
  %v219 = vunpack.c.l.b16 %v77
  %v220 = vunpack.c.l.b16 %v78
  %v221 = vpack.c.b16 %v158, %v157
  %v222 = vpack.c.b16 %v160, %v159
  %v223 = vpack.c.b16 %v162, %v161
  %v224 = vpack.c.b16 %v164, %v163
  %v225 = vpack.c.b16 %v166, %v165
  %v226 = vpack.c.b16 %v168, %v167
  %v227 = vpack.c.b16 %v170, %v169
  %v228 = vpack.c.b16 %v172, %v171
  %v229 = vpack.c.b16 %v174, %v173
  %v230 = vpack.c.b16 %v176, %v175
  %v231 = vpack.c.b16 %v178, %v177
  %v232 = vpack.c.b16 %v180, %v179
  %v233 = vpack.c.b16 %v182, %v181
  %v234 = vpack.c.b16 %v184, %v183
  %v235 = vpack.c.b16 %v186, %v185
  %v236 = vpack.c.b16 %v188, %v187
  %v237 = vpack.c.b16 %v190, %v189
  %v238 = vpack.c.b16 %v192, %v191
  %v239 = vpack.c.b16 %v194, %v193
  %v240 = vpack.c.b16 %v196, %v195
  %v241 = vpack.c.b16 %v198, %v197
  %v242 = vpack.c.b16 %v200, %v199
  %v243 = vpack.c.b16 %v202, %v201
  %v244 = vpack.c.b16 %v204, %v203
  %v245 = vpack.c.b16 %v206, %v205
  %v246 = vpack.c.b16 %v208, %v207
  %v247 = vpack.c.b16 %v210, %v209
  %v248 = vpack.c.b16 %v212, %v211
  %v249 = vpack.c.b16 %v214, %v213
  %v250 = vpack.c.b16 %v216, %v215
  %v251 = vpack.c.b16 %v218, %v217
  %v252 = vpack.c.b16 %v220, %v219
  %v260 = vunpack.c.l.b16 %v79
  %v261 = vunpack.c.l.b16 %v80
  %v262 = vunpack.c.l.b16 %v81
  %v263 = vunpack.c.l.b16 %v82
  %v264 = vunpack.c.l.b16 %v83
  %v265 = vunpack.c.l.b16 %v84
  %v266 = vunpack.c.l.b16 %v85
  %v267 = vpack.c.b16 %v261, %v260
  %v268 = vpack.c.b16 %v263, %v262
  %v269 = vpack.c.b16 %v265, %v264
  %v270 = vpack.c.b16 %v266, %v266
  %vm274 = vcmask 441344
  %v276 = vsel %vm274, %v221, 0
  %v279 = vsel %vm274, %v222, 0
  %v282 = vsel %vm274, %v223, 0
  %v285 = vsel %vm274, %v224, 0
  %v288 = vsel %vm274, %v225, 0
  %v291 = vsel %vm274, %v226, 0
  %v294 = vsel %vm274, %v227, 0
  %v297 = vsel %vm274, %v228, 0
  %v300 = vsel %vm274, %v229, 0
  %v303 = vsel %vm274, %v230, 0
  %v306 = vsel %vm274, %v231, 0
  %v309 = vsel %vm274, %v232, 0
  %v312 = vsel %vm274, %v233, 0
  %v315 = vsel %vm274, %v234, 0
  %v318 = vsel %vm274, %v235, 0
  %v321 = vsel %vm274, %v236, 0
  %v324 = vsel %vm274, %v237, 0
  %v327 = vsel %vm274, %v238, 0
  %v330 = vsel %vm274, %v239, 0
  %v333 = vsel %vm274, %v240, 0
  %v336 = vsel %vm274, %v241, 0
  %v339 = vsel %vm274, %v242, 0
  %v342 = vsel %vm274, %v243, 0
  %v345 = vsel %vm274, %v244, 0
  %v348 = vsel %vm274, %v245, 0
  %v351 = vsel %vm274, %v246, 0
  %v354 = vsel %vm274, %v247, 0
  %v357 = vsel %vm274, %v248, 0
  %v360 = vsel %vm274, %v249, 0
  %v363 = vsel %vm274, %v250, 0
  %v366 = vsel %vm274, %v251, 0
  %v369 = vsel %vm274, %v252, 0
  %vm371 = vcmask 1042432
  %v373 = vsel %vm371, %v270, 0
  %375 = vmatprep.subr.bf16.mxu0 0
  %376 = vmatpush1.bf16.msra.mxu0 0
  %377 = vmatprep.subr.bf16.mxu0 0
  %378 = vmatpush1.bf16.msra.mxu0 0
  %379 = vmatprep.subr.bf16.mxu0 0
  %380 = vmatpush1.bf16.msra.mxu0 0
  %381 = vmatprep.subr.bf16.mxu0 0
  %382 = vmatpush1.bf16.msra.mxu0 0
  %383 = vmatprep.subr.bf16.mxu0 0
  %384 = vmatpush1.bf16.msra.mxu0 %v373
  %385 = vmatprep.subr.bf16.mxu0 0
  %386 = vmatpush1.bf16.msra.mxu0 %v269
  %387 = vmatprep.subr.bf16.mxu0 0
  %388 = vmatpush1.bf16.msra.mxu0 %v268
  %389 = vmatprep.subr.bf16.mxu0 0
  %390 = vmatpush1.bf16.msra.mxu0 %v267
  %391 = vmatprep.subr.bf16.mxu0 0
  %392 = vmatpush2.bf16.msra.mxu0 0
  %393 = vmatprep.subr.bf16.mxu0 0
  %394 = vmatpush2.bf16.msra.mxu0 0
  %395 = vmatprep.subr.bf16.mxu0 0
  %396 = vmatpush2.bf16.msra.mxu0 0
  %397 = vmatprep.subr.bf16.mxu0 0
  %398 = vmatpush2.bf16.msra.mxu0 0
  %399 = vmatprep.subr.bf16.mxu0 0
  %400 = vmatpush2.bf16.msra.mxu0 0
  %401 = vmatprep.subr.bf16.mxu0 0
  %402 = vmatpush2.bf16.msra.mxu0 0
  %403 = vmatprep.subr.bf16.mxu0 0
  %404 = vmatpush2.bf16.msra.mxu0 0
  %405 = vmatprep.subr.bf16.mxu0 0
  %406 = vmatpush2.bf16.msra.mxu0 0
  %407 = vmatprep.mubr.bf16.mxu0 0
  %408 = vmatmul.mubr.bf16.gmra.mxu0 %v276
  %v409 = vpop.f32.mrf.mxu0
  %v410 = vadd.f32 %v91, %v409
  %v411 = vpop.f32.mrf.mxu0
  %v412 = vpop.f32.mrf.mxu0
  %v413 = vadd.f32 %v91, %v412
  %v414 = vpop.f32.mrf.mxu0
  %415 = vmatprep.mubr.bf16.mxu0 0
  %416 = vmatmul.mubr.bf16.gmra.mxu0 %v279
  %v417 = vpop.f32.mrf.mxu0
  %v418 = vadd.f32 %v91, %v417
  %v419 = vpop.f32.mrf.mxu0
  %v420 = vpop.f32.mrf.mxu0
  %v421 = vadd.f32 %v91, %v420
  %v422 = vpop.f32.mrf.mxu0
  %423 = vmatprep.mubr.bf16.mxu0 0
  %424 = vmatmul.mubr.bf16.gmra.mxu0 %v282
  %v425 = vpop.f32.mrf.mxu0
  %v426 = vadd.f32 %v91, %v425
  %v427 = vpop.f32.mrf.mxu0
  %v428 = vpop.f32.mrf.mxu0
  %v429 = vadd.f32 %v91, %v428
  %v430 = vpop.f32.mrf.mxu0
  %431 = vmatprep.mubr.bf16.mxu0 0
  %432 = vmatmul.mubr.bf16.gmra.mxu0 %v285
  %v433 = vpop.f32.mrf.mxu0
  %v434 = vadd.f32 %v91, %v433
  %v435 = vpop.f32.mrf.mxu0
  %v436 = vpop.f32.mrf.mxu0
  %v437 = vadd.f32 %v91, %v436
  %v438 = vpop.f32.mrf.mxu0
  %439 = vmatprep.mubr.bf16.mxu0 0
  %440 = vmatmul.mubr.bf16.gmra.mxu0 %v288
  %v441 = vpop.f32.mrf.mxu0
  %v442 = vadd.f32 %v91, %v441
  %v443 = vpop.f32.mrf.mxu0
  %v444 = vpop.f32.mrf.mxu0
  %v445 = vadd.f32 %v91, %v444
  %v446 = vpop.f32.mrf.mxu0
  %447 = vmatprep.mubr.bf16.mxu0 0
  %448 = vmatmul.mubr.bf16.gmra.mxu0 %v291
  %v449 = vpop.f32.mrf.mxu0
  %v450 = vadd.f32 %v91, %v449
  %v451 = vpop.f32.mrf.mxu0
  %v452 = vpop.f32.mrf.mxu0
  %v453 = vadd.f32 %v91, %v452
  %v454 = vpop.f32.mrf.mxu0
  %455 = vmatprep.mubr.bf16.mxu0 0
  %456 = vmatmul.mubr.bf16.gmra.mxu0 %v294
  %v457 = vpop.f32.mrf.mxu0
  %v458 = vadd.f32 %v91, %v457
  %v459 = vpop.f32.mrf.mxu0
  %v460 = vpop.f32.mrf.mxu0
  %v461 = vadd.f32 %v91, %v460
  %v462 = vpop.f32.mrf.mxu0
  %463 = vmatprep.mubr.bf16.mxu0 0
  %464 = vmatmul.mubr.bf16.gmra.mxu0 %v297
  %v465 = vpop.f32.mrf.mxu0
  %v466 = vadd.f32 %v91, %v465
  %v467 = vpop.f32.mrf.mxu0
  %v468 = vpop.f32.mrf.mxu0
  %v469 = vadd.f32 %v91, %v468
  %v470 = vpop.f32.mrf.mxu0
  %471 = vmatprep.mubr.bf16.mxu0 0
  %472 = vmatmul.mubr.bf16.gmra.mxu0 %v300
  %v473 = vpop.f32.mrf.mxu0
  %v474 = vadd.f32 %v91, %v473
  %v475 = vpop.f32.mrf.mxu0
  %v476 = vpop.f32.mrf.mxu0
  %v477 = vadd.f32 %v91, %v476
  %v478 = vpop.f32.mrf.mxu0
  %479 = vmatprep.mubr.bf16.mxu0 0
  %480 = vmatmul.mubr.bf16.gmra.mxu0 %v303
  %v481 = vpop.f32.mrf.mxu0
  %v482 = vadd.f32 %v91, %v481
  %v483 = vpop.f32.mrf.mxu0
  %v484 = vpop.f32.mrf.mxu0
  %v485 = vadd.f32 %v91, %v484
  %v486 = vpop.f32.mrf.mxu0
  %487 = vmatprep.mubr.bf16.mxu0 0
  %488 = vmatmul.mubr.bf16.gmra.mxu0 %v306
  %v489 = vpop.f32.mrf.mxu0
  %v490 = vadd.f32 %v91, %v489
  %v491 = vpop.f32.mrf.mxu0
  %v492 = vpop.f32.mrf.mxu0
  %v493 = vadd.f32 %v91, %v492
  %v494 = vpop.f32.mrf.mxu0
  %495 = vmatprep.mubr.bf16.mxu0 0
  %496 = vmatmul.mubr.bf16.gmra.mxu0 %v309
  %v497 = vpop.f32.mrf.mxu0
  %v498 = vadd.f32 %v91, %v497
  %v499 = vpop.f32.mrf.mxu0
  %v500 = vpop.f32.mrf.mxu0
  %v501 = vadd.f32 %v91, %v500
  %v502 = vpop.f32.mrf.mxu0
  %503 = vmatprep.mubr.bf16.mxu0 0
  %504 = vmatmul.mubr.bf16.gmra.mxu0 %v312
  %v505 = vpop.f32.mrf.mxu0
  %v506 = vadd.f32 %v91, %v505
  %v507 = vpop.f32.mrf.mxu0
  %v508 = vpop.f32.mrf.mxu0
  %v509 = vadd.f32 %v91, %v508
  %v510 = vpop.f32.mrf.mxu0
  %511 = vmatprep.mubr.bf16.mxu0 0
  %512 = vmatmul.mubr.bf16.gmra.mxu0 %v315
  %v513 = vpop.f32.mrf.mxu0
  %v514 = vadd.f32 %v91, %v513
  %v515 = vpop.f32.mrf.mxu0
  %v516 = vpop.f32.mrf.mxu0
  %v517 = vadd.f32 %v91, %v516
  %v518 = vpop.f32.mrf.mxu0
  %519 = vmatprep.mubr.bf16.mxu0 0
  %520 = vmatmul.mubr.bf16.gmra.mxu0 %v318
  %v521 = vpop.f32.mrf.mxu0
  %v522 = vadd.f32 %v91, %v521
  %v523 = vpop.f32.mrf.mxu0
  %v524 = vpop.f32.mrf.mxu0
  %v525 = vadd.f32 %v91, %v524
  %v526 = vpop.f32.mrf.mxu0
  %527 = vmatprep.mubr.bf16.mxu0 0
  %528 = vmatmul.mubr.bf16.gmra.mxu0 %v321
  %v529 = vpop.f32.mrf.mxu0
  %v530 = vadd.f32 %v91, %v529
  %v531 = vpop.f32.mrf.mxu0
  %v532 = vpop.f32.mrf.mxu0
  %v533 = vadd.f32 %v91, %v532
  %v534 = vpop.f32.mrf.mxu0
  %535 = vmatprep.mubr.bf16.mxu0 0
  %536 = vmatmul.mubr.bf16.gmra.mxu0 %v324
  %v537 = vpop.f32.mrf.mxu0
  %v538 = vadd.f32 %v91, %v537
  %v539 = vpop.f32.mrf.mxu0
  %v540 = vpop.f32.mrf.mxu0
  %v541 = vadd.f32 %v91, %v540
  %v542 = vpop.f32.mrf.mxu0
  %543 = vmatprep.mubr.bf16.mxu0 0
  %544 = vmatmul.mubr.bf16.gmra.mxu0 %v327
  %v545 = vpop.f32.mrf.mxu0
  %v546 = vadd.f32 %v91, %v545
  %v547 = vpop.f32.mrf.mxu0
  %v548 = vpop.f32.mrf.mxu0
  %v549 = vadd.f32 %v91, %v548
  %v550 = vpop.f32.mrf.mxu0
  %551 = vmatprep.mubr.bf16.mxu0 0
  %552 = vmatmul.mubr.bf16.gmra.mxu0 %v330
  %v553 = vpop.f32.mrf.mxu0
  %v554 = vadd.f32 %v91, %v553
  %v555 = vpop.f32.mrf.mxu0
  %v556 = vpop.f32.mrf.mxu0
  %v557 = vadd.f32 %v91, %v556
  %v558 = vpop.f32.mrf.mxu0
  %559 = vmatprep.mubr.bf16.mxu0 0
  %560 = vmatmul.mubr.bf16.gmra.mxu0 %v333
  %v561 = vpop.f32.mrf.mxu0
  %v562 = vadd.f32 %v91, %v561
  %v563 = vpop.f32.mrf.mxu0
  %v564 = vpop.f32.mrf.mxu0
  %v565 = vadd.f32 %v91, %v564
  %v566 = vpop.f32.mrf.mxu0
  %567 = vmatprep.mubr.bf16.mxu0 0
  %568 = vmatmul.mubr.bf16.gmra.mxu0 %v336
  %v569 = vpop.f32.mrf.mxu0
  %v570 = vadd.f32 %v91, %v569
  %v571 = vpop.f32.mrf.mxu0
  %v572 = vpop.f32.mrf.mxu0
  %v573 = vadd.f32 %v91, %v572
  %v574 = vpop.f32.mrf.mxu0
  %575 = vmatprep.mubr.bf16.mxu0 0
  %576 = vmatmul.mubr.bf16.gmra.mxu0 %v339
  %v577 = vpop.f32.mrf.mxu0
  %v578 = vadd.f32 %v91, %v577
  %v579 = vpop.f32.mrf.mxu0
  %v580 = vpop.f32.mrf.mxu0
  %v581 = vadd.f32 %v91, %v580
  %v582 = vpop.f32.mrf.mxu0
  %583 = vmatprep.mubr.bf16.mxu0 0
  %584 = vmatmul.mubr.bf16.gmra.mxu0 %v342
  %v585 = vpop.f32.mrf.mxu0
  %v586 = vadd.f32 %v91, %v585
  %v587 = vpop.f32.mrf.mxu0
  %v588 = vpop.f32.mrf.mxu0
  %v589 = vadd.f32 %v91, %v588
  %v590 = vpop.f32.mrf.mxu0
  %591 = vmatprep.mubr.bf16.mxu0 0
  %592 = vmatmul.mubr.bf16.gmra.mxu0 %v345
  %v593 = vpop.f32.mrf.mxu0
  %v594 = vadd.f32 %v91, %v593
  %v595 = vpop.f32.mrf.mxu0
  %v596 = vpop.f32.mrf.mxu0
  %v597 = vadd.f32 %v91, %v596
  %v598 = vpop.f32.mrf.mxu0
  %599 = vmatprep.mubr.bf16.mxu0 0
  %600 = vmatmul.mubr.bf16.gmra.mxu0 %v348
  %v601 = vpop.f32.mrf.mxu0
  %v602 = vadd.f32 %v91, %v601
  %v603 = vpop.f32.mrf.mxu0
  %v604 = vpop.f32.mrf.mxu0
  %v605 = vadd.f32 %v91, %v604
  %v606 = vpop.f32.mrf.mxu0
  %607 = vmatprep.mubr.bf16.mxu0 0
  %608 = vmatmul.mubr.bf16.gmra.mxu0 %v351
  %v609 = vpop.f32.mrf.mxu0
  %v610 = vadd.f32 %v91, %v609
  %v611 = vpop.f32.mrf.mxu0
  %v612 = vpop.f32.mrf.mxu0
  %v613 = vadd.f32 %v91, %v612
  %v614 = vpop.f32.mrf.mxu0
  %615 = vmatprep.mubr.bf16.mxu0 0
  %616 = vmatmul.mubr.bf16.gmra.mxu0 %v354
  %v617 = vpop.f32.mrf.mxu0
  %v618 = vadd.f32 %v91, %v617
  %v619 = vpop.f32.mrf.mxu0
  %v620 = vpop.f32.mrf.mxu0
  %v621 = vadd.f32 %v91, %v620
  %v622 = vpop.f32.mrf.mxu0
  %623 = vmatprep.mubr.bf16.mxu0 0
  %624 = vmatmul.mubr.bf16.gmra.mxu0 %v357
  %v625 = vpop.f32.mrf.mxu0
  %v626 = vadd.f32 %v91, %v625
  %v627 = vpop.f32.mrf.mxu0
  %v628 = vpop.f32.mrf.mxu0
  %v629 = vadd.f32 %v91, %v628
  %v630 = vpop.f32.mrf.mxu0
  %631 = vmatprep.mubr.bf16.mxu0 0
  %632 = vmatmul.mubr.bf16.gmra.mxu0 %v360
  %v633 = vpop.f32.mrf.mxu0
  %v634 = vadd.f32 %v91, %v633
  %v635 = vpop.f32.mrf.mxu0
  %v636 = vpop.f32.mrf.mxu0
  %v637 = vadd.f32 %v91, %v636
  %v638 = vpop.f32.mrf.mxu0
  %639 = vmatprep.mubr.bf16.mxu0 0
  %640 = vmatmul.mubr.bf16.gmra.mxu0 %v363
  %v641 = vpop.f32.mrf.mxu0
  %v642 = vadd.f32 %v91, %v641
  %v643 = vpop.f32.mrf.mxu0
  %v644 = vpop.f32.mrf.mxu0
  %v645 = vadd.f32 %v91, %v644
  %v646 = vpop.f32.mrf.mxu0
  %647 = vmatprep.mubr.bf16.mxu0 0
  %648 = vmatmul.mubr.bf16.gmra.mxu0 %v366
  %v649 = vpop.f32.mrf.mxu0
  %v650 = vadd.f32 %v91, %v649
  %v651 = vpop.f32.mrf.mxu0
  %v652 = vpop.f32.mrf.mxu0
  %v653 = vadd.f32 %v91, %v652
  %v654 = vpop.f32.mrf.mxu0
  %655 = vmatprep.mubr.bf16.mxu0 0
  %656 = vmatmul.mubr.bf16.gmra.mxu0 %v369
  %v657 = vpop.f32.mrf.mxu0
  %v658 = vadd.f32 %v91, %v657
  %v659 = vpop.f32.mrf.mxu0
  %v660 = vpop.f32.mrf.mxu0
  %v661 = vadd.f32 %v91, %v660
  %v662 = vpop.f32.mrf.mxu0
  %663 = vdwg.mxu0
  %v664 = vmax.f32 %v410, 0.0
  %v665 = vmax.f32 %v413, 0.0
  %v666 = vmax.f32 %v418, 0.0
  %v667 = vmax.f32 %v421, 0.0
  %v668 = vmax.f32 %v426, 0.0
  %v669 = vmax.f32 %v429, 0.0
  %v670 = vmax.f32 %v434, 0.0
  %v671 = vmax.f32 %v437, 0.0
  %v672 = vmax.f32 %v442, 0.0
  %v673 = vmax.f32 %v445, 0.0
  %v674 = vmax.f32 %v450, 0.0
  %v675 = vmax.f32 %v453, 0.0
  %v676 = vmax.f32 %v458, 0.0
  %v677 = vmax.f32 %v461, 0.0
  %v678 = vmax.f32 %v466, 0.0
  %v679 = vmax.f32 %v469, 0.0
  %v680 = vmax.f32 %v474, 0.0
  %v681 = vmax.f32 %v477, 0.0
  %v682 = vmax.f32 %v482, 0.0
  %v683 = vmax.f32 %v485, 0.0
  %v684 = vmax.f32 %v490, 0.0
  %v685 = vmax.f32 %v493, 0.0
  %v686 = vmax.f32 %v498, 0.0
  %v687 = vmax.f32 %v501, 0.0
  %v688 = vmax.f32 %v506, 0.0
  %v689 = vmax.f32 %v509, 0.0
  %v690 = vmax.f32 %v514, 0.0
  %v691 = vmax.f32 %v517, 0.0
  %v692 = vmax.f32 %v522, 0.0
  %v693 = vmax.f32 %v525, 0.0
  %v694 = vmax.f32 %v530, 0.0
  %v695 = vmax.f32 %v533, 0.0
  %v696 = vmax.f32 %v538, 0.0
  %v697 = vmax.f32 %v541, 0.0
  %v698 = vmax.f32 %v546, 0.0
  %v699 = vmax.f32 %v549, 0.0
  %v700 = vmax.f32 %v554, 0.0
  %v701 = vmax.f32 %v557, 0.0
  %v702 = vmax.f32 %v562, 0.0
  %v703 = vmax.f32 %v565, 0.0
  %v704 = vmax.f32 %v570, 0.0
  %v705 = vmax.f32 %v573, 0.0
  %v706 = vmax.f32 %v578, 0.0
  %v707 = vmax.f32 %v581, 0.0
  %v708 = vmax.f32 %v586, 0.0
  %v709 = vmax.f32 %v589, 0.0
  %v710 = vmax.f32 %v594, 0.0
  %v711 = vmax.f32 %v597, 0.0
  %v712 = vmax.f32 %v602, 0.0
  %v713 = vmax.f32 %v605, 0.0
  %v714 = vmax.f32 %v610, 0.0
  %v715 = vmax.f32 %v613, 0.0
  %v716 = vmax.f32 %v618, 0.0
  %v717 = vmax.f32 %v621, 0.0
  %v718 = vmax.f32 %v626, 0.0
  %v719 = vmax.f32 %v629, 0.0
  %v720 = vmax.f32 %v634, 0.0
  %v721 = vmax.f32 %v637, 0.0
  %v722 = vmax.f32 %v642, 0.0
  %v723 = vmax.f32 %v645, 0.0
  %v724 = vmax.f32 %v650, 0.0
  %v725 = vmax.f32 %v653, 0.0
  %v726 = vmax.f32 %v658, 0.0
  %v727 = vmax.f32 %v661, 0.0
  %v728 = vpack.c.bf16 %v665, %v664
  %v729 = vpack.c.bf16 %v667, %v666
  %v730 = vpack.c.bf16 %v669, %v668
  %v731 = vpack.c.bf16 %v671, %v670
  %v732 = vpack.c.bf16 %v673, %v672
  %v733 = vpack.c.bf16 %v675, %v674
  %v734 = vpack.c.bf16 %v677, %v676
  %v735 = vpack.c.bf16 %v679, %v678
  %v736 = vpack.c.bf16 %v681, %v680
  %v737 = vpack.c.bf16 %v683, %v682
  %v738 = vpack.c.bf16 %v685, %v684
  %v739 = vpack.c.bf16 %v687, %v686
  %v740 = vpack.c.bf16 %v689, %v688
  %v741 = vpack.c.bf16 %v691, %v690
  %v742 = vpack.c.bf16 %v693, %v692
  %v743 = vpack.c.bf16 %v695, %v694
  %v744 = vpack.c.bf16 %v697, %v696
  %v745 = vpack.c.bf16 %v699, %v698
  %v746 = vpack.c.bf16 %v701, %v700
  %v747 = vpack.c.bf16 %v703, %v702
  %v748 = vpack.c.bf16 %v705, %v704
  %v749 = vpack.c.bf16 %v707, %v706
  %v750 = vpack.c.bf16 %v709, %v708
  %v751 = vpack.c.bf16 %v711, %v710
  %v752 = vpack.c.bf16 %v713, %v712
  %v753 = vpack.c.bf16 %v715, %v714
  %v754 = vpack.c.bf16 %v717, %v716
  %v755 = vpack.c.bf16 %v719, %v718
  %v756 = vpack.c.bf16 %v721, %v720
  %v757 = vpack.c.bf16 %v723, %v722
  %v758 = vpack.c.bf16 %v725, %v724
  %v759 = vpack.c.bf16 %v727, %v726
  %v792 = vunpack.c.l.b16 %v728
  %v793 = vunpack.c.h.b16 %v728
  %v794 = vunpack.c.l.b16 %v729
  %v795 = vunpack.c.h.b16 %v729
  %v796 = vunpack.c.l.b16 %v730
  %v797 = vunpack.c.h.b16 %v730
  %v798 = vunpack.c.l.b16 %v731
  %v799 = vunpack.c.h.b16 %v731
  %v800 = vunpack.c.l.b16 %v732
  %v801 = vunpack.c.h.b16 %v732
  %v802 = vunpack.c.l.b16 %v733
  %v803 = vunpack.c.h.b16 %v733
  %v804 = vunpack.c.l.b16 %v734
  %v805 = vunpack.c.h.b16 %v734
  %v806 = vunpack.c.l.b16 %v735
  %v807 = vunpack.c.h.b16 %v735
  %v808 = vunpack.c.l.b16 %v736
  %v809 = vunpack.c.h.b16 %v736
  %v810 = vunpack.c.l.b16 %v737
  %v811 = vunpack.c.h.b16 %v737
  %v812 = vunpack.c.l.b16 %v738
  %v813 = vunpack.c.h.b16 %v738
  %v814 = vunpack.c.l.b16 %v739
  %v815 = vunpack.c.h.b16 %v739
  %v816 = vunpack.c.l.b16 %v740
  %v817 = vunpack.c.h.b16 %v740
  %v818 = vunpack.c.l.b16 %v741
  %v819 = vunpack.c.h.b16 %v741
  %v820 = vunpack.c.l.b16 %v742
  %v821 = vunpack.c.h.b16 %v742
  %v822 = vunpack.c.l.b16 %v743
  %v823 = vunpack.c.h.b16 %v743
  %v824 = vunpack.c.l.b16 %v744
  %v825 = vunpack.c.h.b16 %v744
  %v826 = vunpack.c.l.b16 %v745
  %v827 = vunpack.c.h.b16 %v745
  %v828 = vunpack.c.l.b16 %v746
  %v829 = vunpack.c.h.b16 %v746
  %v830 = vunpack.c.l.b16 %v747
  %v831 = vunpack.c.h.b16 %v747
  %v832 = vunpack.c.l.b16 %v748
  %v833 = vunpack.c.h.b16 %v748
  %v834 = vunpack.c.l.b16 %v749
  %v835 = vunpack.c.h.b16 %v749
  %v836 = vunpack.c.l.b16 %v750
  %v837 = vunpack.c.h.b16 %v750
  %v838 = vunpack.c.l.b16 %v751
  %v839 = vunpack.c.h.b16 %v751
  %v840 = vunpack.c.l.b16 %v752
  %v841 = vunpack.c.h.b16 %v752
  %v842 = vunpack.c.l.b16 %v753
  %v843 = vunpack.c.h.b16 %v753
  %v844 = vunpack.c.l.b16 %v754
  %v845 = vunpack.c.h.b16 %v754
  %v846 = vunpack.c.l.b16 %v755
  %v847 = vunpack.c.h.b16 %v755
  %v848 = vunpack.c.l.b16 %v756
  %v849 = vunpack.c.h.b16 %v756
  %v850 = vunpack.c.l.b16 %v757
  %v851 = vunpack.c.h.b16 %v757
  %v852 = vunpack.c.l.b16 %v758
  %v853 = vunpack.c.h.b16 %v758
  %v854 = vunpack.c.l.b16 %v759
  %v855 = vunpack.c.h.b16 %v759
  %v856 = vpack.c.b16 %v792, %v792
  %v857 = vpack.c.b16 %v793, %v793
  %v858 = vpack.c.b16 %v794, %v794
  %v859 = vpack.c.b16 %v795, %v795
  %v860 = vpack.c.b16 %v796, %v796
  %v861 = vpack.c.b16 %v797, %v797
  %v862 = vpack.c.b16 %v798, %v798
  %v863 = vpack.c.b16 %v799, %v799
  %v864 = vpack.c.b16 %v800, %v800
  %v865 = vpack.c.b16 %v801, %v801
  %v866 = vpack.c.b16 %v802, %v802
  %v867 = vpack.c.b16 %v803, %v803
  %v868 = vpack.c.b16 %v804, %v804
  %v869 = vpack.c.b16 %v805, %v805
  %v870 = vpack.c.b16 %v806, %v806
  %v871 = vpack.c.b16 %v807, %v807
  %v872 = vpack.c.b16 %v808, %v808
  %v873 = vpack.c.b16 %v809, %v809
  %v874 = vpack.c.b16 %v810, %v810
  %v875 = vpack.c.b16 %v811, %v811
  %v876 = vpack.c.b16 %v812, %v812
  %v877 = vpack.c.b16 %v813, %v813
  %v878 = vpack.c.b16 %v814, %v814
  %v879 = vpack.c.b16 %v815, %v815
  %v880 = vpack.c.b16 %v816, %v816
  %v881 = vpack.c.b16 %v817, %v817
  %v882 = vpack.c.b16 %v818, %v818
  %v883 = vpack.c.b16 %v819, %v819
  %v884 = vpack.c.b16 %v820, %v820
  %v885 = vpack.c.b16 %v821, %v821
  %v886 = vpack.c.b16 %v822, %v822
  %v887 = vpack.c.b16 %v823, %v823
  %v888 = vpack.c.b16 %v824, %v824
  %v889 = vpack.c.b16 %v825, %v825
  %v890 = vpack.c.b16 %v826, %v826
  %v891 = vpack.c.b16 %v827, %v827
  %v892 = vpack.c.b16 %v828, %v828
  %v893 = vpack.c.b16 %v829, %v829
  %v894 = vpack.c.b16 %v830, %v830
  %v895 = vpack.c.b16 %v831, %v831
  %v896 = vpack.c.b16 %v832, %v832
  %v897 = vpack.c.b16 %v833, %v833
  %v898 = vpack.c.b16 %v834, %v834
  %v899 = vpack.c.b16 %v835, %v835
  %v900 = vpack.c.b16 %v836, %v836
  %v901 = vpack.c.b16 %v837, %v837
  %v902 = vpack.c.b16 %v838, %v838
  %v903 = vpack.c.b16 %v839, %v839
  %v904 = vpack.c.b16 %v840, %v840
  %v905 = vpack.c.b16 %v841, %v841
  %v906 = vpack.c.b16 %v842, %v842
  %v907 = vpack.c.b16 %v843, %v843
  %v908 = vpack.c.b16 %v844, %v844
  %v909 = vpack.c.b16 %v845, %v845
  %v910 = vpack.c.b16 %v846, %v846
  %v911 = vpack.c.b16 %v847, %v847
  %v912 = vpack.c.b16 %v848, %v848
  %v913 = vpack.c.b16 %v849, %v849
  %v914 = vpack.c.b16 %v850, %v850
  %v915 = vpack.c.b16 %v851, %v851
  %v916 = vpack.c.b16 %v852, %v852
  %v917 = vpack.c.b16 %v853, %v853
  %v918 = vpack.c.b16 %v854, %v854
  %v919 = vpack.c.b16 %v855, %v855
  %vm984 = vcmask 60416
  %985 = vst.msk [vmem:[%s3] sm:$0xf] %vm984, %v856
  %986 = vst.msk [vmem:[%s3 + $0x4] sm:$0xf] %vm984, %v857
  %987 = vst.msk [vmem:[%s3 + $0x8] sm:$0xf] %vm984, %v858
  %988 = vst.msk [vmem:[%s3 + $0xc] sm:$0xf] %vm984, %v859
  %989 = vst.msk [vmem:[%s3 + $0x10] sm:$0xf] %vm984, %v860
  %990 = vst.msk [vmem:[%s3 + $0x14] sm:$0xf] %vm984, %v861
  %991 = vst.msk [vmem:[%s3 + $0x18] sm:$0xf] %vm984, %v862
  %992 = vst.msk [vmem:[%s3 + $0x1c] sm:$0xf] %vm984, %v863
  %993 = vst.msk [vmem:[%s3 + $0x20] sm:$0xf] %vm984, %v864
  %994 = vst.msk [vmem:[%s3 + $0x24] sm:$0xf] %vm984, %v865
  %995 = vst.msk [vmem:[%s3 + $0x28] sm:$0xf] %vm984, %v866
  %996 = vst.msk [vmem:[%s3 + $0x2c] sm:$0xf] %vm984, %v867
  %997 = vst.msk [vmem:[%s3 + $0x30] sm:$0xf] %vm984, %v868
  %998 = vst.msk [vmem:[%s3 + $0x34] sm:$0xf] %vm984, %v869
  %999 = vst.msk [vmem:[%s3 + $0x38] sm:$0xf] %vm984, %v870
  %1000 = vst.msk [vmem:[%s3 + $0x3c] sm:$0xf] %vm984, %v871
  %1001 = vst.msk [vmem:[%s3 + $0x40] sm:$0xf] %vm984, %v872
  %1002 = vst.msk [vmem:[%s3 + $0x44] sm:$0xf] %vm984, %v873
  %1003 = vst.msk [vmem:[%s3 + $0x48] sm:$0xf] %vm984, %v874
  %1004 = vst.msk [vmem:[%s3 + $0x4c] sm:$0xf] %vm984, %v875
  %1005 = vst.msk [vmem:[%s3 + $0x50] sm:$0xf] %vm984, %v876
  %1006 = vst.msk [vmem:[%s3 + $0x54] sm:$0xf] %vm984, %v877
  %1007 = vst.msk [vmem:[%s3 + $0x58] sm:$0xf] %vm984, %v878
  %1008 = vst.msk [vmem:[%s3 + $0x5c] sm:$0xf] %vm984, %v879
  %1009 = vst.msk [vmem:[%s3 + $0x60] sm:$0xf] %vm984, %v880
  %1010 = vst.msk [vmem:[%s3 + $0x64] sm:$0xf] %vm984, %v881
  %1011 = vst.msk [vmem:[%s3 + $0x68] sm:$0xf] %vm984, %v882
  %1012 = vst.msk [vmem:[%s3 + $0x6c] sm:$0xf] %vm984, %v883
  %1013 = vst.msk [vmem:[%s3 + $0x70] sm:$0xf] %vm984, %v884
  %1014 = vst.msk [vmem:[%s3 + $0x74] sm:$0xf] %vm984, %v885
  %1015 = vst.msk [vmem:[%s3 + $0x78] sm:$0xf] %vm984, %v886
  %1016 = vst.msk [vmem:[%s3 + $0x7c] sm:$0xf] %vm984, %v887
  %1017 = vst.msk [vmem:[%s3 + $0x80] sm:$0xf] %vm984, %v888
  %1018 = vst.msk [vmem:[%s3 + $0x84] sm:$0xf] %vm984, %v889
  %1019 = vst.msk [vmem:[%s3 + $0x88] sm:$0xf] %vm984, %v890
  %1020 = vst.msk [vmem:[%s3 + $0x8c] sm:$0xf] %vm984, %v891
  %1021 = vst.msk [vmem:[%s3 + $0x90] sm:$0xf] %vm984, %v892
  %1022 = vst.msk [vmem:[%s3 + $0x94] sm:$0xf] %vm984, %v893
  %1023 = vst.msk [vmem:[%s3 + $0x98] sm:$0xf] %vm984, %v894
  %1024 = vst.msk [vmem:[%s3 + $0x9c] sm:$0xf] %vm984, %v895
  %1025 = vst.msk [vmem:[%s3 + $0xa0] sm:$0xf] %vm984, %v896
  %1026 = vst.msk [vmem:[%s3 + $0xa4] sm:$0xf] %vm984, %v897
  %1027 = vst.msk [vmem:[%s3 + $0xa8] sm:$0xf] %vm984, %v898
  %1028 = vst.msk [vmem:[%s3 + $0xac] sm:$0xf] %vm984, %v899
  %1029 = vst.msk [vmem:[%s3 + $0xb0] sm:$0xf] %vm984, %v900
  %1030 = vst.msk [vmem:[%s3 + $0xb4] sm:$0xf] %vm984, %v901
  %1031 = vst.msk [vmem:[%s3 + $0xb8] sm:$0xf] %vm984, %v902
  %1032 = vst.msk [vmem:[%s3 + $0xbc] sm:$0xf] %vm984, %v903
  %1033 = vst.msk [vmem:[%s3 + $0xc0] sm:$0xf] %vm984, %v904
  %1034 = vst.msk [vmem:[%s3 + $0xc4] sm:$0xf] %vm984, %v905
  %1035 = vst.msk [vmem:[%s3 + $0xc8] sm:$0xf] %vm984, %v906
  %1036 = vst.msk [vmem:[%s3 + $0xcc] sm:$0xf] %vm984, %v907
  %1037 = vst.msk [vmem:[%s3 + $0xd0] sm:$0xf] %vm984, %v908
  %1038 = vst.msk [vmem:[%s3 + $0xd4] sm:$0xf] %vm984, %v909
  %1039 = vst.msk [vmem:[%s3 + $0xd8] sm:$0xf] %vm984, %v910
  %1040 = vst.msk [vmem:[%s3 + $0xdc] sm:$0xf] %vm984, %v911
  %1041 = vst.msk [vmem:[%s3 + $0xe0] sm:$0xf] %vm984, %v912
  %1042 = vst.msk [vmem:[%s3 + $0xe4] sm:$0xf] %vm984, %v913
  %1043 = vst.msk [vmem:[%s3 + $0xe8] sm:$0xf] %vm984, %v914
  %1044 = vst.msk [vmem:[%s3 + $0xec] sm:$0xf] %vm984, %v915
  %1045 = vst.msk [vmem:[%s3 + $0xf0] sm:$0xf] %vm984, %v916
  %1046 = vst.msk [vmem:[%s3 + $0xf4] sm:$0xf] %vm984, %v917
  %1047 = vst.msk [vmem:[%s3 + $0xf8] sm:$0xf] %vm984, %v918
  %1048 = vst.msk [vmem:[%s3 + $0xfc] sm:$0xf] %vm984, %v919
  // Predicated region
  $region14: #{encoder_forward.10} parent=0 // pred_check
    _
  $region15: #{encoder_forward.10} parent=0 // pred_check_branch
    %1050 = sbr.rel (0) target = $region17
  $region16: #{encoder_forward.10} parent=0 // pred_region
    _
  $region17: #{encoder_forward.10} parent=0 // pred_fallthru
    _
  // Predicated region
  $region18: #{encoder_forward.10} parent=0 // pred_check
    _
  $region19: #{encoder_forward.10} parent=0 // pred_check_branch
    %1052 = sbr.rel (0) target = $region21
  $region20: #{encoder_forward.10} parent=0 // pred_region
    _
  $region21: #{encoder_forward.10} parent=0 // pred_fallthru
    _

// kernel: encoder_forward.11
$region0: #{encoder_forward.11}
  #allocation0 [shape = 'u32[]', space=smem, size = 0x4, offset = 0x4, fixed_abs, tag = 'smem constant byte address 0x4 - core index']
  #allocation1 [shape = 'u32[144,128]{1,0:T(1,128)}', space=vmem, size = 0x12000, scoped, tag = 'internal scratch']
  %s0 = inlined_call_operand.vmem [shape: bf16[128,72], index: 0, kind: input, shape index: {}]
  %s1 = inlined_call_operand.vmem [shape: bf16[72,16], index: 1, kind: input, shape index: {}]
  %s2 = inlined_call_operand.vmem [shape: f32[1,16], index: 2, kind: input, shape index: {}]
  %s3 = inlined_call_operand.vmem [shape: bf16[128,16], index: 3, kind: output, shape index: {}]
  %s4 = sld [smem:[#allocation0]]
  $region22: #{encoder_forward.11} parent=0
    _
  %s6 = ssub.s32 1, %s4
  %s7 = scalar_select 0, %s6, %s4
  // Predicated region
  $region2: #{encoder_forward.11} parent=0 // pred_check
    _
  $region3: #{encoder_forward.11} parent=0 // pred_check_branch
    %9 = sbr.rel (0) target = $region5
  $region4: #{encoder_forward.11} parent=0 // pred_region
    _
  $region5: #{encoder_forward.11} parent=0 // pred_fallthru
    _
  // Predicated region
  $region6: #{encoder_forward.11} parent=0 // pred_check
    _
  $region7: #{encoder_forward.11} parent=0 // pred_check_branch
    %11 = sbr.rel (0) target = $region9
  $region8: #{encoder_forward.11} parent=0 // pred_region
    _
  $region9: #{encoder_forward.11} parent=0 // pred_fallthru
    _
  // Predicated region
  $region10: #{encoder_forward.11} parent=0 // pred_check
    _
  $region11: #{encoder_forward.11} parent=0 // pred_check_branch
    %13 = sbr.rel (0) target = $region13
  $region12: #{encoder_forward.11} parent=0 // pred_region
    _
  $region13: #{encoder_forward.11} parent=0 // pred_fallthru
    _
  %v15 = vld [vmem:[%s0] sm:$0xf]
  %v16 = vld [vmem:[%s0 + $0x4] sm:$0xf]
  %v17 = vld [vmem:[%s0 + $0x8] sm:$0xf]
  %v18 = vld [vmem:[%s0 + $0xc] sm:$0xf]
  %v19 = vld [vmem:[%s0 + $0x10] sm:$0xf]
  %v20 = vld [vmem:[%s0 + $0x14] sm:$0xf]
  %v21 = vld [vmem:[%s0 + $0x18] sm:$0xf]
  %v22 = vld [vmem:[%s0 + $0x1c] sm:$0xf]
  %v23 = vld [vmem:[%s0 + $0x20] sm:$0xf]
  %v24 = vld [vmem:[%s0 + $0x24] sm:$0xf]
  %v25 = vld [vmem:[%s0 + $0x28] sm:$0xf]
  %v26 = vld [vmem:[%s0 + $0x2c] sm:$0xf]
  %v27 = vld [vmem:[%s0 + $0x30] sm:$0xf]
  %v28 = vld [vmem:[%s0 + $0x34] sm:$0xf]
  %v29 = vld [vmem:[%s0 + $0x38] sm:$0xf]
  %v30 = vld [vmem:[%s0 + $0x3c] sm:$0xf]
  %v31 = vld [vmem:[%s1] sm:$0xf]
  %v32 = vld [vmem:[%s1 + $0x4] sm:$0xf]
  %v33 = vld [vmem:[%s1 + $0x8] sm:$0xf]
  %v34 = vld [vmem:[%s1 + $0xc] sm:$0xf]
  %v35 = vld [vmem:[%s1 + $0x10] sm:$0xf]
  %v36 = vld [vmem:[%s1 + $0x14] sm:$0xf]
  %v37 = vld [vmem:[%s1 + $0x18] sm:$0xf]
  %v38 = vld [vmem:[%s1 + $0x1c] sm:$0xf]
  %v39 = vld [vmem:[%s1 + $0x20] sm:$0xf]
  %v40 = vld [vmem:[%s2] sm:$0x1]
  %v42 = vlaneseq
  %v43 = vshrl.u32 %v42, 7
  %v44 = vsub.s32 0, %v43
  %v45 = vrot.slane %v40, %v44
  %v63 = vunpack.c.l.b16 %v15
  %v64 = vunpack.c.l.b16 %v16
  %v65 = vunpack.c.l.b16 %v17
  %v66 = vunpack.c.l.b16 %v18
  %v67 = vunpack.c.l.b16 %v19
  %v68 = vunpack.c.l.b16 %v20
  %v69 = vunpack.c.l.b16 %v21
  %v70 = vunpack.c.l.b16 %v22
  %v71 = vunpack.c.l.b16 %v23
  %v72 = vunpack.c.l.b16 %v24
  %v73 = vunpack.c.l.b16 %v25
  %v74 = vunpack.c.l.b16 %v26
  %v75 = vunpack.c.l.b16 %v27
  %v76 = vunpack.c.l.b16 %v28
  %v77 = vunpack.c.l.b16 %v29
  %v78 = vunpack.c.l.b16 %v30
  %v79 = vpack.c.b16 %v64, %v63
  %v80 = vpack.c.b16 %v66, %v65
  %v81 = vpack.c.b16 %v68, %v67
  %v82 = vpack.c.b16 %v70, %v69
  %v83 = vpack.c.b16 %v72, %v71
  %v84 = vpack.c.b16 %v74, %v73
  %v85 = vpack.c.b16 %v76, %v75
  %v86 = vpack.c.b16 %v78, %v77
  %v96 = vunpack.c.l.b16 %v31
  %v97 = vunpack.c.l.b16 %v32
  %v98 = vunpack.c.l.b16 %v33
  %v99 = vunpack.c.l.b16 %v34
  %v100 = vunpack.c.l.b16 %v35
  %v101 = vunpack.c.l.b16 %v36
  %v102 = vunpack.c.l.b16 %v37
  %v103 = vunpack.c.l.b16 %v38
  %v104 = vunpack.c.l.b16 %v39
  %v105 = vpack.c.b16 %v97, %v96
  %v106 = vpack.c.b16 %v99, %v98
  %v107 = vpack.c.b16 %v101, %v100
  %v108 = vpack.c.b16 %v103, %v102
  %v109 = vpack.c.b16 %v104, %v104
  %vm114 = vcmask 588800
  %v116 = vsel %vm114, %v79, 0
  %v119 = vsel %vm114, %v80, 0
  %v122 = vsel %vm114, %v81, 0
  %v125 = vsel %vm114, %v82, 0
  %v128 = vsel %vm114, %v83, 0
  %v131 = vsel %vm114, %v84, 0
  %v134 = vsel %vm114, %v85, 0
  %v137 = vsel %vm114, %v86, 0
  %vm139 = vcmask 1043456
  %v141 = vsel %vm139, %v109, 0
  %143 = vmatprep.subr.bf16.mxu0 0
  %144 = vmatpush1.bf16.msra.mxu0 0
  %145 = vmatprep.subr.bf16.mxu0 0
  %146 = vmatpush1.bf16.msra.mxu0 0
  %147 = vmatprep.subr.bf16.mxu0 0
  %148 = vmatpush1.bf16.msra.mxu0 0
  %149 = vmatprep.subr.bf16.mxu0 0
  %150 = vmatpush1.bf16.msra.mxu0 %v141
  %151 = vmatprep.subr.bf16.mxu0 0
  %152 = vmatpush1.bf16.msra.mxu0 %v108
  %153 = vmatprep.subr.bf16.mxu0 0
  %154 = vmatpush1.bf16.msra.mxu0 %v107
  %155 = vmatprep.subr.bf16.mxu0 0
  %156 = vmatpush1.bf16.msra.mxu0 %v106
  %157 = vmatprep.subr.bf16.mxu0 0
  %158 = vmatpush1.bf16.msra.mxu0 %v105
  %159 = vmatprep.subr.bf16.mxu0 0
  %160 = vmatpush2.bf16.msra.mxu0 0
  %161 = vmatprep.subr.bf16.mxu0 0
  %162 = vmatpush2.bf16.msra.mxu0 0
  %163 = vmatprep.subr.bf16.mxu0 0
  %164 = vmatpush2.bf16.msra.mxu0 0
  %165 = vmatprep.subr.bf16.mxu0 0
  %166 = vmatpush2.bf16.msra.mxu0 0
  %167 = vmatprep.subr.bf16.mxu0 0
  %168 = vmatpush2.bf16.msra.mxu0 0
  %169 = vmatprep.subr.bf16.mxu0 0
  %170 = vmatpush2.bf16.msra.mxu0 0
  %171 = vmatprep.subr.bf16.mxu0 0
  %172 = vmatpush2.bf16.msra.mxu0 0
  %173 = vmatprep.subr.bf16.mxu0 0
  %174 = vmatpush2.bf16.msra.mxu0 0
  %175 = vmatprep.mubr.bf16.mxu0 0
  %176 = vmatmul.mubr.bf16.gmra.mxu0 %v116
  %v177 = vpop.f32.mrf.mxu0
  %v178 = vadd.f32 %v45, %v177
  %v179 = vpop.f32.mrf.mxu0
  %v180 = vpop.f32.mrf.mxu0
  %v181 = vadd.f32 %v45, %v180
  %v182 = vpop.f32.mrf.mxu0
  %183 = vmatprep.mubr.bf16.mxu0 0
  %184 = vmatmul.mubr.bf16.gmra.mxu0 %v119
  %v185 = vpop.f32.mrf.mxu0
  %v186 = vadd.f32 %v45, %v185
  %v187 = vpop.f32.mrf.mxu0
  %v188 = vpop.f32.mrf.mxu0
  %v189 = vadd.f32 %v45, %v188
  %v190 = vpop.f32.mrf.mxu0
  %191 = vmatprep.mubr.bf16.mxu0 0
  %192 = vmatmul.mubr.bf16.gmra.mxu0 %v122
  %v193 = vpop.f32.mrf.mxu0
  %v194 = vadd.f32 %v45, %v193
  %v195 = vpop.f32.mrf.mxu0
  %v196 = vpop.f32.mrf.mxu0
  %v197 = vadd.f32 %v45, %v196
  %v198 = vpop.f32.mrf.mxu0
  %199 = vmatprep.mubr.bf16.mxu0 0
  %200 = vmatmul.mubr.bf16.gmra.mxu0 %v125
  %v201 = vpop.f32.mrf.mxu0
  %v202 = vadd.f32 %v45, %v201
  %v203 = vpop.f32.mrf.mxu0
  %v204 = vpop.f32.mrf.mxu0
  %v205 = vadd.f32 %v45, %v204
  %v206 = vpop.f32.mrf.mxu0
  %207 = vmatprep.mubr.bf16.mxu0 0
  %208 = vmatmul.mubr.bf16.gmra.mxu0 %v128
  %v209 = vpop.f32.mrf.mxu0
  %v210 = vadd.f32 %v45, %v209
  %v211 = vpop.f32.mrf.mxu0
  %v212 = vpop.f32.mrf.mxu0
  %v213 = vadd.f32 %v45, %v212
  %v214 = vpop.f32.mrf.mxu0
  %215 = vmatprep.mubr.bf16.mxu0 0
  %216 = vmatmul.mubr.bf16.gmra.mxu0 %v131
  %v217 = vpop.f32.mrf.mxu0
  %v218 = vadd.f32 %v45, %v217
  %v219 = vpop.f32.mrf.mxu0
  %v220 = vpop.f32.mrf.mxu0
  %v221 = vadd.f32 %v45, %v220
  %v222 = vpop.f32.mrf.mxu0
  %223 = vmatprep.mubr.bf16.mxu0 0
  %224 = vmatmul.mubr.bf16.gmra.mxu0 %v134
  %v225 = vpop.f32.mrf.mxu0
  %v226 = vadd.f32 %v45, %v225
  %v227 = vpop.f32.mrf.mxu0
  %v228 = vpop.f32.mrf.mxu0
  %v229 = vadd.f32 %v45, %v228
  %v230 = vpop.f32.mrf.mxu0
  %231 = vmatprep.mubr.bf16.mxu0 0
  %232 = vmatmul.mubr.bf16.gmra.mxu0 %v137
  %v233 = vpop.f32.mrf.mxu0
  %v234 = vadd.f32 %v45, %v233
  %v235 = vpop.f32.mrf.mxu0
  %v236 = vpop.f32.mrf.mxu0
  %v237 = vadd.f32 %v45, %v236
  %v238 = vpop.f32.mrf.mxu0
  %239 = vdwg.mxu0
  %v240 = vmax.f32 %v178, 0.0
  %v241 = vmax.f32 %v181, 0.0
  %v242 = vmax.f32 %v186, 0.0
  %v243 = vmax.f32 %v189, 0.0
  %v244 = vmax.f32 %v194, 0.0
  %v245 = vmax.f32 %v197, 0.0
  %v246 = vmax.f32 %v202, 0.0
  %v247 = vmax.f32 %v205, 0.0
  %v248 = vmax.f32 %v210, 0.0
  %v249 = vmax.f32 %v213, 0.0
  %v250 = vmax.f32 %v218, 0.0
  %v251 = vmax.f32 %v221, 0.0
  %v252 = vmax.f32 %v226, 0.0
  %v253 = vmax.f32 %v229, 0.0
  %v254 = vmax.f32 %v234, 0.0
  %v255 = vmax.f32 %v237, 0.0
  %v256 = vpack.c.bf16 %v241, %v240
  %v257 = vpack.c.bf16 %v243, %v242
  %v258 = vpack.c.bf16 %v245, %v244
  %v259 = vpack.c.bf16 %v247, %v246
  %v260 = vpack.c.bf16 %v249, %v248
  %v261 = vpack.c.bf16 %v251, %v250
  %v262 = vpack.c.bf16 %v253, %v252
  %v263 = vpack.c.bf16 %v255, %v254
  %v272 = vunpack.c.l.b16 %v256
  %v273 = vunpack.c.h.b16 %v256
  %v274 = vunpack.c.l.b16 %v257
  %v275 = vunpack.c.h.b16 %v257
  %v276 = vunpack.c.l.b16 %v258
  %v277 = vunpack.c.h.b16 %v258
  %v278 = vunpack.c.l.b16 %v259
  %v279 = vunpack.c.h.b16 %v259
  %v280 = vunpack.c.l.b16 %v260
  %v281 = vunpack.c.h.b16 %v260
  %v282 = vunpack.c.l.b16 %v261
  %v283 = vunpack.c.h.b16 %v261
  %v284 = vunpack.c.l.b16 %v262
  %v285 = vunpack.c.h.b16 %v262
  %v286 = vunpack.c.l.b16 %v263
  %v287 = vunpack.c.h.b16 %v263
  %v288 = vpack.c.b16 %v272, %v272
  %v289 = vpack.c.b16 %v273, %v273
  %v290 = vpack.c.b16 %v274, %v274
  %v291 = vpack.c.b16 %v275, %v275
  %v292 = vpack.c.b16 %v276, %v276
  %v293 = vpack.c.b16 %v277, %v277
  %v294 = vpack.c.b16 %v278, %v278
  %v295 = vpack.c.b16 %v279, %v279
  %v296 = vpack.c.b16 %v280, %v280
  %v297 = vpack.c.b16 %v281, %v281
  %v298 = vpack.c.b16 %v282, %v282
  %v299 = vpack.c.b16 %v283, %v283
  %v300 = vpack.c.b16 %v284, %v284
  %v301 = vpack.c.b16 %v285, %v285
  %v302 = vpack.c.b16 %v286, %v286
  %v303 = vpack.c.b16 %v287, %v287
  %vm320 = vcmask 125952
  %321 = vst.msk [vmem:[%s3] sm:$0xf] %vm320, %v288
  %322 = vst.msk [vmem:[%s3 + $0x4] sm:$0xf] %vm320, %v289
  %323 = vst.msk [vmem:[%s3 + $0x8] sm:$0xf] %vm320, %v290
  %324 = vst.msk [vmem:[%s3 + $0xc] sm:$0xf] %vm320, %v291
  %325 = vst.msk [vmem:[%s3 + $0x10] sm:$0xf] %vm320, %v292
  %326 = vst.msk [vmem:[%s3 + $0x14] sm:$0xf] %vm320, %v293
  %327 = vst.msk [vmem:[%s3 + $0x18] sm:$0xf] %vm320, %v294
  %328 = vst.msk [vmem:[%s3 + $0x1c] sm:$0xf] %vm320, %v295
  %329 = vst.msk [vmem:[%s3 + $0x20] sm:$0xf] %vm320, %v296
  %330 = vst.msk [vmem:[%s3 + $0x24] sm:$0xf] %vm320, %v297
  %331 = vst.msk [vmem:[%s3 + $0x28] sm:$0xf] %vm320, %v298
  %332 = vst.msk [vmem:[%s3 + $0x2c] sm:$0xf] %vm320, %v299
  %333 = vst.msk [vmem:[%s3 + $0x30] sm:$0xf] %vm320, %v300
  %334 = vst.msk [vmem:[%s3 + $0x34] sm:$0xf] %vm320, %v301
  %335 = vst.msk [vmem:[%s3 + $0x38] sm:$0xf] %vm320, %v302
  %336 = vst.msk [vmem:[%s3 + $0x3c] sm:$0xf] %vm320, %v303
  // Predicated region
  $region14: #{encoder_forward.11} parent=0 // pred_check
    _
  $region15: #{encoder_forward.11} parent=0 // pred_check_branch
    %338 = sbr.rel (0) target = $region17
  $region16: #{encoder_forward.11} parent=0 // pred_region
    _
  $region17: #{encoder_forward.11} parent=0 // pred_fallthru
    _
  // Predicated region
  $region18: #{encoder_forward.11} parent=0 // pred_check
    _
  $region19: #{encoder_forward.11} parent=0 // pred_check_branch
    %340 = sbr.rel (0) target = $region21
  $region20: #{encoder_forward.11} parent=0 // pred_region
    _
  $region21: #{encoder_forward.11} parent=0 // pred_fallthru
    _

// kernel: encoder_forward.12
$region0: #{encoder_forward.12}
  #allocation0 [shape = 'u32[]', space=smem, size = 0x4, offset = 0x4, fixed_abs, tag = 'smem constant byte address 0x4 - core index']
  #allocation1 [shape = 'u32[144,128]{1,0:T(1,128)}', space=vmem, size = 0x12000, scoped, tag = 'internal scratch']
  %s0 = inlined_call_operand.vmem [shape: bf16[32,144], index: 0, kind: input, shape index: {}]
  %s1 = inlined_call_operand.vmem [shape: bf16[144,32], index: 1, kind: input, shape index: {}]
  %s2 = inlined_call_operand.vmem [shape: f32[1,32], index: 2, kind: input, shape index: {}]
  %s3 = inlined_call_operand.vmem [shape: bf16[32,32], index: 3, kind: output, shape index: {}]
  %s4 = sld [smem:[#allocation0]]
  $region22: #{encoder_forward.12} parent=0
    _
  %s6 = ssub.s32 1, %s4
  %s7 = scalar_select 0, %s6, %s4
  // Predicated region
  $region2: #{encoder_forward.12} parent=0 // pred_check
    _
  $region3: #{encoder_forward.12} parent=0 // pred_check_branch
    %9 = sbr.rel (0) target = $region5
  $region4: #{encoder_forward.12} parent=0 // pred_region
    _
  $region5: #{encoder_forward.12} parent=0 // pred_fallthru
    _
  // Predicated region
  $region6: #{encoder_forward.12} parent=0 // pred_check
    _
  $region7: #{encoder_forward.12} parent=0 // pred_check_branch
    %11 = sbr.rel (0) target = $region9
  $region8: #{encoder_forward.12} parent=0 // pred_region
    _
  $region9: #{encoder_forward.12} parent=0 // pred_fallthru
    _
  // Predicated region
  $region10: #{encoder_forward.12} parent=0 // pred_check
    _
  $region11: #{encoder_forward.12} parent=0 // pred_check_branch
    %13 = sbr.rel (0) target = $region13
  $region12: #{encoder_forward.12} parent=0 // pred_region
    _
  $region13: #{encoder_forward.12} parent=0 // pred_fallthru
    _
  %v15 = vld [vmem:[%s0] sm:$0xff]
  %v16 = vld [vmem:[%s0 + $0x8] sm:$0xff]
  %v17 = vld [vmem:[%s0 + $0x10] sm:$0xff]
  %v18 = vld [vmem:[%s0 + $0x18] sm:$0xff]
  %v19 = vld [vmem:[%s1] sm:$0xf]
  %v20 = vld [vmem:[%s1 + $0x4] sm:$0xf]
  %v21 = vld [vmem:[%s1 + $0x8] sm:$0xf]
  %v22 = vld [vmem:[%s1 + $0xc] sm:$0xf]
  %v23 = vld [vmem:[%s1 + $0x10] sm:$0xf]
  %v24 = vld [vmem:[%s1 + $0x14] sm:$0xf]
  %v25 = vld [vmem:[%s1 + $0x18] sm:$0xf]
  %v26 = vld [vmem:[%s1 + $0x1c] sm:$0xf]
  %v27 = vld [vmem:[%s1 + $0x20] sm:$0xf]
  %v28 = vld [vmem:[%s1 + $0x24] sm:$0xf]
  %v29 = vld [vmem:[%s1 + $0x28] sm:$0xf]
  %v30 = vld [vmem:[%s1 + $0x2c] sm:$0xf]
  %v31 = vld [vmem:[%s1 + $0x30] sm:$0xf]
  %v32 = vld [vmem:[%s1 + $0x34] sm:$0xf]
  %v33 = vld [vmem:[%s1 + $0x38] sm:$0xf]
  %v34 = vld [vmem:[%s1 + $0x3c] sm:$0xf]
  %v35 = vld [vmem:[%s1 + $0x40] sm:$0xf]
  %v36 = vld [vmem:[%s1 + $0x44] sm:$0xf]
  %v37 = vld [vmem:[%s2] sm:$0x1]
  %v39 = vlaneseq
  %v40 = vshrl.u32 %v39, 7
  %v41 = vsub.s32 0, %v40
  %v42 = vrot.slane %v37, %v41
  %v48 = vunpack.c.l.b16 %v15
  %v49 = vunpack.c.h.b16 %v15
  %v50 = vunpack.c.l.b16 %v16
  %v51 = vunpack.c.h.b16 %v16
  %v52 = vunpack.c.l.b16 %v17
  %v53 = vunpack.c.h.b16 %v17
  %v54 = vunpack.c.l.b16 %v18
  %v55 = vunpack.c.h.b16 %v18
  %v56 = vpack.c.b16 %v50, %v48
  %v57 = vpack.c.b16 %v51, %v49
  %v58 = vpack.c.b16 %v54, %v52
  %v59 = vpack.c.b16 %v55, %v53
  %v80 = vunpack.c.l.b16 %v19
  %v81 = vunpack.c.l.b16 %v20
  %v82 = vunpack.c.l.b16 %v21
  %v83 = vunpack.c.l.b16 %v22
  %v84 = vunpack.c.l.b16 %v23
  %v85 = vunpack.c.l.b16 %v24
  %v86 = vunpack.c.l.b16 %v25
  %v87 = vunpack.c.l.b16 %v26
  %v88 = vunpack.c.l.b16 %v27
  %v89 = vunpack.c.l.b16 %v28
  %v90 = vunpack.c.l.b16 %v29
  %v91 = vunpack.c.l.b16 %v30
  %v92 = vunpack.c.l.b16 %v31
  %v93 = vunpack.c.l.b16 %v32
  %v94 = vunpack.c.l.b16 %v33
  %v95 = vunpack.c.l.b16 %v34
  %v96 = vunpack.c.l.b16 %v35
  %v97 = vunpack.c.l.b16 %v36
  %v98 = vpack.c.b16 %v81, %v80
  %v99 = vpack.c.b16 %v83, %v82
  %v100 = vpack.c.b16 %v85, %v84
  %v101 = vpack.c.b16 %v87, %v86
  %v102 = vpack.c.b16 %v89, %v88
  %v103 = vpack.c.b16 %v91, %v90
  %v104 = vpack.c.b16 %v93, %v92
  %v105 = vpack.c.b16 %v95, %v94
  %v106 = vpack.c.b16 %v97, %v96
  %vm116 = vcmask 130048
  %v118 = vsel %vm116, %v57, 0
  %v121 = vsel %vm116, %v59, 0
  %123 = vmatprep.subr.bf16.mxu0 0
  %124 = vmatpush1.bf16.msra.mxu0 %v105
  %125 = vmatprep.subr.bf16.mxu0 0
  %126 = vmatpush1.bf16.msra.mxu0 %v104
  %127 = vmatprep.subr.bf16.mxu0 0
  %128 = vmatpush1.bf16.msra.mxu0 %v103
  %129 = vmatprep.subr.bf16.mxu0 0
  %130 = vmatpush1.bf16.msra.mxu0 %v102
  %131 = vmatprep.subr.bf16.mxu0 0
  %132 = vmatpush1.bf16.msra.mxu0 %v101
  %133 = vmatprep.subr.bf16.mxu0 0
  %134 = vmatpush1.bf16.msra.mxu0 %v100
  %135 = vmatprep.subr.bf16.mxu0 0
  %136 = vmatpush1.bf16.msra.mxu0 %v99
  %137 = vmatprep.subr.bf16.mxu0 0
  %138 = vmatpush1.bf16.msra.mxu0 %v98
  %139 = vmatprep.subr.bf16.mxu0 0
  %140 = vmatpush2.bf16.msra.mxu0 0
  %141 = vmatprep.subr.bf16.mxu0 0
  %142 = vmatpush2.bf16.msra.mxu0 0
  %143 = vmatprep.subr.bf16.mxu0 0
  %144 = vmatpush2.bf16.msra.mxu0 0
  %145 = vmatprep.subr.bf16.mxu0 0
  %146 = vmatpush2.bf16.msra.mxu0 0
  %147 = vmatprep.subr.bf16.mxu0 0
  %148 = vmatpush2.bf16.msra.mxu0 0
  %149 = vmatprep.subr.bf16.mxu0 0
  %150 = vmatpush2.bf16.msra.mxu0 0
  %151 = vmatprep.subr.bf16.mxu0 0
  %152 = vmatpush2.bf16.msra.mxu0 0
  %153 = vmatprep.subr.bf16.mxu0 0
  %154 = vmatpush2.bf16.msra.mxu0 %v106
  %155 = vmatprep.mubr.bf16.mxu0 %v118
  %156 = vmatmul.mubr.bf16.gmra.mxu0 %v56
  %v157 = vpop.f32.mrf.mxu0
  %v158 = vadd.f32 %v42, %v157
  %v159 = vpop.f32.mrf.mxu0
  %v160 = vpop.f32.mrf.mxu0
  %v161 = vadd.f32 %v42, %v160
  %v162 = vpop.f32.mrf.mxu0
  %163 = vmatprep.mubr.bf16.mxu0 %v121
  %164 = vmatmul.mubr.bf16.gmra.mxu0 %v58
  %v165 = vpop.f32.mrf.mxu0
  %v166 = vadd.f32 %v42, %v165
  %v167 = vpop.f32.mrf.mxu0
  %v168 = vpop.f32.mrf.mxu0
  %v169 = vadd.f32 %v42, %v168
  %v170 = vpop.f32.mrf.mxu0
  %171 = vdwg.mxu0
  %v172 = vmax.f32 %v158, 0.0
  %v173 = vmax.f32 %v161, 0.0
  %v174 = vmax.f32 %v166, 0.0
  %v175 = vmax.f32 %v169, 0.0
  %v176 = vpack.c.bf16 %v173, %v172
  %v177 = vpack.c.bf16 %v175, %v174
  %v180 = vunpack.c.l.b16 %v176
  %v181 = vunpack.c.h.b16 %v176
  %v182 = vunpack.c.l.b16 %v177
  %v183 = vunpack.c.h.b16 %v177
  %v184 = vpack.c.b16 %v180, %v180
  %v185 = vpack.c.b16 %v181, %v181
  %v186 = vpack.c.b16 %v182, %v182
  %v187 = vpack.c.b16 %v183, %v183
  %vm192 = vcmask 257024
  %193 = vst.msk [vmem:[%s3] sm:$0xf] %vm192, %v184
  %194 = vst.msk [vmem:[%s3 + $0x4] sm:$0xf] %vm192, %v185
  %195 = vst.msk [vmem:[%s3 + $0x8] sm:$0xf] %vm192, %v186
  %196 = vst.msk [vmem:[%s3 + $0xc] sm:$0xf] %vm192, %v187
  // Predicated region
  $region14: #{encoder_forward.12} parent=0 // pred_check
    _
  $region15: #{encoder_forward.12} parent=0 // pred_check_branch
    %198 = sbr.rel (0) target = $region17
  $region16: #{encoder_forward.12} parent=0 // pred_region
    _
  $region17: #{encoder_forward.12} parent=0 // pred_fallthru
    _
  // Predicated region
  $region18: #{encoder_forward.12} parent=0 // pred_check
    _
  $region19: #{encoder_forward.12} parent=0 // pred_check_branch
    %200 = sbr.rel (0) target = $region21
  $region20: #{encoder_forward.12} parent=0 // pred_region
    _
  $region21: #{encoder_forward.12} parent=0 // pred_fallthru
    _

// kernel: encoder_forward.13
$region0: #{encoder_forward.13}
  #allocation0 [shape = 'u32[]', space=smem, size = 0x4, offset = 0x4, fixed_abs, tag = 'smem constant byte address 0x4 - core index']
  #allocation1 [shape = 'u32[144,128]{1,0:T(1,128)}', space=vmem, size = 0x12000, scoped, tag = 'internal scratch']
  %s0 = inlined_call_operand.vmem [shape: bf16[128,128], index: 0, kind: input, shape index: {}]
  %s1 = inlined_call_operand.vmem [shape: bf16[128,16], index: 1, kind: input, shape index: {}]
  %s2 = inlined_call_operand.vmem [shape: f32[1,16], index: 2, kind: input, shape index: {}]
  %s3 = inlined_call_operand.vmem [shape: bf16[128,16], index: 3, kind: output, shape index: {}]
  %s4 = sld [smem:[#allocation0]]
  $region22: #{encoder_forward.13} parent=0
    _
  %s6 = ssub.s32 1, %s4
  %s7 = scalar_select 0, %s6, %s4
  // Predicated region
  $region2: #{encoder_forward.13} parent=0 // pred_check
    _
  $region3: #{encoder_forward.13} parent=0 // pred_check_branch
    %9 = sbr.rel (0) target = $region5
  $region4: #{encoder_forward.13} parent=0 // pred_region
    _
  $region5: #{encoder_forward.13} parent=0 // pred_fallthru
    _
  // Predicated region
  $region6: #{encoder_forward.13} parent=0 // pred_check
    _
  $region7: #{encoder_forward.13} parent=0 // pred_check_branch
    %11 = sbr.rel (0) target = $region9
  $region8: #{encoder_forward.13} parent=0 // pred_region
    _
  $region9: #{encoder_forward.13} parent=0 // pred_fallthru
    _
  // Predicated region
  $region10: #{encoder_forward.13} parent=0 // pred_check
    _
  $region11: #{encoder_forward.13} parent=0 // pred_check_branch
    %13 = sbr.rel (0) target = $region13
  $region12: #{encoder_forward.13} parent=0 // pred_region
    _
  $region13: #{encoder_forward.13} parent=0 // pred_fallthru
    _
  %v15 = vld [vmem:[%s0] sm:$0xf]
  %v16 = vld [vmem:[%s0 + $0x4] sm:$0xf]
  %v17 = vld [vmem:[%s0 + $0x8] sm:$0xf]
  %v18 = vld [vmem:[%s0 + $0xc] sm:$0xf]
  %v19 = vld [vmem:[%s0 + $0x10] sm:$0xf]
  %v20 = vld [vmem:[%s0 + $0x14] sm:$0xf]
  %v21 = vld [vmem:[%s0 + $0x18] sm:$0xf]
  %v22 = vld [vmem:[%s0 + $0x1c] sm:$0xf]
  %v23 = vld [vmem:[%s0 + $0x20] sm:$0xf]
  %v24 = vld [vmem:[%s0 + $0x24] sm:$0xf]
  %v25 = vld [vmem:[%s0 + $0x28] sm:$0xf]
  %v26 = vld [vmem:[%s0 + $0x2c] sm:$0xf]
  %v27 = vld [vmem:[%s0 + $0x30] sm:$0xf]
  %v28 = vld [vmem:[%s0 + $0x34] sm:$0xf]
  %v29 = vld [vmem:[%s0 + $0x38] sm:$0xf]
  %v30 = vld [vmem:[%s0 + $0x3c] sm:$0xf]
  %v31 = vld [vmem:[%s1] sm:$0xf]
  %v32 = vld [vmem:[%s1 + $0x4] sm:$0xf]
  %v33 = vld [vmem:[%s1 + $0x8] sm:$0xf]
  %v34 = vld [vmem:[%s1 + $0xc] sm:$0xf]
  %v35 = vld [vmem:[%s1 + $0x10] sm:$0xf]
  %v36 = vld [vmem:[%s1 + $0x14] sm:$0xf]
  %v37 = vld [vmem:[%s1 + $0x18] sm:$0xf]
  %v38 = vld [vmem:[%s1 + $0x1c] sm:$0xf]
  %v39 = vld [vmem:[%s1 + $0x20] sm:$0xf]
  %v40 = vld [vmem:[%s1 + $0x24] sm:$0xf]
  %v41 = vld [vmem:[%s1 + $0x28] sm:$0xf]
  %v42 = vld [vmem:[%s1 + $0x2c] sm:$0xf]
  %v43 = vld [vmem:[%s1 + $0x30] sm:$0xf]
  %v44 = vld [vmem:[%s1 + $0x34] sm:$0xf]
  %v45 = vld [vmem:[%s1 + $0x38] sm:$0xf]
  %v46 = vld [vmem:[%s1 + $0x3c] sm:$0xf]
  %v47 = vld [vmem:[%s2] sm:$0x1]
  %v49 = vlaneseq
  %v50 = vshrl.u32 %v49, 7
  %v51 = vsub.s32 0, %v50
  %v52 = vrot.slane %v47, %v51
  %v70 = vunpack.c.l.b16 %v15
  %v71 = vunpack.c.l.b16 %v16
  %v72 = vunpack.c.l.b16 %v17
  %v73 = vunpack.c.l.b16 %v18
  %v74 = vunpack.c.l.b16 %v19
  %v75 = vunpack.c.l.b16 %v20
  %v76 = vunpack.c.l.b16 %v21
  %v77 = vunpack.c.l.b16 %v22
  %v78 = vunpack.c.l.b16 %v23
  %v79 = vunpack.c.l.b16 %v24
  %v80 = vunpack.c.l.b16 %v25
  %v81 = vunpack.c.l.b16 %v26
  %v82 = vunpack.c.l.b16 %v27
  %v83 = vunpack.c.l.b16 %v28
  %v84 = vunpack.c.l.b16 %v29
  %v85 = vunpack.c.l.b16 %v30
  %v86 = vpack.c.b16 %v71, %v70
  %v87 = vpack.c.b16 %v73, %v72
  %v88 = vpack.c.b16 %v75, %v74
  %v89 = vpack.c.b16 %v77, %v76
  %v90 = vpack.c.b16 %v79, %v78
  %v91 = vpack.c.b16 %v81, %v80
  %v92 = vpack.c.b16 %v83, %v82
  %v93 = vpack.c.b16 %v85, %v84
  %v118 = vunpack.c.l.b16 %v31
  %v119 = vunpack.c.l.b16 %v32
  %v120 = vunpack.c.l.b16 %v33
  %v121 = vunpack.c.l.b16 %v34
  %v122 = vunpack.c.l.b16 %v35
  %v123 = vunpack.c.l.b16 %v36
  %v124 = vunpack.c.l.b16 %v37
  %v125 = vunpack.c.l.b16 %v38
  %v126 = vunpack.c.l.b16 %v39
  %v127 = vunpack.c.l.b16 %v40
  %v128 = vunpack.c.l.b16 %v41
  %v129 = vunpack.c.l.b16 %v42
  %v130 = vunpack.c.l.b16 %v43
  %v131 = vunpack.c.l.b16 %v44
  %v132 = vunpack.c.l.b16 %v45
  %v133 = vunpack.c.l.b16 %v46
  %v134 = vpack.c.b16 %v119, %v118
  %v135 = vpack.c.b16 %v121, %v120
  %v136 = vpack.c.b16 %v123, %v122
  %v137 = vpack.c.b16 %v125, %v124
  %v138 = vpack.c.b16 %v127, %v126
  %v139 = vpack.c.b16 %v129, %v128
  %v140 = vpack.c.b16 %v131, %v130
  %v141 = vpack.c.b16 %v133, %v132
  %150 = vmatprep.subr.bf16.mxu0 0
  %151 = vmatpush1.bf16.msra.mxu0 %v141
  %152 = vmatprep.subr.bf16.mxu0 0
  %153 = vmatpush1.bf16.msra.mxu0 %v140
  %154 = vmatprep.subr.bf16.mxu0 0
  %155 = vmatpush1.bf16.msra.mxu0 %v139
  %156 = vmatprep.subr.bf16.mxu0 0
  %157 = vmatpush1.bf16.msra.mxu0 %v138
  %158 = vmatprep.subr.bf16.mxu0 0
  %159 = vmatpush1.bf16.msra.mxu0 %v137
  %160 = vmatprep.subr.bf16.mxu0 0
  %161 = vmatpush1.bf16.msra.mxu0 %v136
  %162 = vmatprep.subr.bf16.mxu0 0
  %163 = vmatpush1.bf16.msra.mxu0 %v135
  %164 = vmatprep.subr.bf16.mxu0 0
  %165 = vmatpush1.bf16.msra.mxu0 %v134
  %166 = vmatprep.subr.bf16.mxu0 0
  %167 = vmatpush2.bf16.msra.mxu0 0
  %168 = vmatprep.subr.bf16.mxu0 0
  %169 = vmatpush2.bf16.msra.mxu0 0
  %170 = vmatprep.subr.bf16.mxu0 0
  %171 = vmatpush2.bf16.msra.mxu0 0
  %172 = vmatprep.subr.bf16.mxu0 0
  %173 = vmatpush2.bf16.msra.mxu0 0
  %174 = vmatprep.subr.bf16.mxu0 0
  %175 = vmatpush2.bf16.msra.mxu0 0
  %176 = vmatprep.subr.bf16.mxu0 0
  %177 = vmatpush2.bf16.msra.mxu0 0
  %178 = vmatprep.subr.bf16.mxu0 0
  %179 = vmatpush2.bf16.msra.mxu0 0
  %180 = vmatprep.subr.bf16.mxu0 0
  %181 = vmatpush2.bf16.msra.mxu0 0
  %182 = vmatprep.mubr.bf16.mxu0 0
  %183 = vmatmul.mubr.bf16.gmra.mxu0 %v86
  %v184 = vpop.f32.mrf.mxu0
  %v185 = vadd.f32 %v52, %v184
  %v186 = vpop.f32.mrf.mxu0
  %v187 = vpop.f32.mrf.mxu0
  %v188 = vadd.f32 %v52, %v187
  %v189 = vpop.f32.mrf.mxu0
  %190 = vmatprep.mubr.bf16.mxu0 0
  %191 = vmatmul.mubr.bf16.gmra.mxu0 %v87
  %v192 = vpop.f32.mrf.mxu0
  %v193 = vadd.f32 %v52, %v192
  %v194 = vpop.f32.mrf.mxu0
  %v195 = vpop.f32.mrf.mxu0
  %v196 = vadd.f32 %v52, %v195
  %v197 = vpop.f32.mrf.mxu0
  %198 = vmatprep.mubr.bf16.mxu0 0
  %199 = vmatmul.mubr.bf16.gmra.mxu0 %v88
  %v200 = vpop.f32.mrf.mxu0
  %v201 = vadd.f32 %v52, %v200
  %v202 = vpop.f32.mrf.mxu0
  %v203 = vpop.f32.mrf.mxu0
  %v204 = vadd.f32 %v52, %v203
  %v205 = vpop.f32.mrf.mxu0
  %206 = vmatprep.mubr.bf16.mxu0 0
  %207 = vmatmul.mubr.bf16.gmra.mxu0 %v89
  %v208 = vpop.f32.mrf.mxu0
  %v209 = vadd.f32 %v52, %v208
  %v210 = vpop.f32.mrf.mxu0
  %v211 = vpop.f32.mrf.mxu0
  %v212 = vadd.f32 %v52, %v211
  %v213 = vpop.f32.mrf.mxu0
  %214 = vmatprep.mubr.bf16.mxu0 0
  %215 = vmatmul.mubr.bf16.gmra.mxu0 %v90
  %v216 = vpop.f32.mrf.mxu0
  %v217 = vadd.f32 %v52, %v216
  %v218 = vpop.f32.mrf.mxu0
  %v219 = vpop.f32.mrf.mxu0
  %v220 = vadd.f32 %v52, %v219
  %v221 = vpop.f32.mrf.mxu0
  %222 = vmatprep.mubr.bf16.mxu0 0
  %223 = vmatmul.mubr.bf16.gmra.mxu0 %v91
  %v224 = vpop.f32.mrf.mxu0
  %v225 = vadd.f32 %v52, %v224
  %v226 = vpop.f32.mrf.mxu0
  %v227 = vpop.f32.mrf.mxu0
  %v228 = vadd.f32 %v52, %v227
  %v229 = vpop.f32.mrf.mxu0
  %230 = vmatprep.mubr.bf16.mxu0 0
  %231 = vmatmul.mubr.bf16.gmra.mxu0 %v92
  %v232 = vpop.f32.mrf.mxu0
  %v233 = vadd.f32 %v52, %v232
  %v234 = vpop.f32.mrf.mxu0
  %v235 = vpop.f32.mrf.mxu0
  %v236 = vadd.f32 %v52, %v235
  %v237 = vpop.f32.mrf.mxu0
  %238 = vmatprep.mubr.bf16.mxu0 0
  %239 = vmatmul.mubr.bf16.gmra.mxu0 %v93
  %v240 = vpop.f32.mrf.mxu0
  %v241 = vadd.f32 %v52, %v240
  %v242 = vpop.f32.mrf.mxu0
  %v243 = vpop.f32.mrf.mxu0
  %v244 = vadd.f32 %v52, %v243
  %v245 = vpop.f32.mrf.mxu0
  %246 = vdwg.mxu0
  %v247 = vmax.f32 %v185, 0.0
  %v248 = vmax.f32 %v188, 0.0
  %v249 = vmax.f32 %v193, 0.0
  %v250 = vmax.f32 %v196, 0.0
  %v251 = vmax.f32 %v201, 0.0
  %v252 = vmax.f32 %v204, 0.0
  %v253 = vmax.f32 %v209, 0.0
  %v254 = vmax.f32 %v212, 0.0
  %v255 = vmax.f32 %v217, 0.0
  %v256 = vmax.f32 %v220, 0.0
  %v257 = vmax.f32 %v225, 0.0
  %v258 = vmax.f32 %v228, 0.0
  %v259 = vmax.f32 %v233, 0.0
  %v260 = vmax.f32 %v236, 0.0
  %v261 = vmax.f32 %v241, 0.0
  %v262 = vmax.f32 %v244, 0.0
  %v263 = vpack.c.bf16 %v248, %v247
  %v264 = vpack.c.bf16 %v250, %v249
  %v265 = vpack.c.bf16 %v252, %v251
  %v266 = vpack.c.bf16 %v254, %v253
  %v267 = vpack.c.bf16 %v256, %v255
  %v268 = vpack.c.bf16 %v258, %v257
  %v269 = vpack.c.bf16 %v260, %v259
  %v270 = vpack.c.bf16 %v262, %v261
  %v279 = vunpack.c.l.b16 %v263
  %v280 = vunpack.c.h.b16 %v263
  %v281 = vunpack.c.l.b16 %v264
  %v282 = vunpack.c.h.b16 %v264
  %v283 = vunpack.c.l.b16 %v265
  %v284 = vunpack.c.h.b16 %v265
  %v285 = vunpack.c.l.b16 %v266
  %v286 = vunpack.c.h.b16 %v266
  %v287 = vunpack.c.l.b16 %v267
  %v288 = vunpack.c.h.b16 %v267
  %v289 = vunpack.c.l.b16 %v268
  %v290 = vunpack.c.h.b16 %v268
  %v291 = vunpack.c.l.b16 %v269
  %v292 = vunpack.c.h.b16 %v269
  %v293 = vunpack.c.l.b16 %v270
  %v294 = vunpack.c.h.b16 %v270
  %v295 = vpack.c.b16 %v279, %v279
  %v296 = vpack.c.b16 %v280, %v280
  %v297 = vpack.c.b16 %v281, %v281
  %v298 = vpack.c.b16 %v282, %v282
  %v299 = vpack.c.b16 %v283, %v283
  %v300 = vpack.c.b16 %v284, %v284
  %v301 = vpack.c.b16 %v285, %v285
  %v302 = vpack.c.b16 %v286, %v286
  %v303 = vpack.c.b16 %v287, %v287
  %v304 = vpack.c.b16 %v288, %v288
  %v305 = vpack.c.b16 %v289, %v289
  %v306 = vpack.c.b16 %v290, %v290
  %v307 = vpack.c.b16 %v291, %v291
  %v308 = vpack.c.b16 %v292, %v292
  %v309 = vpack.c.b16 %v293, %v293
  %v310 = vpack.c.b16 %v294, %v294
  %vm327 = vcmask 125952
  %328 = vst.msk [vmem:[%s3] sm:$0xf] %vm327, %v295
  %329 = vst.msk [vmem:[%s3 + $0x4] sm:$0xf] %vm327, %v296
  %330 = vst.msk [vmem:[%s3 + $0x8] sm:$0xf] %vm327, %v297
  %331 = vst.msk [vmem:[%s3 + $0xc] sm:$0xf] %vm327, %v298
  %332 = vst.msk [vmem:[%s3 + $0x10] sm:$0xf] %vm327, %v299
  %333 = vst.msk [vmem:[%s3 + $0x14] sm:$0xf] %vm327, %v300
  %334 = vst.msk [vmem:[%s3 + $0x18] sm:$0xf] %vm327, %v301
  %335 = vst.msk [vmem:[%s3 + $0x1c] sm:$0xf] %vm327, %v302
  %336 = vst.msk [vmem:[%s3 + $0x20] sm:$0xf] %vm327, %v303
  %337 = vst.msk [vmem:[%s3 + $0x24] sm:$0xf] %vm327, %v304
  %338 = vst.msk [vmem:[%s3 + $0x28] sm:$0xf] %vm327, %v305
  %339 = vst.msk [vmem:[%s3 + $0x2c] sm:$0xf] %vm327, %v306
  %340 = vst.msk [vmem:[%s3 + $0x30] sm:$0xf] %vm327, %v307
  %341 = vst.msk [vmem:[%s3 + $0x34] sm:$0xf] %vm327, %v308
  %342 = vst.msk [vmem:[%s3 + $0x38] sm:$0xf] %vm327, %v309
  %343 = vst.msk [vmem:[%s3 + $0x3c] sm:$0xf] %vm327, %v310
  // Predicated region
  $region14: #{encoder_forward.13} parent=0 // pred_check
    _
  $region15: #{encoder_forward.13} parent=0 // pred_check_branch
    %345 = sbr.rel (0) target = $region17
  $region16: #{encoder_forward.13} parent=0 // pred_region
    _
  $region17: #{encoder_forward.13} parent=0 // pred_fallthru
    _
  // Predicated region
  $region18: #{encoder_forward.13} parent=0 // pred_check
    _
  $region19: #{encoder_forward.13} parent=0 // pred_check_branch
    %347 = sbr.rel (0) target = $region21
  $region20: #{encoder_forward.13} parent=0 // pred_region
    _
  $region21: #{encoder_forward.13} parent=0 // pred_fallthru
    _

// kernel: encoder_forward.14
$region0: #{encoder_forward.14}
  #allocation0 [shape = 'u32[]', space=smem, size = 0x4, offset = 0x4, fixed_abs, tag = 'smem constant byte address 0x4 - core index']
  #allocation1 [shape = 'u32[144,128]{1,0:T(1,128)}', space=vmem, size = 0x12000, scoped, tag = 'internal scratch']
  %s0 = inlined_call_operand.vmem [shape: bf16[128,288], index: 0, kind: input, shape index: {}]
  %s1 = inlined_call_operand.vmem [shape: bf16[288,16], index: 1, kind: input, shape index: {}]
  %s2 = inlined_call_operand.vmem [shape: f32[1,16], index: 2, kind: input, shape index: {}]
  %s3 = inlined_call_operand.vmem [shape: bf16[128,16], index: 3, kind: output, shape index: {}]
  %s4 = sld [smem:[#allocation0]]
  $region22: #{encoder_forward.14} parent=0
    _
  %s6 = ssub.s32 1, %s4
  %s7 = scalar_select 0, %s6, %s4
  // Predicated region
  $region2: #{encoder_forward.14} parent=0 // pred_check
    _
  $region3: #{encoder_forward.14} parent=0 // pred_check_branch
    %9 = sbr.rel (0) target = $region5
  $region4: #{encoder_forward.14} parent=0 // pred_region
    _
  $region5: #{encoder_forward.14} parent=0 // pred_fallthru
    _
  // Predicated region
  $region6: #{encoder_forward.14} parent=0 // pred_check
    _
  $region7: #{encoder_forward.14} parent=0 // pred_check_branch
    %11 = sbr.rel (0) target = $region9
  $region8: #{encoder_forward.14} parent=0 // pred_region
    _
  $region9: #{encoder_forward.14} parent=0 // pred_fallthru
    _
  // Predicated region
  $region10: #{encoder_forward.14} parent=0 // pred_check
    _
  $region11: #{encoder_forward.14} parent=0 // pred_check_branch
    %13 = sbr.rel (0) target = $region13
  $region12: #{encoder_forward.14} parent=0 // pred_region
    _
  $region13: #{encoder_forward.14} parent=0 // pred_fallthru
    _
  %v15 = vld [vmem:[%s0] sm:$0xff]
  %v16 = vld [vmem:[%s0 + $0x8] sm:$0xf]
  %v17 = vld [vmem:[%s0 + $0xc] sm:$0xff]
  %v18 = vld [vmem:[%s0 + $0x14] sm:$0xf]
  %v19 = vld [vmem:[%s0 + $0x18] sm:$0xff]
  %v20 = vld [vmem:[%s0 + $0x20] sm:$0xf]
  %v21 = vld [vmem:[%s0 + $0x24] sm:$0xff]
  %v22 = vld [vmem:[%s0 + $0x2c] sm:$0xf]
  %v23 = vld [vmem:[%s0 + $0x30] sm:$0xff]
  %v24 = vld [vmem:[%s0 + $0x38] sm:$0xf]
  %v25 = vld [vmem:[%s0 + $0x3c] sm:$0xff]
  %v26 = vld [vmem:[%s0 + $0x44] sm:$0xf]
  %v27 = vld [vmem:[%s0 + $0x48] sm:$0xff]
  %v28 = vld [vmem:[%s0 + $0x50] sm:$0xf]
  %v29 = vld [vmem:[%s0 + $0x54] sm:$0xff]
  %v30 = vld [vmem:[%s0 + $0x5c] sm:$0xf]
  %v31 = vld [vmem:[%s0 + $0x60] sm:$0xff]
  %v32 = vld [vmem:[%s0 + $0x68] sm:$0xf]
  %v33 = vld [vmem:[%s0 + $0x6c] sm:$0xff]
  %v34 = vld [vmem:[%s0 + $0x74] sm:$0xf]
  %v35 = vld [vmem:[%s0 + $0x78] sm:$0xff]
  %v36 = vld [vmem:[%s0 + $0x80] sm:$0xf]
  %v37 = vld [vmem:[%s0 + $0x84] sm:$0xff]
  %v38 = vld [vmem:[%s0 + $0x8c] sm:$0xf]
  %v39 = vld [vmem:[%s0 + $0x90] sm:$0xff]
  %v40 = vld [vmem:[%s0 + $0x98] sm:$0xf]
  %v41 = vld [vmem:[%s0 + $0x9c] sm:$0xff]
  %v42 = vld [vmem:[%s0 + $0xa4] sm:$0xf]
  %v43 = vld [vmem:[%s0 + $0xa8] sm:$0xff]
  %v44 = vld [vmem:[%s0 + $0xb0] sm:$0xf]
  %v45 = vld [vmem:[%s0 + $0xb4] sm:$0xff]
  %v46 = vld [vmem:[%s0 + $0xbc] sm:$0xf]
  %v47 = vld [vmem:[%s1] sm:$0xf]
  %v48 = vld [vmem:[%s1 + $0x4] sm:$0xf]
  %v49 = vld [vmem:[%s1 + $0x8] sm:$0xf]
  %v50 = vld [vmem:[%s1 + $0xc] sm:$0xf]
  %v51 = vld [vmem:[%s1 + $0x10] sm:$0xf]
  %v52 = vld [vmem:[%s1 + $0x14] sm:$0xf]
  %v53 = vld [vmem:[%s1 + $0x18] sm:$0xf]
  %v54 = vld [vmem:[%s1 + $0x1c] sm:$0xf]
  %v55 = vld [vmem:[%s1 + $0x20] sm:$0xf]
  %v56 = vld [vmem:[%s1 + $0x24] sm:$0xf]
  %v57 = vld [vmem:[%s1 + $0x28] sm:$0xf]
  %v58 = vld [vmem:[%s1 + $0x2c] sm:$0xf]
  %v59 = vld [vmem:[%s1 + $0x30] sm:$0xf]
  %v60 = vld [vmem:[%s1 + $0x34] sm:$0xf]
  %v61 = vld [vmem:[%s1 + $0x38] sm:$0xf]
  %v62 = vld [vmem:[%s1 + $0x3c] sm:$0xf]
  %v63 = vld [vmem:[%s1 + $0x40] sm:$0xf]
  %v64 = vld [vmem:[%s1 + $0x44] sm:$0xf]
  %v65 = vld [vmem:[%s1 + $0x48] sm:$0xf]
  %v66 = vld [vmem:[%s1 + $0x4c] sm:$0xf]
  %v67 = vld [vmem:[%s1 + $0x50] sm:$0xf]
  %v68 = vld [vmem:[%s1 + $0x54] sm:$0xf]
  %v69 = vld [vmem:[%s1 + $0x58] sm:$0xf]
  %v70 = vld [vmem:[%s1 + $0x5c] sm:$0xf]
  %v71 = vld [vmem:[%s1 + $0x60] sm:$0xf]
  %v72 = vld [vmem:[%s1 + $0x64] sm:$0xf]
  %v73 = vld [vmem:[%s1 + $0x68] sm:$0xf]
  %v74 = vld [vmem:[%s1 + $0x6c] sm:$0xf]
  %v75 = vld [vmem:[%s1 + $0x70] sm:$0xf]
  %v76 = vld [vmem:[%s1 + $0x74] sm:$0xf]
  %v77 = vld [vmem:[%s1 + $0x78] sm:$0xf]
  %v78 = vld [vmem:[%s1 + $0x7c] sm:$0xf]
  %v79 = vld [vmem:[%s1 + $0x80] sm:$0xf]
  %v80 = vld [vmem:[%s1 + $0x84] sm:$0xf]
  %v81 = vld [vmem:[%s1 + $0x88] sm:$0xf]
  %v82 = vld [vmem:[%s1 + $0x8c] sm:$0xf]
  %v83 = vld [vmem:[%s2] sm:$0x1]
  %v85 = vlaneseq
  %v86 = vshrl.u32 %v85, 7
  %v87 = vsub.s32 0, %v86
  %v88 = vrot.slane %v83, %v87
  %v122 = vunpack.c.l.b16 %v15
  %v123 = vunpack.c.h.b16 %v15
  %v124 = vunpack.c.l.b16 %v16
  %v125 = vunpack.c.l.b16 %v17
  %v126 = vunpack.c.h.b16 %v17
  %v127 = vunpack.c.l.b16 %v18
  %v128 = vunpack.c.l.b16 %v19
  %v129 = vunpack.c.h.b16 %v19
  %v130 = vunpack.c.l.b16 %v20
  %v131 = vunpack.c.l.b16 %v21
  %v132 = vunpack.c.h.b16 %v21
  %v133 = vunpack.c.l.b16 %v22
  %v134 = vunpack.c.l.b16 %v23
  %v135 = vunpack.c.h.b16 %v23
  %v136 = vunpack.c.l.b16 %v24
  %v137 = vunpack.c.l.b16 %v25
  %v138 = vunpack.c.h.b16 %v25
  %v139 = vunpack.c.l.b16 %v26
  %v140 = vunpack.c.l.b16 %v27
  %v141 = vunpack.c.h.b16 %v27
  %v142 = vunpack.c.l.b16 %v28
  %v143 = vunpack.c.l.b16 %v29
  %v144 = vunpack.c.h.b16 %v29
  %v145 = vunpack.c.l.b16 %v30
  %v146 = vunpack.c.l.b16 %v31
  %v147 = vunpack.c.h.b16 %v31
  %v148 = vunpack.c.l.b16 %v32
  %v149 = vunpack.c.l.b16 %v33
  %v150 = vunpack.c.h.b16 %v33
  %v151 = vunpack.c.l.b16 %v34
  %v152 = vunpack.c.l.b16 %v35
  %v153 = vunpack.c.h.b16 %v35
  %v154 = vunpack.c.l.b16 %v36
  %v155 = vunpack.c.l.b16 %v37
  %v156 = vunpack.c.h.b16 %v37
  %v157 = vunpack.c.l.b16 %v38
  %v158 = vunpack.c.l.b16 %v39
  %v159 = vunpack.c.h.b16 %v39
  %v160 = vunpack.c.l.b16 %v40
  %v161 = vunpack.c.l.b16 %v41
  %v162 = vunpack.c.h.b16 %v41
  %v163 = vunpack.c.l.b16 %v42
  %v164 = vunpack.c.l.b16 %v43
  %v165 = vunpack.c.h.b16 %v43
  %v166 = vunpack.c.l.b16 %v44
  %v167 = vunpack.c.l.b16 %v45
  %v168 = vunpack.c.h.b16 %v45
  %v169 = vunpack.c.l.b16 %v46
  %v170 = vpack.c.b16 %v125, %v122
  %v171 = vpack.c.b16 %v126, %v123
  %v172 = vpack.c.b16 %v127, %v124
  %v173 = vpack.c.b16 %v131, %v128
  %v174 = vpack.c.b16 %v132, %v129
  %v175 = vpack.c.b16 %v133, %v130
  %v176 = vpack.c.b16 %v137, %v134
  %v177 = vpack.c.b16 %v138, %v135
  %v178 = vpack.c.b16 %v139, %v136
  %v179 = vpack.c.b16 %v143, %v140
  %v180 = vpack.c.b16 %v144, %v141
  %v181 = vpack.c.b16 %v145, %v142
  %v182 = vpack.c.b16 %v149, %v146
  %v183 = vpack.c.b16 %v150, %v147
  %v184 = vpack.c.b16 %v151, %v148
  %v185 = vpack.c.b16 %v155, %v152
  %v186 = vpack.c.b16 %v156, %v153
  %v187 = vpack.c.b16 %v157, %v154
  %v188 = vpack.c.b16 %v161, %v158
  %v189 = vpack.c.b16 %v162, %v159
  %v190 = vpack.c.b16 %v163, %v160
  %v191 = vpack.c.b16 %v167, %v164
  %v192 = vpack.c.b16 %v168, %v165
  %v193 = vpack.c.b16 %v169, %v166
  %v246 = vunpack.c.l.b16 %v47
  %v247 = vunpack.c.l.b16 %v48
  %v248 = vunpack.c.l.b16 %v49
  %v249 = vunpack.c.l.b16 %v50
  %v250 = vunpack.c.l.b16 %v51
  %v251 = vunpack.c.l.b16 %v52
  %v252 = vunpack.c.l.b16 %v53
  %v253 = vunpack.c.l.b16 %v54
  %v254 = vunpack.c.l.b16 %v55
  %v255 = vunpack.c.l.b16 %v56
  %v256 = vunpack.c.l.b16 %v57
  %v257 = vunpack.c.l.b16 %v58
  %v258 = vunpack.c.l.b16 %v59
  %v259 = vunpack.c.l.b16 %v60
  %v260 = vunpack.c.l.b16 %v61
  %v261 = vunpack.c.l.b16 %v62
  %v262 = vunpack.c.l.b16 %v63
  %v263 = vunpack.c.l.b16 %v64
  %v264 = vunpack.c.l.b16 %v65
  %v265 = vunpack.c.l.b16 %v66
  %v266 = vunpack.c.l.b16 %v67
  %v267 = vunpack.c.l.b16 %v68
  %v268 = vunpack.c.l.b16 %v69
  %v269 = vunpack.c.l.b16 %v70
  %v270 = vunpack.c.l.b16 %v71
  %v271 = vunpack.c.l.b16 %v72
  %v272 = vunpack.c.l.b16 %v73
  %v273 = vunpack.c.l.b16 %v74
  %v274 = vunpack.c.l.b16 %v75
  %v275 = vunpack.c.l.b16 %v76
  %v276 = vunpack.c.l.b16 %v77
  %v277 = vunpack.c.l.b16 %v78
  %v278 = vunpack.c.l.b16 %v79
  %v279 = vunpack.c.l.b16 %v80
  %v280 = vunpack.c.l.b16 %v81
  %v281 = vunpack.c.l.b16 %v82
  %v282 = vpack.c.b16 %v247, %v246
  %v283 = vpack.c.b16 %v249, %v248
  %v284 = vpack.c.b16 %v251, %v250
  %v285 = vpack.c.b16 %v253, %v252
  %v286 = vpack.c.b16 %v255, %v254
  %v287 = vpack.c.b16 %v257, %v256
  %v288 = vpack.c.b16 %v259, %v258
  %v289 = vpack.c.b16 %v261, %v260
  %v290 = vpack.c.b16 %v263, %v262
  %v291 = vpack.c.b16 %v265, %v264
  %v292 = vpack.c.b16 %v267, %v266
  %v293 = vpack.c.b16 %v269, %v268
  %v294 = vpack.c.b16 %v271, %v270
  %v295 = vpack.c.b16 %v273, %v272
  %v296 = vpack.c.b16 %v275, %v274
  %v297 = vpack.c.b16 %v277, %v276
  %v298 = vpack.c.b16 %v279, %v278
  %v299 = vpack.c.b16 %v281, %v280
  %vm318 = vcmask 261120
  %v320 = vsel %vm318, %v172, 0
  %v323 = vsel %vm318, %v175, 0
  %v326 = vsel %vm318, %v178, 0
  %v329 = vsel %vm318, %v181, 0
  %v332 = vsel %vm318, %v184, 0
  %v335 = vsel %vm318, %v187, 0
  %v338 = vsel %vm318, %v190, 0
  %v341 = vsel %vm318, %v193, 0
  %343 = vmatprep.subr.bf16.mxu0 0
  %344 = vmatpush1.bf16.msra.mxu0 %v289
  %345 = vmatprep.subr.bf16.mxu0 0
  %346 = vmatpush1.bf16.msra.mxu0 %v288
  %347 = vmatprep.subr.bf16.mxu0 0
  %348 = vmatpush1.bf16.msra.mxu0 %v287
  %349 = vmatprep.subr.bf16.mxu0 0
  %350 = vmatpush1.bf16.msra.mxu0 %v286
  %351 = vmatprep.subr.bf16.mxu0 0
  %352 = vmatpush1.bf16.msra.mxu0 %v285
  %353 = vmatprep.subr.bf16.mxu0 0
  %354 = vmatpush1.bf16.msra.mxu0 %v284
  %355 = vmatprep.subr.bf16.mxu0 0
  %356 = vmatpush1.bf16.msra.mxu0 %v283
  %357 = vmatprep.subr.bf16.mxu0 0
  %358 = vmatpush1.bf16.msra.mxu0 %v282
  %359 = vmatprep.subr.bf16.mxu0 0
  %360 = vmatpush2.bf16.msra.mxu0 %v297
  %361 = vmatprep.subr.bf16.mxu0 0
  %362 = vmatpush2.bf16.msra.mxu0 %v296
  %363 = vmatprep.subr.bf16.mxu0 0
  %364 = vmatpush2.bf16.msra.mxu0 %v295
  %365 = vmatprep.subr.bf16.mxu0 0
  %366 = vmatpush2.bf16.msra.mxu0 %v294
  %367 = vmatprep.subr.bf16.mxu0 0
  %368 = vmatpush2.bf16.msra.mxu0 %v293
  %369 = vmatprep.subr.bf16.mxu0 0
  %370 = vmatpush2.bf16.msra.mxu0 %v292
  %371 = vmatprep.subr.bf16.mxu0 0
  %372 = vmatpush2.bf16.msra.mxu0 %v291
  %373 = vmatprep.subr.bf16.mxu0 0
  %374 = vmatpush2.bf16.msra.mxu0 %v290
  %375 = vmatprep.mubr.bf16.mxu0 %v171
  %376 = vmatmul.mubr.bf16.gmra.mxu0 %v170
  %v377 = vpop.f32.mrf.mxu0
  %v378 = vadd.f32 %v88, %v377
  %v379 = vpop.f32.mrf.mxu0
  %v380 = vpop.f32.mrf.mxu0
  %v381 = vadd.f32 %v88, %v380
  %v382 = vpop.f32.mrf.mxu0
  %383 = vmatprep.mubr.bf16.mxu0 %v174
  %384 = vmatmul.mubr.bf16.gmra.mxu0 %v173
  %v385 = vpop.f32.mrf.mxu0
  %v386 = vadd.f32 %v88, %v385
  %v387 = vpop.f32.mrf.mxu0
  %v388 = vpop.f32.mrf.mxu0
  %v389 = vadd.f32 %v88, %v388
  %v390 = vpop.f32.mrf.mxu0
  %391 = vmatprep.mubr.bf16.mxu0 %v177
  %392 = vmatmul.mubr.bf16.gmra.mxu0 %v176
  %v393 = vpop.f32.mrf.mxu0
  %v394 = vadd.f32 %v88, %v393
  %v395 = vpop.f32.mrf.mxu0
  %v396 = vpop.f32.mrf.mxu0
  %v397 = vadd.f32 %v88, %v396
  %v398 = vpop.f32.mrf.mxu0
  %399 = vmatprep.mubr.bf16.mxu0 %v180
  %400 = vmatmul.mubr.bf16.gmra.mxu0 %v179
  %v401 = vpop.f32.mrf.mxu0
  %v402 = vadd.f32 %v88, %v401
  %v403 = vpop.f32.mrf.mxu0
  %v404 = vpop.f32.mrf.mxu0
  %v405 = vadd.f32 %v88, %v404
  %v406 = vpop.f32.mrf.mxu0
  %407 = vmatprep.mubr.bf16.mxu0 %v183
  %408 = vmatmul.mubr.bf16.gmra.mxu0 %v182
  %v409 = vpop.f32.mrf.mxu0
  %v410 = vadd.f32 %v88, %v409
  %v411 = vpop.f32.mrf.mxu0
  %v412 = vpop.f32.mrf.mxu0
  %v413 = vadd.f32 %v88, %v412
  %v414 = vpop.f32.mrf.mxu0
  %415 = vmatprep.mubr.bf16.mxu0 %v186
  %416 = vmatmul.mubr.bf16.gmra.mxu0 %v185
  %v417 = vpop.f32.mrf.mxu0
  %v418 = vadd.f32 %v88, %v417
  %v419 = vpop.f32.mrf.mxu0
  %v420 = vpop.f32.mrf.mxu0
  %v421 = vadd.f32 %v88, %v420
  %v422 = vpop.f32.mrf.mxu0
  %423 = vmatprep.mubr.bf16.mxu0 %v189
  %424 = vmatmul.mubr.bf16.gmra.mxu0 %v188
  %v425 = vpop.f32.mrf.mxu0
  %v426 = vadd.f32 %v88, %v425
  %v427 = vpop.f32.mrf.mxu0
  %v428 = vpop.f32.mrf.mxu0
  %v429 = vadd.f32 %v88, %v428
  %v430 = vpop.f32.mrf.mxu0
  %431 = vmatprep.mubr.bf16.mxu0 %v192
  %432 = vmatmul.mubr.bf16.gmra.mxu0 %v191
  %v433 = vpop.f32.mrf.mxu0
  %v434 = vadd.f32 %v88, %v433
  %v435 = vpop.f32.mrf.mxu0
  %v436 = vpop.f32.mrf.mxu0
  %v437 = vadd.f32 %v88, %v436
  %v438 = vpop.f32.mrf.mxu0
  %439 = vdwg.mxu0
  %440 = vmatprep.subr.bf16.mxu0 0
  %441 = vmatpush1.bf16.msra.mxu0 0
  %442 = vmatprep.subr.bf16.mxu0 0
  %443 = vmatpush1.bf16.msra.mxu0 0
  %444 = vmatprep.subr.bf16.mxu0 0
  %445 = vmatpush1.bf16.msra.mxu0 0
  %446 = vmatprep.subr.bf16.mxu0 0
  %447 = vmatpush1.bf16.msra.mxu0 0
  %448 = vmatprep.subr.bf16.mxu0 0
  %449 = vmatpush1.bf16.msra.mxu0 0
  %450 = vmatprep.subr.bf16.mxu0 0
  %451 = vmatpush1.bf16.msra.mxu0 0
  %452 = vmatprep.subr.bf16.mxu0 0
  %453 = vmatpush1.bf16.msra.mxu0 %v299
  %454 = vmatprep.subr.bf16.mxu0 0
  %455 = vmatpush1.bf16.msra.mxu0 %v298
  %456 = vmatprep.subr.bf16.mxu0 0
  %457 = vmatpush2.bf16.msra.mxu0 0
  %458 = vmatprep.subr.bf16.mxu0 0
  %459 = vmatpush2.bf16.msra.mxu0 0
  %460 = vmatprep.subr.bf16.mxu0 0
  %461 = vmatpush2.bf16.msra.mxu0 0
  %462 = vmatprep.subr.bf16.mxu0 0
  %463 = vmatpush2.bf16.msra.mxu0 0
  %464 = vmatprep.subr.bf16.mxu0 0
  %465 = vmatpush2.bf16.msra.mxu0 0
  %466 = vmatprep.subr.bf16.mxu0 0
  %467 = vmatpush2.bf16.msra.mxu0 0
  %468 = vmatprep.subr.bf16.mxu0 0
  %469 = vmatpush2.bf16.msra.mxu0 0
  %470 = vmatprep.subr.bf16.mxu0 0
  %471 = vmatpush2.bf16.msra.mxu0 0
  %472 = vmatprep.mubr.bf16.mxu0 0
  %473 = vmatmul.mubr.bf16.gmra.mxu0 %v320
  %v474 = vpop.f32.mrf.mxu0
  %v475 = vadd.f32 %v378, %v474
  %v476 = vpop.f32.mrf.mxu0
  %v477 = vpop.f32.mrf.mxu0
  %v478 = vadd.f32 %v381, %v477
  %v479 = vpop.f32.mrf.mxu0
  %480 = vmatprep.mubr.bf16.mxu0 0
  %481 = vmatmul.mubr.bf16.gmra.mxu0 %v323
  %v482 = vpop.f32.mrf.mxu0
  %v483 = vadd.f32 %v386, %v482
  %v484 = vpop.f32.mrf.mxu0
  %v485 = vpop.f32.mrf.mxu0
  %v486 = vadd.f32 %v389, %v485
  %v487 = vpop.f32.mrf.mxu0
  %488 = vmatprep.mubr.bf16.mxu0 0
  %489 = vmatmul.mubr.bf16.gmra.mxu0 %v326
  %v490 = vpop.f32.mrf.mxu0
  %v491 = vadd.f32 %v394, %v490
  %v492 = vpop.f32.mrf.mxu0
  %v493 = vpop.f32.mrf.mxu0
  %v494 = vadd.f32 %v397, %v493
  %v495 = vpop.f32.mrf.mxu0
  %496 = vmatprep.mubr.bf16.mxu0 0
  %497 = vmatmul.mubr.bf16.gmra.mxu0 %v329
  %v498 = vpop.f32.mrf.mxu0
  %v499 = vadd.f32 %v402, %v498
  %v500 = vpop.f32.mrf.mxu0
  %v501 = vpop.f32.mrf.mxu0
  %v502 = vadd.f32 %v405, %v501
  %v503 = vpop.f32.mrf.mxu0
  %504 = vmatprep.mubr.bf16.mxu0 0
  %505 = vmatmul.mubr.bf16.gmra.mxu0 %v332
  %v506 = vpop.f32.mrf.mxu0
  %v507 = vadd.f32 %v410, %v506
  %v508 = vpop.f32.mrf.mxu0
  %v509 = vpop.f32.mrf.mxu0
  %v510 = vadd.f32 %v413, %v509
  %v511 = vpop.f32.mrf.mxu0
  %512 = vmatprep.mubr.bf16.mxu0 0
  %513 = vmatmul.mubr.bf16.gmra.mxu0 %v335
  %v514 = vpop.f32.mrf.mxu0
  %v515 = vadd.f32 %v418, %v514
  %v516 = vpop.f32.mrf.mxu0
  %v517 = vpop.f32.mrf.mxu0
  %v518 = vadd.f32 %v421, %v517
  %v519 = vpop.f32.mrf.mxu0
  %520 = vmatprep.mubr.bf16.mxu0 0
  %521 = vmatmul.mubr.bf16.gmra.mxu0 %v338
  %v522 = vpop.f32.mrf.mxu0
  %v523 = vadd.f32 %v426, %v522
  %v524 = vpop.f32.mrf.mxu0
  %v525 = vpop.f32.mrf.mxu0
  %v526 = vadd.f32 %v429, %v525
  %v527 = vpop.f32.mrf.mxu0
  %528 = vmatprep.mubr.bf16.mxu0 0
  %529 = vmatmul.mubr.bf16.gmra.mxu0 %v341
  %v530 = vpop.f32.mrf.mxu0
  %v531 = vadd.f32 %v434, %v530
  %v532 = vpop.f32.mrf.mxu0
  %v533 = vpop.f32.mrf.mxu0
  %v534 = vadd.f32 %v437, %v533
  %v535 = vpop.f32.mrf.mxu0
  %536 = vdwg.mxu0
  %v537 = vmax.f32 %v475, 0.0
  %v538 = vmax.f32 %v478, 0.0
  %v539 = vmax.f32 %v483, 0.0
  %v540 = vmax.f32 %v486, 0.0
  %v541 = vmax.f32 %v491, 0.0
  %v542 = vmax.f32 %v494, 0.0
  %v543 = vmax.f32 %v499, 0.0
  %v544 = vmax.f32 %v502, 0.0
  %v545 = vmax.f32 %v507, 0.0
  %v546 = vmax.f32 %v510, 0.0
  %v547 = vmax.f32 %v515, 0.0
  %v548 = vmax.f32 %v518, 0.0
  %v549 = vmax.f32 %v523, 0.0
  %v550 = vmax.f32 %v526, 0.0
  %v551 = vmax.f32 %v531, 0.0
  %v552 = vmax.f32 %v534, 0.0
  %v553 = vpack.c.bf16 %v538, %v537
  %v554 = vpack.c.bf16 %v540, %v539
  %v555 = vpack.c.bf16 %v542, %v541
  %v556 = vpack.c.bf16 %v544, %v543
  %v557 = vpack.c.bf16 %v546, %v545
  %v558 = vpack.c.bf16 %v548, %v547
  %v559 = vpack.c.bf16 %v550, %v549
  %v560 = vpack.c.bf16 %v552, %v551
  %v569 = vunpack.c.l.b16 %v553
  %v570 = vunpack.c.h.b16 %v553
  %v571 = vunpack.c.l.b16 %v554
  %v572 = vunpack.c.h.b16 %v554
  %v573 = vunpack.c.l.b16 %v555
  %v574 = vunpack.c.h.b16 %v555
  %v575 = vunpack.c.l.b16 %v556
  %v576 = vunpack.c.h.b16 %v556
  %v577 = vunpack.c.l.b16 %v557
  %v578 = vunpack.c.h.b16 %v557
  %v579 = vunpack.c.l.b16 %v558
  %v580 = vunpack.c.h.b16 %v558
  %v581 = vunpack.c.l.b16 %v559
  %v582 = vunpack.c.h.b16 %v559
  %v583 = vunpack.c.l.b16 %v560
  %v584 = vunpack.c.h.b16 %v560
  %v585 = vpack.c.b16 %v569, %v569
  %v586 = vpack.c.b16 %v570, %v570
  %v587 = vpack.c.b16 %v571, %v571
  %v588 = vpack.c.b16 %v572, %v572
  %v589 = vpack.c.b16 %v573, %v573
  %v590 = vpack.c.b16 %v574, %v574
  %v591 = vpack.c.b16 %v575, %v575
  %v592 = vpack.c.b16 %v576, %v576
  %v593 = vpack.c.b16 %v577, %v577
  %v594 = vpack.c.b16 %v578, %v578
  %v595 = vpack.c.b16 %v579, %v579
  %v596 = vpack.c.b16 %v580, %v580
  %v597 = vpack.c.b16 %v581, %v581
  %v598 = vpack.c.b16 %v582, %v582
  %v599 = vpack.c.b16 %v583, %v583
  %v600 = vpack.c.b16 %v584, %v584
  %vm617 = vcmask 125952
  %618 = vst.msk [vmem:[%s3] sm:$0xf] %vm617, %v585
  %619 = vst.msk [vmem:[%s3 + $0x4] sm:$0xf] %vm617, %v586
  %620 = vst.msk [vmem:[%s3 + $0x8] sm:$0xf] %vm617, %v587
  %621 = vst.msk [vmem:[%s3 + $0xc] sm:$0xf] %vm617, %v588
  %622 = vst.msk [vmem:[%s3 + $0x10] sm:$0xf] %vm617, %v589
  %623 = vst.msk [vmem:[%s3 + $0x14] sm:$0xf] %vm617, %v590
  %624 = vst.msk [vmem:[%s3 + $0x18] sm:$0xf] %vm617, %v591
  %625 = vst.msk [vmem:[%s3 + $0x1c] sm:$0xf] %vm617, %v592
  %626 = vst.msk [vmem:[%s3 + $0x20] sm:$0xf] %vm617, %v593
  %627 = vst.msk [vmem:[%s3 + $0x24] sm:$0xf] %vm617, %v594
  %628 = vst.msk [vmem:[%s3 + $0x28] sm:$0xf] %vm617, %v595
  %629 = vst.msk [vmem:[%s3 + $0x2c] sm:$0xf] %vm617, %v596
  %630 = vst.msk [vmem:[%s3 + $0x30] sm:$0xf] %vm617, %v597
  %631 = vst.msk [vmem:[%s3 + $0x34] sm:$0xf] %vm617, %v598
  %632 = vst.msk [vmem:[%s3 + $0x38] sm:$0xf] %vm617, %v599
  %633 = vst.msk [vmem:[%s3 + $0x3c] sm:$0xf] %vm617, %v600
  // Predicated region
  $region14: #{encoder_forward.14} parent=0 // pred_check
    _
  $region15: #{encoder_forward.14} parent=0 // pred_check_branch
    %635 = sbr.rel (0) target = $region17
  $region16: #{encoder_forward.14} parent=0 // pred_region
    _
  $region17: #{encoder_forward.14} parent=0 // pred_fallthru
    _
  // Predicated region
  $region18: #{encoder_forward.14} parent=0 // pred_check
    _
  $region19: #{encoder_forward.14} parent=0 // pred_check_branch
    %637 = sbr.rel (0) target = $region21
  $region20: #{encoder_forward.14} parent=0 // pred_region
    _
  $region21: #{encoder_forward.14} parent=0 // pred_fallthru
    _

// kernel: encoder_forward.15
$region0: #{encoder_forward.15}
  #allocation0 [shape = 'u32[]', space=smem, size = 0x4, offset = 0x4, fixed_abs, tag = 'smem constant byte address 0x4 - core index']
  #allocation1 [shape = 'u32[144,128]{1,0:T(1,128)}', space=vmem, size = 0x12000, scoped, tag = 'internal scratch']
  %s0 = inlined_call_operand.vmem [shape: bf16[512,64], index: 0, kind: input, shape index: {}]
  %s1 = inlined_call_operand.vmem [shape: bf16[64,8], index: 1, kind: input, shape index: {}]
  %s2 = inlined_call_operand.vmem [shape: f32[1,8], index: 2, kind: input, shape index: {}]
  %s3 = inlined_call_operand.vmem [shape: bf16[512,8], index: 3, kind: output, shape index: {}]
  %s4 = sld [smem:[#allocation0]]
  $region22: #{encoder_forward.15} parent=0
    _
  %s6 = ssub.s32 1, %s4
  %s7 = scalar_select 0, %s6, %s4
  // Predicated region
  $region2: #{encoder_forward.15} parent=0 // pred_check
    _
  $region3: #{encoder_forward.15} parent=0 // pred_check_branch
    %9 = sbr.rel (0) target = $region5
  $region4: #{encoder_forward.15} parent=0 // pred_region
    _
  $region5: #{encoder_forward.15} parent=0 // pred_fallthru
    _
  // Predicated region
  $region6: #{encoder_forward.15} parent=0 // pred_check
    _
  $region7: #{encoder_forward.15} parent=0 // pred_check_branch
    %11 = sbr.rel (0) target = $region9
  $region8: #{encoder_forward.15} parent=0 // pred_region
    _
  $region9: #{encoder_forward.15} parent=0 // pred_fallthru
    _
  // Predicated region
  $region10: #{encoder_forward.15} parent=0 // pred_check
    _
  $region11: #{encoder_forward.15} parent=0 // pred_check_branch
    %13 = sbr.rel (0) target = $region13
  $region12: #{encoder_forward.15} parent=0 // pred_region
    _
  $region13: #{encoder_forward.15} parent=0 // pred_fallthru
    _
  %v15 = vld [vmem:[%s0] sm:$0xf]
  %v16 = vld [vmem:[%s0 + $0x4] sm:$0xf]
  %v17 = vld [vmem:[%s0 + $0x8] sm:$0xf]
  %v18 = vld [vmem:[%s0 + $0xc] sm:$0xf]
  %v19 = vld [vmem:[%s0 + $0x10] sm:$0xf]
  %v20 = vld [vmem:[%s0 + $0x14] sm:$0xf]
  %v21 = vld [vmem:[%s0 + $0x18] sm:$0xf]
  %v22 = vld [vmem:[%s0 + $0x1c] sm:$0xf]
  %v23 = vld [vmem:[%s0 + $0x20] sm:$0xf]
  %v24 = vld [vmem:[%s0 + $0x24] sm:$0xf]
  %v25 = vld [vmem:[%s0 + $0x28] sm:$0xf]
  %v26 = vld [vmem:[%s0 + $0x2c] sm:$0xf]
  %v27 = vld [vmem:[%s0 + $0x30] sm:$0xf]
  %v28 = vld [vmem:[%s0 + $0x34] sm:$0xf]
  %v29 = vld [vmem:[%s0 + $0x38] sm:$0xf]
  %v30 = vld [vmem:[%s0 + $0x3c] sm:$0xf]
  %v31 = vld [vmem:[%s0 + $0x40] sm:$0xf]
  %v32 = vld [vmem:[%s0 + $0x44] sm:$0xf]
  %v33 = vld [vmem:[%s0 + $0x48] sm:$0xf]
  %v34 = vld [vmem:[%s0 + $0x4c] sm:$0xf]
  %v35 = vld [vmem:[%s0 + $0x50] sm:$0xf]
  %v36 = vld [vmem:[%s0 + $0x54] sm:$0xf]
  %v37 = vld [vmem:[%s0 + $0x58] sm:$0xf]
  %v38 = vld [vmem:[%s0 + $0x5c] sm:$0xf]
  %v39 = vld [vmem:[%s0 + $0x60] sm:$0xf]
  %v40 = vld [vmem:[%s0 + $0x64] sm:$0xf]
  %v41 = vld [vmem:[%s0 + $0x68] sm:$0xf]
  %v42 = vld [vmem:[%s0 + $0x6c] sm:$0xf]
  %v43 = vld [vmem:[%s0 + $0x70] sm:$0xf]
  %v44 = vld [vmem:[%s0 + $0x74] sm:$0xf]
  %v45 = vld [vmem:[%s0 + $0x78] sm:$0xf]
  %v46 = vld [vmem:[%s0 + $0x7c] sm:$0xf]
  %v47 = vld [vmem:[%s0 + $0x80] sm:$0xf]
  %v48 = vld [vmem:[%s0 + $0x84] sm:$0xf]
  %v49 = vld [vmem:[%s0 + $0x88] sm:$0xf]
  %v50 = vld [vmem:[%s0 + $0x8c] sm:$0xf]
  %v51 = vld [vmem:[%s0 + $0x90] sm:$0xf]
  %v52 = vld [vmem:[%s0 + $0x94] sm:$0xf]
  %v53 = vld [vmem:[%s0 + $0x98] sm:$0xf]
  %v54 = vld [vmem:[%s0 + $0x9c] sm:$0xf]
  %v55 = vld [vmem:[%s0 + $0xa0] sm:$0xf]
  %v56 = vld [vmem:[%s0 + $0xa4] sm:$0xf]
  %v57 = vld [vmem:[%s0 + $0xa8] sm:$0xf]
  %v58 = vld [vmem:[%s0 + $0xac] sm:$0xf]
  %v59 = vld [vmem:[%s0 + $0xb0] sm:$0xf]
  %v60 = vld [vmem:[%s0 + $0xb4] sm:$0xf]
  %v61 = vld [vmem:[%s0 + $0xb8] sm:$0xf]
  %v62 = vld [vmem:[%s0 + $0xbc] sm:$0xf]
  %v63 = vld [vmem:[%s0 + $0xc0] sm:$0xf]
  %v64 = vld [vmem:[%s0 + $0xc4] sm:$0xf]
  %v65 = vld [vmem:[%s0 + $0xc8] sm:$0xf]
  %v66 = vld [vmem:[%s0 + $0xcc] sm:$0xf]
  %v67 = vld [vmem:[%s0 + $0xd0] sm:$0xf]
  %v68 = vld [vmem:[%s0 + $0xd4] sm:$0xf]
  %v69 = vld [vmem:[%s0 + $0xd8] sm:$0xf]
  %v70 = vld [vmem:[%s0 + $0xdc] sm:$0xf]
  %v71 = vld [vmem:[%s0 + $0xe0] sm:$0xf]
  %v72 = vld [vmem:[%s0 + $0xe4] sm:$0xf]
  %v73 = vld [vmem:[%s0 + $0xe8] sm:$0xf]
  %v74 = vld [vmem:[%s0 + $0xec] sm:$0xf]
  %v75 = vld [vmem:[%s0 + $0xf0] sm:$0xf]
  %v76 = vld [vmem:[%s0 + $0xf4] sm:$0xf]
  %v77 = vld [vmem:[%s0 + $0xf8] sm:$0xf]
  %v78 = vld [vmem:[%s0 + $0xfc] sm:$0xf]
  %v79 = vld [vmem:[%s1] sm:$0xf]
  %v80 = vld [vmem:[%s1 + $0x4] sm:$0xf]
  %v81 = vld [vmem:[%s1 + $0x8] sm:$0xf]
  %v82 = vld [vmem:[%s1 + $0xc] sm:$0xf]
  %v83 = vld [vmem:[%s1 + $0x10] sm:$0xf]
  %v84 = vld [vmem:[%s1 + $0x14] sm:$0xf]
  %v85 = vld [vmem:[%s1 + $0x18] sm:$0xf]
  %v86 = vld [vmem:[%s1 + $0x1c] sm:$0xf]
  %v87 = vld [vmem:[%s2] sm:$0x1]
  %v89 = vlaneseq
  %v90 = vshrl.u32 %v89, 7
  %v91 = vsub.s32 0, %v90
  %v92 = vrot.slane %v87, %v91
  %v158 = vunpack.c.l.b16 %v15
  %v159 = vunpack.c.l.b16 %v16
  %v160 = vunpack.c.l.b16 %v17
  %v161 = vunpack.c.l.b16 %v18
  %v162 = vunpack.c.l.b16 %v19
  %v163 = vunpack.c.l.b16 %v20
  %v164 = vunpack.c.l.b16 %v21
  %v165 = vunpack.c.l.b16 %v22
  %v166 = vunpack.c.l.b16 %v23
  %v167 = vunpack.c.l.b16 %v24
  %v168 = vunpack.c.l.b16 %v25
  %v169 = vunpack.c.l.b16 %v26
  %v170 = vunpack.c.l.b16 %v27
  %v171 = vunpack.c.l.b16 %v28
  %v172 = vunpack.c.l.b16 %v29
  %v173 = vunpack.c.l.b16 %v30
  %v174 = vunpack.c.l.b16 %v31
  %v175 = vunpack.c.l.b16 %v32
  %v176 = vunpack.c.l.b16 %v33
  %v177 = vunpack.c.l.b16 %v34
  %v178 = vunpack.c.l.b16 %v35
  %v179 = vunpack.c.l.b16 %v36
  %v180 = vunpack.c.l.b16 %v37
  %v181 = vunpack.c.l.b16 %v38
  %v182 = vunpack.c.l.b16 %v39
  %v183 = vunpack.c.l.b16 %v40
  %v184 = vunpack.c.l.b16 %v41
  %v185 = vunpack.c.l.b16 %v42
  %v186 = vunpack.c.l.b16 %v43
  %v187 = vunpack.c.l.b16 %v44
  %v188 = vunpack.c.l.b16 %v45
  %v189 = vunpack.c.l.b16 %v46
  %v190 = vunpack.c.l.b16 %v47
  %v191 = vunpack.c.l.b16 %v48
  %v192 = vunpack.c.l.b16 %v49
  %v193 = vunpack.c.l.b16 %v50
  %v194 = vunpack.c.l.b16 %v51
  %v195 = vunpack.c.l.b16 %v52
  %v196 = vunpack.c.l.b16 %v53
  %v197 = vunpack.c.l.b16 %v54
  %v198 = vunpack.c.l.b16 %v55
  %v199 = vunpack.c.l.b16 %v56
  %v200 = vunpack.c.l.b16 %v57
  %v201 = vunpack.c.l.b16 %v58
  %v202 = vunpack.c.l.b16 %v59
  %v203 = vunpack.c.l.b16 %v60
  %v204 = vunpack.c.l.b16 %v61
  %v205 = vunpack.c.l.b16 %v62
  %v206 = vunpack.c.l.b16 %v63
  %v207 = vunpack.c.l.b16 %v64
  %v208 = vunpack.c.l.b16 %v65
  %v209 = vunpack.c.l.b16 %v66
  %v210 = vunpack.c.l.b16 %v67
  %v211 = vunpack.c.l.b16 %v68
  %v212 = vunpack.c.l.b16 %v69
  %v213 = vunpack.c.l.b16 %v70
  %v214 = vunpack.c.l.b16 %v71
  %v215 = vunpack.c.l.b16 %v72
  %v216 = vunpack.c.l.b16 %v73
  %v217 = vunpack.c.l.b16 %v74
  %v218 = vunpack.c.l.b16 %v75
  %v219 = vunpack.c.l.b16 %v76
  %v220 = vunpack.c.l.b16 %v77
  %v221 = vunpack.c.l.b16 %v78
  %v222 = vpack.c.b16 %v159, %v158
  %v223 = vpack.c.b16 %v161, %v160
  %v224 = vpack.c.b16 %v163, %v162
  %v225 = vpack.c.b16 %v165, %v164
  %v226 = vpack.c.b16 %v167, %v166
  %v227 = vpack.c.b16 %v169, %v168
  %v228 = vpack.c.b16 %v171, %v170
  %v229 = vpack.c.b16 %v173, %v172
  %v230 = vpack.c.b16 %v175, %v174
  %v231 = vpack.c.b16 %v177, %v176
  %v232 = vpack.c.b16 %v179, %v178
  %v233 = vpack.c.b16 %v181, %v180
  %v234 = vpack.c.b16 %v183, %v182
  %v235 = vpack.c.b16 %v185, %v184
  %v236 = vpack.c.b16 %v187, %v186
  %v237 = vpack.c.b16 %v189, %v188
  %v238 = vpack.c.b16 %v191, %v190
  %v239 = vpack.c.b16 %v193, %v192
  %v240 = vpack.c.b16 %v195, %v194
  %v241 = vpack.c.b16 %v197, %v196
  %v242 = vpack.c.b16 %v199, %v198
  %v243 = vpack.c.b16 %v201, %v200
  %v244 = vpack.c.b16 %v203, %v202
  %v245 = vpack.c.b16 %v205, %v204
  %v246 = vpack.c.b16 %v207, %v206
  %v247 = vpack.c.b16 %v209, %v208
  %v248 = vpack.c.b16 %v211, %v210
  %v249 = vpack.c.b16 %v213, %v212
  %v250 = vpack.c.b16 %v215, %v214
  %v251 = vpack.c.b16 %v217, %v216
  %v252 = vpack.c.b16 %v219, %v218
  %v253 = vpack.c.b16 %v221, %v220
  %v262 = vunpack.c.l.b16 %v79
  %v263 = vunpack.c.l.b16 %v80
  %v264 = vunpack.c.l.b16 %v81
  %v265 = vunpack.c.l.b16 %v82
  %v266 = vunpack.c.l.b16 %v83
  %v267 = vunpack.c.l.b16 %v84
  %v268 = vunpack.c.l.b16 %v85
  %v269 = vunpack.c.l.b16 %v86
  %v270 = vpack.c.b16 %v263, %v262
  %v271 = vpack.c.b16 %v265, %v264
  %v272 = vpack.c.b16 %v267, %v266
  %v273 = vpack.c.b16 %v269, %v268
  %vm278 = vcmask 523264
  %v280 = vsel %vm278, %v222, 0
  %v283 = vsel %vm278, %v223, 0
  %v286 = vsel %vm278, %v224, 0
  %v289 = vsel %vm278, %v225, 0
  %v292 = vsel %vm278, %v226, 0
  %v295 = vsel %vm278, %v227, 0
  %v298 = vsel %vm278, %v228, 0
  %v301 = vsel %vm278, %v229, 0
  %v304 = vsel %vm278, %v230, 0
  %v307 = vsel %vm278, %v231, 0
  %v310 = vsel %vm278, %v232, 0
  %v313 = vsel %vm278, %v233, 0
  %v316 = vsel %vm278, %v234, 0
  %v319 = vsel %vm278, %v235, 0
  %v322 = vsel %vm278, %v236, 0
  %v325 = vsel %vm278, %v237, 0
  %v328 = vsel %vm278, %v238, 0
  %v331 = vsel %vm278, %v239, 0
  %v334 = vsel %vm278, %v240, 0
  %v337 = vsel %vm278, %v241, 0
  %v340 = vsel %vm278, %v242, 0
  %v343 = vsel %vm278, %v243, 0
  %v346 = vsel %vm278, %v244, 0
  %v349 = vsel %vm278, %v245, 0
  %v352 = vsel %vm278, %v246, 0
  %v355 = vsel %vm278, %v247, 0
  %v358 = vsel %vm278, %v248, 0
  %v361 = vsel %vm278, %v249, 0
  %v364 = vsel %vm278, %v250, 0
  %v367 = vsel %vm278, %v251, 0
  %v370 = vsel %vm278, %v252, 0
  %v373 = vsel %vm278, %v253, 0
  %375 = vmatprep.subr.bf16.mxu0 0
  %376 = vmatpush1.bf16.msra.mxu0 0
  %377 = vmatprep.subr.bf16.mxu0 0
  %378 = vmatpush1.bf16.msra.mxu0 0
  %379 = vmatprep.subr.bf16.mxu0 0
  %380 = vmatpush1.bf16.msra.mxu0 0
  %381 = vmatprep.subr.bf16.mxu0 0
  %382 = vmatpush1.bf16.msra.mxu0 0
  %383 = vmatprep.subr.bf16.mxu0 0
  %384 = vmatpush1.bf16.msra.mxu0 %v273
  %385 = vmatprep.subr.bf16.mxu0 0
  %386 = vmatpush1.bf16.msra.mxu0 %v272
  %387 = vmatprep.subr.bf16.mxu0 0
  %388 = vmatpush1.bf16.msra.mxu0 %v271
  %389 = vmatprep.subr.bf16.mxu0 0
  %390 = vmatpush1.bf16.msra.mxu0 %v270
  %391 = vmatprep.subr.bf16.mxu0 0
  %392 = vmatpush2.bf16.msra.mxu0 0
  %393 = vmatprep.subr.bf16.mxu0 0
  %394 = vmatpush2.bf16.msra.mxu0 0
  %395 = vmatprep.subr.bf16.mxu0 0
  %396 = vmatpush2.bf16.msra.mxu0 0
  %397 = vmatprep.subr.bf16.mxu0 0
  %398 = vmatpush2.bf16.msra.mxu0 0
  %399 = vmatprep.subr.bf16.mxu0 0
  %400 = vmatpush2.bf16.msra.mxu0 0
  %401 = vmatprep.subr.bf16.mxu0 0
  %402 = vmatpush2.bf16.msra.mxu0 0
  %403 = vmatprep.subr.bf16.mxu0 0
  %404 = vmatpush2.bf16.msra.mxu0 0
  %405 = vmatprep.subr.bf16.mxu0 0
  %406 = vmatpush2.bf16.msra.mxu0 0
  %407 = vmatprep.mubr.bf16.mxu0 0
  %408 = vmatmul.mubr.bf16.gmra.mxu0 %v280
  %v409 = vpop.f32.mrf.mxu0
  %v410 = vadd.f32 %v92, %v409
  %v411 = vpop.f32.mrf.mxu0
  %v412 = vpop.f32.mrf.mxu0
  %v413 = vadd.f32 %v92, %v412
  %v414 = vpop.f32.mrf.mxu0
  %415 = vmatprep.mubr.bf16.mxu0 0
  %416 = vmatmul.mubr.bf16.gmra.mxu0 %v283
  %v417 = vpop.f32.mrf.mxu0
  %v418 = vadd.f32 %v92, %v417
  %v419 = vpop.f32.mrf.mxu0
  %v420 = vpop.f32.mrf.mxu0
  %v421 = vadd.f32 %v92, %v420
  %v422 = vpop.f32.mrf.mxu0
  %423 = vmatprep.mubr.bf16.mxu0 0
  %424 = vmatmul.mubr.bf16.gmra.mxu0 %v286
  %v425 = vpop.f32.mrf.mxu0
  %v426 = vadd.f32 %v92, %v425
  %v427 = vpop.f32.mrf.mxu0
  %v428 = vpop.f32.mrf.mxu0
  %v429 = vadd.f32 %v92, %v428
  %v430 = vpop.f32.mrf.mxu0
  %431 = vmatprep.mubr.bf16.mxu0 0
  %432 = vmatmul.mubr.bf16.gmra.mxu0 %v289
  %v433 = vpop.f32.mrf.mxu0
  %v434 = vadd.f32 %v92, %v433
  %v435 = vpop.f32.mrf.mxu0
  %v436 = vpop.f32.mrf.mxu0
  %v437 = vadd.f32 %v92, %v436
  %v438 = vpop.f32.mrf.mxu0
  %439 = vmatprep.mubr.bf16.mxu0 0
  %440 = vmatmul.mubr.bf16.gmra.mxu0 %v292
  %v441 = vpop.f32.mrf.mxu0
  %v442 = vadd.f32 %v92, %v441
  %v443 = vpop.f32.mrf.mxu0
  %v444 = vpop.f32.mrf.mxu0
  %v445 = vadd.f32 %v92, %v444
  %v446 = vpop.f32.mrf.mxu0
  %447 = vmatprep.mubr.bf16.mxu0 0
  %448 = vmatmul.mubr.bf16.gmra.mxu0 %v295
  %v449 = vpop.f32.mrf.mxu0
  %v450 = vadd.f32 %v92, %v449
  %v451 = vpop.f32.mrf.mxu0
  %v452 = vpop.f32.mrf.mxu0
  %v453 = vadd.f32 %v92, %v452
  %v454 = vpop.f32.mrf.mxu0
  %455 = vmatprep.mubr.bf16.mxu0 0
  %456 = vmatmul.mubr.bf16.gmra.mxu0 %v298
  %v457 = vpop.f32.mrf.mxu0
  %v458 = vadd.f32 %v92, %v457
  %v459 = vpop.f32.mrf.mxu0
  %v460 = vpop.f32.mrf.mxu0
  %v461 = vadd.f32 %v92, %v460
  %v462 = vpop.f32.mrf.mxu0
  %463 = vmatprep.mubr.bf16.mxu0 0
  %464 = vmatmul.mubr.bf16.gmra.mxu0 %v301
  %v465 = vpop.f32.mrf.mxu0
  %v466 = vadd.f32 %v92, %v465
  %v467 = vpop.f32.mrf.mxu0
  %v468 = vpop.f32.mrf.mxu0
  %v469 = vadd.f32 %v92, %v468
  %v470 = vpop.f32.mrf.mxu0
  %471 = vmatprep.mubr.bf16.mxu0 0
  %472 = vmatmul.mubr.bf16.gmra.mxu0 %v304
  %v473 = vpop.f32.mrf.mxu0
  %v474 = vadd.f32 %v92, %v473
  %v475 = vpop.f32.mrf.mxu0
  %v476 = vpop.f32.mrf.mxu0
  %v477 = vadd.f32 %v92, %v476
  %v478 = vpop.f32.mrf.mxu0
  %479 = vmatprep.mubr.bf16.mxu0 0
  %480 = vmatmul.mubr.bf16.gmra.mxu0 %v307
  %v481 = vpop.f32.mrf.mxu0
  %v482 = vadd.f32 %v92, %v481
  %v483 = vpop.f32.mrf.mxu0
  %v484 = vpop.f32.mrf.mxu0
  %v485 = vadd.f32 %v92, %v484
  %v486 = vpop.f32.mrf.mxu0
  %487 = vmatprep.mubr.bf16.mxu0 0
  %488 = vmatmul.mubr.bf16.gmra.mxu0 %v310
  %v489 = vpop.f32.mrf.mxu0
  %v490 = vadd.f32 %v92, %v489
  %v491 = vpop.f32.mrf.mxu0
  %v492 = vpop.f32.mrf.mxu0
  %v493 = vadd.f32 %v92, %v492
  %v494 = vpop.f32.mrf.mxu0
  %495 = vmatprep.mubr.bf16.mxu0 0
  %496 = vmatmul.mubr.bf16.gmra.mxu0 %v313
  %v497 = vpop.f32.mrf.mxu0
  %v498 = vadd.f32 %v92, %v497
  %v499 = vpop.f32.mrf.mxu0
  %v500 = vpop.f32.mrf.mxu0
  %v501 = vadd.f32 %v92, %v500
  %v502 = vpop.f32.mrf.mxu0
  %503 = vmatprep.mubr.bf16.mxu0 0
  %504 = vmatmul.mubr.bf16.gmra.mxu0 %v316
  %v505 = vpop.f32.mrf.mxu0
  %v506 = vadd.f32 %v92, %v505
  %v507 = vpop.f32.mrf.mxu0
  %v508 = vpop.f32.mrf.mxu0
  %v509 = vadd.f32 %v92, %v508
  %v510 = vpop.f32.mrf.mxu0
  %511 = vmatprep.mubr.bf16.mxu0 0
  %512 = vmatmul.mubr.bf16.gmra.mxu0 %v319
  %v513 = vpop.f32.mrf.mxu0
  %v514 = vadd.f32 %v92, %v513
  %v515 = vpop.f32.mrf.mxu0
  %v516 = vpop.f32.mrf.mxu0
  %v517 = vadd.f32 %v92, %v516
  %v518 = vpop.f32.mrf.mxu0
  %519 = vmatprep.mubr.bf16.mxu0 0
  %520 = vmatmul.mubr.bf16.gmra.mxu0 %v322
  %v521 = vpop.f32.mrf.mxu0
  %v522 = vadd.f32 %v92, %v521
  %v523 = vpop.f32.mrf.mxu0
  %v524 = vpop.f32.mrf.mxu0
  %v525 = vadd.f32 %v92, %v524
  %v526 = vpop.f32.mrf.mxu0
  %527 = vmatprep.mubr.bf16.mxu0 0
  %528 = vmatmul.mubr.bf16.gmra.mxu0 %v325
  %v529 = vpop.f32.mrf.mxu0
  %v530 = vadd.f32 %v92, %v529
  %v531 = vpop.f32.mrf.mxu0
  %v532 = vpop.f32.mrf.mxu0
  %v533 = vadd.f32 %v92, %v532
  %v534 = vpop.f32.mrf.mxu0
  %535 = vmatprep.mubr.bf16.mxu0 0
  %536 = vmatmul.mubr.bf16.gmra.mxu0 %v328
  %v537 = vpop.f32.mrf.mxu0
  %v538 = vadd.f32 %v92, %v537
  %v539 = vpop.f32.mrf.mxu0
  %v540 = vpop.f32.mrf.mxu0
  %v541 = vadd.f32 %v92, %v540
  %v542 = vpop.f32.mrf.mxu0
  %543 = vmatprep.mubr.bf16.mxu0 0
  %544 = vmatmul.mubr.bf16.gmra.mxu0 %v331
  %v545 = vpop.f32.mrf.mxu0
  %v546 = vadd.f32 %v92, %v545
  %v547 = vpop.f32.mrf.mxu0
  %v548 = vpop.f32.mrf.mxu0
  %v549 = vadd.f32 %v92, %v548
  %v550 = vpop.f32.mrf.mxu0
  %551 = vmatprep.mubr.bf16.mxu0 0
  %552 = vmatmul.mubr.bf16.gmra.mxu0 %v334
  %v553 = vpop.f32.mrf.mxu0
  %v554 = vadd.f32 %v92, %v553
  %v555 = vpop.f32.mrf.mxu0
  %v556 = vpop.f32.mrf.mxu0
  %v557 = vadd.f32 %v92, %v556
  %v558 = vpop.f32.mrf.mxu0
  %559 = vmatprep.mubr.bf16.mxu0 0
  %560 = vmatmul.mubr.bf16.gmra.mxu0 %v337
  %v561 = vpop.f32.mrf.mxu0
  %v562 = vadd.f32 %v92, %v561
  %v563 = vpop.f32.mrf.mxu0
  %v564 = vpop.f32.mrf.mxu0
  %v565 = vadd.f32 %v92, %v564
  %v566 = vpop.f32.mrf.mxu0
  %567 = vmatprep.mubr.bf16.mxu0 0
  %568 = vmatmul.mubr.bf16.gmra.mxu0 %v340
  %v569 = vpop.f32.mrf.mxu0
  %v570 = vadd.f32 %v92, %v569
  %v571 = vpop.f32.mrf.mxu0
  %v572 = vpop.f32.mrf.mxu0
  %v573 = vadd.f32 %v92, %v572
  %v574 = vpop.f32.mrf.mxu0
  %575 = vmatprep.mubr.bf16.mxu0 0
  %576 = vmatmul.mubr.bf16.gmra.mxu0 %v343
  %v577 = vpop.f32.mrf.mxu0
  %v578 = vadd.f32 %v92, %v577
  %v579 = vpop.f32.mrf.mxu0
  %v580 = vpop.f32.mrf.mxu0
  %v581 = vadd.f32 %v92, %v580
  %v582 = vpop.f32.mrf.mxu0
  %583 = vmatprep.mubr.bf16.mxu0 0
  %584 = vmatmul.mubr.bf16.gmra.mxu0 %v346
  %v585 = vpop.f32.mrf.mxu0
  %v586 = vadd.f32 %v92, %v585
  %v587 = vpop.f32.mrf.mxu0
  %v588 = vpop.f32.mrf.mxu0
  %v589 = vadd.f32 %v92, %v588
  %v590 = vpop.f32.mrf.mxu0
  %591 = vmatprep.mubr.bf16.mxu0 0
  %592 = vmatmul.mubr.bf16.gmra.mxu0 %v349
  %v593 = vpop.f32.mrf.mxu0
  %v594 = vadd.f32 %v92, %v593
  %v595 = vpop.f32.mrf.mxu0
  %v596 = vpop.f32.mrf.mxu0
  %v597 = vadd.f32 %v92, %v596
  %v598 = vpop.f32.mrf.mxu0
  %599 = vmatprep.mubr.bf16.mxu0 0
  %600 = vmatmul.mubr.bf16.gmra.mxu0 %v352
  %v601 = vpop.f32.mrf.mxu0
  %v602 = vadd.f32 %v92, %v601
  %v603 = vpop.f32.mrf.mxu0
  %v604 = vpop.f32.mrf.mxu0
  %v605 = vadd.f32 %v92, %v604
  %v606 = vpop.f32.mrf.mxu0
  %607 = vmatprep.mubr.bf16.mxu0 0
  %608 = vmatmul.mubr.bf16.gmra.mxu0 %v355
  %v609 = vpop.f32.mrf.mxu0
  %v610 = vadd.f32 %v92, %v609
  %v611 = vpop.f32.mrf.mxu0
  %v612 = vpop.f32.mrf.mxu0
  %v613 = vadd.f32 %v92, %v612
  %v614 = vpop.f32.mrf.mxu0
  %615 = vmatprep.mubr.bf16.mxu0 0
  %616 = vmatmul.mubr.bf16.gmra.mxu0 %v358
  %v617 = vpop.f32.mrf.mxu0
  %v618 = vadd.f32 %v92, %v617
  %v619 = vpop.f32.mrf.mxu0
  %v620 = vpop.f32.mrf.mxu0
  %v621 = vadd.f32 %v92, %v620
  %v622 = vpop.f32.mrf.mxu0
  %623 = vmatprep.mubr.bf16.mxu0 0
  %624 = vmatmul.mubr.bf16.gmra.mxu0 %v361
  %v625 = vpop.f32.mrf.mxu0
  %v626 = vadd.f32 %v92, %v625
  %v627 = vpop.f32.mrf.mxu0
  %v628 = vpop.f32.mrf.mxu0
  %v629 = vadd.f32 %v92, %v628
  %v630 = vpop.f32.mrf.mxu0
  %631 = vmatprep.mubr.bf16.mxu0 0
  %632 = vmatmul.mubr.bf16.gmra.mxu0 %v364
  %v633 = vpop.f32.mrf.mxu0
  %v634 = vadd.f32 %v92, %v633
  %v635 = vpop.f32.mrf.mxu0
  %v636 = vpop.f32.mrf.mxu0
  %v637 = vadd.f32 %v92, %v636
  %v638 = vpop.f32.mrf.mxu0
  %639 = vmatprep.mubr.bf16.mxu0 0
  %640 = vmatmul.mubr.bf16.gmra.mxu0 %v367
  %v641 = vpop.f32.mrf.mxu0
  %v642 = vadd.f32 %v92, %v641
  %v643 = vpop.f32.mrf.mxu0
  %v644 = vpop.f32.mrf.mxu0
  %v645 = vadd.f32 %v92, %v644
  %v646 = vpop.f32.mrf.mxu0
  %647 = vmatprep.mubr.bf16.mxu0 0
  %648 = vmatmul.mubr.bf16.gmra.mxu0 %v370
  %v649 = vpop.f32.mrf.mxu0
  %v650 = vadd.f32 %v92, %v649
  %v651 = vpop.f32.mrf.mxu0
  %v652 = vpop.f32.mrf.mxu0
  %v653 = vadd.f32 %v92, %v652
  %v654 = vpop.f32.mrf.mxu0
  %655 = vmatprep.mubr.bf16.mxu0 0
  %656 = vmatmul.mubr.bf16.gmra.mxu0 %v373
  %v657 = vpop.f32.mrf.mxu0
  %v658 = vadd.f32 %v92, %v657
  %v659 = vpop.f32.mrf.mxu0
  %v660 = vpop.f32.mrf.mxu0
  %v661 = vadd.f32 %v92, %v660
  %v662 = vpop.f32.mrf.mxu0
  %663 = vdwg.mxu0
  %v664 = vmax.f32 %v410, 0.0
  %v665 = vmax.f32 %v413, 0.0
  %v666 = vmax.f32 %v418, 0.0
  %v667 = vmax.f32 %v421, 0.0
  %v668 = vmax.f32 %v426, 0.0
  %v669 = vmax.f32 %v429, 0.0
  %v670 = vmax.f32 %v434, 0.0
  %v671 = vmax.f32 %v437, 0.0
  %v672 = vmax.f32 %v442, 0.0
  %v673 = vmax.f32 %v445, 0.0
  %v674 = vmax.f32 %v450, 0.0
  %v675 = vmax.f32 %v453, 0.0
  %v676 = vmax.f32 %v458, 0.0
  %v677 = vmax.f32 %v461, 0.0
  %v678 = vmax.f32 %v466, 0.0
  %v679 = vmax.f32 %v469, 0.0
  %v680 = vmax.f32 %v474, 0.0
  %v681 = vmax.f32 %v477, 0.0
  %v682 = vmax.f32 %v482, 0.0
  %v683 = vmax.f32 %v485, 0.0
  %v684 = vmax.f32 %v490, 0.0
  %v685 = vmax.f32 %v493, 0.0
  %v686 = vmax.f32 %v498, 0.0
  %v687 = vmax.f32 %v501, 0.0
  %v688 = vmax.f32 %v506, 0.0
  %v689 = vmax.f32 %v509, 0.0
  %v690 = vmax.f32 %v514, 0.0
  %v691 = vmax.f32 %v517, 0.0
  %v692 = vmax.f32 %v522, 0.0
  %v693 = vmax.f32 %v525, 0.0
  %v694 = vmax.f32 %v530, 0.0
  %v695 = vmax.f32 %v533, 0.0
  %v696 = vmax.f32 %v538, 0.0
  %v697 = vmax.f32 %v541, 0.0
  %v698 = vmax.f32 %v546, 0.0
  %v699 = vmax.f32 %v549, 0.0
  %v700 = vmax.f32 %v554, 0.0
  %v701 = vmax.f32 %v557, 0.0
  %v702 = vmax.f32 %v562, 0.0
  %v703 = vmax.f32 %v565, 0.0
  %v704 = vmax.f32 %v570, 0.0
  %v705 = vmax.f32 %v573, 0.0
  %v706 = vmax.f32 %v578, 0.0
  %v707 = vmax.f32 %v581, 0.0
  %v708 = vmax.f32 %v586, 0.0
  %v709 = vmax.f32 %v589, 0.0
  %v710 = vmax.f32 %v594, 0.0
  %v711 = vmax.f32 %v597, 0.0
  %v712 = vmax.f32 %v602, 0.0
  %v713 = vmax.f32 %v605, 0.0
  %v714 = vmax.f32 %v610, 0.0
  %v715 = vmax.f32 %v613, 0.0
  %v716 = vmax.f32 %v618, 0.0
  %v717 = vmax.f32 %v621, 0.0
  %v718 = vmax.f32 %v626, 0.0
  %v719 = vmax.f32 %v629, 0.0
  %v720 = vmax.f32 %v634, 0.0
  %v721 = vmax.f32 %v637, 0.0
  %v722 = vmax.f32 %v642, 0.0
  %v723 = vmax.f32 %v645, 0.0
  %v724 = vmax.f32 %v650, 0.0
  %v725 = vmax.f32 %v653, 0.0
  %v726 = vmax.f32 %v658, 0.0
  %v727 = vmax.f32 %v661, 0.0
  %v728 = vpack.c.bf16 %v665, %v664
  %v729 = vpack.c.bf16 %v667, %v666
  %v730 = vpack.c.bf16 %v669, %v668
  %v731 = vpack.c.bf16 %v671, %v670
  %v732 = vpack.c.bf16 %v673, %v672
  %v733 = vpack.c.bf16 %v675, %v674
  %v734 = vpack.c.bf16 %v677, %v676
  %v735 = vpack.c.bf16 %v679, %v678
  %v736 = vpack.c.bf16 %v681, %v680
  %v737 = vpack.c.bf16 %v683, %v682
  %v738 = vpack.c.bf16 %v685, %v684
  %v739 = vpack.c.bf16 %v687, %v686
  %v740 = vpack.c.bf16 %v689, %v688
  %v741 = vpack.c.bf16 %v691, %v690
  %v742 = vpack.c.bf16 %v693, %v692
  %v743 = vpack.c.bf16 %v695, %v694
  %v744 = vpack.c.bf16 %v697, %v696
  %v745 = vpack.c.bf16 %v699, %v698
  %v746 = vpack.c.bf16 %v701, %v700
  %v747 = vpack.c.bf16 %v703, %v702
  %v748 = vpack.c.bf16 %v705, %v704
  %v749 = vpack.c.bf16 %v707, %v706
  %v750 = vpack.c.bf16 %v709, %v708
  %v751 = vpack.c.bf16 %v711, %v710
  %v752 = vpack.c.bf16 %v713, %v712
  %v753 = vpack.c.bf16 %v715, %v714
  %v754 = vpack.c.bf16 %v717, %v716
  %v755 = vpack.c.bf16 %v719, %v718
  %v756 = vpack.c.bf16 %v721, %v720
  %v757 = vpack.c.bf16 %v723, %v722
  %v758 = vpack.c.bf16 %v725, %v724
  %v759 = vpack.c.bf16 %v727, %v726
  %v792 = vunpack.c.l.b16 %v728
  %v793 = vunpack.c.h.b16 %v728
  %v794 = vunpack.c.l.b16 %v729
  %v795 = vunpack.c.h.b16 %v729
  %v796 = vunpack.c.l.b16 %v730
  %v797 = vunpack.c.h.b16 %v730
  %v798 = vunpack.c.l.b16 %v731
  %v799 = vunpack.c.h.b16 %v731
  %v800 = vunpack.c.l.b16 %v732
  %v801 = vunpack.c.h.b16 %v732
  %v802 = vunpack.c.l.b16 %v733
  %v803 = vunpack.c.h.b16 %v733
  %v804 = vunpack.c.l.b16 %v734
  %v805 = vunpack.c.h.b16 %v734
  %v806 = vunpack.c.l.b16 %v735
  %v807 = vunpack.c.h.b16 %v735
  %v808 = vunpack.c.l.b16 %v736
  %v809 = vunpack.c.h.b16 %v736
  %v810 = vunpack.c.l.b16 %v737
  %v811 = vunpack.c.h.b16 %v737
  %v812 = vunpack.c.l.b16 %v738
  %v813 = vunpack.c.h.b16 %v738
  %v814 = vunpack.c.l.b16 %v739
  %v815 = vunpack.c.h.b16 %v739
  %v816 = vunpack.c.l.b16 %v740
  %v817 = vunpack.c.h.b16 %v740
  %v818 = vunpack.c.l.b16 %v741
  %v819 = vunpack.c.h.b16 %v741
  %v820 = vunpack.c.l.b16 %v742
  %v821 = vunpack.c.h.b16 %v742
  %v822 = vunpack.c.l.b16 %v743
  %v823 = vunpack.c.h.b16 %v743
  %v824 = vunpack.c.l.b16 %v744
  %v825 = vunpack.c.h.b16 %v744
  %v826 = vunpack.c.l.b16 %v745
  %v827 = vunpack.c.h.b16 %v745
  %v828 = vunpack.c.l.b16 %v746
  %v829 = vunpack.c.h.b16 %v746
  %v830 = vunpack.c.l.b16 %v747
  %v831 = vunpack.c.h.b16 %v747
  %v832 = vunpack.c.l.b16 %v748
  %v833 = vunpack.c.h.b16 %v748
  %v834 = vunpack.c.l.b16 %v749
  %v835 = vunpack.c.h.b16 %v749
  %v836 = vunpack.c.l.b16 %v750
  %v837 = vunpack.c.h.b16 %v750
  %v838 = vunpack.c.l.b16 %v751
  %v839 = vunpack.c.h.b16 %v751
  %v840 = vunpack.c.l.b16 %v752
  %v841 = vunpack.c.h.b16 %v752
  %v842 = vunpack.c.l.b16 %v753
  %v843 = vunpack.c.h.b16 %v753
  %v844 = vunpack.c.l.b16 %v754
  %v845 = vunpack.c.h.b16 %v754
  %v846 = vunpack.c.l.b16 %v755
  %v847 = vunpack.c.h.b16 %v755
  %v848 = vunpack.c.l.b16 %v756
  %v849 = vunpack.c.h.b16 %v756
  %v850 = vunpack.c.l.b16 %v757
  %v851 = vunpack.c.h.b16 %v757
  %v852 = vunpack.c.l.b16 %v758
  %v853 = vunpack.c.h.b16 %v758
  %v854 = vunpack.c.l.b16 %v759
  %v855 = vunpack.c.h.b16 %v759
  %v856 = vpack.c.b16 %v792, %v792
  %v857 = vpack.c.b16 %v793, %v793
  %v858 = vpack.c.b16 %v794, %v794
  %v859 = vpack.c.b16 %v795, %v795
  %v860 = vpack.c.b16 %v796, %v796
  %v861 = vpack.c.b16 %v797, %v797
  %v862 = vpack.c.b16 %v798, %v798
  %v863 = vpack.c.b16 %v799, %v799
  %v864 = vpack.c.b16 %v800, %v800
  %v865 = vpack.c.b16 %v801, %v801
  %v866 = vpack.c.b16 %v802, %v802
  %v867 = vpack.c.b16 %v803, %v803
  %v868 = vpack.c.b16 %v804, %v804
  %v869 = vpack.c.b16 %v805, %v805
  %v870 = vpack.c.b16 %v806, %v806
  %v871 = vpack.c.b16 %v807, %v807
  %v872 = vpack.c.b16 %v808, %v808
  %v873 = vpack.c.b16 %v809, %v809
  %v874 = vpack.c.b16 %v810, %v810
  %v875 = vpack.c.b16 %v811, %v811
  %v876 = vpack.c.b16 %v812, %v812
  %v877 = vpack.c.b16 %v813, %v813
  %v878 = vpack.c.b16 %v814, %v814
  %v879 = vpack.c.b16 %v815, %v815
  %v880 = vpack.c.b16 %v816, %v816
  %v881 = vpack.c.b16 %v817, %v817
  %v882 = vpack.c.b16 %v818, %v818
  %v883 = vpack.c.b16 %v819, %v819
  %v884 = vpack.c.b16 %v820, %v820
  %v885 = vpack.c.b16 %v821, %v821
  %v886 = vpack.c.b16 %v822, %v822
  %v887 = vpack.c.b16 %v823, %v823
  %v888 = vpack.c.b16 %v824, %v824
  %v889 = vpack.c.b16 %v825, %v825
  %v890 = vpack.c.b16 %v826, %v826
  %v891 = vpack.c.b16 %v827, %v827
  %v892 = vpack.c.b16 %v828, %v828
  %v893 = vpack.c.b16 %v829, %v829
  %v894 = vpack.c.b16 %v830, %v830
  %v895 = vpack.c.b16 %v831, %v831
  %v896 = vpack.c.b16 %v832, %v832
  %v897 = vpack.c.b16 %v833, %v833
  %v898 = vpack.c.b16 %v834, %v834
  %v899 = vpack.c.b16 %v835, %v835
  %v900 = vpack.c.b16 %v836, %v836
  %v901 = vpack.c.b16 %v837, %v837
  %v902 = vpack.c.b16 %v838, %v838
  %v903 = vpack.c.b16 %v839, %v839
  %v904 = vpack.c.b16 %v840, %v840
  %v905 = vpack.c.b16 %v841, %v841
  %v906 = vpack.c.b16 %v842, %v842
  %v907 = vpack.c.b16 %v843, %v843
  %v908 = vpack.c.b16 %v844, %v844
  %v909 = vpack.c.b16 %v845, %v845
  %v910 = vpack.c.b16 %v846, %v846
  %v911 = vpack.c.b16 %v847, %v847
  %v912 = vpack.c.b16 %v848, %v848
  %v913 = vpack.c.b16 %v849, %v849
  %v914 = vpack.c.b16 %v850, %v850
  %v915 = vpack.c.b16 %v851, %v851
  %v916 = vpack.c.b16 %v852, %v852
  %v917 = vpack.c.b16 %v853, %v853
  %v918 = vpack.c.b16 %v854, %v854
  %v919 = vpack.c.b16 %v855, %v855
  %vm984 = vcmask 60416
  %985 = vst.msk [vmem:[%s3] sm:$0xf] %vm984, %v856
  %986 = vst.msk [vmem:[%s3 + $0x4] sm:$0xf] %vm984, %v857
  %987 = vst.msk [vmem:[%s3 + $0x8] sm:$0xf] %vm984, %v858
  %988 = vst.msk [vmem:[%s3 + $0xc] sm:$0xf] %vm984, %v859
  %989 = vst.msk [vmem:[%s3 + $0x10] sm:$0xf] %vm984, %v860
  %990 = vst.msk [vmem:[%s3 + $0x14] sm:$0xf] %vm984, %v861
  %991 = vst.msk [vmem:[%s3 + $0x18] sm:$0xf] %vm984, %v862
  %992 = vst.msk [vmem:[%s3 + $0x1c] sm:$0xf] %vm984, %v863
  %993 = vst.msk [vmem:[%s3 + $0x20] sm:$0xf] %vm984, %v864
  %994 = vst.msk [vmem:[%s3 + $0x24] sm:$0xf] %vm984, %v865
  %995 = vst.msk [vmem:[%s3 + $0x28] sm:$0xf] %vm984, %v866
  %996 = vst.msk [vmem:[%s3 + $0x2c] sm:$0xf] %vm984, %v867
  %997 = vst.msk [vmem:[%s3 + $0x30] sm:$0xf] %vm984, %v868
  %998 = vst.msk [vmem:[%s3 + $0x34] sm:$0xf] %vm984, %v869
  %999 = vst.msk [vmem:[%s3 + $0x38] sm:$0xf] %vm984, %v870
  %1000 = vst.msk [vmem:[%s3 + $0x3c] sm:$0xf] %vm984, %v871
  %1001 = vst.msk [vmem:[%s3 + $0x40] sm:$0xf] %vm984, %v872
  %1002 = vst.msk [vmem:[%s3 + $0x44] sm:$0xf] %vm984, %v873
  %1003 = vst.msk [vmem:[%s3 + $0x48] sm:$0xf] %vm984, %v874
  %1004 = vst.msk [vmem:[%s3 + $0x4c] sm:$0xf] %vm984, %v875
  %1005 = vst.msk [vmem:[%s3 + $0x50] sm:$0xf] %vm984, %v876
  %1006 = vst.msk [vmem:[%s3 + $0x54] sm:$0xf] %vm984, %v877
  %1007 = vst.msk [vmem:[%s3 + $0x58] sm:$0xf] %vm984, %v878
  %1008 = vst.msk [vmem:[%s3 + $0x5c] sm:$0xf] %vm984, %v879
  %1009 = vst.msk [vmem:[%s3 + $0x60] sm:$0xf] %vm984, %v880
  %1010 = vst.msk [vmem:[%s3 + $0x64] sm:$0xf] %vm984, %v881
  %1011 = vst.msk [vmem:[%s3 + $0x68] sm:$0xf] %vm984, %v882
  %1012 = vst.msk [vmem:[%s3 + $0x6c] sm:$0xf] %vm984, %v883
  %1013 = vst.msk [vmem:[%s3 + $0x70] sm:$0xf] %vm984, %v884
  %1014 = vst.msk [vmem:[%s3 + $0x74] sm:$0xf] %vm984, %v885
  %1015 = vst.msk [vmem:[%s3 + $0x78] sm:$0xf] %vm984, %v886
  %1016 = vst.msk [vmem:[%s3 + $0x7c] sm:$0xf] %vm984, %v887
  %1017 = vst.msk [vmem:[%s3 + $0x80] sm:$0xf] %vm984, %v888
  %1018 = vst.msk [vmem:[%s3 + $0x84] sm:$0xf] %vm984, %v889
  %1019 = vst.msk [vmem:[%s3 + $0x88] sm:$0xf] %vm984, %v890
  %1020 = vst.msk [vmem:[%s3 + $0x8c] sm:$0xf] %vm984, %v891
  %1021 = vst.msk [vmem:[%s3 + $0x90] sm:$0xf] %vm984, %v892
  %1022 = vst.msk [vmem:[%s3 + $0x94] sm:$0xf] %vm984, %v893
  %1023 = vst.msk [vmem:[%s3 + $0x98] sm:$0xf] %vm984, %v894
  %1024 = vst.msk [vmem:[%s3 + $0x9c] sm:$0xf] %vm984, %v895
  %1025 = vst.msk [vmem:[%s3 + $0xa0] sm:$0xf] %vm984, %v896
  %1026 = vst.msk [vmem:[%s3 + $0xa4] sm:$0xf] %vm984, %v897
  %1027 = vst.msk [vmem:[%s3 + $0xa8] sm:$0xf] %vm984, %v898
  %1028 = vst.msk [vmem:[%s3 + $0xac] sm:$0xf] %vm984, %v899
  %1029 = vst.msk [vmem:[%s3 + $0xb0] sm:$0xf] %vm984, %v900
  %1030 = vst.msk [vmem:[%s3 + $0xb4] sm:$0xf] %vm984, %v901
  %1031 = vst.msk [vmem:[%s3 + $0xb8] sm:$0xf] %vm984, %v902
  %1032 = vst.msk [vmem:[%s3 + $0xbc] sm:$0xf] %vm984, %v903
  %1033 = vst.msk [vmem:[%s3 + $0xc0] sm:$0xf] %vm984, %v904
  %1034 = vst.msk [vmem:[%s3 + $0xc4] sm:$0xf] %vm984, %v905
  %1035 = vst.msk [vmem:[%s3 + $0xc8] sm:$0xf] %vm984, %v906
  %1036 = vst.msk [vmem:[%s3 + $0xcc] sm:$0xf] %vm984, %v907
  %1037 = vst.msk [vmem:[%s3 + $0xd0] sm:$0xf] %vm984, %v908
  %1038 = vst.msk [vmem:[%s3 + $0xd4] sm:$0xf] %vm984, %v909
  %1039 = vst.msk [vmem:[%s3 + $0xd8] sm:$0xf] %vm984, %v910
  %1040 = vst.msk [vmem:[%s3 + $0xdc] sm:$0xf] %vm984, %v911
  %1041 = vst.msk [vmem:[%s3 + $0xe0] sm:$0xf] %vm984, %v912
  %1042 = vst.msk [vmem:[%s3 + $0xe4] sm:$0xf] %vm984, %v913
  %1043 = vst.msk [vmem:[%s3 + $0xe8] sm:$0xf] %vm984, %v914
  %1044 = vst.msk [vmem:[%s3 + $0xec] sm:$0xf] %vm984, %v915
  %1045 = vst.msk [vmem:[%s3 + $0xf0] sm:$0xf] %vm984, %v916
  %1046 = vst.msk [vmem:[%s3 + $0xf4] sm:$0xf] %vm984, %v917
  %1047 = vst.msk [vmem:[%s3 + $0xf8] sm:$0xf] %vm984, %v918
  %1048 = vst.msk [vmem:[%s3 + $0xfc] sm:$0xf] %vm984, %v919
  // Predicated region
  $region14: #{encoder_forward.15} parent=0 // pred_check
    _
  $region15: #{encoder_forward.15} parent=0 // pred_check_branch
    %1050 = sbr.rel (0) target = $region17
  $region16: #{encoder_forward.15} parent=0 // pred_region
    _
  $region17: #{encoder_forward.15} parent=0 // pred_fallthru
    _
  // Predicated region
  $region18: #{encoder_forward.15} parent=0 // pred_check
    _
  $region19: #{encoder_forward.15} parent=0 // pred_check_branch
    %1052 = sbr.rel (0) target = $region21
  $region20: #{encoder_forward.15} parent=0 // pred_region
    _
  $region21: #{encoder_forward.15} parent=0 // pred_fallthru
    _

// kernel: encoder_forward.16
$region0: #{encoder_forward.16}
  #allocation0 [shape = 'u32[]', space=smem, size = 0x4, offset = 0x4, fixed_abs, tag = 'smem constant byte address 0x4 - core index']
  #allocation1 [shape = 'u32[144,128]{1,0:T(1,128)}', space=vmem, size = 0x12000, scoped, tag = 'internal scratch']
  %s0 = inlined_call_operand.vmem [shape: bf16[512,198], index: 0, kind: input, shape index: {}]
  %s1 = inlined_call_operand.vmem [shape: bf16[198,8], index: 1, kind: input, shape index: {}]
  %s2 = inlined_call_operand.vmem [shape: f32[1,8], index: 2, kind: input, shape index: {}]
  %s3 = inlined_call_operand.vmem [shape: bf16[512,8], index: 3, kind: output, shape index: {}]
  %s4 = sld [smem:[#allocation0]]
  $region22: #{encoder_forward.16} parent=0
    _
  %s6 = ssub.s32 1, %s4
  %s7 = scalar_select 0, %s6, %s4
  // Predicated region
  $region2: #{encoder_forward.16} parent=0 // pred_check
    _
  $region3: #{encoder_forward.16} parent=0 // pred_check_branch
    %9 = sbr.rel (0) target = $region5
  $region4: #{encoder_forward.16} parent=0 // pred_region
    _
  $region5: #{encoder_forward.16} parent=0 // pred_fallthru
    _
  // Predicated region
  $region6: #{encoder_forward.16} parent=0 // pred_check
    _
  $region7: #{encoder_forward.16} parent=0 // pred_check_branch
    %11 = sbr.rel (0) target = $region9
  $region8: #{encoder_forward.16} parent=0 // pred_region
    _
  $region9: #{encoder_forward.16} parent=0 // pred_fallthru
    _
  // Predicated region
  $region10: #{encoder_forward.16} parent=0 // pred_check
    _
  $region11: #{encoder_forward.16} parent=0 // pred_check_branch
    %13 = sbr.rel (0) target = $region13
  $region12: #{encoder_forward.16} parent=0 // pred_region
    _
  $region13: #{encoder_forward.16} parent=0 // pred_fallthru
    _
  %v15 = vld [vmem:[%s0] sm:$0xff]
  %v16 = vld [vmem:[%s0 + $0x8] sm:$0xff]
  %v17 = vld [vmem:[%s0 + $0x10] sm:$0xff]
  %v18 = vld [vmem:[%s0 + $0x18] sm:$0xff]
  %v19 = vld [vmem:[%s0 + $0x20] sm:$0xff]
  %v20 = vld [vmem:[%s0 + $0x28] sm:$0xff]
  %v21 = vld [vmem:[%s0 + $0x30] sm:$0xff]
  %v22 = vld [vmem:[%s0 + $0x38] sm:$0xff]
  %v23 = vld [vmem:[%s0 + $0x40] sm:$0xff]
  %v24 = vld [vmem:[%s0 + $0x48] sm:$0xff]
  %v25 = vld [vmem:[%s0 + $0x50] sm:$0xff]
  %v26 = vld [vmem:[%s0 + $0x58] sm:$0xff]
  %v27 = vld [vmem:[%s0 + $0x60] sm:$0xff]
  %v28 = vld [vmem:[%s0 + $0x68] sm:$0xff]
  %v29 = vld [vmem:[%s0 + $0x70] sm:$0xff]
  %v30 = vld [vmem:[%s0 + $0x78] sm:$0xff]
  %v31 = vld [vmem:[%s0 + $0x80] sm:$0xff]
  %v32 = vld [vmem:[%s0 + $0x88] sm:$0xff]
  %v33 = vld [vmem:[%s0 + $0x90] sm:$0xff]
  %v34 = vld [vmem:[%s0 + $0x98] sm:$0xff]
  %v35 = vld [vmem:[%s0 + $0xa0] sm:$0xff]
  %v36 = vld [vmem:[%s0 + $0xa8] sm:$0xff]
  %v37 = vld [vmem:[%s0 + $0xb0] sm:$0xff]
  %v38 = vld [vmem:[%s0 + $0xb8] sm:$0xff]
  %v39 = vld [vmem:[%s0 + $0xc0] sm:$0xff]
  %v40 = vld [vmem:[%s0 + $0xc8] sm:$0xff]
  %v41 = vld [vmem:[%s0 + $0xd0] sm:$0xff]
  %v42 = vld [vmem:[%s0 + $0xd8] sm:$0xff]
  %v43 = vld [vmem:[%s0 + $0xe0] sm:$0xff]
  %v44 = vld [vmem:[%s0 + $0xe8] sm:$0xff]
  %v45 = vld [vmem:[%s0 + $0xf0] sm:$0xff]
  %v46 = vld [vmem:[%s0 + $0xf8] sm:$0xff]
  %v47 = vld [vmem:[%s0 + $0x100] sm:$0xff]
  %v48 = vld [vmem:[%s0 + $0x108] sm:$0xff]
  %v49 = vld [vmem:[%s0 + $0x110] sm:$0xff]
  %v50 = vld [vmem:[%s0 + $0x118] sm:$0xff]
  %v51 = vld [vmem:[%s0 + $0x120] sm:$0xff]
  %v52 = vld [vmem:[%s0 + $0x128] sm:$0xff]
  %v53 = vld [vmem:[%s0 + $0x130] sm:$0xff]
  %v54 = vld [vmem:[%s0 + $0x138] sm:$0xff]
  %v55 = vld [vmem:[%s0 + $0x140] sm:$0xff]
  %v56 = vld [vmem:[%s0 + $0x148] sm:$0xff]
  %v57 = vld [vmem:[%s0 + $0x150] sm:$0xff]
  %v58 = vld [vmem:[%s0 + $0x158] sm:$0xff]
  %v59 = vld [vmem:[%s0 + $0x160] sm:$0xff]
  %v60 = vld [vmem:[%s0 + $0x168] sm:$0xff]
  %v61 = vld [vmem:[%s0 + $0x170] sm:$0xff]
  %v62 = vld [vmem:[%s0 + $0x178] sm:$0xff]
  %v63 = vld [vmem:[%s0 + $0x180] sm:$0xff]
  %v64 = vld [vmem:[%s0 + $0x188] sm:$0xff]
  %v65 = vld [vmem:[%s0 + $0x190] sm:$0xff]
  %v66 = vld [vmem:[%s0 + $0x198] sm:$0xff]
  %v67 = vld [vmem:[%s0 + $0x1a0] sm:$0xff]
  %v68 = vld [vmem:[%s0 + $0x1a8] sm:$0xff]
  %v69 = vld [vmem:[%s0 + $0x1b0] sm:$0xff]
  %v70 = vld [vmem:[%s0 + $0x1b8] sm:$0xff]
  %v71 = vld [vmem:[%s0 + $0x1c0] sm:$0xff]
  %v72 = vld [vmem:[%s0 + $0x1c8] sm:$0xff]
  %v73 = vld [vmem:[%s0 + $0x1d0] sm:$0xff]
  %v74 = vld [vmem:[%s0 + $0x1d8] sm:$0xff]
  %v75 = vld [vmem:[%s0 + $0x1e0] sm:$0xff]
  %v76 = vld [vmem:[%s0 + $0x1e8] sm:$0xff]
  %v77 = vld [vmem:[%s0 + $0x1f0] sm:$0xff]
  %v78 = vld [vmem:[%s0 + $0x1f8] sm:$0xff]
  %v79 = vld [vmem:[%s1] sm:$0xf]
  %v80 = vld [vmem:[%s1 + $0x4] sm:$0xf]
  %v81 = vld [vmem:[%s1 + $0x8] sm:$0xf]
  %v82 = vld [vmem:[%s1 + $0xc] sm:$0xf]
  %v83 = vld [vmem:[%s1 + $0x10] sm:$0xf]
  %v84 = vld [vmem:[%s1 + $0x14] sm:$0xf]
  %v85 = vld [vmem:[%s1 + $0x18] sm:$0xf]
  %v86 = vld [vmem:[%s1 + $0x1c] sm:$0xf]
  %v87 = vld [vmem:[%s1 + $0x20] sm:$0xf]
  %v88 = vld [vmem:[%s1 + $0x24] sm:$0xf]
  %v89 = vld [vmem:[%s1 + $0x28] sm:$0xf]
  %v90 = vld [vmem:[%s1 + $0x2c] sm:$0xf]
  %v91 = vld [vmem:[%s1 + $0x30] sm:$0xf]
  %v92 = vld [vmem:[%s1 + $0x34] sm:$0xf]
  %v93 = vld [vmem:[%s1 + $0x38] sm:$0xf]
  %v94 = vld [vmem:[%s1 + $0x3c] sm:$0xf]
  %v95 = vld [vmem:[%s1 + $0x40] sm:$0xf]
  %v96 = vld [vmem:[%s1 + $0x44] sm:$0xf]
  %v97 = vld [vmem:[%s1 + $0x48] sm:$0xf]
  %v98 = vld [vmem:[%s1 + $0x4c] sm:$0xf]
  %v99 = vld [vmem:[%s1 + $0x50] sm:$0xf]
  %v100 = vld [vmem:[%s1 + $0x54] sm:$0xf]
  %v101 = vld [vmem:[%s1 + $0x58] sm:$0xf]
  %v102 = vld [vmem:[%s1 + $0x5c] sm:$0xf]
  %v103 = vld [vmem:[%s1 + $0x60] sm:$0x7]
  %v104 = vld [vmem:[%s2] sm:$0x1]
  %v106 = vlaneseq
  %v107 = vshrl.u32 %v106, 7
  %v108 = vsub.s32 0, %v107
  %v109 = vrot.slane %v104, %v108
  %v175 = vunpack.c.l.b16 %v15
  %v176 = vunpack.c.h.b16 %v15
  %v177 = vunpack.c.l.b16 %v16
  %v178 = vunpack.c.h.b16 %v16
  %v179 = vunpack.c.l.b16 %v17
  %v180 = vunpack.c.h.b16 %v17
  %v181 = vunpack.c.l.b16 %v18
  %v182 = vunpack.c.h.b16 %v18
  %v183 = vunpack.c.l.b16 %v19
  %v184 = vunpack.c.h.b16 %v19
  %v185 = vunpack.c.l.b16 %v20
  %v186 = vunpack.c.h.b16 %v20
  %v187 = vunpack.c.l.b16 %v21
  %v188 = vunpack.c.h.b16 %v21
  %v189 = vunpack.c.l.b16 %v22
  %v190 = vunpack.c.h.b16 %v22
  %v191 = vunpack.c.l.b16 %v23
  %v192 = vunpack.c.h.b16 %v23
  %v193 = vunpack.c.l.b16 %v24
  %v194 = vunpack.c.h.b16 %v24
  %v195 = vunpack.c.l.b16 %v25
  %v196 = vunpack.c.h.b16 %v25
  %v197 = vunpack.c.l.b16 %v26
  %v198 = vunpack.c.h.b16 %v26
  %v199 = vunpack.c.l.b16 %v27
  %v200 = vunpack.c.h.b16 %v27
  %v201 = vunpack.c.l.b16 %v28
  %v202 = vunpack.c.h.b16 %v28
  %v203 = vunpack.c.l.b16 %v29
  %v204 = vunpack.c.h.b16 %v29
  %v205 = vunpack.c.l.b16 %v30
  %v206 = vunpack.c.h.b16 %v30
  %v207 = vunpack.c.l.b16 %v31
  %v208 = vunpack.c.h.b16 %v31
  %v209 = vunpack.c.l.b16 %v32
  %v210 = vunpack.c.h.b16 %v32
  %v211 = vunpack.c.l.b16 %v33
  %v212 = vunpack.c.h.b16 %v33
  %v213 = vunpack.c.l.b16 %v34
  %v214 = vunpack.c.h.b16 %v34
  %v215 = vunpack.c.l.b16 %v35
  %v216 = vunpack.c.h.b16 %v35
  %v217 = vunpack.c.l.b16 %v36
  %v218 = vunpack.c.h.b16 %v36
  %v219 = vunpack.c.l.b16 %v37
  %v220 = vunpack.c.h.b16 %v37
  %v221 = vunpack.c.l.b16 %v38
  %v222 = vunpack.c.h.b16 %v38
  %v223 = vunpack.c.l.b16 %v39
  %v224 = vunpack.c.h.b16 %v39
  %v225 = vunpack.c.l.b16 %v40
  %v226 = vunpack.c.h.b16 %v40
  %v227 = vunpack.c.l.b16 %v41
  %v228 = vunpack.c.h.b16 %v41
  %v229 = vunpack.c.l.b16 %v42
  %v230 = vunpack.c.h.b16 %v42
  %v231 = vunpack.c.l.b16 %v43
  %v232 = vunpack.c.h.b16 %v43
  %v233 = vunpack.c.l.b16 %v44
  %v234 = vunpack.c.h.b16 %v44
  %v235 = vunpack.c.l.b16 %v45
  %v236 = vunpack.c.h.b16 %v45
  %v237 = vunpack.c.l.b16 %v46
  %v238 = vunpack.c.h.b16 %v46
  %v239 = vunpack.c.l.b16 %v47
  %v240 = vunpack.c.h.b16 %v47
  %v241 = vunpack.c.l.b16 %v48
  %v242 = vunpack.c.h.b16 %v48
  %v243 = vunpack.c.l.b16 %v49
  %v244 = vunpack.c.h.b16 %v49
  %v245 = vunpack.c.l.b16 %v50
  %v246 = vunpack.c.h.b16 %v50
  %v247 = vunpack.c.l.b16 %v51
  %v248 = vunpack.c.h.b16 %v51
  %v249 = vunpack.c.l.b16 %v52
  %v250 = vunpack.c.h.b16 %v52
  %v251 = vunpack.c.l.b16 %v53
  %v252 = vunpack.c.h.b16 %v53
  %v253 = vunpack.c.l.b16 %v54
  %v254 = vunpack.c.h.b16 %v54
  %v255 = vunpack.c.l.b16 %v55
  %v256 = vunpack.c.h.b16 %v55
  %v257 = vunpack.c.l.b16 %v56
  %v258 = vunpack.c.h.b16 %v56
  %v259 = vunpack.c.l.b16 %v57
  %v260 = vunpack.c.h.b16 %v57
  %v261 = vunpack.c.l.b16 %v58
  %v262 = vunpack.c.h.b16 %v58
  %v263 = vunpack.c.l.b16 %v59
  %v264 = vunpack.c.h.b16 %v59
  %v265 = vunpack.c.l.b16 %v60
  %v266 = vunpack.c.h.b16 %v60
  %v267 = vunpack.c.l.b16 %v61
  %v268 = vunpack.c.h.b16 %v61
  %v269 = vunpack.c.l.b16 %v62
  %v270 = vunpack.c.h.b16 %v62
  %v271 = vunpack.c.l.b16 %v63
  %v272 = vunpack.c.h.b16 %v63
  %v273 = vunpack.c.l.b16 %v64
  %v274 = vunpack.c.h.b16 %v64
  %v275 = vunpack.c.l.b16 %v65
  %v276 = vunpack.c.h.b16 %v65
  %v277 = vunpack.c.l.b16 %v66
  %v278 = vunpack.c.h.b16 %v66
  %v279 = vunpack.c.l.b16 %v67
  %v280 = vunpack.c.h.b16 %v67
  %v281 = vunpack.c.l.b16 %v68
  %v282 = vunpack.c.h.b16 %v68
  %v283 = vunpack.c.l.b16 %v69
  %v284 = vunpack.c.h.b16 %v69
  %v285 = vunpack.c.l.b16 %v70
  %v286 = vunpack.c.h.b16 %v70
  %v287 = vunpack.c.l.b16 %v71
  %v288 = vunpack.c.h.b16 %v71
  %v289 = vunpack.c.l.b16 %v72
  %v290 = vunpack.c.h.b16 %v72
  %v291 = vunpack.c.l.b16 %v73
  %v292 = vunpack.c.h.b16 %v73
  %v293 = vunpack.c.l.b16 %v74
  %v294 = vunpack.c.h.b16 %v74
  %v295 = vunpack.c.l.b16 %v75
  %v296 = vunpack.c.h.b16 %v75
  %v297 = vunpack.c.l.b16 %v76
  %v298 = vunpack.c.h.b16 %v76
  %v299 = vunpack.c.l.b16 %v77
  %v300 = vunpack.c.h.b16 %v77
  %v301 = vunpack.c.l.b16 %v78
  %v302 = vunpack.c.h.b16 %v78
  %v303 = vpack.c.b16 %v177, %v175
  %v304 = vpack.c.b16 %v178, %v176
  %v305 = vpack.c.b16 %v181, %v179
  %v306 = vpack.c.b16 %v182, %v180
  %v307 = vpack.c.b16 %v185, %v183
  %v308 = vpack.c.b16 %v186, %v184
  %v309 = vpack.c.b16 %v189, %v187
  %v310 = vpack.c.b16 %v190, %v188
  %v311 = vpack.c.b16 %v193, %v191
  %v312 = vpack.c.b16 %v194, %v192
  %v313 = vpack.c.b16 %v197, %v195
  %v314 = vpack.c.b16 %v198, %v196
  %v315 = vpack.c.b16 %v201, %v199
  %v316 = vpack.c.b16 %v202, %v200
  %v317 = vpack.c.b16 %v205, %v203
  %v318 = vpack.c.b16 %v206, %v204
  %v319 = vpack.c.b16 %v209, %v207
  %v320 = vpack.c.b16 %v210, %v208
  %v321 = vpack.c.b16 %v213, %v211
  %v322 = vpack.c.b16 %v214, %v212
  %v323 = vpack.c.b16 %v217, %v215
  %v324 = vpack.c.b16 %v218, %v216
  %v325 = vpack.c.b16 %v221, %v219
  %v326 = vpack.c.b16 %v222, %v220
  %v327 = vpack.c.b16 %v225, %v223
  %v328 = vpack.c.b16 %v226, %v224
  %v329 = vpack.c.b16 %v229, %v227
  %v330 = vpack.c.b16 %v230, %v228
  %v331 = vpack.c.b16 %v233, %v231
  %v332 = vpack.c.b16 %v234, %v232
  %v333 = vpack.c.b16 %v237, %v235
  %v334 = vpack.c.b16 %v238, %v236
  %v335 = vpack.c.b16 %v241, %v239
  %v336 = vpack.c.b16 %v242, %v240
  %v337 = vpack.c.b16 %v245, %v243
  %v338 = vpack.c.b16 %v246, %v244
  %v339 = vpack.c.b16 %v249, %v247
  %v340 = vpack.c.b16 %v250, %v248
  %v341 = vpack.c.b16 %v253, %v251
  %v342 = vpack.c.b16 %v254, %v252
  %v343 = vpack.c.b16 %v257, %v255
  %v344 = vpack.c.b16 %v258, %v256
  %v345 = vpack.c.b16 %v261, %v259
  %v346 = vpack.c.b16 %v262, %v260
  %v347 = vpack.c.b16 %v265, %v263
  %v348 = vpack.c.b16 %v266, %v264
  %v349 = vpack.c.b16 %v269, %v267
  %v350 = vpack.c.b16 %v270, %v268
  %v351 = vpack.c.b16 %v273, %v271
  %v352 = vpack.c.b16 %v274, %v272
  %v353 = vpack.c.b16 %v277, %v275
  %v354 = vpack.c.b16 %v278, %v276
  %v355 = vpack.c.b16 %v281, %v279
  %v356 = vpack.c.b16 %v282, %v280
  %v357 = vpack.c.b16 %v285, %v283
  %v358 = vpack.c.b16 %v286, %v284
  %v359 = vpack.c.b16 %v289, %v287
  %v360 = vpack.c.b16 %v290, %v288
  %v361 = vpack.c.b16 %v293, %v291
  %v362 = vpack.c.b16 %v294, %v292
  %v363 = vpack.c.b16 %v297, %v295
  %v364 = vpack.c.b16 %v298, %v296
  %v365 = vpack.c.b16 %v301, %v299
  %v366 = vpack.c.b16 %v302, %v300
  %v424 = vunpack.c.l.b16 %v79
  %v425 = vunpack.c.l.b16 %v80
  %v426 = vunpack.c.l.b16 %v81
  %v427 = vunpack.c.l.b16 %v82
  %v428 = vunpack.c.l.b16 %v83
  %v429 = vunpack.c.l.b16 %v84
  %v430 = vunpack.c.l.b16 %v85
  %v431 = vunpack.c.l.b16 %v86
  %v432 = vunpack.c.l.b16 %v87
  %v433 = vunpack.c.l.b16 %v88
  %v434 = vunpack.c.l.b16 %v89
  %v435 = vunpack.c.l.b16 %v90
  %v436 = vunpack.c.l.b16 %v91
  %v437 = vunpack.c.l.b16 %v92
  %v438 = vunpack.c.l.b16 %v93
  %v439 = vunpack.c.l.b16 %v94
  %v440 = vunpack.c.l.b16 %v95
  %v441 = vunpack.c.l.b16 %v96
  %v442 = vunpack.c.l.b16 %v97
  %v443 = vunpack.c.l.b16 %v98
  %v444 = vunpack.c.l.b16 %v99
  %v445 = vunpack.c.l.b16 %v100
  %v446 = vunpack.c.l.b16 %v101
  %v447 = vunpack.c.l.b16 %v102
  %v448 = vunpack.c.l.b16 %v103
  %v449 = vpack.c.b16 %v425, %v424
  %v450 = vpack.c.b16 %v427, %v426
  %v451 = vpack.c.b16 %v429, %v428
  %v452 = vpack.c.b16 %v431, %v430
  %v453 = vpack.c.b16 %v433, %v432
  %v454 = vpack.c.b16 %v435, %v434
  %v455 = vpack.c.b16 %v437, %v436
  %v456 = vpack.c.b16 %v439, %v438
  %v457 = vpack.c.b16 %v441, %v440
  %v458 = vpack.c.b16 %v443, %v442
  %v459 = vpack.c.b16 %v445, %v444
  %v460 = vpack.c.b16 %v447, %v446
  %v461 = vpack.c.b16 %v448, %v448
  %vm474 = vcmask 572416
  %v476 = vsel %vm474, %v304, 0
  %v479 = vsel %vm474, %v306, 0
  %v482 = vsel %vm474, %v308, 0
  %v485 = vsel %vm474, %v310, 0
  %v488 = vsel %vm474, %v312, 0
  %v491 = vsel %vm474, %v314, 0
  %v494 = vsel %vm474, %v316, 0
  %v497 = vsel %vm474, %v318, 0
  %v500 = vsel %vm474, %v320, 0
  %v503 = vsel %vm474, %v322, 0
  %v506 = vsel %vm474, %v324, 0
  %v509 = vsel %vm474, %v326, 0
  %v512 = vsel %vm474, %v328, 0
  %v515 = vsel %vm474, %v330, 0
  %v518 = vsel %vm474, %v332, 0
  %v521 = vsel %vm474, %v334, 0
  %v524 = vsel %vm474, %v336, 0
  %v527 = vsel %vm474, %v338, 0
  %v530 = vsel %vm474, %v340, 0
  %v533 = vsel %vm474, %v342, 0
  %v536 = vsel %vm474, %v344, 0
  %v539 = vsel %vm474, %v346, 0
  %v542 = vsel %vm474, %v348, 0
  %v545 = vsel %vm474, %v350, 0
  %v548 = vsel %vm474, %v352, 0
  %v551 = vsel %vm474, %v354, 0
  %v554 = vsel %vm474, %v356, 0
  %v557 = vsel %vm474, %v358, 0
  %v560 = vsel %vm474, %v360, 0
  %v563 = vsel %vm474, %v362, 0
  %v566 = vsel %vm474, %v364, 0
  %v569 = vsel %vm474, %v366, 0
  %vm571 = vcmask 1042432
  %v573 = vsel %vm571, %v461, 0
  %575 = vmatprep.subr.bf16.mxu0 0
  %576 = vmatpush1.bf16.msra.mxu0 %v456
  %577 = vmatprep.subr.bf16.mxu0 0
  %578 = vmatpush1.bf16.msra.mxu0 %v455
  %579 = vmatprep.subr.bf16.mxu0 0
  %580 = vmatpush1.bf16.msra.mxu0 %v454
  %581 = vmatprep.subr.bf16.mxu0 0
  %582 = vmatpush1.bf16.msra.mxu0 %v453
  %583 = vmatprep.subr.bf16.mxu0 0
  %584 = vmatpush1.bf16.msra.mxu0 %v452
  %585 = vmatprep.subr.bf16.mxu0 0
  %586 = vmatpush1.bf16.msra.mxu0 %v451
  %587 = vmatprep.subr.bf16.mxu0 0
  %588 = vmatpush1.bf16.msra.mxu0 %v450
  %589 = vmatprep.subr.bf16.mxu0 0
  %590 = vmatpush1.bf16.msra.mxu0 %v449
  %591 = vmatprep.subr.bf16.mxu0 0
  %592 = vmatpush2.bf16.msra.mxu0 0
  %593 = vmatprep.subr.bf16.mxu0 0
  %594 = vmatpush2.bf16.msra.mxu0 0
  %595 = vmatprep.subr.bf16.mxu0 0
  %596 = vmatpush2.bf16.msra.mxu0 0
  %597 = vmatprep.subr.bf16.mxu0 0
  %598 = vmatpush2.bf16.msra.mxu0 %v573
  %599 = vmatprep.subr.bf16.mxu0 0
  %600 = vmatpush2.bf16.msra.mxu0 %v460
  %601 = vmatprep.subr.bf16.mxu0 0
  %602 = vmatpush2.bf16.msra.mxu0 %v459
  %603 = vmatprep.subr.bf16.mxu0 0
  %604 = vmatpush2.bf16.msra.mxu0 %v458
  %605 = vmatprep.subr.bf16.mxu0 0
  %606 = vmatpush2.bf16.msra.mxu0 %v457
  %607 = vmatprep.mubr.bf16.mxu0 %v476
  %608 = vmatmul.mubr.bf16.gmra.mxu0 %v303
  %v609 = vpop.f32.mrf.mxu0
  %v610 = vadd.f32 %v109, %v609
  %v611 = vpop.f32.mrf.mxu0
  %v612 = vpop.f32.mrf.mxu0
  %v613 = vadd.f32 %v109, %v612
  %v614 = vpop.f32.mrf.mxu0
  %615 = vmatprep.mubr.bf16.mxu0 %v479
  %616 = vmatmul.mubr.bf16.gmra.mxu0 %v305
  %v617 = vpop.f32.mrf.mxu0
  %v618 = vadd.f32 %v109, %v617
  %v619 = vpop.f32.mrf.mxu0
  %v620 = vpop.f32.mrf.mxu0
  %v621 = vadd.f32 %v109, %v620
  %v622 = vpop.f32.mrf.mxu0
  %623 = vmatprep.mubr.bf16.mxu0 %v482
  %624 = vmatmul.mubr.bf16.gmra.mxu0 %v307
  %v625 = vpop.f32.mrf.mxu0
  %v626 = vadd.f32 %v109, %v625
  %v627 = vpop.f32.mrf.mxu0
  %v628 = vpop.f32.mrf.mxu0
  %v629 = vadd.f32 %v109, %v628
  %v630 = vpop.f32.mrf.mxu0
  %631 = vmatprep.mubr.bf16.mxu0 %v485
  %632 = vmatmul.mubr.bf16.gmra.mxu0 %v309
  %v633 = vpop.f32.mrf.mxu0
  %v634 = vadd.f32 %v109, %v633
  %v635 = vpop.f32.mrf.mxu0
  %v636 = vpop.f32.mrf.mxu0
  %v637 = vadd.f32 %v109, %v636
  %v638 = vpop.f32.mrf.mxu0
  %639 = vmatprep.mubr.bf16.mxu0 %v488
  %640 = vmatmul.mubr.bf16.gmra.mxu0 %v311
  %v641 = vpop.f32.mrf.mxu0
  %v642 = vadd.f32 %v109, %v641
  %v643 = vpop.f32.mrf.mxu0
  %v644 = vpop.f32.mrf.mxu0
  %v645 = vadd.f32 %v109, %v644
  %v646 = vpop.f32.mrf.mxu0
  %647 = vmatprep.mubr.bf16.mxu0 %v491
  %648 = vmatmul.mubr.bf16.gmra.mxu0 %v313
  %v649 = vpop.f32.mrf.mxu0
  %v650 = vadd.f32 %v109, %v649
  %v651 = vpop.f32.mrf.mxu0
  %v652 = vpop.f32.mrf.mxu0
  %v653 = vadd.f32 %v109, %v652
  %v654 = vpop.f32.mrf.mxu0
  %655 = vmatprep.mubr.bf16.mxu0 %v494
  %656 = vmatmul.mubr.bf16.gmra.mxu0 %v315
  %v657 = vpop.f32.mrf.mxu0
  %v658 = vadd.f32 %v109, %v657
  %v659 = vpop.f32.mrf.mxu0
  %v660 = vpop.f32.mrf.mxu0
  %v661 = vadd.f32 %v109, %v660
  %v662 = vpop.f32.mrf.mxu0
  %663 = vmatprep.mubr.bf16.mxu0 %v497
  %664 = vmatmul.mubr.bf16.gmra.mxu0 %v317
  %v665 = vpop.f32.mrf.mxu0
  %v666 = vadd.f32 %v109, %v665
  %v667 = vpop.f32.mrf.mxu0
  %v668 = vpop.f32.mrf.mxu0
  %v669 = vadd.f32 %v109, %v668
  %v670 = vpop.f32.mrf.mxu0
  %671 = vmatprep.mubr.bf16.mxu0 %v500
  %672 = vmatmul.mubr.bf16.gmra.mxu0 %v319
  %v673 = vpop.f32.mrf.mxu0
  %v674 = vadd.f32 %v109, %v673
  %v675 = vpop.f32.mrf.mxu0
  %v676 = vpop.f32.mrf.mxu0
  %v677 = vadd.f32 %v109, %v676
  %v678 = vpop.f32.mrf.mxu0
  %679 = vmatprep.mubr.bf16.mxu0 %v503
  %680 = vmatmul.mubr.bf16.gmra.mxu0 %v321
  %v681 = vpop.f32.mrf.mxu0
  %v682 = vadd.f32 %v109, %v681
  %v683 = vpop.f32.mrf.mxu0
  %v684 = vpop.f32.mrf.mxu0
  %v685 = vadd.f32 %v109, %v684
  %v686 = vpop.f32.mrf.mxu0
  %687 = vmatprep.mubr.bf16.mxu0 %v506
  %688 = vmatmul.mubr.bf16.gmra.mxu0 %v323
  %v689 = vpop.f32.mrf.mxu0
  %v690 = vadd.f32 %v109, %v689
  %v691 = vpop.f32.mrf.mxu0
  %v692 = vpop.f32.mrf.mxu0
  %v693 = vadd.f32 %v109, %v692
  %v694 = vpop.f32.mrf.mxu0
  %695 = vmatprep.mubr.bf16.mxu0 %v509
  %696 = vmatmul.mubr.bf16.gmra.mxu0 %v325
  %v697 = vpop.f32.mrf.mxu0
  %v698 = vadd.f32 %v109, %v697
  %v699 = vpop.f32.mrf.mxu0
  %v700 = vpop.f32.mrf.mxu0
  %v701 = vadd.f32 %v109, %v700
  %v702 = vpop.f32.mrf.mxu0
  %703 = vmatprep.mubr.bf16.mxu0 %v512
  %704 = vmatmul.mubr.bf16.gmra.mxu0 %v327
  %v705 = vpop.f32.mrf.mxu0
  %v706 = vadd.f32 %v109, %v705
  %v707 = vpop.f32.mrf.mxu0
  %v708 = vpop.f32.mrf.mxu0
  %v709 = vadd.f32 %v109, %v708
  %v710 = vpop.f32.mrf.mxu0
  %711 = vmatprep.mubr.bf16.mxu0 %v515
  %712 = vmatmul.mubr.bf16.gmra.mxu0 %v329
  %v713 = vpop.f32.mrf.mxu0
  %v714 = vadd.f32 %v109, %v713
  %v715 = vpop.f32.mrf.mxu0
  %v716 = vpop.f32.mrf.mxu0
  %v717 = vadd.f32 %v109, %v716
  %v718 = vpop.f32.mrf.mxu0
  %719 = vmatprep.mubr.bf16.mxu0 %v518
  %720 = vmatmul.mubr.bf16.gmra.mxu0 %v331
  %v721 = vpop.f32.mrf.mxu0
  %v722 = vadd.f32 %v109, %v721
  %v723 = vpop.f32.mrf.mxu0
  %v724 = vpop.f32.mrf.mxu0
  %v725 = vadd.f32 %v109, %v724
  %v726 = vpop.f32.mrf.mxu0
  %727 = vmatprep.mubr.bf16.mxu0 %v521
  %728 = vmatmul.mubr.bf16.gmra.mxu0 %v333
  %v729 = vpop.f32.mrf.mxu0
  %v730 = vadd.f32 %v109, %v729
  %v731 = vpop.f32.mrf.mxu0
  %v732 = vpop.f32.mrf.mxu0
  %v733 = vadd.f32 %v109, %v732
  %v734 = vpop.f32.mrf.mxu0
  %735 = vmatprep.mubr.bf16.mxu0 %v524
  %736 = vmatmul.mubr.bf16.gmra.mxu0 %v335
  %v737 = vpop.f32.mrf.mxu0
  %v738 = vadd.f32 %v109, %v737
  %v739 = vpop.f32.mrf.mxu0
  %v740 = vpop.f32.mrf.mxu0
  %v741 = vadd.f32 %v109, %v740
  %v742 = vpop.f32.mrf.mxu0
  %743 = vmatprep.mubr.bf16.mxu0 %v527
  %744 = vmatmul.mubr.bf16.gmra.mxu0 %v337
  %v745 = vpop.f32.mrf.mxu0
  %v746 = vadd.f32 %v109, %v745
  %v747 = vpop.f32.mrf.mxu0
  %v748 = vpop.f32.mrf.mxu0
  %v749 = vadd.f32 %v109, %v748
  %v750 = vpop.f32.mrf.mxu0
  %751 = vmatprep.mubr.bf16.mxu0 %v530
  %752 = vmatmul.mubr.bf16.gmra.mxu0 %v339
  %v753 = vpop.f32.mrf.mxu0
  %v754 = vadd.f32 %v109, %v753
  %v755 = vpop.f32.mrf.mxu0
  %v756 = vpop.f32.mrf.mxu0
  %v757 = vadd.f32 %v109, %v756
  %v758 = vpop.f32.mrf.mxu0
  %759 = vmatprep.mubr.bf16.mxu0 %v533
  %760 = vmatmul.mubr.bf16.gmra.mxu0 %v341
  %v761 = vpop.f32.mrf.mxu0
  %v762 = vadd.f32 %v109, %v761
  %v763 = vpop.f32.mrf.mxu0
  %v764 = vpop.f32.mrf.mxu0
  %v765 = vadd.f32 %v109, %v764
  %v766 = vpop.f32.mrf.mxu0
  %767 = vmatprep.mubr.bf16.mxu0 %v536
  %768 = vmatmul.mubr.bf16.gmra.mxu0 %v343
  %v769 = vpop.f32.mrf.mxu0
  %v770 = vadd.f32 %v109, %v769
  %v771 = vpop.f32.mrf.mxu0
  %v772 = vpop.f32.mrf.mxu0
  %v773 = vadd.f32 %v109, %v772
  %v774 = vpop.f32.mrf.mxu0
  %775 = vmatprep.mubr.bf16.mxu0 %v539
  %776 = vmatmul.mubr.bf16.gmra.mxu0 %v345
  %v777 = vpop.f32.mrf.mxu0
  %v778 = vadd.f32 %v109, %v777
  %v779 = vpop.f32.mrf.mxu0
  %v780 = vpop.f32.mrf.mxu0
  %v781 = vadd.f32 %v109, %v780
  %v782 = vpop.f32.mrf.mxu0
  %783 = vmatprep.mubr.bf16.mxu0 %v542
  %784 = vmatmul.mubr.bf16.gmra.mxu0 %v347
  %v785 = vpop.f32.mrf.mxu0
  %v786 = vadd.f32 %v109, %v785
  %v787 = vpop.f32.mrf.mxu0
  %v788 = vpop.f32.mrf.mxu0
  %v789 = vadd.f32 %v109, %v788
  %v790 = vpop.f32.mrf.mxu0
  %791 = vmatprep.mubr.bf16.mxu0 %v545
  %792 = vmatmul.mubr.bf16.gmra.mxu0 %v349
  %v793 = vpop.f32.mrf.mxu0
  %v794 = vadd.f32 %v109, %v793
  %v795 = vpop.f32.mrf.mxu0
  %v796 = vpop.f32.mrf.mxu0
  %v797 = vadd.f32 %v109, %v796
  %v798 = vpop.f32.mrf.mxu0
  %799 = vmatprep.mubr.bf16.mxu0 %v548
  %800 = vmatmul.mubr.bf16.gmra.mxu0 %v351
  %v801 = vpop.f32.mrf.mxu0
  %v802 = vadd.f32 %v109, %v801
  %v803 = vpop.f32.mrf.mxu0
  %v804 = vpop.f32.mrf.mxu0
  %v805 = vadd.f32 %v109, %v804
  %v806 = vpop.f32.mrf.mxu0
  %807 = vmatprep.mubr.bf16.mxu0 %v551
  %808 = vmatmul.mubr.bf16.gmra.mxu0 %v353
  %v809 = vpop.f32.mrf.mxu0
  %v810 = vadd.f32 %v109, %v809
  %v811 = vpop.f32.mrf.mxu0
  %v812 = vpop.f32.mrf.mxu0
  %v813 = vadd.f32 %v109, %v812
  %v814 = vpop.f32.mrf.mxu0
  %815 = vmatprep.mubr.bf16.mxu0 %v554
  %816 = vmatmul.mubr.bf16.gmra.mxu0 %v355
  %v817 = vpop.f32.mrf.mxu0
  %v818 = vadd.f32 %v109, %v817
  %v819 = vpop.f32.mrf.mxu0
  %v820 = vpop.f32.mrf.mxu0
  %v821 = vadd.f32 %v109, %v820
  %v822 = vpop.f32.mrf.mxu0
  %823 = vmatprep.mubr.bf16.mxu0 %v557
  %824 = vmatmul.mubr.bf16.gmra.mxu0 %v357
  %v825 = vpop.f32.mrf.mxu0
  %v826 = vadd.f32 %v109, %v825
  %v827 = vpop.f32.mrf.mxu0
  %v828 = vpop.f32.mrf.mxu0
  %v829 = vadd.f32 %v109, %v828
  %v830 = vpop.f32.mrf.mxu0
  %831 = vmatprep.mubr.bf16.mxu0 %v560
  %832 = vmatmul.mubr.bf16.gmra.mxu0 %v359
  %v833 = vpop.f32.mrf.mxu0
  %v834 = vadd.f32 %v109, %v833
  %v835 = vpop.f32.mrf.mxu0
  %v836 = vpop.f32.mrf.mxu0
  %v837 = vadd.f32 %v109, %v836
  %v838 = vpop.f32.mrf.mxu0
  %839 = vmatprep.mubr.bf16.mxu0 %v563
  %840 = vmatmul.mubr.bf16.gmra.mxu0 %v361
  %v841 = vpop.f32.mrf.mxu0
  %v842 = vadd.f32 %v109, %v841
  %v843 = vpop.f32.mrf.mxu0
  %v844 = vpop.f32.mrf.mxu0
  %v845 = vadd.f32 %v109, %v844
  %v846 = vpop.f32.mrf.mxu0
  %847 = vmatprep.mubr.bf16.mxu0 %v566
  %848 = vmatmul.mubr.bf16.gmra.mxu0 %v363
  %v849 = vpop.f32.mrf.mxu0
  %v850 = vadd.f32 %v109, %v849
  %v851 = vpop.f32.mrf.mxu0
  %v852 = vpop.f32.mrf.mxu0
  %v853 = vadd.f32 %v109, %v852
  %v854 = vpop.f32.mrf.mxu0
  %855 = vmatprep.mubr.bf16.mxu0 %v569
  %856 = vmatmul.mubr.bf16.gmra.mxu0 %v365
  %v857 = vpop.f32.mrf.mxu0
  %v858 = vadd.f32 %v109, %v857
  %v859 = vpop.f32.mrf.mxu0
  %v860 = vpop.f32.mrf.mxu0
  %v861 = vadd.f32 %v109, %v860
  %v862 = vpop.f32.mrf.mxu0
  %863 = vdwg.mxu0
  %v864 = vmax.f32 %v610, 0.0
  %v865 = vmax.f32 %v613, 0.0
  %v866 = vmax.f32 %v618, 0.0
  %v867 = vmax.f32 %v621, 0.0
  %v868 = vmax.f32 %v626, 0.0
  %v869 = vmax.f32 %v629, 0.0
  %v870 = vmax.f32 %v634, 0.0
  %v871 = vmax.f32 %v637, 0.0
  %v872 = vmax.f32 %v642, 0.0
  %v873 = vmax.f32 %v645, 0.0
  %v874 = vmax.f32 %v650, 0.0
  %v875 = vmax.f32 %v653, 0.0
  %v876 = vmax.f32 %v658, 0.0
  %v877 = vmax.f32 %v661, 0.0
  %v878 = vmax.f32 %v666, 0.0
  %v879 = vmax.f32 %v669, 0.0
  %v880 = vmax.f32 %v674, 0.0
  %v881 = vmax.f32 %v677, 0.0
  %v882 = vmax.f32 %v682, 0.0
  %v883 = vmax.f32 %v685, 0.0
  %v884 = vmax.f32 %v690, 0.0
  %v885 = vmax.f32 %v693, 0.0
  %v886 = vmax.f32 %v698, 0.0
  %v887 = vmax.f32 %v701, 0.0
  %v888 = vmax.f32 %v706, 0.0
  %v889 = vmax.f32 %v709, 0.0
  %v890 = vmax.f32 %v714, 0.0
  %v891 = vmax.f32 %v717, 0.0
  %v892 = vmax.f32 %v722, 0.0
  %v893 = vmax.f32 %v725, 0.0
  %v894 = vmax.f32 %v730, 0.0
  %v895 = vmax.f32 %v733, 0.0
  %v896 = vmax.f32 %v738, 0.0
  %v897 = vmax.f32 %v741, 0.0
  %v898 = vmax.f32 %v746, 0.0
  %v899 = vmax.f32 %v749, 0.0
  %v900 = vmax.f32 %v754, 0.0
  %v901 = vmax.f32 %v757, 0.0
  %v902 = vmax.f32 %v762, 0.0
  %v903 = vmax.f32 %v765, 0.0
  %v904 = vmax.f32 %v770, 0.0
  %v905 = vmax.f32 %v773, 0.0
  %v906 = vmax.f32 %v778, 0.0
  %v907 = vmax.f32 %v781, 0.0
  %v908 = vmax.f32 %v786, 0.0
  %v909 = vmax.f32 %v789, 0.0
  %v910 = vmax.f32 %v794, 0.0
  %v911 = vmax.f32 %v797, 0.0
  %v912 = vmax.f32 %v802, 0.0
  %v913 = vmax.f32 %v805, 0.0
  %v914 = vmax.f32 %v810, 0.0
  %v915 = vmax.f32 %v813, 0.0
  %v916 = vmax.f32 %v818, 0.0
  %v917 = vmax.f32 %v821, 0.0
  %v918 = vmax.f32 %v826, 0.0
  %v919 = vmax.f32 %v829, 0.0
  %v920 = vmax.f32 %v834, 0.0
  %v921 = vmax.f32 %v837, 0.0
  %v922 = vmax.f32 %v842, 0.0
  %v923 = vmax.f32 %v845, 0.0
  %v924 = vmax.f32 %v850, 0.0
  %v925 = vmax.f32 %v853, 0.0
  %v926 = vmax.f32 %v858, 0.0
  %v927 = vmax.f32 %v861, 0.0
  %v928 = vpack.c.bf16 %v865, %v864
  %v929 = vpack.c.bf16 %v867, %v866
  %v930 = vpack.c.bf16 %v869, %v868
  %v931 = vpack.c.bf16 %v871, %v870
  %v932 = vpack.c.bf16 %v873, %v872
  %v933 = vpack.c.bf16 %v875, %v874
  %v934 = vpack.c.bf16 %v877, %v876
  %v935 = vpack.c.bf16 %v879, %v878
  %v936 = vpack.c.bf16 %v881, %v880
  %v937 = vpack.c.bf16 %v883, %v882
  %v938 = vpack.c.bf16 %v885, %v884
  %v939 = vpack.c.bf16 %v887, %v886
  %v940 = vpack.c.bf16 %v889, %v888
  %v941 = vpack.c.bf16 %v891, %v890
  %v942 = vpack.c.bf16 %v893, %v892
  %v943 = vpack.c.bf16 %v895, %v894
  %v944 = vpack.c.bf16 %v897, %v896
  %v945 = vpack.c.bf16 %v899, %v898
  %v946 = vpack.c.bf16 %v901, %v900
  %v947 = vpack.c.bf16 %v903, %v902
  %v948 = vpack.c.bf16 %v905, %v904
  %v949 = vpack.c.bf16 %v907, %v906
  %v950 = vpack.c.bf16 %v909, %v908
  %v951 = vpack.c.bf16 %v911, %v910
  %v952 = vpack.c.bf16 %v913, %v912
  %v953 = vpack.c.bf16 %v915, %v914
  %v954 = vpack.c.bf16 %v917, %v916
  %v955 = vpack.c.bf16 %v919, %v918
  %v956 = vpack.c.bf16 %v921, %v920
  %v957 = vpack.c.bf16 %v923, %v922
  %v958 = vpack.c.bf16 %v925, %v924
  %v959 = vpack.c.bf16 %v927, %v926
  %v992 = vunpack.c.l.b16 %v928
  %v993 = vunpack.c.h.b16 %v928
  %v994 = vunpack.c.l.b16 %v929
  %v995 = vunpack.c.h.b16 %v929
  %v996 = vunpack.c.l.b16 %v930
  %v997 = vunpack.c.h.b16 %v930
  %v998 = vunpack.c.l.b16 %v931
  %v999 = vunpack.c.h.b16 %v931
  %v1000 = vunpack.c.l.b16 %v932
  %v1001 = vunpack.c.h.b16 %v932
  %v1002 = vunpack.c.l.b16 %v933
  %v1003 = vunpack.c.h.b16 %v933
  %v1004 = vunpack.c.l.b16 %v934
  %v1005 = vunpack.c.h.b16 %v934
  %v1006 = vunpack.c.l.b16 %v935
  %v1007 = vunpack.c.h.b16 %v935
  %v1008 = vunpack.c.l.b16 %v936
  %v1009 = vunpack.c.h.b16 %v936
  %v1010 = vunpack.c.l.b16 %v937
  %v1011 = vunpack.c.h.b16 %v937
  %v1012 = vunpack.c.l.b16 %v938
  %v1013 = vunpack.c.h.b16 %v938
  %v1014 = vunpack.c.l.b16 %v939
  %v1015 = vunpack.c.h.b16 %v939
  %v1016 = vunpack.c.l.b16 %v940
  %v1017 = vunpack.c.h.b16 %v940
  %v1018 = vunpack.c.l.b16 %v941
  %v1019 = vunpack.c.h.b16 %v941
  %v1020 = vunpack.c.l.b16 %v942
  %v1021 = vunpack.c.h.b16 %v942
  %v1022 = vunpack.c.l.b16 %v943
  %v1023 = vunpack.c.h.b16 %v943
  %v1024 = vunpack.c.l.b16 %v944
  %v1025 = vunpack.c.h.b16 %v944
  %v1026 = vunpack.c.l.b16 %v945
  %v1027 = vunpack.c.h.b16 %v945
  %v1028 = vunpack.c.l.b16 %v946
  %v1029 = vunpack.c.h.b16 %v946
  %v1030 = vunpack.c.l.b16 %v947
  %v1031 = vunpack.c.h.b16 %v947
  %v1032 = vunpack.c.l.b16 %v948
  %v1033 = vunpack.c.h.b16 %v948
  %v1034 = vunpack.c.l.b16 %v949
  %v1035 = vunpack.c.h.b16 %v949
  %v1036 = vunpack.c.l.b16 %v950
  %v1037 = vunpack.c.h.b16 %v950
  %v1038 = vunpack.c.l.b16 %v951
  %v1039 = vunpack.c.h.b16 %v951
  %v1040 = vunpack.c.l.b16 %v952
  %v1041 = vunpack.c.h.b16 %v952
  %v1042 = vunpack.c.l.b16 %v953
  %v1043 = vunpack.c.h.b16 %v953
  %v1044 = vunpack.c.l.b16 %v954
  %v1045 = vunpack.c.h.b16 %v954
  %v1046 = vunpack.c.l.b16 %v955
  %v1047 = vunpack.c.h.b16 %v955
  %v1048 = vunpack.c.l.b16 %v956
  %v1049 = vunpack.c.h.b16 %v956
  %v1050 = vunpack.c.l.b16 %v957
  %v1051 = vunpack.c.h.b16 %v957
  %v1052 = vunpack.c.l.b16 %v958
  %v1053 = vunpack.c.h.b16 %v958
  %v1054 = vunpack.c.l.b16 %v959
  %v1055 = vunpack.c.h.b16 %v959
  %v1056 = vpack.c.b16 %v992, %v992
  %v1057 = vpack.c.b16 %v993, %v993
  %v1058 = vpack.c.b16 %v994, %v994
  %v1059 = vpack.c.b16 %v995, %v995
  %v1060 = vpack.c.b16 %v996, %v996
  %v1061 = vpack.c.b16 %v997, %v997
  %v1062 = vpack.c.b16 %v998, %v998
  %v1063 = vpack.c.b16 %v999, %v999
  %v1064 = vpack.c.b16 %v1000, %v1000
  %v1065 = vpack.c.b16 %v1001, %v1001
  %v1066 = vpack.c.b16 %v1002, %v1002
  %v1067 = vpack.c.b16 %v1003, %v1003
  %v1068 = vpack.c.b16 %v1004, %v1004
  %v1069 = vpack.c.b16 %v1005, %v1005
  %v1070 = vpack.c.b16 %v1006, %v1006
  %v1071 = vpack.c.b16 %v1007, %v1007
  %v1072 = vpack.c.b16 %v1008, %v1008
  %v1073 = vpack.c.b16 %v1009, %v1009
  %v1074 = vpack.c.b16 %v1010, %v1010
  %v1075 = vpack.c.b16 %v1011, %v1011
  %v1076 = vpack.c.b16 %v1012, %v1012
  %v1077 = vpack.c.b16 %v1013, %v1013
  %v1078 = vpack.c.b16 %v1014, %v1014
  %v1079 = vpack.c.b16 %v1015, %v1015
  %v1080 = vpack.c.b16 %v1016, %v1016
  %v1081 = vpack.c.b16 %v1017, %v1017
  %v1082 = vpack.c.b16 %v1018, %v1018
  %v1083 = vpack.c.b16 %v1019, %v1019
  %v1084 = vpack.c.b16 %v1020, %v1020
  %v1085 = vpack.c.b16 %v1021, %v1021
  %v1086 = vpack.c.b16 %v1022, %v1022
  %v1087 = vpack.c.b16 %v1023, %v1023
  %v1088 = vpack.c.b16 %v1024, %v1024
  %v1089 = vpack.c.b16 %v1025, %v1025
  %v1090 = vpack.c.b16 %v1026, %v1026
  %v1091 = vpack.c.b16 %v1027, %v1027
  %v1092 = vpack.c.b16 %v1028, %v1028
  %v1093 = vpack.c.b16 %v1029, %v1029
  %v1094 = vpack.c.b16 %v1030, %v1030
  %v1095 = vpack.c.b16 %v1031, %v1031
  %v1096 = vpack.c.b16 %v1032, %v1032
  %v1097 = vpack.c.b16 %v1033, %v1033
  %v1098 = vpack.c.b16 %v1034, %v1034
  %v1099 = vpack.c.b16 %v1035, %v1035
  %v1100 = vpack.c.b16 %v1036, %v1036
  %v1101 = vpack.c.b16 %v1037, %v1037
  %v1102 = vpack.c.b16 %v1038, %v1038
  %v1103 = vpack.c.b16 %v1039, %v1039
  %v1104 = vpack.c.b16 %v1040, %v1040
  %v1105 = vpack.c.b16 %v1041, %v1041
  %v1106 = vpack.c.b16 %v1042, %v1042
  %v1107 = vpack.c.b16 %v1043, %v1043
  %v1108 = vpack.c.b16 %v1044, %v1044
  %v1109 = vpack.c.b16 %v1045, %v1045
  %v1110 = vpack.c.b16 %v1046, %v1046
  %v1111 = vpack.c.b16 %v1047, %v1047
  %v1112 = vpack.c.b16 %v1048, %v1048
  %v1113 = vpack.c.b16 %v1049, %v1049
  %v1114 = vpack.c.b16 %v1050, %v1050
  %v1115 = vpack.c.b16 %v1051, %v1051
  %v1116 = vpack.c.b16 %v1052, %v1052
  %v1117 = vpack.c.b16 %v1053, %v1053
  %v1118 = vpack.c.b16 %v1054, %v1054
  %v1119 = vpack.c.b16 %v1055, %v1055
  %vm1184 = vcmask 60416
  %1185 = vst.msk [vmem:[%s3] sm:$0xf] %vm1184, %v1056
  %1186 = vst.msk [vmem:[%s3 + $0x4] sm:$0xf] %vm1184, %v1057
  %1187 = vst.msk [vmem:[%s3 + $0x8] sm:$0xf] %vm1184, %v1058
  %1188 = vst.msk [vmem:[%s3 + $0xc] sm:$0xf] %vm1184, %v1059
  %1189 = vst.msk [vmem:[%s3 + $0x10] sm:$0xf] %vm1184, %v1060
  %1190 = vst.msk [vmem:[%s3 + $0x14] sm:$0xf] %vm1184, %v1061
  %1191 = vst.msk [vmem:[%s3 + $0x18] sm:$0xf] %vm1184, %v1062
  %1192 = vst.msk [vmem:[%s3 + $0x1c] sm:$0xf] %vm1184, %v1063
  %1193 = vst.msk [vmem:[%s3 + $0x20] sm:$0xf] %vm1184, %v1064
  %1194 = vst.msk [vmem:[%s3 + $0x24] sm:$0xf] %vm1184, %v1065
  %1195 = vst.msk [vmem:[%s3 + $0x28] sm:$0xf] %vm1184, %v1066
  %1196 = vst.msk [vmem:[%s3 + $0x2c] sm:$0xf] %vm1184, %v1067
  %1197 = vst.msk [vmem:[%s3 + $0x30] sm:$0xf] %vm1184, %v1068
  %1198 = vst.msk [vmem:[%s3 + $0x34] sm:$0xf] %vm1184, %v1069
  %1199 = vst.msk [vmem:[%s3 + $0x38] sm:$0xf] %vm1184, %v1070
  %1200 = vst.msk [vmem:[%s3 + $0x3c] sm:$0xf] %vm1184, %v1071
  %1201 = vst.msk [vmem:[%s3 + $0x40] sm:$0xf] %vm1184, %v1072
  %1202 = vst.msk [vmem:[%s3 + $0x44] sm:$0xf] %vm1184, %v1073
  %1203 = vst.msk [vmem:[%s3 + $0x48] sm:$0xf] %vm1184, %v1074
  %1204 = vst.msk [vmem:[%s3 + $0x4c] sm:$0xf] %vm1184, %v1075
  %1205 = vst.msk [vmem:[%s3 + $0x50] sm:$0xf] %vm1184, %v1076
  %1206 = vst.msk [vmem:[%s3 + $0x54] sm:$0xf] %vm1184, %v1077
  %1207 = vst.msk [vmem:[%s3 + $0x58] sm:$0xf] %vm1184, %v1078
  %1208 = vst.msk [vmem:[%s3 + $0x5c] sm:$0xf] %vm1184, %v1079
  %1209 = vst.msk [vmem:[%s3 + $0x60] sm:$0xf] %vm1184, %v1080
  %1210 = vst.msk [vmem:[%s3 + $0x64] sm:$0xf] %vm1184, %v1081
  %1211 = vst.msk [vmem:[%s3 + $0x68] sm:$0xf] %vm1184, %v1082
  %1212 = vst.msk [vmem:[%s3 + $0x6c] sm:$0xf] %vm1184, %v1083
  %1213 = vst.msk [vmem:[%s3 + $0x70] sm:$0xf] %vm1184, %v1084
  %1214 = vst.msk [vmem:[%s3 + $0x74] sm:$0xf] %vm1184, %v1085
  %1215 = vst.msk [vmem:[%s3 + $0x78] sm:$0xf] %vm1184, %v1086
  %1216 = vst.msk [vmem:[%s3 + $0x7c] sm:$0xf] %vm1184, %v1087
  %1217 = vst.msk [vmem:[%s3 + $0x80] sm:$0xf] %vm1184, %v1088
  %1218 = vst.msk [vmem:[%s3 + $0x84] sm:$0xf] %vm1184, %v1089
  %1219 = vst.msk [vmem:[%s3 + $0x88] sm:$0xf] %vm1184, %v1090
  %1220 = vst.msk [vmem:[%s3 + $0x8c] sm:$0xf] %vm1184, %v1091
  %1221 = vst.msk [vmem:[%s3 + $0x90] sm:$0xf] %vm1184, %v1092
  %1222 = vst.msk [vmem:[%s3 + $0x94] sm:$0xf] %vm1184, %v1093
  %1223 = vst.msk [vmem:[%s3 + $0x98] sm:$0xf] %vm1184, %v1094
  %1224 = vst.msk [vmem:[%s3 + $0x9c] sm:$0xf] %vm1184, %v1095
  %1225 = vst.msk [vmem:[%s3 + $0xa0] sm:$0xf] %vm1184, %v1096
  %1226 = vst.msk [vmem:[%s3 + $0xa4] sm:$0xf] %vm1184, %v1097
  %1227 = vst.msk [vmem:[%s3 + $0xa8] sm:$0xf] %vm1184, %v1098
  %1228 = vst.msk [vmem:[%s3 + $0xac] sm:$0xf] %vm1184, %v1099
  %1229 = vst.msk [vmem:[%s3 + $0xb0] sm:$0xf] %vm1184, %v1100
  %1230 = vst.msk [vmem:[%s3 + $0xb4] sm:$0xf] %vm1184, %v1101
  %1231 = vst.msk [vmem:[%s3 + $0xb8] sm:$0xf] %vm1184, %v1102
  %1232 = vst.msk [vmem:[%s3 + $0xbc] sm:$0xf] %vm1184, %v1103
  %1233 = vst.msk [vmem:[%s3 + $0xc0] sm:$0xf] %vm1184, %v1104
  %1234 = vst.msk [vmem:[%s3 + $0xc4] sm:$0xf] %vm1184, %v1105
  %1235 = vst.msk [vmem:[%s3 + $0xc8] sm:$0xf] %vm1184, %v1106
  %1236 = vst.msk [vmem:[%s3 + $0xcc] sm:$0xf] %vm1184, %v1107
  %1237 = vst.msk [vmem:[%s3 + $0xd0] sm:$0xf] %vm1184, %v1108
  %1238 = vst.msk [vmem:[%s3 + $0xd4] sm:$0xf] %vm1184, %v1109
  %1239 = vst.msk [vmem:[%s3 + $0xd8] sm:$0xf] %vm1184, %v1110
  %1240 = vst.msk [vmem:[%s3 + $0xdc] sm:$0xf] %vm1184, %v1111
  %1241 = vst.msk [vmem:[%s3 + $0xe0] sm:$0xf] %vm1184, %v1112
  %1242 = vst.msk [vmem:[%s3 + $0xe4] sm:$0xf] %vm1184, %v1113
  %1243 = vst.msk [vmem:[%s3 + $0xe8] sm:$0xf] %vm1184, %v1114
  %1244 = vst.msk [vmem:[%s3 + $0xec] sm:$0xf] %vm1184, %v1115
  %1245 = vst.msk [vmem:[%s3 + $0xf0] sm:$0xf] %vm1184, %v1116
  %1246 = vst.msk [vmem:[%s3 + $0xf4] sm:$0xf] %vm1184, %v1117
  %1247 = vst.msk [vmem:[%s3 + $0xf8] sm:$0xf] %vm1184, %v1118
  %1248 = vst.msk [vmem:[%s3 + $0xfc] sm:$0xf] %vm1184, %v1119
  // Predicated region
  $region14: #{encoder_forward.16} parent=0 // pred_check
    _
  $region15: #{encoder_forward.16} parent=0 // pred_check_branch
    %1250 = sbr.rel (0) target = $region17
  $region16: #{encoder_forward.16} parent=0 // pred_region
    _
  $region17: #{encoder_forward.16} parent=0 // pred_fallthru
    _
  // Predicated region
  $region18: #{encoder_forward.16} parent=0 // pred_check
    _
  $region19: #{encoder_forward.16} parent=0 // pred_check_branch
    %1252 = sbr.rel (0) target = $region21
  $region20: #{encoder_forward.16} parent=0 // pred_region
    _
  $region21: #{encoder_forward.16} parent=0 // pred_fallthru
    _

// kernel: encoder_forward.17
$region0: #{encoder_forward.17}
  #allocation0 [shape = 'u32[]', space=smem, size = 0x4, offset = 0x4, fixed_abs, tag = 'smem constant byte address 0x4 - core index']
  #allocation1 [shape = 'u32[144,128]{1,0:T(1,128)}', space=vmem, size = 0x12000, scoped, tag = 'internal scratch']
  %s0 = inlined_call_operand.vmem [shape: bf16[512,72], index: 0, kind: input, shape index: {}]
  %s1 = inlined_call_operand.vmem [shape: bf16[72,8], index: 1, kind: input, shape index: {}]
  %s2 = inlined_call_operand.vmem [shape: f32[1,8], index: 2, kind: input, shape index: {}]
  %s3 = inlined_call_operand.vmem [shape: bf16[8,4], index: 3, kind: input, shape index: {}]
  %s4 = inlined_call_operand.vmem [shape: f32[1,4], index: 4, kind: input, shape index: {}]
  %s5 = inlined_call_operand.vmem [shape: bf16[4,3], index: 5, kind: input, shape index: {}]
  %s6 = inlined_call_operand.vmem [shape: f32[1,3], index: 6, kind: input, shape index: {}]
  %s7 = inlined_call_operand.vmem [shape: f32[512,3], index: 7, kind: output, shape index: {}]
  %s8 = sld [smem:[#allocation0]]
  $region38: #{encoder_forward.17} parent=0
    _
  %s10 = ssub.s32 1, %s8
  %s11 = scalar_select 0, %s10, %s8
  // Predicated region
  $region2: #{encoder_forward.17} parent=0 // pred_check
    _
  $region3: #{encoder_forward.17} parent=0 // pred_check_branch
    %13 = sbr.rel (0) target = $region5
  $region4: #{encoder_forward.17} parent=0 // pred_region
    _
  $region5: #{encoder_forward.17} parent=0 // pred_fallthru
    _
  // Predicated region
  $region6: #{encoder_forward.17} parent=0 // pred_check
    _
  $region7: #{encoder_forward.17} parent=0 // pred_check_branch
    %15 = sbr.rel (0) target = $region9
  $region8: #{encoder_forward.17} parent=0 // pred_region
    _
  $region9: #{encoder_forward.17} parent=0 // pred_fallthru
    _
  // Predicated region
  $region10: #{encoder_forward.17} parent=0 // pred_check
    _
  $region11: #{encoder_forward.17} parent=0 // pred_check_branch
    %17 = sbr.rel (0) target = $region13
  $region12: #{encoder_forward.17} parent=0 // pred_region
    _
  $region13: #{encoder_forward.17} parent=0 // pred_fallthru
    _
  // Predicated region
  $region14: #{encoder_forward.17} parent=0 // pred_check
    _
  $region15: #{encoder_forward.17} parent=0 // pred_check_branch
    %19 = sbr.rel (0) target = $region17
  $region16: #{encoder_forward.17} parent=0 // pred_region
    _
  $region17: #{encoder_forward.17} parent=0 // pred_fallthru
    _
  // Predicated region
  $region18: #{encoder_forward.17} parent=0 // pred_check
    _
  $region19: #{encoder_forward.17} parent=0 // pred_check_branch
    %21 = sbr.rel (0) target = $region21
  $region20: #{encoder_forward.17} parent=0 // pred_region
    _
  $region21: #{encoder_forward.17} parent=0 // pred_fallthru
    _
  // Predicated region
  $region22: #{encoder_forward.17} parent=0 // pred_check
    _
  $region23: #{encoder_forward.17} parent=0 // pred_check_branch
    %23 = sbr.rel (0) target = $region25
  $region24: #{encoder_forward.17} parent=0 // pred_region
    _
  $region25: #{encoder_forward.17} parent=0 // pred_fallthru
    _
  // Predicated region
  $region26: #{encoder_forward.17} parent=0 // pred_check
    _
  $region27: #{encoder_forward.17} parent=0 // pred_check_branch
    %25 = sbr.rel (0) target = $region29
  $region28: #{encoder_forward.17} parent=0 // pred_region
    _
  $region29: #{encoder_forward.17} parent=0 // pred_fallthru
    _
  %v27 = vld [vmem:[%s0] sm:$0xf]
  %v28 = vld [vmem:[%s0 + $0x4] sm:$0xf]
  %v29 = vld [vmem:[%s0 + $0x8] sm:$0xf]
  %v30 = vld [vmem:[%s0 + $0xc] sm:$0xf]
  %v31 = vld [vmem:[%s0 + $0x10] sm:$0xf]
  %v32 = vld [vmem:[%s0 + $0x14] sm:$0xf]
  %v33 = vld [vmem:[%s0 + $0x18] sm:$0xf]
  %v34 = vld [vmem:[%s0 + $0x1c] sm:$0xf]
  %v35 = vld [vmem:[%s0 + $0x20] sm:$0xf]
  %v36 = vld [vmem:[%s0 + $0x24] sm:$0xf]
  %v37 = vld [vmem:[%s0 + $0x28] sm:$0xf]
  %v38 = vld [vmem:[%s0 + $0x2c] sm:$0xf]
  %v39 = vld [vmem:[%s0 + $0x30] sm:$0xf]
  %v40 = vld [vmem:[%s0 + $0x34] sm:$0xf]
  %v41 = vld [vmem:[%s0 + $0x38] sm:$0xf]
  %v42 = vld [vmem:[%s0 + $0x3c] sm:$0xf]
  %v43 = vld [vmem:[%s0 + $0x40] sm:$0xf]
  %v44 = vld [vmem:[%s0 + $0x44] sm:$0xf]
  %v45 = vld [vmem:[%s0 + $0x48] sm:$0xf]
  %v46 = vld [vmem:[%s0 + $0x4c] sm:$0xf]
  %v47 = vld [vmem:[%s0 + $0x50] sm:$0xf]
  %v48 = vld [vmem:[%s0 + $0x54] sm:$0xf]
  %v49 = vld [vmem:[%s0 + $0x58] sm:$0xf]
  %v50 = vld [vmem:[%s0 + $0x5c] sm:$0xf]
  %v51 = vld [vmem:[%s0 + $0x60] sm:$0xf]
  %v52 = vld [vmem:[%s0 + $0x64] sm:$0xf]
  %v53 = vld [vmem:[%s0 + $0x68] sm:$0xf]
  %v54 = vld [vmem:[%s0 + $0x6c] sm:$0xf]
  %v55 = vld [vmem:[%s0 + $0x70] sm:$0xf]
  %v56 = vld [vmem:[%s0 + $0x74] sm:$0xf]
  %v57 = vld [vmem:[%s0 + $0x78] sm:$0xf]
  %v58 = vld [vmem:[%s0 + $0x7c] sm:$0xf]
  %v59 = vld [vmem:[%s0 + $0x80] sm:$0xf]
  %v60 = vld [vmem:[%s0 + $0x84] sm:$0xf]
  %v61 = vld [vmem:[%s0 + $0x88] sm:$0xf]
  %v62 = vld [vmem:[%s0 + $0x8c] sm:$0xf]
  %v63 = vld [vmem:[%s0 + $0x90] sm:$0xf]
  %v64 = vld [vmem:[%s0 + $0x94] sm:$0xf]
  %v65 = vld [vmem:[%s0 + $0x98] sm:$0xf]
  %v66 = vld [vmem:[%s0 + $0x9c] sm:$0xf]
  %v67 = vld [vmem:[%s0 + $0xa0] sm:$0xf]
  %v68 = vld [vmem:[%s0 + $0xa4] sm:$0xf]
  %v69 = vld [vmem:[%s0 + $0xa8] sm:$0xf]
  %v70 = vld [vmem:[%s0 + $0xac] sm:$0xf]
  %v71 = vld [vmem:[%s0 + $0xb0] sm:$0xf]
  %v72 = vld [vmem:[%s0 + $0xb4] sm:$0xf]
  %v73 = vld [vmem:[%s0 + $0xb8] sm:$0xf]
  %v74 = vld [vmem:[%s0 + $0xbc] sm:$0xf]
  %v75 = vld [vmem:[%s0 + $0xc0] sm:$0xf]
  %v76 = vld [vmem:[%s0 + $0xc4] sm:$0xf]
  %v77 = vld [vmem:[%s0 + $0xc8] sm:$0xf]
  %v78 = vld [vmem:[%s0 + $0xcc] sm:$0xf]
  %v79 = vld [vmem:[%s0 + $0xd0] sm:$0xf]
  %v80 = vld [vmem:[%s0 + $0xd4] sm:$0xf]
  %v81 = vld [vmem:[%s0 + $0xd8] sm:$0xf]
  %v82 = vld [vmem:[%s0 + $0xdc] sm:$0xf]
  %v83 = vld [vmem:[%s0 + $0xe0] sm:$0xf]
  %v84 = vld [vmem:[%s0 + $0xe4] sm:$0xf]
  %v85 = vld [vmem:[%s0 + $0xe8] sm:$0xf]
  %v86 = vld [vmem:[%s0 + $0xec] sm:$0xf]
  %v87 = vld [vmem:[%s0 + $0xf0] sm:$0xf]
  %v88 = vld [vmem:[%s0 + $0xf4] sm:$0xf]
  %v89 = vld [vmem:[%s0 + $0xf8] sm:$0xf]
  %v90 = vld [vmem:[%s0 + $0xfc] sm:$0xf]
  %v91 = vld [vmem:[%s1] sm:$0xf]
  %v92 = vld [vmem:[%s1 + $0x4] sm:$0xf]
  %v93 = vld [vmem:[%s1 + $0x8] sm:$0xf]
  %v94 = vld [vmem:[%s1 + $0xc] sm:$0xf]
  %v95 = vld [vmem:[%s1 + $0x10] sm:$0xf]
  %v96 = vld [vmem:[%s1 + $0x14] sm:$0xf]
  %v97 = vld [vmem:[%s1 + $0x18] sm:$0xf]
  %v98 = vld [vmem:[%s1 + $0x1c] sm:$0xf]
  %v99 = vld [vmem:[%s1 + $0x20] sm:$0xf]
  %v100 = vld [vmem:[%s2] sm:$0x1]
  %v102 = vlaneseq
  %v103 = vshrl.u32 %v102, 7
  %v104 = vsub.s32 0, %v103
  %v105 = vrot.slane %v100, %v104
  %v171 = vunpack.c.l.b16 %v27
  %v172 = vunpack.c.l.b16 %v28
  %v173 = vunpack.c.l.b16 %v29
  %v174 = vunpack.c.l.b16 %v30
  %v175 = vunpack.c.l.b16 %v31
  %v176 = vunpack.c.l.b16 %v32
  %v177 = vunpack.c.l.b16 %v33
  %v178 = vunpack.c.l.b16 %v34
  %v179 = vunpack.c.l.b16 %v35
  %v180 = vunpack.c.l.b16 %v36
  %v181 = vunpack.c.l.b16 %v37
  %v182 = vunpack.c.l.b16 %v38
  %v183 = vunpack.c.l.b16 %v39
  %v184 = vunpack.c.l.b16 %v40
  %v185 = vunpack.c.l.b16 %v41
  %v186 = vunpack.c.l.b16 %v42
  %v187 = vunpack.c.l.b16 %v43
  %v188 = vunpack.c.l.b16 %v44
  %v189 = vunpack.c.l.b16 %v45
  %v190 = vunpack.c.l.b16 %v46
  %v191 = vunpack.c.l.b16 %v47
  %v192 = vunpack.c.l.b16 %v48
  %v193 = vunpack.c.l.b16 %v49
  %v194 = vunpack.c.l.b16 %v50
  %v195 = vunpack.c.l.b16 %v51
  %v196 = vunpack.c.l.b16 %v52
  %v197 = vunpack.c.l.b16 %v53
  %v198 = vunpack.c.l.b16 %v54
  %v199 = vunpack.c.l.b16 %v55
  %v200 = vunpack.c.l.b16 %v56
  %v201 = vunpack.c.l.b16 %v57
  %v202 = vunpack.c.l.b16 %v58
  %v203 = vunpack.c.l.b16 %v59
  %v204 = vunpack.c.l.b16 %v60
  %v205 = vunpack.c.l.b16 %v61
  %v206 = vunpack.c.l.b16 %v62
  %v207 = vunpack.c.l.b16 %v63
  %v208 = vunpack.c.l.b16 %v64
  %v209 = vunpack.c.l.b16 %v65
  %v210 = vunpack.c.l.b16 %v66
  %v211 = vunpack.c.l.b16 %v67
  %v212 = vunpack.c.l.b16 %v68
  %v213 = vunpack.c.l.b16 %v69
  %v214 = vunpack.c.l.b16 %v70
  %v215 = vunpack.c.l.b16 %v71
  %v216 = vunpack.c.l.b16 %v72
  %v217 = vunpack.c.l.b16 %v73
  %v218 = vunpack.c.l.b16 %v74
  %v219 = vunpack.c.l.b16 %v75
  %v220 = vunpack.c.l.b16 %v76
  %v221 = vunpack.c.l.b16 %v77
  %v222 = vunpack.c.l.b16 %v78
  %v223 = vunpack.c.l.b16 %v79
  %v224 = vunpack.c.l.b16 %v80
  %v225 = vunpack.c.l.b16 %v81
  %v226 = vunpack.c.l.b16 %v82
  %v227 = vunpack.c.l.b16 %v83
  %v228 = vunpack.c.l.b16 %v84
  %v229 = vunpack.c.l.b16 %v85
  %v230 = vunpack.c.l.b16 %v86
  %v231 = vunpack.c.l.b16 %v87
  %v232 = vunpack.c.l.b16 %v88
  %v233 = vunpack.c.l.b16 %v89
  %v234 = vunpack.c.l.b16 %v90
  %v235 = vpack.c.b16 %v172, %v171
  %v236 = vpack.c.b16 %v174, %v173
  %v237 = vpack.c.b16 %v176, %v175
  %v238 = vpack.c.b16 %v178, %v177
  %v239 = vpack.c.b16 %v180, %v179
  %v240 = vpack.c.b16 %v182, %v181
  %v241 = vpack.c.b16 %v184, %v183
  %v242 = vpack.c.b16 %v186, %v185
  %v243 = vpack.c.b16 %v188, %v187
  %v244 = vpack.c.b16 %v190, %v189
  %v245 = vpack.c.b16 %v192, %v191
  %v246 = vpack.c.b16 %v194, %v193
  %v247 = vpack.c.b16 %v196, %v195
  %v248 = vpack.c.b16 %v198, %v197
  %v249 = vpack.c.b16 %v200, %v199
  %v250 = vpack.c.b16 %v202, %v201
  %v251 = vpack.c.b16 %v204, %v203
  %v252 = vpack.c.b16 %v206, %v205
  %v253 = vpack.c.b16 %v208, %v207
  %v254 = vpack.c.b16 %v210, %v209
  %v255 = vpack.c.b16 %v212, %v211
  %v256 = vpack.c.b16 %v214, %v213
  %v257 = vpack.c.b16 %v216, %v215
  %v258 = vpack.c.b16 %v218, %v217
  %v259 = vpack.c.b16 %v220, %v219
  %v260 = vpack.c.b16 %v222, %v221
  %v261 = vpack.c.b16 %v224, %v223
  %v262 = vpack.c.b16 %v226, %v225
  %v263 = vpack.c.b16 %v228, %v227
  %v264 = vpack.c.b16 %v230, %v229
  %v265 = vpack.c.b16 %v232, %v231
  %v266 = vpack.c.b16 %v234, %v233
  %v276 = vunpack.c.l.b16 %v91
  %v277 = vunpack.c.l.b16 %v92
  %v278 = vunpack.c.l.b16 %v93
  %v279 = vunpack.c.l.b16 %v94
  %v280 = vunpack.c.l.b16 %v95
  %v281 = vunpack.c.l.b16 %v96
  %v282 = vunpack.c.l.b16 %v97
  %v283 = vunpack.c.l.b16 %v98
  %v284 = vunpack.c.l.b16 %v99
  %v285 = vpack.c.b16 %v277, %v276
  %v286 = vpack.c.b16 %v279, %v278
  %v287 = vpack.c.b16 %v281, %v280
  %v288 = vpack.c.b16 %v283, %v282
  %v289 = vpack.c.b16 %v284, %v284
  %vm294 = vcmask 588800
  %v296 = vsel %vm294, %v235, 0
  %v299 = vsel %vm294, %v236, 0
  %v302 = vsel %vm294, %v237, 0
  %v305 = vsel %vm294, %v238, 0
  %v308 = vsel %vm294, %v239, 0
  %v311 = vsel %vm294, %v240, 0
  %v314 = vsel %vm294, %v241, 0
  %v317 = vsel %vm294, %v242, 0
  %v320 = vsel %vm294, %v243, 0
  %v323 = vsel %vm294, %v244, 0
  %v326 = vsel %vm294, %v245, 0
  %v329 = vsel %vm294, %v246, 0
  %v332 = vsel %vm294, %v247, 0
  %v335 = vsel %vm294, %v248, 0
  %v338 = vsel %vm294, %v249, 0
  %v341 = vsel %vm294, %v250, 0
  %v344 = vsel %vm294, %v251, 0
  %v347 = vsel %vm294, %v252, 0
  %v350 = vsel %vm294, %v253, 0
  %v353 = vsel %vm294, %v254, 0
  %v356 = vsel %vm294, %v255, 0
  %v359 = vsel %vm294, %v256, 0
  %v362 = vsel %vm294, %v257, 0
  %v365 = vsel %vm294, %v258, 0
  %v368 = vsel %vm294, %v259, 0
  %v371 = vsel %vm294, %v260, 0
  %v374 = vsel %vm294, %v261, 0
  %v377 = vsel %vm294, %v262, 0
  %v380 = vsel %vm294, %v263, 0
  %v383 = vsel %vm294, %v264, 0
  %v386 = vsel %vm294, %v265, 0
  %v389 = vsel %vm294, %v266, 0
  %vm391 = vcmask 1043456
  %v393 = vsel %vm391, %v289, 0
  %395 = vmatprep.subr.bf16.mxu0 0
  %396 = vmatpush1.bf16.msra.mxu0 0
  %397 = vmatprep.subr.bf16.mxu0 0
  %398 = vmatpush1.bf16.msra.mxu0 0
  %399 = vmatprep.subr.bf16.mxu0 0
  %400 = vmatpush1.bf16.msra.mxu0 0
  %401 = vmatprep.subr.bf16.mxu0 0
  %402 = vmatpush1.bf16.msra.mxu0 %v393
  %403 = vmatprep.subr.bf16.mxu0 0
  %404 = vmatpush1.bf16.msra.mxu0 %v288
  %405 = vmatprep.subr.bf16.mxu0 0
  %406 = vmatpush1.bf16.msra.mxu0 %v287
  %407 = vmatprep.subr.bf16.mxu0 0
  %408 = vmatpush1.bf16.msra.mxu0 %v286
  %409 = vmatprep.subr.bf16.mxu0 0
  %410 = vmatpush1.bf16.msra.mxu0 %v285
  %411 = vmatprep.subr.bf16.mxu0 0
  %412 = vmatpush2.bf16.msra.mxu0 0
  %413 = vmatprep.subr.bf16.mxu0 0
  %414 = vmatpush2.bf16.msra.mxu0 0
  %415 = vmatprep.subr.bf16.mxu0 0
  %416 = vmatpush2.bf16.msra.mxu0 0
  %417 = vmatprep.subr.bf16.mxu0 0
  %418 = vmatpush2.bf16.msra.mxu0 0
  %419 = vmatprep.subr.bf16.mxu0 0
  %420 = vmatpush2.bf16.msra.mxu0 0
  %421 = vmatprep.subr.bf16.mxu0 0
  %422 = vmatpush2.bf16.msra.mxu0 0
  %423 = vmatprep.subr.bf16.mxu0 0
  %424 = vmatpush2.bf16.msra.mxu0 0
  %425 = vmatprep.subr.bf16.mxu0 0
  %426 = vmatpush2.bf16.msra.mxu0 0
  %427 = vmatprep.mubr.bf16.mxu0 0
  %428 = vmatmul.mubr.bf16.gmra.mxu0 %v296
  %v429 = vpop.f32.mrf.mxu0
  %v430 = vadd.f32 %v105, %v429
  %v431 = vpop.f32.mrf.mxu0
  %v432 = vpop.f32.mrf.mxu0
  %v433 = vadd.f32 %v105, %v432
  %v434 = vpop.f32.mrf.mxu0
  %435 = vmatprep.mubr.bf16.mxu0 0
  %436 = vmatmul.mubr.bf16.gmra.mxu0 %v299
  %v437 = vpop.f32.mrf.mxu0
  %v438 = vadd.f32 %v105, %v437
  %v439 = vpop.f32.mrf.mxu0
  %v440 = vpop.f32.mrf.mxu0
  %v441 = vadd.f32 %v105, %v440
  %v442 = vpop.f32.mrf.mxu0
  %443 = vmatprep.mubr.bf16.mxu0 0
  %444 = vmatmul.mubr.bf16.gmra.mxu0 %v302
  %v445 = vpop.f32.mrf.mxu0
  %v446 = vadd.f32 %v105, %v445
  %v447 = vpop.f32.mrf.mxu0
  %v448 = vpop.f32.mrf.mxu0
  %v449 = vadd.f32 %v105, %v448
  %v450 = vpop.f32.mrf.mxu0
  %451 = vmatprep.mubr.bf16.mxu0 0
  %452 = vmatmul.mubr.bf16.gmra.mxu0 %v305
  %v453 = vpop.f32.mrf.mxu0
  %v454 = vadd.f32 %v105, %v453
  %v455 = vpop.f32.mrf.mxu0
  %v456 = vpop.f32.mrf.mxu0
  %v457 = vadd.f32 %v105, %v456
  %v458 = vpop.f32.mrf.mxu0
  %459 = vmatprep.mubr.bf16.mxu0 0
  %460 = vmatmul.mubr.bf16.gmra.mxu0 %v308
  %v461 = vpop.f32.mrf.mxu0
  %v462 = vadd.f32 %v105, %v461
  %v463 = vpop.f32.mrf.mxu0
  %v464 = vpop.f32.mrf.mxu0
  %v465 = vadd.f32 %v105, %v464
  %v466 = vpop.f32.mrf.mxu0
  %467 = vmatprep.mubr.bf16.mxu0 0
  %468 = vmatmul.mubr.bf16.gmra.mxu0 %v311
  %v469 = vpop.f32.mrf.mxu0
  %v470 = vadd.f32 %v105, %v469
  %v471 = vpop.f32.mrf.mxu0
  %v472 = vpop.f32.mrf.mxu0
  %v473 = vadd.f32 %v105, %v472
  %v474 = vpop.f32.mrf.mxu0
  %475 = vmatprep.mubr.bf16.mxu0 0
  %476 = vmatmul.mubr.bf16.gmra.mxu0 %v314
  %v477 = vpop.f32.mrf.mxu0
  %v478 = vadd.f32 %v105, %v477
  %v479 = vpop.f32.mrf.mxu0
  %v480 = vpop.f32.mrf.mxu0
  %v481 = vadd.f32 %v105, %v480
  %v482 = vpop.f32.mrf.mxu0
  %483 = vmatprep.mubr.bf16.mxu0 0
  %484 = vmatmul.mubr.bf16.gmra.mxu0 %v317
  %v485 = vpop.f32.mrf.mxu0
  %v486 = vadd.f32 %v105, %v485
  %v487 = vpop.f32.mrf.mxu0
  %v488 = vpop.f32.mrf.mxu0
  %v489 = vadd.f32 %v105, %v488
  %v490 = vpop.f32.mrf.mxu0
  %491 = vmatprep.mubr.bf16.mxu0 0
  %492 = vmatmul.mubr.bf16.gmra.mxu0 %v320
  %v493 = vpop.f32.mrf.mxu0
  %v494 = vadd.f32 %v105, %v493
  %v495 = vpop.f32.mrf.mxu0
  %v496 = vpop.f32.mrf.mxu0
  %v497 = vadd.f32 %v105, %v496
  %v498 = vpop.f32.mrf.mxu0
  %499 = vmatprep.mubr.bf16.mxu0 0
  %500 = vmatmul.mubr.bf16.gmra.mxu0 %v323
  %v501 = vpop.f32.mrf.mxu0
  %v502 = vadd.f32 %v105, %v501
  %v503 = vpop.f32.mrf.mxu0
  %v504 = vpop.f32.mrf.mxu0
  %v505 = vadd.f32 %v105, %v504
  %v506 = vpop.f32.mrf.mxu0
  %507 = vmatprep.mubr.bf16.mxu0 0
  %508 = vmatmul.mubr.bf16.gmra.mxu0 %v326
  %v509 = vpop.f32.mrf.mxu0
  %v510 = vadd.f32 %v105, %v509
  %v511 = vpop.f32.mrf.mxu0
  %v512 = vpop.f32.mrf.mxu0
  %v513 = vadd.f32 %v105, %v512
  %v514 = vpop.f32.mrf.mxu0
  %515 = vmatprep.mubr.bf16.mxu0 0
  %516 = vmatmul.mubr.bf16.gmra.mxu0 %v329
  %v517 = vpop.f32.mrf.mxu0
  %v518 = vadd.f32 %v105, %v517
  %v519 = vpop.f32.mrf.mxu0
  %v520 = vpop.f32.mrf.mxu0
  %v521 = vadd.f32 %v105, %v520
  %v522 = vpop.f32.mrf.mxu0
  %523 = vmatprep.mubr.bf16.mxu0 0
  %524 = vmatmul.mubr.bf16.gmra.mxu0 %v332
  %v525 = vpop.f32.mrf.mxu0
  %v526 = vadd.f32 %v105, %v525
  %v527 = vpop.f32.mrf.mxu0
  %v528 = vpop.f32.mrf.mxu0
  %v529 = vadd.f32 %v105, %v528
  %v530 = vpop.f32.mrf.mxu0
  %531 = vmatprep.mubr.bf16.mxu0 0
  %532 = vmatmul.mubr.bf16.gmra.mxu0 %v335
  %v533 = vpop.f32.mrf.mxu0
  %v534 = vadd.f32 %v105, %v533
  %v535 = vpop.f32.mrf.mxu0
  %v536 = vpop.f32.mrf.mxu0
  %v537 = vadd.f32 %v105, %v536
  %v538 = vpop.f32.mrf.mxu0
  %539 = vmatprep.mubr.bf16.mxu0 0
  %540 = vmatmul.mubr.bf16.gmra.mxu0 %v338
  %v541 = vpop.f32.mrf.mxu0
  %v542 = vadd.f32 %v105, %v541
  %v543 = vpop.f32.mrf.mxu0
  %v544 = vpop.f32.mrf.mxu0
  %v545 = vadd.f32 %v105, %v544
  %v546 = vpop.f32.mrf.mxu0
  %547 = vmatprep.mubr.bf16.mxu0 0
  %548 = vmatmul.mubr.bf16.gmra.mxu0 %v341
  %v549 = vpop.f32.mrf.mxu0
  %v550 = vadd.f32 %v105, %v549
  %v551 = vpop.f32.mrf.mxu0
  %v552 = vpop.f32.mrf.mxu0
  %v553 = vadd.f32 %v105, %v552
  %v554 = vpop.f32.mrf.mxu0
  %555 = vmatprep.mubr.bf16.mxu0 0
  %556 = vmatmul.mubr.bf16.gmra.mxu0 %v344
  %v557 = vpop.f32.mrf.mxu0
  %v558 = vadd.f32 %v105, %v557
  %v559 = vpop.f32.mrf.mxu0
  %v560 = vpop.f32.mrf.mxu0
  %v561 = vadd.f32 %v105, %v560
  %v562 = vpop.f32.mrf.mxu0
  %563 = vmatprep.mubr.bf16.mxu0 0
  %564 = vmatmul.mubr.bf16.gmra.mxu0 %v347
  %v565 = vpop.f32.mrf.mxu0
  %v566 = vadd.f32 %v105, %v565
  %v567 = vpop.f32.mrf.mxu0
  %v568 = vpop.f32.mrf.mxu0
  %v569 = vadd.f32 %v105, %v568
  %v570 = vpop.f32.mrf.mxu0
  %571 = vmatprep.mubr.bf16.mxu0 0
  %572 = vmatmul.mubr.bf16.gmra.mxu0 %v350
  %v573 = vpop.f32.mrf.mxu0
  %v574 = vadd.f32 %v105, %v573
  %v575 = vpop.f32.mrf.mxu0
  %v576 = vpop.f32.mrf.mxu0
  %v577 = vadd.f32 %v105, %v576
  %v578 = vpop.f32.mrf.mxu0
  %579 = vmatprep.mubr.bf16.mxu0 0
  %580 = vmatmul.mubr.bf16.gmra.mxu0 %v353
  %v581 = vpop.f32.mrf.mxu0
  %v582 = vadd.f32 %v105, %v581
  %v583 = vpop.f32.mrf.mxu0
  %v584 = vpop.f32.mrf.mxu0
  %v585 = vadd.f32 %v105, %v584
  %v586 = vpop.f32.mrf.mxu0
  %587 = vmatprep.mubr.bf16.mxu0 0
  %588 = vmatmul.mubr.bf16.gmra.mxu0 %v356
  %v589 = vpop.f32.mrf.mxu0
  %v590 = vadd.f32 %v105, %v589
  %v591 = vpop.f32.mrf.mxu0
  %v592 = vpop.f32.mrf.mxu0
  %v593 = vadd.f32 %v105, %v592
  %v594 = vpop.f32.mrf.mxu0
  %595 = vmatprep.mubr.bf16.mxu0 0
  %596 = vmatmul.mubr.bf16.gmra.mxu0 %v359
  %v597 = vpop.f32.mrf.mxu0
  %v598 = vadd.f32 %v105, %v597
  %v599 = vpop.f32.mrf.mxu0
  %v600 = vpop.f32.mrf.mxu0
  %v601 = vadd.f32 %v105, %v600
  %v602 = vpop.f32.mrf.mxu0
  %603 = vmatprep.mubr.bf16.mxu0 0
  %604 = vmatmul.mubr.bf16.gmra.mxu0 %v362
  %v605 = vpop.f32.mrf.mxu0
  %v606 = vadd.f32 %v105, %v605
  %v607 = vpop.f32.mrf.mxu0
  %v608 = vpop.f32.mrf.mxu0
  %v609 = vadd.f32 %v105, %v608
  %v610 = vpop.f32.mrf.mxu0
  %611 = vmatprep.mubr.bf16.mxu0 0
  %612 = vmatmul.mubr.bf16.gmra.mxu0 %v365
  %v613 = vpop.f32.mrf.mxu0
  %v614 = vadd.f32 %v105, %v613
  %v615 = vpop.f32.mrf.mxu0
  %v616 = vpop.f32.mrf.mxu0
  %v617 = vadd.f32 %v105, %v616
  %v618 = vpop.f32.mrf.mxu0
  %619 = vmatprep.mubr.bf16.mxu0 0
  %620 = vmatmul.mubr.bf16.gmra.mxu0 %v368
  %v621 = vpop.f32.mrf.mxu0
  %v622 = vadd.f32 %v105, %v621
  %v623 = vpop.f32.mrf.mxu0
  %v624 = vpop.f32.mrf.mxu0
  %v625 = vadd.f32 %v105, %v624
  %v626 = vpop.f32.mrf.mxu0
  %627 = vmatprep.mubr.bf16.mxu0 0
  %628 = vmatmul.mubr.bf16.gmra.mxu0 %v371
  %v629 = vpop.f32.mrf.mxu0
  %v630 = vadd.f32 %v105, %v629
  %v631 = vpop.f32.mrf.mxu0
  %v632 = vpop.f32.mrf.mxu0
  %v633 = vadd.f32 %v105, %v632
  %v634 = vpop.f32.mrf.mxu0
  %635 = vmatprep.mubr.bf16.mxu0 0
  %636 = vmatmul.mubr.bf16.gmra.mxu0 %v374
  %v637 = vpop.f32.mrf.mxu0
  %v638 = vadd.f32 %v105, %v637
  %v639 = vpop.f32.mrf.mxu0
  %v640 = vpop.f32.mrf.mxu0
  %v641 = vadd.f32 %v105, %v640
  %v642 = vpop.f32.mrf.mxu0
  %643 = vmatprep.mubr.bf16.mxu0 0
  %644 = vmatmul.mubr.bf16.gmra.mxu0 %v377
  %v645 = vpop.f32.mrf.mxu0
  %v646 = vadd.f32 %v105, %v645
  %v647 = vpop.f32.mrf.mxu0
  %v648 = vpop.f32.mrf.mxu0
  %v649 = vadd.f32 %v105, %v648
  %v650 = vpop.f32.mrf.mxu0
  %651 = vmatprep.mubr.bf16.mxu0 0
  %652 = vmatmul.mubr.bf16.gmra.mxu0 %v380
  %v653 = vpop.f32.mrf.mxu0
  %v654 = vadd.f32 %v105, %v653
  %v655 = vpop.f32.mrf.mxu0
  %v656 = vpop.f32.mrf.mxu0
  %v657 = vadd.f32 %v105, %v656
  %v658 = vpop.f32.mrf.mxu0
  %659 = vmatprep.mubr.bf16.mxu0 0
  %660 = vmatmul.mubr.bf16.gmra.mxu0 %v383
  %v661 = vpop.f32.mrf.mxu0
  %v662 = vadd.f32 %v105, %v661
  %v663 = vpop.f32.mrf.mxu0
  %v664 = vpop.f32.mrf.mxu0
  %v665 = vadd.f32 %v105, %v664
  %v666 = vpop.f32.mrf.mxu0
  %667 = vmatprep.mubr.bf16.mxu0 0
  %668 = vmatmul.mubr.bf16.gmra.mxu0 %v386
  %v669 = vpop.f32.mrf.mxu0
  %v670 = vadd.f32 %v105, %v669
  %v671 = vpop.f32.mrf.mxu0
  %v672 = vpop.f32.mrf.mxu0
  %v673 = vadd.f32 %v105, %v672
  %v674 = vpop.f32.mrf.mxu0
  %675 = vmatprep.mubr.bf16.mxu0 0
  %676 = vmatmul.mubr.bf16.gmra.mxu0 %v389
  %v677 = vpop.f32.mrf.mxu0
  %v678 = vadd.f32 %v105, %v677
  %v679 = vpop.f32.mrf.mxu0
  %v680 = vpop.f32.mrf.mxu0
  %v681 = vadd.f32 %v105, %v680
  %v682 = vpop.f32.mrf.mxu0
  %683 = vdwg.mxu0
  %v684 = vpack.c.bf16 %v433, %v430
  %v685 = vpack.c.bf16 %v441, %v438
  %v686 = vpack.c.bf16 %v449, %v446
  %v687 = vpack.c.bf16 %v457, %v454
  %v688 = vpack.c.bf16 %v465, %v462
  %v689 = vpack.c.bf16 %v473, %v470
  %v690 = vpack.c.bf16 %v481, %v478
  %v691 = vpack.c.bf16 %v489, %v486
  %v692 = vpack.c.bf16 %v497, %v494
  %v693 = vpack.c.bf16 %v505, %v502
  %v694 = vpack.c.bf16 %v513, %v510
  %v695 = vpack.c.bf16 %v521, %v518
  %v696 = vpack.c.bf16 %v529, %v526
  %v697 = vpack.c.bf16 %v537, %v534
  %v698 = vpack.c.bf16 %v545, %v542
  %v699 = vpack.c.bf16 %v553, %v550
  %v700 = vpack.c.bf16 %v561, %v558
  %v701 = vpack.c.bf16 %v569, %v566
  %v702 = vpack.c.bf16 %v577, %v574
  %v703 = vpack.c.bf16 %v585, %v582
  %v704 = vpack.c.bf16 %v593, %v590
  %v705 = vpack.c.bf16 %v601, %v598
  %v706 = vpack.c.bf16 %v609, %v606
  %v707 = vpack.c.bf16 %v617, %v614
  %v708 = vpack.c.bf16 %v625, %v622
  %v709 = vpack.c.bf16 %v633, %v630
  %v710 = vpack.c.bf16 %v641, %v638
  %v711 = vpack.c.bf16 %v649, %v646
  %v712 = vpack.c.bf16 %v657, %v654
  %v713 = vpack.c.bf16 %v665, %v662
  %v714 = vpack.c.bf16 %v673, %v670
  %v715 = vpack.c.bf16 %v681, %v678
  %v716 = vld [vmem:[%s3] sm:$0xf]
  %v717 = vld [vmem:[%s4] sm:$0x1]
  %v719 = vlaneseq
  %v720 = vshrl.u32 %v719, 7
  %v721 = vsub.s32 0, %v720
  %v722 = vrot.slane %v717, %v721
  %vm724 = vcmask 64512
  %v726 = vsel %vm724, %v684, 0
  %v729 = vsel %vm724, %v685, 0
  %v732 = vsel %vm724, %v686, 0
  %v735 = vsel %vm724, %v687, 0
  %v738 = vsel %vm724, %v688, 0
  %v741 = vsel %vm724, %v689, 0
  %v744 = vsel %vm724, %v690, 0
  %v747 = vsel %vm724, %v691, 0
  %v750 = vsel %vm724, %v692, 0
  %v753 = vsel %vm724, %v693, 0
  %v756 = vsel %vm724, %v694, 0
  %v759 = vsel %vm724, %v695, 0
  %v762 = vsel %vm724, %v696, 0
  %v765 = vsel %vm724, %v697, 0
  %v768 = vsel %vm724, %v698, 0
  %v771 = vsel %vm724, %v699, 0
  %v774 = vsel %vm724, %v700, 0
  %v777 = vsel %vm724, %v701, 0
  %v780 = vsel %vm724, %v702, 0
  %v783 = vsel %vm724, %v703, 0
  %v786 = vsel %vm724, %v704, 0
  %v789 = vsel %vm724, %v705, 0
  %v792 = vsel %vm724, %v706, 0
  %v795 = vsel %vm724, %v707, 0
  %v798 = vsel %vm724, %v708, 0
  %v801 = vsel %vm724, %v709, 0
  %v804 = vsel %vm724, %v710, 0
  %v807 = vsel %vm724, %v711, 0
  %v810 = vsel %vm724, %v712, 0
  %v813 = vsel %vm724, %v713, 0
  %v816 = vsel %vm724, %v714, 0
  %v819 = vsel %vm724, %v715, 0
  %v822 = vsel %vm391, %v716, 0
  %824 = vmatprep.subr.bf16.mxu0 0
  %825 = vmatpush1.bf16.msra.mxu0 0
  %826 = vmatprep.subr.bf16.mxu0 0
  %827 = vmatpush1.bf16.msra.mxu0 0
  %828 = vmatprep.subr.bf16.mxu0 0
  %829 = vmatpush1.bf16.msra.mxu0 0
  %830 = vmatprep.subr.bf16.mxu0 0
  %831 = vmatpush1.bf16.msra.mxu0 0
  %832 = vmatprep.subr.bf16.mxu0 0
  %833 = vmatpush1.bf16.msra.mxu0 0
  %834 = vmatprep.subr.bf16.mxu0 0
  %835 = vmatpush1.bf16.msra.mxu0 0
  %836 = vmatprep.subr.bf16.mxu0 0
  %837 = vmatpush1.bf16.msra.mxu0 0
  %838 = vmatprep.subr.bf16.mxu0 0
  %839 = vmatpush1.bf16.msra.mxu0 %v822
  %840 = vmatprep.subr.bf16.mxu0 0
  %841 = vmatpush2.bf16.msra.mxu0 0
  %842 = vmatprep.subr.bf16.mxu0 0
  %843 = vmatpush2.bf16.msra.mxu0 0
  %844 = vmatprep.subr.bf16.mxu0 0
  %845 = vmatpush2.bf16.msra.mxu0 0
  %846 = vmatprep.subr.bf16.mxu0 0
  %847 = vmatpush2.bf16.msra.mxu0 0
  %848 = vmatprep.subr.bf16.mxu0 0
  %849 = vmatpush2.bf16.msra.mxu0 0
  %850 = vmatprep.subr.bf16.mxu0 0
  %851 = vmatpush2.bf16.msra.mxu0 0
  %852 = vmatprep.subr.bf16.mxu0 0
  %853 = vmatpush2.bf16.msra.mxu0 0
  %854 = vmatprep.subr.bf16.mxu0 0
  %855 = vmatpush2.bf16.msra.mxu0 0
  %856 = vmatprep.mubr.bf16.mxu0 0
  %857 = vmatmul.mubr.bf16.gmra.mxu0 %v726
  %v858 = vpop.f32.mrf.mxu0
  %v859 = vadd.f32 %v722, %v858
  %v860 = vpop.f32.mrf.mxu0
  %v861 = vpop.f32.mrf.mxu0
  %v862 = vadd.f32 %v722, %v861
  %v863 = vpop.f32.mrf.mxu0
  %864 = vmatprep.mubr.bf16.mxu0 0
  %865 = vmatmul.mubr.bf16.gmra.mxu0 %v729
  %v866 = vpop.f32.mrf.mxu0
  %v867 = vadd.f32 %v722, %v866
  %v868 = vpop.f32.mrf.mxu0
  %v869 = vpop.f32.mrf.mxu0
  %v870 = vadd.f32 %v722, %v869
  %v871 = vpop.f32.mrf.mxu0
  %872 = vmatprep.mubr.bf16.mxu0 0
  %873 = vmatmul.mubr.bf16.gmra.mxu0 %v732
  %v874 = vpop.f32.mrf.mxu0
  %v875 = vadd.f32 %v722, %v874
  %v876 = vpop.f32.mrf.mxu0
  %v877 = vpop.f32.mrf.mxu0
  %v878 = vadd.f32 %v722, %v877
  %v879 = vpop.f32.mrf.mxu0
  %880 = vmatprep.mubr.bf16.mxu0 0
  %881 = vmatmul.mubr.bf16.gmra.mxu0 %v735
  %v882 = vpop.f32.mrf.mxu0
  %v883 = vadd.f32 %v722, %v882
  %v884 = vpop.f32.mrf.mxu0
  %v885 = vpop.f32.mrf.mxu0
  %v886 = vadd.f32 %v722, %v885
  %v887 = vpop.f32.mrf.mxu0
  %888 = vmatprep.mubr.bf16.mxu0 0
  %889 = vmatmul.mubr.bf16.gmra.mxu0 %v738
  %v890 = vpop.f32.mrf.mxu0
  %v891 = vadd.f32 %v722, %v890
  %v892 = vpop.f32.mrf.mxu0
  %v893 = vpop.f32.mrf.mxu0
  %v894 = vadd.f32 %v722, %v893
  %v895 = vpop.f32.mrf.mxu0
  %896 = vmatprep.mubr.bf16.mxu0 0
  %897 = vmatmul.mubr.bf16.gmra.mxu0 %v741
  %v898 = vpop.f32.mrf.mxu0
  %v899 = vadd.f32 %v722, %v898
  %v900 = vpop.f32.mrf.mxu0
  %v901 = vpop.f32.mrf.mxu0
  %v902 = vadd.f32 %v722, %v901
  %v903 = vpop.f32.mrf.mxu0
  %904 = vmatprep.mubr.bf16.mxu0 0
  %905 = vmatmul.mubr.bf16.gmra.mxu0 %v744
  %v906 = vpop.f32.mrf.mxu0
  %v907 = vadd.f32 %v722, %v906
  %v908 = vpop.f32.mrf.mxu0
  %v909 = vpop.f32.mrf.mxu0
  %v910 = vadd.f32 %v722, %v909
  %v911 = vpop.f32.mrf.mxu0
  %912 = vmatprep.mubr.bf16.mxu0 0
  %913 = vmatmul.mubr.bf16.gmra.mxu0 %v747
  %v914 = vpop.f32.mrf.mxu0
  %v915 = vadd.f32 %v722, %v914
  %v916 = vpop.f32.mrf.mxu0
  %v917 = vpop.f32.mrf.mxu0
  %v918 = vadd.f32 %v722, %v917
  %v919 = vpop.f32.mrf.mxu0
  %920 = vmatprep.mubr.bf16.mxu0 0
  %921 = vmatmul.mubr.bf16.gmra.mxu0 %v750
  %v922 = vpop.f32.mrf.mxu0
  %v923 = vadd.f32 %v722, %v922
  %v924 = vpop.f32.mrf.mxu0
  %v925 = vpop.f32.mrf.mxu0
  %v926 = vadd.f32 %v722, %v925
  %v927 = vpop.f32.mrf.mxu0
  %928 = vmatprep.mubr.bf16.mxu0 0
  %929 = vmatmul.mubr.bf16.gmra.mxu0 %v753
  %v930 = vpop.f32.mrf.mxu0
  %v931 = vadd.f32 %v722, %v930
  %v932 = vpop.f32.mrf.mxu0
  %v933 = vpop.f32.mrf.mxu0
  %v934 = vadd.f32 %v722, %v933
  %v935 = vpop.f32.mrf.mxu0
  %936 = vmatprep.mubr.bf16.mxu0 0
  %937 = vmatmul.mubr.bf16.gmra.mxu0 %v756
  %v938 = vpop.f32.mrf.mxu0
  %v939 = vadd.f32 %v722, %v938
  %v940 = vpop.f32.mrf.mxu0
  %v941 = vpop.f32.mrf.mxu0
  %v942 = vadd.f32 %v722, %v941
  %v943 = vpop.f32.mrf.mxu0
  %944 = vmatprep.mubr.bf16.mxu0 0
  %945 = vmatmul.mubr.bf16.gmra.mxu0 %v759
  %v946 = vpop.f32.mrf.mxu0
  %v947 = vadd.f32 %v722, %v946
  %v948 = vpop.f32.mrf.mxu0
  %v949 = vpop.f32.mrf.mxu0
  %v950 = vadd.f32 %v722, %v949
  %v951 = vpop.f32.mrf.mxu0
  %952 = vmatprep.mubr.bf16.mxu0 0
  %953 = vmatmul.mubr.bf16.gmra.mxu0 %v762
  %v954 = vpop.f32.mrf.mxu0
  %v955 = vadd.f32 %v722, %v954
  %v956 = vpop.f32.mrf.mxu0
  %v957 = vpop.f32.mrf.mxu0
  %v958 = vadd.f32 %v722, %v957
  %v959 = vpop.f32.mrf.mxu0
  %960 = vmatprep.mubr.bf16.mxu0 0
  %961 = vmatmul.mubr.bf16.gmra.mxu0 %v765
  %v962 = vpop.f32.mrf.mxu0
  %v963 = vadd.f32 %v722, %v962
  %v964 = vpop.f32.mrf.mxu0
  %v965 = vpop.f32.mrf.mxu0
  %v966 = vadd.f32 %v722, %v965
  %v967 = vpop.f32.mrf.mxu0
  %968 = vmatprep.mubr.bf16.mxu0 0
  %969 = vmatmul.mubr.bf16.gmra.mxu0 %v768
  %v970 = vpop.f32.mrf.mxu0
  %v971 = vadd.f32 %v722, %v970
  %v972 = vpop.f32.mrf.mxu0
  %v973 = vpop.f32.mrf.mxu0
  %v974 = vadd.f32 %v722, %v973
  %v975 = vpop.f32.mrf.mxu0
  %976 = vmatprep.mubr.bf16.mxu0 0
  %977 = vmatmul.mubr.bf16.gmra.mxu0 %v771
  %v978 = vpop.f32.mrf.mxu0
  %v979 = vadd.f32 %v722, %v978
  %v980 = vpop.f32.mrf.mxu0
  %v981 = vpop.f32.mrf.mxu0
  %v982 = vadd.f32 %v722, %v981
  %v983 = vpop.f32.mrf.mxu0
  %984 = vmatprep.mubr.bf16.mxu0 0
  %985 = vmatmul.mubr.bf16.gmra.mxu0 %v774
  %v986 = vpop.f32.mrf.mxu0
  %v987 = vadd.f32 %v722, %v986
  %v988 = vpop.f32.mrf.mxu0
  %v989 = vpop.f32.mrf.mxu0
  %v990 = vadd.f32 %v722, %v989
  %v991 = vpop.f32.mrf.mxu0
  %992 = vmatprep.mubr.bf16.mxu0 0
  %993 = vmatmul.mubr.bf16.gmra.mxu0 %v777
  %v994 = vpop.f32.mrf.mxu0
  %v995 = vadd.f32 %v722, %v994
  %v996 = vpop.f32.mrf.mxu0
  %v997 = vpop.f32.mrf.mxu0
  %v998 = vadd.f32 %v722, %v997
  %v999 = vpop.f32.mrf.mxu0
  %1000 = vmatprep.mubr.bf16.mxu0 0
  %1001 = vmatmul.mubr.bf16.gmra.mxu0 %v780
  %v1002 = vpop.f32.mrf.mxu0
  %v1003 = vadd.f32 %v722, %v1002
  %v1004 = vpop.f32.mrf.mxu0
  %v1005 = vpop.f32.mrf.mxu0
  %v1006 = vadd.f32 %v722, %v1005
  %v1007 = vpop.f32.mrf.mxu0
  %1008 = vmatprep.mubr.bf16.mxu0 0
  %1009 = vmatmul.mubr.bf16.gmra.mxu0 %v783
  %v1010 = vpop.f32.mrf.mxu0
  %v1011 = vadd.f32 %v722, %v1010
  %v1012 = vpop.f32.mrf.mxu0
  %v1013 = vpop.f32.mrf.mxu0
  %v1014 = vadd.f32 %v722, %v1013
  %v1015 = vpop.f32.mrf.mxu0
  %1016 = vmatprep.mubr.bf16.mxu0 0
  %1017 = vmatmul.mubr.bf16.gmra.mxu0 %v786
  %v1018 = vpop.f32.mrf.mxu0
  %v1019 = vadd.f32 %v722, %v1018
  %v1020 = vpop.f32.mrf.mxu0
  %v1021 = vpop.f32.mrf.mxu0
  %v1022 = vadd.f32 %v722, %v1021
  %v1023 = vpop.f32.mrf.mxu0
  %1024 = vmatprep.mubr.bf16.mxu0 0
  %1025 = vmatmul.mubr.bf16.gmra.mxu0 %v789
  %v1026 = vpop.f32.mrf.mxu0
  %v1027 = vadd.f32 %v722, %v1026
  %v1028 = vpop.f32.mrf.mxu0
  %v1029 = vpop.f32.mrf.mxu0
  %v1030 = vadd.f32 %v722, %v1029
  %v1031 = vpop.f32.mrf.mxu0
  %1032 = vmatprep.mubr.bf16.mxu0 0
  %1033 = vmatmul.mubr.bf16.gmra.mxu0 %v792
  %v1034 = vpop.f32.mrf.mxu0
  %v1035 = vadd.f32 %v722, %v1034
  %v1036 = vpop.f32.mrf.mxu0
  %v1037 = vpop.f32.mrf.mxu0
  %v1038 = vadd.f32 %v722, %v1037
  %v1039 = vpop.f32.mrf.mxu0
  %1040 = vmatprep.mubr.bf16.mxu0 0
  %1041 = vmatmul.mubr.bf16.gmra.mxu0 %v795
  %v1042 = vpop.f32.mrf.mxu0
  %v1043 = vadd.f32 %v722, %v1042
  %v1044 = vpop.f32.mrf.mxu0
  %v1045 = vpop.f32.mrf.mxu0
  %v1046 = vadd.f32 %v722, %v1045
  %v1047 = vpop.f32.mrf.mxu0
  %1048 = vmatprep.mubr.bf16.mxu0 0
  %1049 = vmatmul.mubr.bf16.gmra.mxu0 %v798
  %v1050 = vpop.f32.mrf.mxu0
  %v1051 = vadd.f32 %v722, %v1050
  %v1052 = vpop.f32.mrf.mxu0
  %v1053 = vpop.f32.mrf.mxu0
  %v1054 = vadd.f32 %v722, %v1053
  %v1055 = vpop.f32.mrf.mxu0
  %1056 = vmatprep.mubr.bf16.mxu0 0
  %1057 = vmatmul.mubr.bf16.gmra.mxu0 %v801
  %v1058 = vpop.f32.mrf.mxu0
  %v1059 = vadd.f32 %v722, %v1058
  %v1060 = vpop.f32.mrf.mxu0
  %v1061 = vpop.f32.mrf.mxu0
  %v1062 = vadd.f32 %v722, %v1061
  %v1063 = vpop.f32.mrf.mxu0
  %1064 = vmatprep.mubr.bf16.mxu0 0
  %1065 = vmatmul.mubr.bf16.gmra.mxu0 %v804
  %v1066 = vpop.f32.mrf.mxu0
  %v1067 = vadd.f32 %v722, %v1066
  %v1068 = vpop.f32.mrf.mxu0
  %v1069 = vpop.f32.mrf.mxu0
  %v1070 = vadd.f32 %v722, %v1069
  %v1071 = vpop.f32.mrf.mxu0
  %1072 = vmatprep.mubr.bf16.mxu0 0
  %1073 = vmatmul.mubr.bf16.gmra.mxu0 %v807
  %v1074 = vpop.f32.mrf.mxu0
  %v1075 = vadd.f32 %v722, %v1074
  %v1076 = vpop.f32.mrf.mxu0
  %v1077 = vpop.f32.mrf.mxu0
  %v1078 = vadd.f32 %v722, %v1077
  %v1079 = vpop.f32.mrf.mxu0
  %1080 = vmatprep.mubr.bf16.mxu0 0
  %1081 = vmatmul.mubr.bf16.gmra.mxu0 %v810
  %v1082 = vpop.f32.mrf.mxu0
  %v1083 = vadd.f32 %v722, %v1082
  %v1084 = vpop.f32.mrf.mxu0
  %v1085 = vpop.f32.mrf.mxu0
  %v1086 = vadd.f32 %v722, %v1085
  %v1087 = vpop.f32.mrf.mxu0
  %1088 = vmatprep.mubr.bf16.mxu0 0
  %1089 = vmatmul.mubr.bf16.gmra.mxu0 %v813
  %v1090 = vpop.f32.mrf.mxu0
  %v1091 = vadd.f32 %v722, %v1090
  %v1092 = vpop.f32.mrf.mxu0
  %v1093 = vpop.f32.mrf.mxu0
  %v1094 = vadd.f32 %v722, %v1093
  %v1095 = vpop.f32.mrf.mxu0
  %1096 = vmatprep.mubr.bf16.mxu0 0
  %1097 = vmatmul.mubr.bf16.gmra.mxu0 %v816
  %v1098 = vpop.f32.mrf.mxu0
  %v1099 = vadd.f32 %v722, %v1098
  %v1100 = vpop.f32.mrf.mxu0
  %v1101 = vpop.f32.mrf.mxu0
  %v1102 = vadd.f32 %v722, %v1101
  %v1103 = vpop.f32.mrf.mxu0
  %1104 = vmatprep.mubr.bf16.mxu0 0
  %1105 = vmatmul.mubr.bf16.gmra.mxu0 %v819
  %v1106 = vpop.f32.mrf.mxu0
  %v1107 = vadd.f32 %v722, %v1106
  %v1108 = vpop.f32.mrf.mxu0
  %v1109 = vpop.f32.mrf.mxu0
  %v1110 = vadd.f32 %v722, %v1109
  %v1111 = vpop.f32.mrf.mxu0
  %1112 = vdwg.mxu0
  %v1113 = vsub.f32 0.0, %v859
  %v1114 = vsub.f32 0.0, %v862
  %v1115 = vsub.f32 0.0, %v867
  %v1116 = vsub.f32 0.0, %v870
  %v1117 = vsub.f32 0.0, %v875
  %v1118 = vsub.f32 0.0, %v878
  %v1119 = vsub.f32 0.0, %v883
  %v1120 = vsub.f32 0.0, %v886
  %v1121 = vsub.f32 0.0, %v891
  %v1122 = vsub.f32 0.0, %v894
  %v1123 = vsub.f32 0.0, %v899
  %v1124 = vsub.f32 0.0, %v902
  %v1125 = vsub.f32 0.0, %v907
  %v1126 = vsub.f32 0.0, %v910
  %v1127 = vsub.f32 0.0, %v915
  %v1128 = vsub.f32 0.0, %v918
  %v1129 = vsub.f32 0.0, %v923
  %v1130 = vsub.f32 0.0, %v926
  %v1131 = vsub.f32 0.0, %v931
  %v1132 = vsub.f32 0.0, %v934
  %v1133 = vsub.f32 0.0, %v939
  %v1134 = vsub.f32 0.0, %v942
  %v1135 = vsub.f32 0.0, %v947
  %v1136 = vsub.f32 0.0, %v950
  %v1137 = vsub.f32 0.0, %v955
  %v1138 = vsub.f32 0.0, %v958
  %v1139 = vsub.f32 0.0, %v963
  %v1140 = vsub.f32 0.0, %v966
  %v1141 = vsub.f32 0.0, %v971
  %v1142 = vsub.f32 0.0, %v974
  %v1143 = vsub.f32 0.0, %v979
  %v1144 = vsub.f32 0.0, %v982
  %v1145 = vsub.f32 0.0, %v987
  %v1146 = vsub.f32 0.0, %v990
  %v1147 = vsub.f32 0.0, %v995
  %v1148 = vsub.f32 0.0, %v998
  %v1149 = vsub.f32 0.0, %v1003
  %v1150 = vsub.f32 0.0, %v1006
  %v1151 = vsub.f32 0.0, %v1011
  %v1152 = vsub.f32 0.0, %v1014
  %v1153 = vsub.f32 0.0, %v1019
  %v1154 = vsub.f32 0.0, %v1022
  %v1155 = vsub.f32 0.0, %v1027
  %v1156 = vsub.f32 0.0, %v1030
  %v1157 = vsub.f32 0.0, %v1035
  %v1158 = vsub.f32 0.0, %v1038
  %v1159 = vsub.f32 0.0, %v1043
  %v1160 = vsub.f32 0.0, %v1046
  %v1161 = vsub.f32 0.0, %v1051
  %v1162 = vsub.f32 0.0, %v1054
  %v1163 = vsub.f32 0.0, %v1059
  %v1164 = vsub.f32 0.0, %v1062
  %v1165 = vsub.f32 0.0, %v1067
  %v1166 = vsub.f32 0.0, %v1070
  %v1167 = vsub.f32 0.0, %v1075
  %v1168 = vsub.f32 0.0, %v1078
  %v1169 = vsub.f32 0.0, %v1083
  %v1170 = vsub.f32 0.0, %v1086
  %v1171 = vsub.f32 0.0, %v1091
  %v1172 = vsub.f32 0.0, %v1094
  %v1173 = vsub.f32 0.0, %v1099
  %v1174 = vsub.f32 0.0, %v1102
  %v1175 = vsub.f32 0.0, %v1107
  %v1176 = vsub.f32 0.0, %v1110
  %v1177 = vmul.f32 %v1113, 1.442695
  %v1178 = vpow.pop %v1177
  %v1179 = vmul.f32 %v1114, 1.442695
  %v1180 = vpow.pop %v1179
  %v1181 = vmul.f32 %v1115, 1.442695
  %v1182 = vpow.pop %v1181
  %v1183 = vmul.f32 %v1116, 1.442695
  %v1184 = vpow.pop %v1183
  %v1185 = vmul.f32 %v1117, 1.442695
  %v1186 = vpow.pop %v1185
  %v1187 = vmul.f32 %v1118, 1.442695
  %v1188 = vpow.pop %v1187
  %v1189 = vmul.f32 %v1119, 1.442695
  %v1190 = vpow.pop %v1189
  %v1191 = vmul.f32 %v1120, 1.442695
  %v1192 = vpow.pop %v1191
  %v1193 = vmul.f32 %v1121, 1.442695
  %v1194 = vpow.pop %v1193
  %v1195 = vmul.f32 %v1122, 1.442695
  %v1196 = vpow.pop %v1195
  %v1197 = vmul.f32 %v1123, 1.442695
  %v1198 = vpow.pop %v1197
  %v1199 = vmul.f32 %v1124, 1.442695
  %v1200 = vpow.pop %v1199
  %v1201 = vmul.f32 %v1125, 1.442695
  %v1202 = vpow.pop %v1201
  %v1203 = vmul.f32 %v1126, 1.442695
  %v1204 = vpow.pop %v1203
  %v1205 = vmul.f32 %v1127, 1.442695
  %v1206 = vpow.pop %v1205
  %v1207 = vmul.f32 %v1128, 1.442695
  %v1208 = vpow.pop %v1207
  %v1209 = vmul.f32 %v1129, 1.442695
  %v1210 = vpow.pop %v1209
  %v1211 = vmul.f32 %v1130, 1.442695
  %v1212 = vpow.pop %v1211
  %v1213 = vmul.f32 %v1131, 1.442695
  %v1214 = vpow.pop %v1213
  %v1215 = vmul.f32 %v1132, 1.442695
  %v1216 = vpow.pop %v1215
  %v1217 = vmul.f32 %v1133, 1.442695
  %v1218 = vpow.pop %v1217
  %v1219 = vmul.f32 %v1134, 1.442695
  %v1220 = vpow.pop %v1219
  %v1221 = vmul.f32 %v1135, 1.442695
  %v1222 = vpow.pop %v1221
  %v1223 = vmul.f32 %v1136, 1.442695
  %v1224 = vpow.pop %v1223
  %v1225 = vmul.f32 %v1137, 1.442695
  %v1226 = vpow.pop %v1225
  %v1227 = vmul.f32 %v1138, 1.442695
  %v1228 = vpow.pop %v1227
  %v1229 = vmul.f32 %v1139, 1.442695
  %v1230 = vpow.pop %v1229
  %v1231 = vmul.f32 %v1140, 1.442695
  %v1232 = vpow.pop %v1231
  %v1233 = vmul.f32 %v1141, 1.442695
  %v1234 = vpow.pop %v1233
  %v1235 = vmul.f32 %v1142, 1.442695
  %v1236 = vpow.pop %v1235
  %v1237 = vmul.f32 %v1143, 1.442695
  %v1238 = vpow.pop %v1237
  %v1239 = vmul.f32 %v1144, 1.442695
  %v1240 = vpow.pop %v1239
  %v1241 = vmul.f32 %v1145, 1.442695
  %v1242 = vpow.pop %v1241
  %v1243 = vmul.f32 %v1146, 1.442695
  %v1244 = vpow.pop %v1243
  %v1245 = vmul.f32 %v1147, 1.442695
  %v1246 = vpow.pop %v1245
  %v1247 = vmul.f32 %v1148, 1.442695
  %v1248 = vpow.pop %v1247
  %v1249 = vmul.f32 %v1149, 1.442695
  %v1250 = vpow.pop %v1249
  %v1251 = vmul.f32 %v1150, 1.442695
  %v1252 = vpow.pop %v1251
  %v1253 = vmul.f32 %v1151, 1.442695
  %v1254 = vpow.pop %v1253
  %v1255 = vmul.f32 %v1152, 1.442695
  %v1256 = vpow.pop %v1255
  %v1257 = vmul.f32 %v1153, 1.442695
  %v1258 = vpow.pop %v1257
  %v1259 = vmul.f32 %v1154, 1.442695
  %v1260 = vpow.pop %v1259
  %v1261 = vmul.f32 %v1155, 1.442695
  %v1262 = vpow.pop %v1261
  %v1263 = vmul.f32 %v1156, 1.442695
  %v1264 = vpow.pop %v1263
  %v1265 = vmul.f32 %v1157, 1.442695
  %v1266 = vpow.pop %v1265
  %v1267 = vmul.f32 %v1158, 1.442695
  %v1268 = vpow.pop %v1267
  %v1269 = vmul.f32 %v1159, 1.442695
  %v1270 = vpow.pop %v1269
  %v1271 = vmul.f32 %v1160, 1.442695
  %v1272 = vpow.pop %v1271
  %v1273 = vmul.f32 %v1161, 1.442695
  %v1274 = vpow.pop %v1273
  %v1275 = vmul.f32 %v1162, 1.442695
  %v1276 = vpow.pop %v1275
  %v1277 = vmul.f32 %v1163, 1.442695
  %v1278 = vpow.pop %v1277
  %v1279 = vmul.f32 %v1164, 1.442695
  %v1280 = vpow.pop %v1279
  %v1281 = vmul.f32 %v1165, 1.442695
  %v1282 = vpow.pop %v1281
  %v1283 = vmul.f32 %v1166, 1.442695
  %v1284 = vpow.pop %v1283
  %v1285 = vmul.f32 %v1167, 1.442695
  %v1286 = vpow.pop %v1285
  %v1287 = vmul.f32 %v1168, 1.442695
  %v1288 = vpow.pop %v1287
  %v1289 = vmul.f32 %v1169, 1.442695
  %v1290 = vpow.pop %v1289
  %v1291 = vmul.f32 %v1170, 1.442695
  %v1292 = vpow.pop %v1291
  %v1293 = vmul.f32 %v1171, 1.442695
  %v1294 = vpow.pop %v1293
  %v1295 = vmul.f32 %v1172, 1.442695
  %v1296 = vpow.pop %v1295
  %v1297 = vmul.f32 %v1173, 1.442695
  %v1298 = vpow.pop %v1297
  %v1299 = vmul.f32 %v1174, 1.442695
  %v1300 = vpow.pop %v1299
  %v1301 = vmul.f32 %v1175, 1.442695
  %v1302 = vpow.pop %v1301
  %v1303 = vmul.f32 %v1176, 1.442695
  %v1304 = vpow.pop %v1303
  %v1305 = vadd.f32 %v1178, 1.0
  %v1306 = vadd.f32 %v1180, 1.0
  %v1307 = vadd.f32 %v1182, 1.0
  %v1308 = vadd.f32 %v1184, 1.0
  %v1309 = vadd.f32 %v1186, 1.0
  %v1310 = vadd.f32 %v1188, 1.0
  %v1311 = vadd.f32 %v1190, 1.0
  %v1312 = vadd.f32 %v1192, 1.0
  %v1313 = vadd.f32 %v1194, 1.0
  %v1314 = vadd.f32 %v1196, 1.0
  %v1315 = vadd.f32 %v1198, 1.0
  %v1316 = vadd.f32 %v1200, 1.0
  %v1317 = vadd.f32 %v1202, 1.0
  %v1318 = vadd.f32 %v1204, 1.0
  %v1319 = vadd.f32 %v1206, 1.0
  %v1320 = vadd.f32 %v1208, 1.0
  %v1321 = vadd.f32 %v1210, 1.0
  %v1322 = vadd.f32 %v1212, 1.0
  %v1323 = vadd.f32 %v1214, 1.0
  %v1324 = vadd.f32 %v1216, 1.0
  %v1325 = vadd.f32 %v1218, 1.0
  %v1326 = vadd.f32 %v1220, 1.0
  %v1327 = vadd.f32 %v1222, 1.0
  %v1328 = vadd.f32 %v1224, 1.0
  %v1329 = vadd.f32 %v1226, 1.0
  %v1330 = vadd.f32 %v1228, 1.0
  %v1331 = vadd.f32 %v1230, 1.0
  %v1332 = vadd.f32 %v1232, 1.0
  %v1333 = vadd.f32 %v1234, 1.0
  %v1334 = vadd.f32 %v1236, 1.0
  %v1335 = vadd.f32 %v1238, 1.0
  %v1336 = vadd.f32 %v1240, 1.0
  %v1337 = vadd.f32 %v1242, 1.0
  %v1338 = vadd.f32 %v1244, 1.0
  %v1339 = vadd.f32 %v1246, 1.0
  %v1340 = vadd.f32 %v1248, 1.0
  %v1341 = vadd.f32 %v1250, 1.0
  %v1342 = vadd.f32 %v1252, 1.0
  %v1343 = vadd.f32 %v1254, 1.0
  %v1344 = vadd.f32 %v1256, 1.0
  %v1345 = vadd.f32 %v1258, 1.0
  %v1346 = vadd.f32 %v1260, 1.0
  %v1347 = vadd.f32 %v1262, 1.0
  %v1348 = vadd.f32 %v1264, 1.0
  %v1349 = vadd.f32 %v1266, 1.0
  %v1350 = vadd.f32 %v1268, 1.0
  %v1351 = vadd.f32 %v1270, 1.0
  %v1352 = vadd.f32 %v1272, 1.0
  %v1353 = vadd.f32 %v1274, 1.0
  %v1354 = vadd.f32 %v1276, 1.0
  %v1355 = vadd.f32 %v1278, 1.0
  %v1356 = vadd.f32 %v1280, 1.0
  %v1357 = vadd.f32 %v1282, 1.0
  %v1358 = vadd.f32 %v1284, 1.0
  %v1359 = vadd.f32 %v1286, 1.0
  %v1360 = vadd.f32 %v1288, 1.0
  %v1361 = vadd.f32 %v1290, 1.0
  %v1362 = vadd.f32 %v1292, 1.0
  %v1363 = vadd.f32 %v1294, 1.0
  %v1364 = vadd.f32 %v1296, 1.0
  %v1365 = vadd.f32 %v1298, 1.0
  %v1366 = vadd.f32 %v1300, 1.0
  %v1367 = vadd.f32 %v1302, 1.0
  %v1368 = vadd.f32 %v1304, 1.0
  %v1369 = vrcp.pop %v1305
  %v1370 = vrcp.pop %v1306
  %v1371 = vrcp.pop %v1307
  %v1372 = vrcp.pop %v1308
  %v1373 = vrcp.pop %v1309
  %v1374 = vrcp.pop %v1310
  %v1375 = vrcp.pop %v1311
  %v1376 = vrcp.pop %v1312
  %v1377 = vrcp.pop %v1313
  %v1378 = vrcp.pop %v1314
  %v1379 = vrcp.pop %v1315
  %v1380 = vrcp.pop %v1316
  %v1381 = vrcp.pop %v1317
  %v1382 = vrcp.pop %v1318
  %v1383 = vrcp.pop %v1319
  %v1384 = vrcp.pop %v1320
  %v1385 = vrcp.pop %v1321
  %v1386 = vrcp.pop %v1322
  %v1387 = vrcp.pop %v1323
  %v1388 = vrcp.pop %v1324
  %v1389 = vrcp.pop %v1325
  %v1390 = vrcp.pop %v1326
  %v1391 = vrcp.pop %v1327
  %v1392 = vrcp.pop %v1328
  %v1393 = vrcp.pop %v1329
  %v1394 = vrcp.pop %v1330
  %v1395 = vrcp.pop %v1331
  %v1396 = vrcp.pop %v1332
  %v1397 = vrcp.pop %v1333
  %v1398 = vrcp.pop %v1334
  %v1399 = vrcp.pop %v1335
  %v1400 = vrcp.pop %v1336
  %v1401 = vrcp.pop %v1337
  %v1402 = vrcp.pop %v1338
  %v1403 = vrcp.pop %v1339
  %v1404 = vrcp.pop %v1340
  %v1405 = vrcp.pop %v1341
  %v1406 = vrcp.pop %v1342
  %v1407 = vrcp.pop %v1343
  %v1408 = vrcp.pop %v1344
  %v1409 = vrcp.pop %v1345
  %v1410 = vrcp.pop %v1346
  %v1411 = vrcp.pop %v1347
  %v1412 = vrcp.pop %v1348
  %v1413 = vrcp.pop %v1349
  %v1414 = vrcp.pop %v1350
  %v1415 = vrcp.pop %v1351
  %v1416 = vrcp.pop %v1352
  %v1417 = vrcp.pop %v1353
  %v1418 = vrcp.pop %v1354
  %v1419 = vrcp.pop %v1355
  %v1420 = vrcp.pop %v1356
  %v1421 = vrcp.pop %v1357
  %v1422 = vrcp.pop %v1358
  %v1423 = vrcp.pop %v1359
  %v1424 = vrcp.pop %v1360
  %v1425 = vrcp.pop %v1361
  %v1426 = vrcp.pop %v1362
  %v1427 = vrcp.pop %v1363
  %v1428 = vrcp.pop %v1364
  %v1429 = vrcp.pop %v1365
  %v1430 = vrcp.pop %v1366
  %v1431 = vrcp.pop %v1367
  %v1432 = vrcp.pop %v1368
  %v1433 = vmul.f32 %v859, %v1369
  %v1434 = vmul.f32 %v862, %v1370
  %v1435 = vmul.f32 %v867, %v1371
  %v1436 = vmul.f32 %v870, %v1372
  %v1437 = vmul.f32 %v875, %v1373
  %v1438 = vmul.f32 %v878, %v1374
  %v1439 = vmul.f32 %v883, %v1375
  %v1440 = vmul.f32 %v886, %v1376
  %v1441 = vmul.f32 %v891, %v1377
  %v1442 = vmul.f32 %v894, %v1378
  %v1443 = vmul.f32 %v899, %v1379
  %v1444 = vmul.f32 %v902, %v1380
  %v1445 = vmul.f32 %v907, %v1381
  %v1446 = vmul.f32 %v910, %v1382
  %v1447 = vmul.f32 %v915, %v1383
  %v1448 = vmul.f32 %v918, %v1384
  %v1449 = vmul.f32 %v923, %v1385
  %v1450 = vmul.f32 %v926, %v1386
  %v1451 = vmul.f32 %v931, %v1387
  %v1452 = vmul.f32 %v934, %v1388
  %v1453 = vmul.f32 %v939, %v1389
  %v1454 = vmul.f32 %v942, %v1390
  %v1455 = vmul.f32 %v947, %v1391
  %v1456 = vmul.f32 %v950, %v1392
  %v1457 = vmul.f32 %v955, %v1393
  %v1458 = vmul.f32 %v958, %v1394
  %v1459 = vmul.f32 %v963, %v1395
  %v1460 = vmul.f32 %v966, %v1396
  %v1461 = vmul.f32 %v971, %v1397
  %v1462 = vmul.f32 %v974, %v1398
  %v1463 = vmul.f32 %v979, %v1399
  %v1464 = vmul.f32 %v982, %v1400
  %v1465 = vmul.f32 %v987, %v1401
  %v1466 = vmul.f32 %v990, %v1402
  %v1467 = vmul.f32 %v995, %v1403
  %v1468 = vmul.f32 %v998, %v1404
  %v1469 = vmul.f32 %v1003, %v1405
  %v1470 = vmul.f32 %v1006, %v1406
  %v1471 = vmul.f32 %v1011, %v1407
  %v1472 = vmul.f32 %v1014, %v1408
  %v1473 = vmul.f32 %v1019, %v1409
  %v1474 = vmul.f32 %v1022, %v1410
  %v1475 = vmul.f32 %v1027, %v1411
  %v1476 = vmul.f32 %v1030, %v1412
  %v1477 = vmul.f32 %v1035, %v1413
  %v1478 = vmul.f32 %v1038, %v1414
  %v1479 = vmul.f32 %v1043, %v1415
  %v1480 = vmul.f32 %v1046, %v1416
  %v1481 = vmul.f32 %v1051, %v1417
  %v1482 = vmul.f32 %v1054, %v1418
  %v1483 = vmul.f32 %v1059, %v1419
  %v1484 = vmul.f32 %v1062, %v1420
  %v1485 = vmul.f32 %v1067, %v1421
  %v1486 = vmul.f32 %v1070, %v1422
  %v1487 = vmul.f32 %v1075, %v1423
  %v1488 = vmul.f32 %v1078, %v1424
  %v1489 = vmul.f32 %v1083, %v1425
  %v1490 = vmul.f32 %v1086, %v1426
  %v1491 = vmul.f32 %v1091, %v1427
  %v1492 = vmul.f32 %v1094, %v1428
  %v1493 = vmul.f32 %v1099, %v1429
  %v1494 = vmul.f32 %v1102, %v1430
  %v1495 = vmul.f32 %v1107, %v1431
  %v1496 = vmul.f32 %v1110, %v1432
  %v1497 = vpack.c.bf16 %v1434, %v1433
  %v1498 = vpack.c.bf16 %v1436, %v1435
  %v1499 = vpack.c.bf16 %v1438, %v1437
  %v1500 = vpack.c.bf16 %v1440, %v1439
  %v1501 = vpack.c.bf16 %v1442, %v1441
  %v1502 = vpack.c.bf16 %v1444, %v1443
  %v1503 = vpack.c.bf16 %v1446, %v1445
  %v1504 = vpack.c.bf16 %v1448, %v1447
  %v1505 = vpack.c.bf16 %v1450, %v1449
  %v1506 = vpack.c.bf16 %v1452, %v1451
  %v1507 = vpack.c.bf16 %v1454, %v1453
  %v1508 = vpack.c.bf16 %v1456, %v1455
  %v1509 = vpack.c.bf16 %v1458, %v1457
  %v1510 = vpack.c.bf16 %v1460, %v1459
  %v1511 = vpack.c.bf16 %v1462, %v1461
  %v1512 = vpack.c.bf16 %v1464, %v1463
  %v1513 = vpack.c.bf16 %v1466, %v1465
  %v1514 = vpack.c.bf16 %v1468, %v1467
  %v1515 = vpack.c.bf16 %v1470, %v1469
  %v1516 = vpack.c.bf16 %v1472, %v1471
  %v1517 = vpack.c.bf16 %v1474, %v1473
  %v1518 = vpack.c.bf16 %v1476, %v1475
  %v1519 = vpack.c.bf16 %v1478, %v1477
  %v1520 = vpack.c.bf16 %v1480, %v1479
  %v1521 = vpack.c.bf16 %v1482, %v1481
  %v1522 = vpack.c.bf16 %v1484, %v1483
  %v1523 = vpack.c.bf16 %v1486, %v1485
  %v1524 = vpack.c.bf16 %v1488, %v1487
  %v1525 = vpack.c.bf16 %v1490, %v1489
  %v1526 = vpack.c.bf16 %v1492, %v1491
  %v1527 = vpack.c.bf16 %v1494, %v1493
  %v1528 = vpack.c.bf16 %v1496, %v1495
  %v1529 = vld [vmem:[%s5] sm:$0x3]
  %v1530 = vld [vmem:[%s6] sm:$0x1]
  %v1532 = vlaneseq
  %v1533 = vshrl.u32 %v1532, 7
  %v1534 = vsub.s32 0, %v1533
  %v1535 = vrot.slane %v1530, %v1534
  %vm1537 = vcmask 31744
  %v1539 = vsel %vm1537, %v1497, 0
  %v1542 = vsel %vm1537, %v1498, 0
  %v1545 = vsel %vm1537, %v1499, 0
  %v1548 = vsel %vm1537, %v1500, 0
  %v1551 = vsel %vm1537, %v1501, 0
  %v1554 = vsel %vm1537, %v1502, 0
  %v1557 = vsel %vm1537, %v1503, 0
  %v1560 = vsel %vm1537, %v1504, 0
  %v1563 = vsel %vm1537, %v1505, 0
  %v1566 = vsel %vm1537, %v1506, 0
  %v1569 = vsel %vm1537, %v1507, 0
  %v1572 = vsel %vm1537, %v1508, 0
  %v1575 = vsel %vm1537, %v1509, 0
  %v1578 = vsel %vm1537, %v1510, 0
  %v1581 = vsel %vm1537, %v1511, 0
  %v1584 = vsel %vm1537, %v1512, 0
  %v1587 = vsel %vm1537, %v1513, 0
  %v1590 = vsel %vm1537, %v1514, 0
  %v1593 = vsel %vm1537, %v1515, 0
  %v1596 = vsel %vm1537, %v1516, 0
  %v1599 = vsel %vm1537, %v1517, 0
  %v1602 = vsel %vm1537, %v1518, 0
  %v1605 = vsel %vm1537, %v1519, 0
  %v1608 = vsel %vm1537, %v1520, 0
  %v1611 = vsel %vm1537, %v1521, 0
  %v1614 = vsel %vm1537, %v1522, 0
  %v1617 = vsel %vm1537, %v1523, 0
  %v1620 = vsel %vm1537, %v1524, 0
  %v1623 = vsel %vm1537, %v1525, 0
  %v1626 = vsel %vm1537, %v1526, 0
  %v1629 = vsel %vm1537, %v1527, 0
  %v1632 = vsel %vm1537, %v1528, 0
  %vm1634 = vcmask 1041408
  %v1636 = vsel %vm1634, %v1529, 0
  %1638 = vmatprep.subr.bf16.mxu0 0
  %1639 = vmatpush1.bf16.msra.mxu0 0
  %1640 = vmatprep.subr.bf16.mxu0 0
  %1641 = vmatpush1.bf16.msra.mxu0 0
  %1642 = vmatprep.subr.bf16.mxu0 0
  %1643 = vmatpush1.bf16.msra.mxu0 0
  %1644 = vmatprep.subr.bf16.mxu0 0
  %1645 = vmatpush1.bf16.msra.mxu0 0
  %1646 = vmatprep.subr.bf16.mxu0 0
  %1647 = vmatpush1.bf16.msra.mxu0 0
  %1648 = vmatprep.subr.bf16.mxu0 0
  %1649 = vmatpush1.bf16.msra.mxu0 0
  %1650 = vmatprep.subr.bf16.mxu0 0
  %1651 = vmatpush1.bf16.msra.mxu0 0
  %1652 = vmatprep.subr.bf16.mxu0 0
  %1653 = vmatpush1.bf16.msra.mxu0 %v1636
  %1654 = vmatprep.subr.bf16.mxu0 0
  %1655 = vmatpush2.bf16.msra.mxu0 0
  %1656 = vmatprep.subr.bf16.mxu0 0
  %1657 = vmatpush2.bf16.msra.mxu0 0
  %1658 = vmatprep.subr.bf16.mxu0 0
  %1659 = vmatpush2.bf16.msra.mxu0 0
  %1660 = vmatprep.subr.bf16.mxu0 0
  %1661 = vmatpush2.bf16.msra.mxu0 0
  %1662 = vmatprep.subr.bf16.mxu0 0
  %1663 = vmatpush2.bf16.msra.mxu0 0
  %1664 = vmatprep.subr.bf16.mxu0 0
  %1665 = vmatpush2.bf16.msra.mxu0 0
  %1666 = vmatprep.subr.bf16.mxu0 0
  %1667 = vmatpush2.bf16.msra.mxu0 0
  %1668 = vmatprep.subr.bf16.mxu0 0
  %1669 = vmatpush2.bf16.msra.mxu0 0
  %1670 = vmatprep.mubr.bf16.mxu0 0
  %1671 = vmatmul.mubr.bf16.gmra.mxu0 %v1539
  %v1672 = vpop.f32.mrf.mxu0
  %v1673 = vadd.f32 %v1535, %v1672
  %v1674 = vpop.f32.mrf.mxu0
  %v1675 = vpop.f32.mrf.mxu0
  %v1676 = vadd.f32 %v1535, %v1675
  %v1677 = vpop.f32.mrf.mxu0
  %1678 = vmatprep.mubr.bf16.mxu0 0
  %1679 = vmatmul.mubr.bf16.gmra.mxu0 %v1542
  %v1680 = vpop.f32.mrf.mxu0
  %v1681 = vadd.f32 %v1535, %v1680
  %v1682 = vpop.f32.mrf.mxu0
  %v1683 = vpop.f32.mrf.mxu0
  %v1684 = vadd.f32 %v1535, %v1683
  %v1685 = vpop.f32.mrf.mxu0
  %1686 = vmatprep.mubr.bf16.mxu0 0
  %1687 = vmatmul.mubr.bf16.gmra.mxu0 %v1545
  %v1688 = vpop.f32.mrf.mxu0
  %v1689 = vadd.f32 %v1535, %v1688
  %v1690 = vpop.f32.mrf.mxu0
  %v1691 = vpop.f32.mrf.mxu0
  %v1692 = vadd.f32 %v1535, %v1691
  %v1693 = vpop.f32.mrf.mxu0
  %1694 = vmatprep.mubr.bf16.mxu0 0
  %1695 = vmatmul.mubr.bf16.gmra.mxu0 %v1548
  %v1696 = vpop.f32.mrf.mxu0
  %v1697 = vadd.f32 %v1535, %v1696
  %v1698 = vpop.f32.mrf.mxu0
  %v1699 = vpop.f32.mrf.mxu0
  %v1700 = vadd.f32 %v1535, %v1699
  %v1701 = vpop.f32.mrf.mxu0
  %1702 = vmatprep.mubr.bf16.mxu0 0
  %1703 = vmatmul.mubr.bf16.gmra.mxu0 %v1551
  %v1704 = vpop.f32.mrf.mxu0
  %v1705 = vadd.f32 %v1535, %v1704
  %v1706 = vpop.f32.mrf.mxu0
  %v1707 = vpop.f32.mrf.mxu0
  %v1708 = vadd.f32 %v1535, %v1707
  %v1709 = vpop.f32.mrf.mxu0
  %1710 = vmatprep.mubr.bf16.mxu0 0
  %1711 = vmatmul.mubr.bf16.gmra.mxu0 %v1554
  %v1712 = vpop.f32.mrf.mxu0
  %v1713 = vadd.f32 %v1535, %v1712
  %v1714 = vpop.f32.mrf.mxu0
  %v1715 = vpop.f32.mrf.mxu0
  %v1716 = vadd.f32 %v1535, %v1715
  %v1717 = vpop.f32.mrf.mxu0
  %1718 = vmatprep.mubr.bf16.mxu0 0
  %1719 = vmatmul.mubr.bf16.gmra.mxu0 %v1557
  %v1720 = vpop.f32.mrf.mxu0
  %v1721 = vadd.f32 %v1535, %v1720
  %v1722 = vpop.f32.mrf.mxu0
  %v1723 = vpop.f32.mrf.mxu0
  %v1724 = vadd.f32 %v1535, %v1723
  %v1725 = vpop.f32.mrf.mxu0
  %1726 = vmatprep.mubr.bf16.mxu0 0
  %1727 = vmatmul.mubr.bf16.gmra.mxu0 %v1560
  %v1728 = vpop.f32.mrf.mxu0
  %v1729 = vadd.f32 %v1535, %v1728
  %v1730 = vpop.f32.mrf.mxu0
  %v1731 = vpop.f32.mrf.mxu0
  %v1732 = vadd.f32 %v1535, %v1731
  %v1733 = vpop.f32.mrf.mxu0
  %1734 = vmatprep.mubr.bf16.mxu0 0
  %1735 = vmatmul.mubr.bf16.gmra.mxu0 %v1563
  %v1736 = vpop.f32.mrf.mxu0
  %v1737 = vadd.f32 %v1535, %v1736
  %v1738 = vpop.f32.mrf.mxu0
  %v1739 = vpop.f32.mrf.mxu0
  %v1740 = vadd.f32 %v1535, %v1739
  %v1741 = vpop.f32.mrf.mxu0
  %1742 = vmatprep.mubr.bf16.mxu0 0
  %1743 = vmatmul.mubr.bf16.gmra.mxu0 %v1566
  %v1744 = vpop.f32.mrf.mxu0
  %v1745 = vadd.f32 %v1535, %v1744
  %v1746 = vpop.f32.mrf.mxu0
  %v1747 = vpop.f32.mrf.mxu0
  %v1748 = vadd.f32 %v1535, %v1747
  %v1749 = vpop.f32.mrf.mxu0
  %1750 = vmatprep.mubr.bf16.mxu0 0
  %1751 = vmatmul.mubr.bf16.gmra.mxu0 %v1569
  %v1752 = vpop.f32.mrf.mxu0
  %v1753 = vadd.f32 %v1535, %v1752
  %v1754 = vpop.f32.mrf.mxu0
  %v1755 = vpop.f32.mrf.mxu0
  %v1756 = vadd.f32 %v1535, %v1755
  %v1757 = vpop.f32.mrf.mxu0
  %1758 = vmatprep.mubr.bf16.mxu0 0
  %1759 = vmatmul.mubr.bf16.gmra.mxu0 %v1572
  %v1760 = vpop.f32.mrf.mxu0
  %v1761 = vadd.f32 %v1535, %v1760
  %v1762 = vpop.f32.mrf.mxu0
  %v1763 = vpop.f32.mrf.mxu0
  %v1764 = vadd.f32 %v1535, %v1763
  %v1765 = vpop.f32.mrf.mxu0
  %1766 = vmatprep.mubr.bf16.mxu0 0
  %1767 = vmatmul.mubr.bf16.gmra.mxu0 %v1575
  %v1768 = vpop.f32.mrf.mxu0
  %v1769 = vadd.f32 %v1535, %v1768
  %v1770 = vpop.f32.mrf.mxu0
  %v1771 = vpop.f32.mrf.mxu0
  %v1772 = vadd.f32 %v1535, %v1771
  %v1773 = vpop.f32.mrf.mxu0
  %1774 = vmatprep.mubr.bf16.mxu0 0
  %1775 = vmatmul.mubr.bf16.gmra.mxu0 %v1578
  %v1776 = vpop.f32.mrf.mxu0
  %v1777 = vadd.f32 %v1535, %v1776
  %v1778 = vpop.f32.mrf.mxu0
  %v1779 = vpop.f32.mrf.mxu0
  %v1780 = vadd.f32 %v1535, %v1779
  %v1781 = vpop.f32.mrf.mxu0
  %1782 = vmatprep.mubr.bf16.mxu0 0
  %1783 = vmatmul.mubr.bf16.gmra.mxu0 %v1581
  %v1784 = vpop.f32.mrf.mxu0
  %v1785 = vadd.f32 %v1535, %v1784
  %v1786 = vpop.f32.mrf.mxu0
  %v1787 = vpop.f32.mrf.mxu0
  %v1788 = vadd.f32 %v1535, %v1787
  %v1789 = vpop.f32.mrf.mxu0
  %1790 = vmatprep.mubr.bf16.mxu0 0
  %1791 = vmatmul.mubr.bf16.gmra.mxu0 %v1584
  %v1792 = vpop.f32.mrf.mxu0
  %v1793 = vadd.f32 %v1535, %v1792
  %v1794 = vpop.f32.mrf.mxu0
  %v1795 = vpop.f32.mrf.mxu0
  %v1796 = vadd.f32 %v1535, %v1795
  %v1797 = vpop.f32.mrf.mxu0
  %1798 = vmatprep.mubr.bf16.mxu0 0
  %1799 = vmatmul.mubr.bf16.gmra.mxu0 %v1587
  %v1800 = vpop.f32.mrf.mxu0
  %v1801 = vadd.f32 %v1535, %v1800
  %v1802 = vpop.f32.mrf.mxu0
  %v1803 = vpop.f32.mrf.mxu0
  %v1804 = vadd.f32 %v1535, %v1803
  %v1805 = vpop.f32.mrf.mxu0
  %1806 = vmatprep.mubr.bf16.mxu0 0
  %1807 = vmatmul.mubr.bf16.gmra.mxu0 %v1590
  %v1808 = vpop.f32.mrf.mxu0
  %v1809 = vadd.f32 %v1535, %v1808
  %v1810 = vpop.f32.mrf.mxu0
  %v1811 = vpop.f32.mrf.mxu0
  %v1812 = vadd.f32 %v1535, %v1811
  %v1813 = vpop.f32.mrf.mxu0
  %1814 = vmatprep.mubr.bf16.mxu0 0
  %1815 = vmatmul.mubr.bf16.gmra.mxu0 %v1593
  %v1816 = vpop.f32.mrf.mxu0
  %v1817 = vadd.f32 %v1535, %v1816
  %v1818 = vpop.f32.mrf.mxu0
  %v1819 = vpop.f32.mrf.mxu0
  %v1820 = vadd.f32 %v1535, %v1819
  %v1821 = vpop.f32.mrf.mxu0
  %1822 = vmatprep.mubr.bf16.mxu0 0
  %1823 = vmatmul.mubr.bf16.gmra.mxu0 %v1596
  %v1824 = vpop.f32.mrf.mxu0
  %v1825 = vadd.f32 %v1535, %v1824
  %v1826 = vpop.f32.mrf.mxu0
  %v1827 = vpop.f32.mrf.mxu0
  %v1828 = vadd.f32 %v1535, %v1827
  %v1829 = vpop.f32.mrf.mxu0
  %1830 = vmatprep.mubr.bf16.mxu0 0
  %1831 = vmatmul.mubr.bf16.gmra.mxu0 %v1599
  %v1832 = vpop.f32.mrf.mxu0
  %v1833 = vadd.f32 %v1535, %v1832
  %v1834 = vpop.f32.mrf.mxu0
  %v1835 = vpop.f32.mrf.mxu0
  %v1836 = vadd.f32 %v1535, %v1835
  %v1837 = vpop.f32.mrf.mxu0
  %1838 = vmatprep.mubr.bf16.mxu0 0
  %1839 = vmatmul.mubr.bf16.gmra.mxu0 %v1602
  %v1840 = vpop.f32.mrf.mxu0
  %v1841 = vadd.f32 %v1535, %v1840
  %v1842 = vpop.f32.mrf.mxu0
  %v1843 = vpop.f32.mrf.mxu0
  %v1844 = vadd.f32 %v1535, %v1843
  %v1845 = vpop.f32.mrf.mxu0
  %1846 = vmatprep.mubr.bf16.mxu0 0
  %1847 = vmatmul.mubr.bf16.gmra.mxu0 %v1605
  %v1848 = vpop.f32.mrf.mxu0
  %v1849 = vadd.f32 %v1535, %v1848
  %v1850 = vpop.f32.mrf.mxu0
  %v1851 = vpop.f32.mrf.mxu0
  %v1852 = vadd.f32 %v1535, %v1851
  %v1853 = vpop.f32.mrf.mxu0
  %1854 = vmatprep.mubr.bf16.mxu0 0
  %1855 = vmatmul.mubr.bf16.gmra.mxu0 %v1608
  %v1856 = vpop.f32.mrf.mxu0
  %v1857 = vadd.f32 %v1535, %v1856
  %v1858 = vpop.f32.mrf.mxu0
  %v1859 = vpop.f32.mrf.mxu0
  %v1860 = vadd.f32 %v1535, %v1859
  %v1861 = vpop.f32.mrf.mxu0
  %1862 = vmatprep.mubr.bf16.mxu0 0
  %1863 = vmatmul.mubr.bf16.gmra.mxu0 %v1611
  %v1864 = vpop.f32.mrf.mxu0
  %v1865 = vadd.f32 %v1535, %v1864
  %v1866 = vpop.f32.mrf.mxu0
  %v1867 = vpop.f32.mrf.mxu0
  %v1868 = vadd.f32 %v1535, %v1867
  %v1869 = vpop.f32.mrf.mxu0
  %1870 = vmatprep.mubr.bf16.mxu0 0
  %1871 = vmatmul.mubr.bf16.gmra.mxu0 %v1614
  %v1872 = vpop.f32.mrf.mxu0
  %v1873 = vadd.f32 %v1535, %v1872
  %v1874 = vpop.f32.mrf.mxu0
  %v1875 = vpop.f32.mrf.mxu0
  %v1876 = vadd.f32 %v1535, %v1875
  %v1877 = vpop.f32.mrf.mxu0
  %1878 = vmatprep.mubr.bf16.mxu0 0
  %1879 = vmatmul.mubr.bf16.gmra.mxu0 %v1617
  %v1880 = vpop.f32.mrf.mxu0
  %v1881 = vadd.f32 %v1535, %v1880
  %v1882 = vpop.f32.mrf.mxu0
  %v1883 = vpop.f32.mrf.mxu0
  %v1884 = vadd.f32 %v1535, %v1883
  %v1885 = vpop.f32.mrf.mxu0
  %1886 = vmatprep.mubr.bf16.mxu0 0
  %1887 = vmatmul.mubr.bf16.gmra.mxu0 %v1620
  %v1888 = vpop.f32.mrf.mxu0
  %v1889 = vadd.f32 %v1535, %v1888
  %v1890 = vpop.f32.mrf.mxu0
  %v1891 = vpop.f32.mrf.mxu0
  %v1892 = vadd.f32 %v1535, %v1891
  %v1893 = vpop.f32.mrf.mxu0
  %1894 = vmatprep.mubr.bf16.mxu0 0
  %1895 = vmatmul.mubr.bf16.gmra.mxu0 %v1623
  %v1896 = vpop.f32.mrf.mxu0
  %v1897 = vadd.f32 %v1535, %v1896
  %v1898 = vpop.f32.mrf.mxu0
  %v1899 = vpop.f32.mrf.mxu0
  %v1900 = vadd.f32 %v1535, %v1899
  %v1901 = vpop.f32.mrf.mxu0
  %1902 = vmatprep.mubr.bf16.mxu0 0
  %1903 = vmatmul.mubr.bf16.gmra.mxu0 %v1626
  %v1904 = vpop.f32.mrf.mxu0
  %v1905 = vadd.f32 %v1535, %v1904
  %v1906 = vpop.f32.mrf.mxu0
  %v1907 = vpop.f32.mrf.mxu0
  %v1908 = vadd.f32 %v1535, %v1907
  %v1909 = vpop.f32.mrf.mxu0
  %1910 = vmatprep.mubr.bf16.mxu0 0
  %1911 = vmatmul.mubr.bf16.gmra.mxu0 %v1629
  %v1912 = vpop.f32.mrf.mxu0
  %v1913 = vadd.f32 %v1535, %v1912
  %v1914 = vpop.f32.mrf.mxu0
  %v1915 = vpop.f32.mrf.mxu0
  %v1916 = vadd.f32 %v1535, %v1915
  %v1917 = vpop.f32.mrf.mxu0
  %1918 = vmatprep.mubr.bf16.mxu0 0
  %1919 = vmatmul.mubr.bf16.gmra.mxu0 %v1632
  %v1920 = vpop.f32.mrf.mxu0
  %v1921 = vadd.f32 %v1535, %v1920
  %v1922 = vpop.f32.mrf.mxu0
  %v1923 = vpop.f32.mrf.mxu0
  %v1924 = vadd.f32 %v1535, %v1923
  %v1925 = vpop.f32.mrf.mxu0
  %1926 = vdwg.mxu0
  %v1927 = vtanh.pop %v1673
  %v1928 = vtanh.pop %v1676
  %v1929 = vtanh.pop %v1681
  %v1930 = vtanh.pop %v1684
  %v1931 = vtanh.pop %v1689
  %v1932 = vtanh.pop %v1692
  %v1933 = vtanh.pop %v1697
  %v1934 = vtanh.pop %v1700
  %v1935 = vtanh.pop %v1705
  %v1936 = vtanh.pop %v1708
  %v1937 = vtanh.pop %v1713
  %v1938 = vtanh.pop %v1716
  %v1939 = vtanh.pop %v1721
  %v1940 = vtanh.pop %v1724
  %v1941 = vtanh.pop %v1729
  %v1942 = vtanh.pop %v1732
  %v1943 = vtanh.pop %v1737
  %v1944 = vtanh.pop %v1740
  %v1945 = vtanh.pop %v1745
  %v1946 = vtanh.pop %v1748
  %v1947 = vtanh.pop %v1753
  %v1948 = vtanh.pop %v1756
  %v1949 = vtanh.pop %v1761
  %v1950 = vtanh.pop %v1764
  %v1951 = vtanh.pop %v1769
  %v1952 = vtanh.pop %v1772
  %v1953 = vtanh.pop %v1777
  %v1954 = vtanh.pop %v1780
  %v1955 = vtanh.pop %v1785
  %v1956 = vtanh.pop %v1788
  %v1957 = vtanh.pop %v1793
  %v1958 = vtanh.pop %v1796
  %v1959 = vtanh.pop %v1801
  %v1960 = vtanh.pop %v1804
  %v1961 = vtanh.pop %v1809
  %v1962 = vtanh.pop %v1812
  %v1963 = vtanh.pop %v1817
  %v1964 = vtanh.pop %v1820
  %v1965 = vtanh.pop %v1825
  %v1966 = vtanh.pop %v1828
  %v1967 = vtanh.pop %v1833
  %v1968 = vtanh.pop %v1836
  %v1969 = vtanh.pop %v1841
  %v1970 = vtanh.pop %v1844
  %v1971 = vtanh.pop %v1849
  %v1972 = vtanh.pop %v1852
  %v1973 = vtanh.pop %v1857
  %v1974 = vtanh.pop %v1860
  %v1975 = vtanh.pop %v1865
  %v1976 = vtanh.pop %v1868
  %v1977 = vtanh.pop %v1873
  %v1978 = vtanh.pop %v1876
  %v1979 = vtanh.pop %v1881
  %v1980 = vtanh.pop %v1884
  %v1981 = vtanh.pop %v1889
  %v1982 = vtanh.pop %v1892
  %v1983 = vtanh.pop %v1897
  %v1984 = vtanh.pop %v1900
  %v1985 = vtanh.pop %v1905
  %v1986 = vtanh.pop %v1908
  %v1987 = vtanh.pop %v1913
  %v1988 = vtanh.pop %v1916
  %v1989 = vtanh.pop %v1921
  %v1990 = vtanh.pop %v1924
  %vm1991 = vcmask 23552
  %1992 = vst.msk [vmem:[%s7] sm:$0xff] %vm1991, %v1927
  %1993 = vst.msk [vmem:[%s7 + $0x8] sm:$0xff] %vm1991, %v1928
  %1994 = vst.msk [vmem:[%s7 + $0x10] sm:$0xff] %vm1991, %v1929
  %1995 = vst.msk [vmem:[%s7 + $0x18] sm:$0xff] %vm1991, %v1930
  %1996 = vst.msk [vmem:[%s7 + $0x20] sm:$0xff] %vm1991, %v1931
  %1997 = vst.msk [vmem:[%s7 + $0x28] sm:$0xff] %vm1991, %v1932
  %1998 = vst.msk [vmem:[%s7 + $0x30] sm:$0xff] %vm1991, %v1933
  %1999 = vst.msk [vmem:[%s7 + $0x38] sm:$0xff] %vm1991, %v1934
  %2000 = vst.msk [vmem:[%s7 + $0x40] sm:$0xff] %vm1991, %v1935
  %2001 = vst.msk [vmem:[%s7 + $0x48] sm:$0xff] %vm1991, %v1936
  %2002 = vst.msk [vmem:[%s7 + $0x50] sm:$0xff] %vm1991, %v1937
  %2003 = vst.msk [vmem:[%s7 + $0x58] sm:$0xff] %vm1991, %v1938
  %2004 = vst.msk [vmem:[%s7 + $0x60] sm:$0xff] %vm1991, %v1939
  %2005 = vst.msk [vmem:[%s7 + $0x68] sm:$0xff] %vm1991, %v1940
  %2006 = vst.msk [vmem:[%s7 + $0x70] sm:$0xff] %vm1991, %v1941
  %2007 = vst.msk [vmem:[%s7 + $0x78] sm:$0xff] %vm1991, %v1942
  %2008 = vst.msk [vmem:[%s7 + $0x80] sm:$0xff] %vm1991, %v1943
  %2009 = vst.msk [vmem:[%s7 + $0x88] sm:$0xff] %vm1991, %v1944
  %2010 = vst.msk [vmem:[%s7 + $0x90] sm:$0xff] %vm1991, %v1945
  %2011 = vst.msk [vmem:[%s7 + $0x98] sm:$0xff] %vm1991, %v1946
  %2012 = vst.msk [vmem:[%s7 + $0xa0] sm:$0xff] %vm1991, %v1947
  %2013 = vst.msk [vmem:[%s7 + $0xa8] sm:$0xff] %vm1991, %v1948
  %2014 = vst.msk [vmem:[%s7 + $0xb0] sm:$0xff] %vm1991, %v1949
  %2015 = vst.msk [vmem:[%s7 + $0xb8] sm:$0xff] %vm1991, %v1950
  %2016 = vst.msk [vmem:[%s7 + $0xc0] sm:$0xff] %vm1991, %v1951
  %2017 = vst.msk [vmem:[%s7 + $0xc8] sm:$0xff] %vm1991, %v1952
  %2018 = vst.msk [vmem:[%s7 + $0xd0] sm:$0xff] %vm1991, %v1953
  %2019 = vst.msk [vmem:[%s7 + $0xd8] sm:$0xff] %vm1991, %v1954
  %2020 = vst.msk [vmem:[%s7 + $0xe0] sm:$0xff] %vm1991, %v1955
  %2021 = vst.msk [vmem:[%s7 + $0xe8] sm:$0xff] %vm1991, %v1956
  %2022 = vst.msk [vmem:[%s7 + $0xf0] sm:$0xff] %vm1991, %v1957
  %2023 = vst.msk [vmem:[%s7 + $0xf8] sm:$0xff] %vm1991, %v1958
  %2024 = vst.msk [vmem:[%s7 + $0x100] sm:$0xff] %vm1991, %v1959
  %2025 = vst.msk [vmem:[%s7 + $0x108] sm:$0xff] %vm1991, %v1960
  %2026 = vst.msk [vmem:[%s7 + $0x110] sm:$0xff] %vm1991, %v1961
  %2027 = vst.msk [vmem:[%s7 + $0x118] sm:$0xff] %vm1991, %v1962
  %2028 = vst.msk [vmem:[%s7 + $0x120] sm:$0xff] %vm1991, %v1963
  %2029 = vst.msk [vmem:[%s7 + $0x128] sm:$0xff] %vm1991, %v1964
  %2030 = vst.msk [vmem:[%s7 + $0x130] sm:$0xff] %vm1991, %v1965
  %2031 = vst.msk [vmem:[%s7 + $0x138] sm:$0xff] %vm1991, %v1966
  %2032 = vst.msk [vmem:[%s7 + $0x140] sm:$0xff] %vm1991, %v1967
  %2033 = vst.msk [vmem:[%s7 + $0x148] sm:$0xff] %vm1991, %v1968
  %2034 = vst.msk [vmem:[%s7 + $0x150] sm:$0xff] %vm1991, %v1969
  %2035 = vst.msk [vmem:[%s7 + $0x158] sm:$0xff] %vm1991, %v1970
  %2036 = vst.msk [vmem:[%s7 + $0x160] sm:$0xff] %vm1991, %v1971
  %2037 = vst.msk [vmem:[%s7 + $0x168] sm:$0xff] %vm1991, %v1972
  %2038 = vst.msk [vmem:[%s7 + $0x170] sm:$0xff] %vm1991, %v1973
  %2039 = vst.msk [vmem:[%s7 + $0x178] sm:$0xff] %vm1991, %v1974
  %2040 = vst.msk [vmem:[%s7 + $0x180] sm:$0xff] %vm1991, %v1975
  %2041 = vst.msk [vmem:[%s7 + $0x188] sm:$0xff] %vm1991, %v1976
  %2042 = vst.msk [vmem:[%s7 + $0x190] sm:$0xff] %vm1991, %v1977
  %2043 = vst.msk [vmem:[%s7 + $0x198] sm:$0xff] %vm1991, %v1978
  %2044 = vst.msk [vmem:[%s7 + $0x1a0] sm:$0xff] %vm1991, %v1979
  %2045 = vst.msk [vmem:[%s7 + $0x1a8] sm:$0xff] %vm1991, %v1980
  %2046 = vst.msk [vmem:[%s7 + $0x1b0] sm:$0xff] %vm1991, %v1981
  %2047 = vst.msk [vmem:[%s7 + $0x1b8] sm:$0xff] %vm1991, %v1982
  %2048 = vst.msk [vmem:[%s7 + $0x1c0] sm:$0xff] %vm1991, %v1983
  %2049 = vst.msk [vmem:[%s7 + $0x1c8] sm:$0xff] %vm1991, %v1984
  %2050 = vst.msk [vmem:[%s7 + $0x1d0] sm:$0xff] %vm1991, %v1985
  %2051 = vst.msk [vmem:[%s7 + $0x1d8] sm:$0xff] %vm1991, %v1986
  %2052 = vst.msk [vmem:[%s7 + $0x1e0] sm:$0xff] %vm1991, %v1987
  %2053 = vst.msk [vmem:[%s7 + $0x1e8] sm:$0xff] %vm1991, %v1988
  %2054 = vst.msk [vmem:[%s7 + $0x1f0] sm:$0xff] %vm1991, %v1989
  %2055 = vst.msk [vmem:[%s7 + $0x1f8] sm:$0xff] %vm1991, %v1990
  // Predicated region
  $region30: #{encoder_forward.17} parent=0 // pred_check
    _
  $region31: #{encoder_forward.17} parent=0 // pred_check_branch
    %2057 = sbr.rel (0) target = $region33
  $region32: #{encoder_forward.17} parent=0 // pred_region
    _
  $region33: #{encoder_forward.17} parent=0 // pred_fallthru
    _
  // Predicated region
  $region34: #{encoder_forward.17} parent=0 // pred_check
    _
  $region35: #{encoder_forward.17} parent=0 // pred_check_branch
    %2059 = sbr.rel (0) target = $region37
  $region36: #{encoder_forward.17} parent=0 // pred_region
    _
  $region37: #{encoder_forward.17} parent=0 // pred_fallthru
    _

</llo_original>
